<compile_context>
chip_gen: v7x
topology: tpu7x:2x2x1
jax: 0.10.0
libtpu: 0.0.40
codegen_flags: <defaults>
</compile_context>

<pallas_src>
import functools

import numpy as np
import jax
import jax.numpy as jnp
from jax import lax
from jax.experimental import pallas as pl
from jax.experimental.pallas import tpu as pltpu

MLP_HIDDEN = 20        # mlp_hiddenchannel in the module
RNN_HIDDEN = 20        # rnn_hiddenchannel in the module
MLP_HS = 32            # sublane-padded MLP hidden size (zero padding is exact)
RNN_HS = 32            # sublane-padded RNN hidden size (zero padding is exact)
MLP_TN_MAX = 8192      # max event tile (lanes) for the MLP kernel
RNN_TP_MAX = 1024      # max pixel tile (lanes) for the RNN kernel
LANE_Q = 512           # tile quantum (multiple of 128 lanes)
NEG_SLOPE = 0.1


def _round_up(x, m):
    return (int(x) + m - 1) // m * m


def _pick_tile(n, max_tile, quantum=LANE_Q):
    """Lane tile size + padded extent: big tiles for big inputs, minimal
    padding waste for small ones.  Tiles are multiples of 128 lanes."""
    tile = min(max_tile, _round_up(max(int(n), 1), quantum))
    return tile, _round_up(max(int(n), 1), tile)


def _leaky(x):
    return jnp.where(x >= 0, x, NEG_SLOPE * x)


# ----------------------------- MLP kernel ----------------------------------

def _mlp_kernel(t_ref, w1_ref, b1_ref, w2_ref, b2_ref, w3_ref, b3_ref, o_ref):
    t = t_ref[...]                                            # (1, TN) events on lanes
    h = _leaky(w1_ref[...] * t + b1_ref[...])                 # Linear(1,H): (HS, TN)
    h = _leaky(jnp.dot(w2_ref[...], h,
                       preferred_element_type=jnp.float32) + b2_ref[...])
    # Linear(H,1) as a sublane reduce -> lane-dense (1, TN) output row.
    o_ref[...] = jnp.sum(h * w3_ref[...], axis=0, keepdims=True) + b3_ref[0]


def mlp_forward(t, params):
    """t: (N,) float32 -> (N,) float32.  Exact MLP.forward (the chunking over
    dim 0 in the PyTorch code is a no-op for row-wise Linear layers)."""
    w1, b1, w2, b2, w3, b3 = params
    n = t.shape[0]
    tn, n_pad = _pick_tile(n, MLP_TN_MAX)
    t_row = jnp.zeros((1, n_pad), jnp.float32).at[0, :n].set(t)

    Hm, HS = MLP_HIDDEN, MLP_HS
    w1p = jnp.zeros((HS, 1), jnp.float32).at[:Hm, 0].set(w1[:, 0])
    b1p = jnp.zeros((HS, 1), jnp.float32).at[:Hm, 0].set(b1)
    w2p = jnp.zeros((HS, HS), jnp.float32).at[:Hm, :Hm].set(w2)   # h2 = W2 @ h
    b2p = jnp.zeros((HS, 1), jnp.float32).at[:Hm, 0].set(b2)
    w3p = jnp.zeros((HS, 1), jnp.float32).at[:Hm, 0].set(w3[0, :])
    b3s = b3.reshape(1).astype(jnp.float32)                   # scalar via SMEM

    full = lambda shape: pl.BlockSpec(shape, lambda i: (0, 0))
    out = pl.pallas_call(
        _mlp_kernel,
        out_shape=jax.ShapeDtypeStruct((1, n_pad), jnp.float32),
        grid=(n_pad // tn,),
        in_specs=[pl.BlockSpec((1, tn), lambda i: (0, i)),
                  full((HS, 1)), full((HS, 1)),
                  full((HS, HS)), full((HS, 1)),
                  full((HS, 1)),
                  pl.BlockSpec(memory_space=pltpu.MemorySpace.SMEM)],
        out_specs=pl.BlockSpec((1, tn), lambda i: (0, i)),
        compiler_params=pltpu.CompilerParams(dimension_semantics=("parallel",)),
    )(t_row, w1p, b1p, w2p, b2p, w3p, b3s)
    return out[0, :n]


# ----------------------------- RNN kernel -----------------------------------

def _make_rnn_kernel(m_steps):
    HS = RNN_HS

    def kernel(vox_ref, wx_ref, bias_ref, whh_ref, w2_ref, b2_ref, o_ref):
        vox = vox_ref[...]                                    # (M, TP) pixels on lanes
        col_sum = jnp.sum(vox, axis=0, keepdims=True)         # use_rnn = sum != 0
        lengths = jnp.sum((vox != 0.0).astype(jnp.float32),   # (rnn_input != 0).sum
                          axis=0, keepdims=True)              # (1, TP)
        wx = wx_ref[...]                                      # (4*HS, 1) rank-1 input
        bias = bias_ref[...]                                  # (4*HS, 1)
        whh = whh_ref[...]                                    # (4*HS, HS)
        tp = vox.shape[1]

        def step(t_f, x_t, h, c):
            gates = (x_t * wx
                     + jnp.dot(whh, h, preferred_element_type=jnp.float32)
                     + bias)                                  # (4*HS, TP)
            i_g = jax.nn.sigmoid(gates[0 * HS:1 * HS, :])
            f_g = jax.nn.sigmoid(gates[1 * HS:2 * HS, :])
            g_g = jnp.tanh(gates[2 * HS:3 * HS, :])
            o_g = jax.nn.sigmoid(gates[3 * HS:4 * HS, :])
            c_new = f_g * c + i_g * g_g
            h_new = o_g * jnp.tanh(c_new)
            upd = t_f < lengths                               # pack_padded_sequence:
            h = jnp.where(upd, h_new, h)                      #   only first `length`
            c = jnp.where(upd, c_new, c)                      #   steps update state
            return h, c

        h = jnp.zeros((HS, tp), jnp.float32)
        c = jnp.zeros((HS, tp), jnp.float32)
        if m_steps <= 16:                                     # small static M: unroll
            for t in range(m_steps):
                h, c = step(jnp.float32(t), vox[t:t + 1, :], h, c)
        else:                                                 # large M: bounded loop
            def body(t, carry):
                hh, cc = carry
                x_t = vox_ref[pl.ds(t, 1), :]
                return step(t.astype(jnp.float32), x_t, hh, cc)
            h, c = lax.fori_loop(0, m_steps, body, (h, c))

        out = jnp.sum(h * w2_ref[...], axis=0, keepdims=True) + b2_ref[0]  # layer2
        o_ref[...] = jnp.where(col_sum != 0.0, out, 0.0)      # gird[use_rnn] = out
    return kernel


def rnn_forward(vox_t, params, *, tile):
    """vox_t: (M, P_pad) float32, pixels on lanes -> (P_pad,) float32
    (already masked by use_rnn).  P_pad must be a multiple of `tile`."""
    w1, b1, wih, whh, bih, bhh, w2, b2 = params
    m, p_pad = vox_t.shape
    Hr, HS = RNN_HIDDEN, RNN_HS

    # Fold the rank-1 input path (Linear(1,H) -> LSTM ih matmul) and pack the
    # four gates (PyTorch order i, f, g, o) into 4*HS = 128 sublanes.
    wx = jnp.zeros((4 * HS, 1), jnp.float32)
    bias = jnp.zeros((4 * HS, 1), jnp.float32)
    whhp = jnp.zeros((4 * HS, HS), jnp.float32)
    for g in range(4):
        wg = wih[g * Hr:(g + 1) * Hr, :]                      # (Hr, Hr)
        wx = wx.at[g * HS:g * HS + Hr, 0].set((wg @ w1)[:, 0])
        bias = bias.at[g * HS:g * HS + Hr, 0].set(
            wg @ b1 + bih[g * Hr:(g + 1) * Hr] + bhh[g * Hr:(g + 1) * Hr])
        whhp = whhp.at[g * HS:g * HS + Hr, :Hr].set(whh[g * Hr:(g + 1) * Hr, :])
    w2p = jnp.zeros((HS, 1), jnp.float32).at[:Hr, 0].set(w2[0, :])
    b2s = b2.reshape(1).astype(jnp.float32)                   # scalar via SMEM

    kernel = _make_rnn_kernel(m)
    full = lambda shape: pl.BlockSpec(shape, lambda i: (0, 0))
    out = pl.pallas_call(
        kernel,
        out_shape=jax.ShapeDtypeStruct((1, p_pad), jnp.float32),
        grid=(p_pad // tile,),
        in_specs=[pl.BlockSpec((m, tile), lambda i: (0, i)),
                  full((4 * HS, 1)), full((4 * HS, 1)), full((4 * HS, HS)),
                  full((HS, 1)),
                  pl.BlockSpec(memory_space=pltpu.MemorySpace.SMEM)],
        out_specs=pl.BlockSpec((1, tile), lambda i: (0, i)),
        compiler_params=pltpu.CompilerParams(dimension_semantics=("parallel",)),
    )(vox_t, wx, bias, whhp, w2p, b2s)
    return out[0]


# ----------------------------- Gird forward ---------------------------------

@functools.partial(jax.jit, static_argnames=("dim", "temporal_aggregation_size",
                                             "num_batches_total",
                                             "max_events_in_pixel"))
def gird_forward(events, mlp_params, rnn_params, *, dim=(8, 16),
                 temporal_aggregation_size=3, num_batches_total=6,
                 max_events_in_pixel=1):
    events = events.astype(jnp.float32)
    Hd, Wd = dim
    B = num_batches_total                # = (1 + batch[-1]) * (1 + itemp[-1])
    M = max(int(max_events_in_pixel), 1)
    P = B * 2 * Hd * Wd
    tp, P_pad = _pick_tile(P, RNN_TP_MAX)

    x = events[:, 0].astype(jnp.int32)
    y = events[:, 1].astype(jnp.int32)
    p = events[:, 2].astype(jnp.int32)
    t = events[:, 3]
    iip = events[:, 4].astype(jnp.int32)
    itemp = events[:, 5].astype(jnp.int32)
    batch = events[:, 6].astype(jnp.int32)

    values = mlp_forward(t, mlp_params)                       # Pallas MLP

    # TODO(synk): data-dependent flat scatter (torch .put_) stays in plain JAX.
    pixel_row = (x + Wd * y + Wd * Hd * p
                 + Wd * Hd * 2 * (batch * temporal_aggregation_size + itemp))
    flat_idx = (iip - 1) * P_pad + pixel_row                  # transposed (M, P) layout
    vox_t = jnp.zeros((M * P_pad,), jnp.float32).at[flat_idx].set(values)
    vox_t = vox_t.reshape(M, P_pad)

    gird_flat = rnn_forward(vox_t, rnn_params, tile=tp)       # Pallas masked LSTM
    return gird_flat[:P].reshape(B, 2, Hd, Wd)


# ----------------------------- deterministic setup ---------------------------

def init_mlp_params(key, hidden=MLP_HIDDEN):
    ks = jax.random.split(key, 6)
    u = lambda k, shape, fan: jax.random.uniform(
        k, shape, jnp.float32, -1.0 / np.sqrt(fan), 1.0 / np.sqrt(fan))
    return (u(ks[0], (hidden, 1), 1), u(ks[1], (hidden,), 1),
            u(ks[2], (hidden, hidden), hidden), u(ks[3], (hidden,), hidden),
            u(ks[4], (1, hidden), hidden), u(ks[5], (1,), hidden))


def init_rnn_params(key, hidden=RNN_HIDDEN):
    ks = jax.random.split(key, 8)
    u = lambda k, shape, fan: jax.random.uniform(
        k, shape, jnp.float32, -1.0 / np.sqrt(fan), 1.0 / np.sqrt(fan))
    w1 = u(ks[0], (hidden, 1), 1)
    b1 = u(ks[1], (hidden,), 1)
    wih = u(ks[2], (4 * hidden, hidden), hidden)
    whh = u(ks[3], (4 * hidden, hidden), hidden)
    bih = u(ks[4], (4 * hidden,), hidden)
    bhh = u(ks[5], (4 * hidden,), hidden)
    w2 = u(ks[6], (1, hidden), hidden)
    b2 = u(ks[7], (1,), hidden)
    return (w1, b1, wih, whh, bih, bhh, w2, b2)


def make_events(key, n, Hd, Wd, num_batches, tas):
    kx, ky, kp, kt, kb, ki = jax.random.split(key, 6)
    # np.array(...) copies -> writable host arrays.
    x = np.array(jax.random.randint(kx, (n,), 0, Wd))
    y = np.array(jax.random.randint(ky, (n,), 0, Hd))
    p = np.array(jax.random.randint(kp, (n,), 0, 2))
    t = np.array(jax.random.uniform(kt, (n,), jnp.float32, -1.0, 1.0))
    batch = np.sort(np.array(jax.random.randint(kb, (n,), 0, num_batches)))
    itemp = np.array(jax.random.randint(ki, (n,), 0, tas))
    # forward() derives B from the last event's (index_in_temporal, batch)
    batch[-1] = num_batches - 1
    itemp[-1] = tas - 1
    # index_in_pixel: 1-based arrival order within each (x, y, p, batch, itemp) cell
    iip = np.zeros(n, dtype=np.int64)
    counts = {}
    for i in range(n):
        cell = (int(x[i]), int(y[i]), int(p[i]), int(batch[i]), int(itemp[i]))
        counts[cell] = counts.get(cell, 0) + 1
        iip[i] = counts[cell]
    ev = np.stack([x.astype(np.float32), y.astype(np.float32),
                   p.astype(np.float32), t.astype(np.float32),
                   iip.astype(np.float32), itemp.astype(np.float32),
                   batch.astype(np.float32)], axis=1)
    return jnp.asarray(ev, dtype=jnp.float32), int(iip.max())


if __name__ == "__main__":
    key = jax.random.PRNGKey(0)
    k_ev, k_mlp, k_rnn = jax.random.split(key, 3)
    Hd, Wd = 8, 16                       # small input_shape for the demo
    num_batches, tas = 2, 3              # temporal_aggregation_size = 3
    events, max_ev = make_events(k_ev, 400, Hd, Wd, num_batches, tas)
    mlp_params = init_mlp_params(k_mlp)
    rnn_params = init_rnn_params(k_rnn)

    gird = gird_forward(events, mlp_params, rnn_params, dim=(Hd, Wd),
                        temporal_aggregation_size=tas,
                        num_batches_total=num_batches * tas,
                        max_events_in_pixel=max_ev)
    gird = jax.block_until_ready(gird)
    assert gird.shape == (num_batches * tas, 2, Hd, Wd)
    assert bool(jnp.isfinite(gird).all())
    print("KERNEL_OK")
</pallas_src>

<mosaic_0001>
module attributes {stable_mosaic.version = 11 : i64} {
  func.func @_mlp_kernel(%arg0: i32, %arg1: memref<1x512xf32, #tpu.memory_space<vmem>>, %arg2: memref<32x1xf32, #tpu.memory_space<vmem>>, %arg3: memref<32x1xf32, #tpu.memory_space<vmem>>, %arg4: memref<32x32xf32, #tpu.memory_space<vmem>>, %arg5: memref<32x1xf32, #tpu.memory_space<vmem>>, %arg6: memref<32x1xf32, #tpu.memory_space<vmem>>, %arg7: memref<1xf32, #tpu.memory_space<smem>>, %arg8: memref<1x512xf32, #tpu.memory_space<vmem>>) attributes {dimension_semantics = [#tpu.dimension_semantics<parallel>], iteration_bounds = array<i64: 1>, scalar_prefetch = 0 : i64, scratch_operands = 0 : i64, tpu.core_type = #tpu.core_type<tc>, window_params = [{transform_indices = @transform_0, window_bounds = array<i64: 1, 512>}, {pipeline_mode = #tpu.pipeline_mode<synchronous>, transform_indices = @transform_1, window_bounds = array<i64: 32, 1>}, {pipeline_mode = #tpu.pipeline_mode<synchronous>, transform_indices = @transform_2, window_bounds = array<i64: 32, 1>}, {pipeline_mode = #tpu.pipeline_mode<synchronous>, transform_indices = @transform_3, window_bounds = array<i64: 32, 32>}, {pipeline_mode = #tpu.pipeline_mode<synchronous>, transform_indices = @transform_4, window_bounds = array<i64: 32, 1>}, {pipeline_mode = #tpu.pipeline_mode<synchronous>, transform_indices = @transform_5, window_bounds = array<i64: 32, 1>}, {transform_indices = @transform_6, window_bounds = array<i64: 1>}, {transform_indices = @transform_7, window_bounds = array<i64: 1, 512>}]} {
    %c0 = arith.constant 0 : index
    %c0_0 = arith.constant 0 : index
    %0 = vector.load %arg1[%c0, %c0_0] : memref<1x512xf32, #tpu.memory_space<vmem>>, vector<1x512xf32>
    %c0_1 = arith.constant 0 : index
    %c0_2 = arith.constant 0 : index
    %1 = vector.load %arg2[%c0_1, %c0_2] : memref<32x1xf32, #tpu.memory_space<vmem>>, vector<32x1xf32>
    %2 = vector.broadcast %1 : vector<32x1xf32> to vector<32x512xf32>
    %3 = vector.broadcast %0 : vector<1x512xf32> to vector<32x512xf32>
    %4 = arith.mulf %2, %3 : vector<32x512xf32>
    %c0_3 = arith.constant 0 : index
    %c0_4 = arith.constant 0 : index
    %5 = vector.load %arg3[%c0_3, %c0_4] : memref<32x1xf32, #tpu.memory_space<vmem>>, vector<32x1xf32>
    %6 = vector.broadcast %5 : vector<32x1xf32> to vector<32x512xf32>
    %7 = arith.addf %4, %6 : vector<32x512xf32>
    %cst = arith.constant 0.000000e+00 : f32
    %8 = vector.broadcast %cst : f32 to vector<32x512xf32>
    %9 = arith.cmpf oge, %7, %8 : vector<32x512xf32>
    %cst_5 = arith.constant 1.000000e-01 : f32
    %10 = vector.broadcast %cst_5 : f32 to vector<32x512xf32>
    %11 = arith.mulf %10, %7 : vector<32x512xf32>
    %12 = arith.select %9, %7, %11 : vector<32x512xi1>, vector<32x512xf32>
    %c0_6 = arith.constant 0 : index
    %c0_7 = arith.constant 0 : index
    %13 = vector.load %arg4[%c0_6, %c0_7] : memref<32x32xf32, #tpu.memory_space<vmem>>, vector<32x32xf32>
    %cst_8 = arith.constant dense<0.000000e+00> : vector<32x512xf32>
    %14 = tpu.matmul %13, %12, %cst_8 {dimension_numbers = #tpu.dot_dimension_numbers<[1], [0], [0], [1], [0, 0, 1, 1], [], []>} : vector<32x32xf32>, vector<32x512xf32>, vector<32x512xf32> -> vector<32x512xf32>
    %c0_9 = arith.constant 0 : index
    %c0_10 = arith.constant 0 : index
    %15 = vector.load %arg5[%c0_9, %c0_10] : memref<32x1xf32, #tpu.memory_space<vmem>>, vector<32x1xf32>
    %16 = vector.broadcast %15 : vector<32x1xf32> to vector<32x512xf32>
    %17 = arith.addf %14, %16 : vector<32x512xf32>
    %cst_11 = arith.constant 0.000000e+00 : f32
    %18 = vector.broadcast %cst_11 : f32 to vector<32x512xf32>
    %19 = arith.cmpf oge, %17, %18 : vector<32x512xf32>
    %cst_12 = arith.constant 1.000000e-01 : f32
    %20 = vector.broadcast %cst_12 : f32 to vector<32x512xf32>
    %21 = arith.mulf %20, %17 : vector<32x512xf32>
    %22 = arith.select %19, %17, %21 : vector<32x512xi1>, vector<32x512xf32>
    %c0_13 = arith.constant 0 : index
    %c0_14 = arith.constant 0 : index
    %23 = vector.load %arg6[%c0_13, %c0_14] : memref<32x1xf32, #tpu.memory_space<vmem>>, vector<32x1xf32>
    %24 = vector.broadcast %23 : vector<32x1xf32> to vector<32x512xf32>
    %25 = arith.mulf %22, %24 : vector<32x512xf32>
    %cst_15 = arith.constant dense<0.000000e+00> : vector<512xf32>
    %26 = vector.multi_reduction <add>, %25, %cst_15 [0] : vector<32x512xf32> to vector<512xf32>
    %27 = vector.shape_cast %26 : vector<512xf32> to vector<1x512xf32>
    %c0_16 = arith.constant 0 : index
    %28 = memref.load %arg7[%c0_16] : memref<1xf32, #tpu.memory_space<smem>>
    %29 = vector.broadcast %28 : f32 to vector<1x512xf32>
    %30 = arith.addf %27, %29 : vector<1x512xf32>
    %c0_17 = arith.constant 0 : index
    %c0_18 = arith.constant 0 : index
    %31 = vector.load %arg8[%c0_17, %c0_18] : memref<1x512xf32, #tpu.memory_space<vmem>>, vector<1x512xf32>
    tpu.vector_store %arg8[%c0_17, %c0_18], %30 {strides = array<i32>} : memref<1x512xf32, #tpu.memory_space<vmem>>, vector<1x512xf32>,
    return
  }
  func.func @transform_0(%arg0: i32) -> (i32, i32) {
    %c0_i32 = arith.constant 0 : i32
    %c0_i32_0 = arith.constant 0 : i32
    return %c0_i32, %arg0 : i32, i32
  }
  func.func @transform_1(%arg0: i32) -> (i32, i32) {
    %c0_i32 = arith.constant 0 : i32
    %c0_i32_0 = arith.constant 0 : i32
    %c0_i32_1 = arith.constant 0 : i32
    return %c0_i32, %c0_i32_0 : i32, i32
  }
  func.func @transform_2(%arg0: i32) -> (i32, i32) {
    %c0_i32 = arith.constant 0 : i32
    %c0_i32_0 = arith.constant 0 : i32
    %c0_i32_1 = arith.constant 0 : i32
    return %c0_i32, %c0_i32_0 : i32, i32
  }
  func.func @transform_3(%arg0: i32) -> (i32, i32) {
    %c0_i32 = arith.constant 0 : i32
    %c0_i32_0 = arith.constant 0 : i32
    %c0_i32_1 = arith.constant 0 : i32
    return %c0_i32, %c0_i32_0 : i32, i32
  }
  func.func @transform_4(%arg0: i32) -> (i32, i32) {
    %c0_i32 = arith.constant 0 : i32
    %c0_i32_0 = arith.constant 0 : i32
    %c0_i32_1 = arith.constant 0 : i32
    return %c0_i32, %c0_i32_0 : i32, i32
  }
  func.func @transform_5(%arg0: i32) -> (i32, i32) {
    %c0_i32 = arith.constant 0 : i32
    %c0_i32_0 = arith.constant 0 : i32
    %c0_i32_1 = arith.constant 0 : i32
    return %c0_i32, %c0_i32_0 : i32, i32
  }
  func.func @transform_6(%arg0: i32) -> i32 {
    %c0_i32 = arith.constant 0 : i32
    %c0_i32_0 = arith.constant 0 : i32
    return %c0_i32 : i32
  }
  func.func @transform_7(%arg0: i32) -> (i32, i32) {
    %c0_i32 = arith.constant 0 : i32
    %c0_i32_0 = arith.constant 0 : i32
    return %c0_i32, %arg0 : i32, i32
  }
}

module attributes {stable_mosaic.version = 11 : i64} {
  func.func @kernel(%arg0: i32, %arg1: memref<3x1024xf32, #tpu.memory_space<vmem>>, %arg2: memref<128x1xf32, #tpu.memory_space<vmem>>, %arg3: memref<128x1xf32, #tpu.memory_space<vmem>>, %arg4: memref<128x32xf32, #tpu.memory_space<vmem>>, %arg5: memref<32x1xf32, #tpu.memory_space<vmem>>, %arg6: memref<1xf32, #tpu.memory_space<smem>>, %arg7: memref<1x1024xf32, #tpu.memory_space<vmem>>) attributes {dimension_semantics = [#tpu.dimension_semantics<parallel>], iteration_bounds = array<i64: 2>, scalar_prefetch = 0 : i64, scratch_operands = 0 : i64, tpu.core_type = #tpu.core_type<tc>, window_params = [{transform_indices = @transform_0, window_bounds = array<i64: 3, 1024>}, {pipeline_mode = #tpu.pipeline_mode<synchronous>, transform_indices = @transform_1, window_bounds = array<i64: 128, 1>}, {pipeline_mode = #tpu.pipeline_mode<synchronous>, transform_indices = @transform_2, window_bounds = array<i64: 128, 1>}, {pipeline_mode = #tpu.pipeline_mode<synchronous>, transform_indices = @transform_3, window_bounds = array<i64: 128, 32>}, {pipeline_mode = #tpu.pipeline_mode<synchronous>, transform_indices = @transform_4, window_bounds = array<i64: 32, 1>}, {transform_indices = @transform_5, window_bounds = array<i64: 1>}, {transform_indices = @transform_6, window_bounds = array<i64: 1, 1024>}]} {
    %c0 = arith.constant 0 : index
    %c0_0 = arith.constant 0 : index
    %0 = vector.load %arg1[%c0, %c0_0] : memref<3x1024xf32, #tpu.memory_space<vmem>>, vector<3x1024xf32>
    %cst = arith.constant dense<0.000000e+00> : vector<1024xf32>
    %1 = vector.multi_reduction <add>, %0, %cst [0] : vector<3x1024xf32> to vector<1024xf32>
    %2 = vector.shape_cast %1 : vector<1024xf32> to vector<1x1024xf32>
    %cst_1 = arith.constant 0.000000e+00 : f32
    %3 = vector.broadcast %cst_1 : f32 to vector<3x1024xf32>
    %4 = arith.cmpf one, %0, %3 : vector<3x1024xf32>
    %5 = arith.extui %4 : vector<3x1024xi1> to vector<3x1024xi32>
    %6 = arith.sitofp %5 : vector<3x1024xi32> to vector<3x1024xf32>
    %cst_2 = arith.constant dense<0.000000e+00> : vector<1024xf32>
    %7 = vector.multi_reduction <add>, %6, %cst_2 [0] : vector<3x1024xf32> to vector<1024xf32>
    %8 = vector.shape_cast %7 : vector<1024xf32> to vector<1x1024xf32>
    %c0_3 = arith.constant 0 : index
    %c0_4 = arith.constant 0 : index
    %9 = vector.load %arg2[%c0_3, %c0_4] : memref<128x1xf32, #tpu.memory_space<vmem>>, vector<128x1xf32>
    %c0_5 = arith.constant 0 : index
    %c0_6 = arith.constant 0 : index
    %10 = vector.load %arg3[%c0_5, %c0_6] : memref<128x1xf32, #tpu.memory_space<vmem>>, vector<128x1xf32>
    %c0_7 = arith.constant 0 : index
    %c0_8 = arith.constant 0 : index
    %11 = vector.load %arg4[%c0_7, %c0_8] : memref<128x32xf32, #tpu.memory_space<vmem>>, vector<128x32xf32>
    %cst_9 = arith.constant 0.000000e+00 : f32
    %12 = vector.broadcast %cst_9 : f32 to vector<32x1024xf32>
    %cst_10 = arith.constant 0.000000e+00 : f32
    %13 = vector.broadcast %cst_10 : f32 to vector<32x1024xf32>
    %14 = vector.extract_strided_slice %0 {offsets = [0, 0], sizes = [1, 1024], strides = [1, 1]} : vector<3x1024xf32> to vector<1x1024xf32>
    %15 = vector.broadcast %14 : vector<1x1024xf32> to vector<128x1024xf32>
    %16 = vector.broadcast %9 : vector<128x1xf32> to vector<128x1024xf32>
    %17 = arith.mulf %15, %16 : vector<128x1024xf32>
    %cst_11 = arith.constant dense<0.000000e+00> : vector<128x1024xf32>
    %18 = tpu.matmul %11, %12, %cst_11 {dimension_numbers = #tpu.dot_dimension_numbers<[1], [0], [0], [1], [0, 0, 1, 1], [], []>} : vector<128x32xf32>, vector<32x1024xf32>, vector<128x1024xf32> -> vector<128x1024xf32>
    %19 = arith.addf %17, %18 : vector<128x1024xf32>
    %20 = vector.broadcast %10 : vector<128x1xf32> to vector<128x1024xf32>
    %21 = arith.addf %19, %20 : vector<128x1024xf32>
    %22 = vector.extract_strided_slice %21 {offsets = [0, 0], sizes = [32, 1024], strides = [1, 1]} : vector<128x1024xf32> to vector<32x1024xf32>
    %23 = arith.negf %22 : vector<32x1024xf32>
    %24 = math.exp %23 : vector<32x1024xf32>
    %cst_12 = arith.constant 1.000000e+00 : f32
    %25 = vector.broadcast %cst_12 : f32 to vector<32x1024xf32>
    %26 = arith.addf %25, %24 : vector<32x1024xf32>
    %27 = arith.divf %25, %26 : vector<32x1024xf32>
    %28 = vector.extract_strided_slice %21 {offsets = [32, 0], sizes = [32, 1024], strides = [1, 1]} : vector<128x1024xf32> to vector<32x1024xf32>
    %29 = arith.negf %28 : vector<32x1024xf32>
    %30 = math.exp %29 : vector<32x1024xf32>
    %cst_13 = arith.constant 1.000000e+00 : f32
    %31 = vector.broadcast %cst_13 : f32 to vector<32x1024xf32>
    %32 = arith.addf %31, %30 : vector<32x1024xf32>
    %33 = arith.divf %31, %32 : vector<32x1024xf32>
    %34 = vector.extract_strided_slice %21 {offsets = [64, 0], sizes = [32, 1024], strides = [1, 1]} : vector<128x1024xf32> to vector<32x1024xf32>
    %35 = math.tanh %34 : vector<32x1024xf32>
    %36 = vector.extract_strided_slice %21 {offsets = [96, 0], sizes = [32, 1024], strides = [1, 1]} : vector<128x1024xf32> to vector<32x1024xf32>
    %37 = arith.negf %36 : vector<32x1024xf32>
    %38 = math.exp %37 : vector<32x1024xf32>
    %cst_14 = arith.constant 1.000000e+00 : f32
    %39 = vector.broadcast %cst_14 : f32 to vector<32x1024xf32>
    %40 = arith.addf %39, %38 : vector<32x1024xf32>
    %41 = arith.divf %39, %40 : vector<32x1024xf32>
    %42 = arith.mulf %33, %13 : vector<32x1024xf32>
    %43 = arith.mulf %27, %35 : vector<32x1024xf32>
    %44 = arith.addf %42, %43 : vector<32x1024xf32>
    %45 = math.tanh %44 : vector<32x1024xf32>
    %46 = arith.mulf %41, %45 : vector<32x1024xf32>
    %cst_15 = arith.constant 0.000000e+00 : f32
    %47 = vector.broadcast %cst_15 : f32 to vector<1x1024xf32>
    %48 = arith.cmpf olt, %47, %8 : vector<1x1024xf32>
    %49 = vector.shape_cast %48 : vector<1x1024xi1> to vector<1x1024xi1>
    %50 = vector.broadcast %49 : vector<1x1024xi1> to vector<32x1024xi1>
    %51 = arith.select %50, %46, %12 : vector<32x1024xi1>, vector<32x1024xf32>
    %52 = vector.shape_cast %48 : vector<1x1024xi1> to vector<1x1024xi1>
    %53 = vector.broadcast %52 : vector<1x1024xi1> to vector<32x1024xi1>
    %54 = arith.select %53, %44, %13 : vector<32x1024xi1>, vector<32x1024xf32>
    %55 = vector.extract_strided_slice %0 {offsets = [1, 0], sizes = [1, 1024], strides = [1, 1]} : vector<3x1024xf32> to vector<1x1024xf32>
    %56 = vector.broadcast %55 : vector<1x1024xf32> to vector<128x1024xf32>
    %57 = vector.broadcast %9 : vector<128x1xf32> to vector<128x1024xf32>
    %58 = arith.mulf %56, %57 : vector<128x1024xf32>
    %cst_16 = arith.constant dense<0.000000e+00> : vector<128x1024xf32>
    %59 = tpu.matmul %11, %51, %cst_16 {dimension_numbers = #tpu.dot_dimension_numbers<[1], [0], [0], [1], [0, 0, 1, 1], [], []>} : vector<128x32xf32>, vector<32x1024xf32>, vector<128x1024xf32> -> vector<128x1024xf32>
    %60 = arith.addf %58, %59 : vector<128x1024xf32>
    %61 = vector.broadcast %10 : vector<128x1xf32> to vector<128x1024xf32>
    %62 = arith.addf %60, %61 : vector<128x1024xf32>
    %63 = vector.extract_strided_slice %62 {offsets = [0, 0], sizes = [32, 1024], strides = [1, 1]} : vector<128x1024xf32> to vector<32x1024xf32>
    %64 = arith.negf %63 : vector<32x1024xf32>
    %65 = math.exp %64 : vector<32x1024xf32>
    %cst_17 = arith.constant 1.000000e+00 : f32
    %66 = vector.broadcast %cst_17 : f32 to vector<32x1024xf32>
    %67 = arith.addf %66, %65 : vector<32x1024xf32>
    %68 = arith.divf %66, %67 : vector<32x1024xf32>
    %69 = vector.extract_strided_slice %62 {offsets = [32, 0], sizes = [32, 1024], strides = [1, 1]} : vector<128x1024xf32> to vector<32x1024xf32>
    %70 = arith.negf %69 : vector<32x1024xf32>
    %71 = math.exp %70 : vector<32x1024xf32>
    %cst_18 = arith.constant 1.000000e+00 : f32
    %72 = vector.broadcast %cst_18 : f32 to vector<32x1024xf32>
    %73 = arith.addf %72, %71 : vector<32x1024xf32>
    %74 = arith.divf %72, %73 : vector<32x1024xf32>
    %75 = vector.extract_strided_slice %62 {offsets = [64, 0], sizes = [32, 1024], strides = [1, 1]} : vector<128x1024xf32> to vector<32x1024xf32>
    %76 = math.tanh %75 : vector<32x1024xf32>
    %77 = vector.extract_strided_slice %62 {offsets = [96, 0], sizes = [32, 1024], strides = [1, 1]} : vector<128x1024xf32> to vector<32x1024xf32>
    %78 = arith.negf %77 : vector<32x1024xf32>
    %79 = math.exp %78 : vector<32x1024xf32>
    %cst_19 = arith.constant 1.000000e+00 : f32
    %80 = vector.broadcast %cst_19 : f32 to vector<32x1024xf32>
    %81 = arith.addf %80, %79 : vector<32x1024xf32>
    %82 = arith.divf %80, %81 : vector<32x1024xf32>
    %83 = arith.mulf %74, %54 : vector<32x1024xf32>
    %84 = arith.mulf %68, %76 : vector<32x1024xf32>
    %85 = arith.addf %83, %84 : vector<32x1024xf32>
    %86 = math.tanh %85 : vector<32x1024xf32>
    %87 = arith.mulf %82, %86 : vector<32x1024xf32>
    %cst_20 = arith.constant 1.000000e+00 : f32
    %88 = vector.broadcast %cst_20 : f32 to vector<1x1024xf32>
    %89 = arith.cmpf olt, %88, %8 : vector<1x1024xf32>
    %90 = vector.shape_cast %89 : vector<1x1024xi1> to vector<1x1024xi1>
    %91 = vector.broadcast %90 : vector<1x1024xi1> to vector<32x1024xi1>
    %92 = arith.select %91, %87, %51 : vector<32x1024xi1>, vector<32x1024xf32>
    %93 = vector.shape_cast %89 : vector<1x1024xi1> to vector<1x1024xi1>
    %94 = vector.broadcast %93 : vector<1x1024xi1> to vector<32x1024xi1>
    %95 = arith.select %94, %85, %54 : vector<32x1024xi1>, vector<32x1024xf32>
    %96 = vector.extract_strided_slice %0 {offsets = [2, 0], sizes = [1, 1024], strides = [1, 1]} : vector<3x1024xf32> to vector<1x1024xf32>
    %97 = vector.broadcast %96 : vector<1x1024xf32> to vector<128x1024xf32>
    %98 = vector.broadcast %9 : vector<128x1xf32> to vector<128x1024xf32>
    %99 = arith.mulf %97, %98 : vector<128x1024xf32>
    %cst_21 = arith.constant dense<0.000000e+00> : vector<128x1024xf32>
    %100 = tpu.matmul %11, %92, %cst_21 {dimension_numbers = #tpu.dot_dimension_numbers<[1], [0], [0], [1], [0, 0, 1, 1], [], []>} : vector<128x32xf32>, vector<32x1024xf32>, vector<128x1024xf32> -> vector<128x1024xf32>
    %101 = arith.addf %99, %100 : vector<128x1024xf32>
    %102 = vector.broadcast %10 : vector<128x1xf32> to vector<128x1024xf32>
    %103 = arith.addf %101, %102 : vector<128x1024xf32>
    %104 = vector.extract_strided_slice %103 {offsets = [0, 0], sizes = [32, 1024], strides = [1, 1]} : vector<128x1024xf32> to vector<32x1024xf32>
    %105 = arith.negf %104 : vector<32x1024xf32>
    %106 = math.exp %105 : vector<32x1024xf32>
    %cst_22 = arith.constant 1.000000e+00 : f32
    %107 = vector.broadcast %cst_22 : f32 to vector<32x1024xf32>
    %108 = arith.addf %107, %106 : vector<32x1024xf32>
    %109 = arith.divf %107, %108 : vector<32x1024xf32>
    %110 = vector.extract_strided_slice %103 {offsets = [32, 0], sizes = [32, 1024], strides = [1, 1]} : vector<128x1024xf32> to vector<32x1024xf32>
    %111 = arith.negf %110 : vector<32x1024xf32>
    %112 = math.exp %111 : vector<32x1024xf32>
    %cst_23 = arith.constant 1.000000e+00 : f32
    %113 = vector.broadcast %cst_23 : f32 to vector<32x1024xf32>
    %114 = arith.addf %113, %112 : vector<32x1024xf32>
    %115 = arith.divf %113, %114 : vector<32x1024xf32>
    %116 = vector.extract_strided_slice %103 {offsets = [64, 0], sizes = [32, 1024], strides = [1, 1]} : vector<128x1024xf32> to vector<32x1024xf32>
    %117 = math.tanh %116 : vector<32x1024xf32>
    %118 = vector.extract_strided_slice %103 {offsets = [96, 0], sizes = [32, 1024], strides = [1, 1]} : vector<128x1024xf32> to vector<32x1024xf32>
    %119 = arith.negf %118 : vector<32x1024xf32>
    %120 = math.exp %119 : vector<32x1024xf32>
    %cst_24 = arith.constant 1.000000e+00 : f32
    %121 = vector.broadcast %cst_24 : f32 to vector<32x1024xf32>
    %122 = arith.addf %121, %120 : vector<32x1024xf32>
    %123 = arith.divf %121, %122 : vector<32x1024xf32>
    %124 = arith.mulf %115, %95 : vector<32x1024xf32>
    %125 = arith.mulf %109, %117 : vector<32x1024xf32>
    %126 = arith.addf %124, %125 : vector<32x1024xf32>
    %127 = math.tanh %126 : vector<32x1024xf32>
    %128 = arith.mulf %123, %127 : vector<32x1024xf32>
    %cst_25 = arith.constant 2.000000e+00 : f32
    %129 = vector.broadcast %cst_25 : f32 to vector<1x1024xf32>
    %130 = arith.cmpf olt, %129, %8 : vector<1x1024xf32>
    %131 = vector.shape_cast %130 : vector<1x1024xi1> to vector<1x1024xi1>
    %132 = vector.broadcast %131 : vector<1x1024xi1> to vector<32x1024xi1>
    %133 = arith.select %132, %128, %92 : vector<32x1024xi1>, vector<32x1024xf32>
    %c0_26 = arith.constant 0 : index
    %c0_27 = arith.constant 0 : index
    %134 = vector.load %arg5[%c0_26, %c0_27] : memref<32x1xf32, #tpu.memory_space<vmem>>, vector<32x1xf32>
    %135 = vector.broadcast %134 : vector<32x1xf32> to vector<32x1024xf32>
    %136 = arith.mulf %133, %135 : vector<32x1024xf32>
    %cst_28 = arith.constant dense<0.000000e+00> : vector<1024xf32>
    %137 = vector.multi_reduction <add>, %136, %cst_28 [0] : vector<32x1024xf32> to vector<1024xf32>
    %138 = vector.shape_cast %137 : vector<1024xf32> to vector<1x1024xf32>
    %c0_29 = arith.constant 0 : index
    %139 = memref.load %arg6[%c0_29] : memref<1xf32, #tpu.memory_space<smem>>
    %140 = vector.broadcast %139 : f32 to vector<1x1024xf32>
    %141 = arith.addf %138, %140 : vector<1x1024xf32>
    %cst_30 = arith.constant 0.000000e+00 : f32
    %142 = vector.broadcast %cst_30 : f32 to vector<1x1024xf32>
    %143 = arith.cmpf one, %2, %142 : vector<1x1024xf32>
    %cst_31 = arith.constant 0.000000e+00 : f32
    %144 = vector.broadcast %cst_31 : f32 to vector<1x1024xf32>
    %145 = arith.select %143, %141, %144 : vector<1x1024xi1>, vector<1x1024xf32>
    %c0_32 = arith.constant 0 : index
    %c0_33 = arith.constant 0 : index
    %146 = vector.load %arg7[%c0_32, %c0_33] : memref<1x1024xf32, #tpu.memory_space<vmem>>, vector<1x1024xf32>
    tpu.vector_store %arg7[%c0_32, %c0_33], %145 {strides = array<i32>} : memref<1x1024xf32, #tpu.memory_space<vmem>>, vector<1x1024xf32>,
    return
  }
  func.func @transform_0(%arg0: i32) -> (i32, i32) {
    %c0_i32 = arith.constant 0 : i32
    %c0_i32_0 = arith.constant 0 : i32
    return %c0_i32, %arg0 : i32, i32
  }
  func.func @transform_1(%arg0: i32) -> (i32, i32) {
    %c0_i32 = arith.constant 0 : i32
    %c0_i32_0 = arith.constant 0 : i32
    %c0_i32_1 = arith.constant 0 : i32
    return %c0_i32, %c0_i32_0 : i32, i32
  }
  func.func @transform_2(%arg0: i32) -> (i32, i32) {
    %c0_i32 = arith.constant 0 : i32
    %c0_i32_0 = arith.constant 0 : i32
    %c0_i32_1 = arith.constant 0 : i32
    return %c0_i32, %c0_i32_0 : i32, i32
  }
  func.func @transform_3(%arg0: i32) -> (i32, i32) {
    %c0_i32 = arith.constant 0 : i32
    %c0_i32_0 = arith.constant 0 : i32
    %c0_i32_1 = arith.constant 0 : i32
    return %c0_i32, %c0_i32_0 : i32, i32
  }
  func.func @transform_4(%arg0: i32) -> (i32, i32) {
    %c0_i32 = arith.constant 0 : i32
    %c0_i32_0 = arith.constant 0 : i32
    %c0_i32_1 = arith.constant 0 : i32
    return %c0_i32, %c0_i32_0 : i32, i32
  }
  func.func @transform_5(%arg0: i32) -> i32 {
    %c0_i32 = arith.constant 0 : i32
    %c0_i32_0 = arith.constant 0 : i32
    return %c0_i32 : i32
  }
  func.func @transform_6(%arg0: i32) -> (i32, i32) {
    %c0_i32 = arith.constant 0 : i32
    %c0_i32_0 = arith.constant 0 : i32
    return %c0_i32, %arg0 : i32, i32
  }
}

</mosaic_0001>

<llo_original>
// kernel: gird_forward.2
$region0: #{gird_forward.2}
  #allocation0 [shape = 'u32[]', space=smem, size = 0x4, offset = 0x4, fixed_abs, tag = 'smem constant byte address 0x4 - core index']
  #allocation1 [shape = 'u32[144,128]{1,0:T(1,128)}', space=vmem, size = 0x12000, scoped, tag = 'internal scratch']
  #allocation2 [shape = 'f32[1]{0:T(128)S(6)}', space=smem, size = 0x200, scoped, tag = 'scoped memory for gird_forward.2']
  %s0 = inlined_call_operand.vmem [shape: f32[1,512], index: 0, kind: input, shape index: {}]
  %s1 = inlined_call_operand.vmem [shape: f32[32,1], index: 1, kind: input, shape index: {}]
  %s2 = inlined_call_operand.vmem [shape: f32[32,1], index: 2, kind: input, shape index: {}]
  %s3 = inlined_call_operand.vmem [shape: f32[32,32], index: 3, kind: input, shape index: {}]
  %s4 = inlined_call_operand.vmem [shape: f32[32,1], index: 4, kind: input, shape index: {}]
  %s5 = inlined_call_operand.vmem [shape: f32[32,1], index: 5, kind: input, shape index: {}]
  %s6 = inlined_call_operand.<no memory space> [shape: f32[1], index: 6, kind: input, shape index: {}]
  %s7 = inlined_call_operand.vmem [shape: f32[1,512], index: 7, kind: output, shape index: {}]
  %s8 = sld [smem:[#allocation0]]
  $region38: #{gird_forward.2} parent=0
    _
  %s10 = ssub.s32 1, %s8
  %s11 = scalar_select 0, %s10, %s8
  %12 = sst [smem:[#allocation2]] %s6
  // Predicated region
  $region2: #{gird_forward.2} parent=0 // pred_check
    _
  $region3: #{gird_forward.2} parent=0 // pred_check_branch
    %14 = sbr.rel (0) target = $region5
  $region4: #{gird_forward.2} parent=0 // pred_region
    _
  $region5: #{gird_forward.2} parent=0 // pred_fallthru
    _
  // Predicated region
  $region6: #{gird_forward.2} parent=0 // pred_check
    _
  $region7: #{gird_forward.2} parent=0 // pred_check_branch
    %16 = sbr.rel (0) target = $region9
  $region8: #{gird_forward.2} parent=0 // pred_region
    _
  $region9: #{gird_forward.2} parent=0 // pred_fallthru
    _
  // Predicated region
  $region10: #{gird_forward.2} parent=0 // pred_check
    _
  $region11: #{gird_forward.2} parent=0 // pred_check_branch
    %18 = sbr.rel (0) target = $region13
  $region12: #{gird_forward.2} parent=0 // pred_region
    _
  $region13: #{gird_forward.2} parent=0 // pred_fallthru
    _
  // Predicated region
  $region14: #{gird_forward.2} parent=0 // pred_check
    _
  $region15: #{gird_forward.2} parent=0 // pred_check_branch
    %20 = sbr.rel (0) target = $region17
  $region16: #{gird_forward.2} parent=0 // pred_region
    _
  $region17: #{gird_forward.2} parent=0 // pred_fallthru
    _
  // Predicated region
  $region18: #{gird_forward.2} parent=0 // pred_check
    _
  $region19: #{gird_forward.2} parent=0 // pred_check_branch
    %22 = sbr.rel (0) target = $region21
  $region20: #{gird_forward.2} parent=0 // pred_region
    _
  $region21: #{gird_forward.2} parent=0 // pred_fallthru
    _
  // Predicated region
  $region22: #{gird_forward.2} parent=0 // pred_check
    _
  $region23: #{gird_forward.2} parent=0 // pred_check_branch
    %24 = sbr.rel (0) target = $region25
  $region24: #{gird_forward.2} parent=0 // pred_region
    _
  $region25: #{gird_forward.2} parent=0 // pred_fallthru
    _
  // Predicated region
  $region26: #{gird_forward.2} parent=0 // pred_check
    _
  $region27: #{gird_forward.2} parent=0 // pred_check_branch
    %26 = sbr.rel (0) target = $region29
  $region28: #{gird_forward.2} parent=0 // pred_region
    _
  $region29: #{gird_forward.2} parent=0 // pred_fallthru
    _
  %v27 = vld [vmem:[%s0] sm:$0xf]
  %v28 = vld [vmem:[%s1] sm:$0xff]
  %v29 = vld [vmem:[%s1 + $0x8] sm:$0xff]
  %v30 = vld [vmem:[%s1 + $0x10] sm:$0xff]
  %v31 = vld [vmem:[%s1 + $0x18] sm:$0xff]
  %33 = vset.pattern.permute.xlu0 0
  %34 = vperm.xlu0 %33, %v28
  %v35 = vpop.permute.xlu0 %34
  %38 = vset.pattern.permute.xlu0 0
  %39 = vperm.xlu0 %38, %v29
  %v40 = vpop.permute.xlu0 %39
  %43 = vset.pattern.permute.xlu0 0
  %44 = vperm.xlu0 %43, %v30
  %v45 = vpop.permute.xlu0 %44
  %48 = vset.pattern.permute.xlu0 0
  %49 = vperm.xlu0 %48, %v31
  %v50 = vpop.permute.xlu0 %49
  %v53 = vlaneseq
  %v54 = vshrl.u32 %v53, 7
  %v55 = vsub.s32 0, %v54
  %v56 = vrot.slane %v27, %v55
  %v57 = vlaneseq
  %v58 = vshrl.u32 %v57, 7
  %v59 = vsub.s32 1, %v58
  %v60 = vrot.slane %v27, %v59
  %v61 = vlaneseq
  %v62 = vshrl.u32 %v61, 7
  %v63 = vsub.s32 2, %v62
  %v64 = vrot.slane %v27, %v63
  %v65 = vlaneseq
  %v66 = vshrl.u32 %v65, 7
  %v67 = vsub.s32 3, %v66
  %v68 = vrot.slane %v27, %v67
  %v73 = vmul.f32 %v35, %v56
  %v74 = vmul.f32 %v35, %v60
  %v75 = vmul.f32 %v35, %v64
  %v76 = vmul.f32 %v35, %v68
  %v77 = vmul.f32 %v40, %v56
  %v78 = vmul.f32 %v40, %v60
  %v79 = vmul.f32 %v40, %v64
  %v80 = vmul.f32 %v40, %v68
  %v81 = vmul.f32 %v45, %v56
  %v82 = vmul.f32 %v45, %v60
  %v83 = vmul.f32 %v45, %v64
  %v84 = vmul.f32 %v45, %v68
  %v85 = vmul.f32 %v50, %v56
  %v86 = vmul.f32 %v50, %v60
  %v87 = vmul.f32 %v50, %v64
  %v88 = vmul.f32 %v50, %v68
  %v89 = vld [vmem:[%s2] sm:$0xff]
  %v90 = vld [vmem:[%s2 + $0x8] sm:$0xff]
  %v91 = vld [vmem:[%s2 + $0x10] sm:$0xff]
  %v92 = vld [vmem:[%s2 + $0x18] sm:$0xff]
  %94 = vset.pattern.permute.xlu0 0
  %95 = vperm.xlu0 %94, %v89
  %v96 = vpop.permute.xlu0 %95
  %99 = vset.pattern.permute.xlu0 0
  %100 = vperm.xlu0 %99, %v90
  %v101 = vpop.permute.xlu0 %100
  %104 = vset.pattern.permute.xlu0 0
  %105 = vperm.xlu0 %104, %v91
  %v106 = vpop.permute.xlu0 %105
  %109 = vset.pattern.permute.xlu0 0
  %110 = vperm.xlu0 %109, %v92
  %v111 = vpop.permute.xlu0 %110
  %v113 = vadd.f32 %v73, %v96
  %v114 = vadd.f32 %v74, %v96
  %v115 = vadd.f32 %v75, %v96
  %v116 = vadd.f32 %v76, %v96
  %v117 = vadd.f32 %v77, %v101
  %v118 = vadd.f32 %v78, %v101
  %v119 = vadd.f32 %v79, %v101
  %v120 = vadd.f32 %v80, %v101
  %v121 = vadd.f32 %v81, %v106
  %v122 = vadd.f32 %v82, %v106
  %v123 = vadd.f32 %v83, %v106
  %v124 = vadd.f32 %v84, %v106
  %v125 = vadd.f32 %v85, %v111
  %v126 = vadd.f32 %v86, %v111
  %v127 = vadd.f32 %v87, %v111
  %v128 = vadd.f32 %v88, %v111
  %vm129 = vcmp.ge.f32.partialorder %v113, 0.0
  %vm130 = vcmp.ge.f32.partialorder %v114, 0.0
  %vm131 = vcmp.ge.f32.partialorder %v115, 0.0
  %vm132 = vcmp.ge.f32.partialorder %v116, 0.0
  %vm133 = vcmp.ge.f32.partialorder %v117, 0.0
  %vm134 = vcmp.ge.f32.partialorder %v118, 0.0
  %vm135 = vcmp.ge.f32.partialorder %v119, 0.0
  %vm136 = vcmp.ge.f32.partialorder %v120, 0.0
  %vm137 = vcmp.ge.f32.partialorder %v121, 0.0
  %vm138 = vcmp.ge.f32.partialorder %v122, 0.0
  %vm139 = vcmp.ge.f32.partialorder %v123, 0.0
  %vm140 = vcmp.ge.f32.partialorder %v124, 0.0
  %vm141 = vcmp.ge.f32.partialorder %v125, 0.0
  %vm142 = vcmp.ge.f32.partialorder %v126, 0.0
  %vm143 = vcmp.ge.f32.partialorder %v127, 0.0
  %vm144 = vcmp.ge.f32.partialorder %v128, 0.0
  %v145 = vmul.f32 %v113, 0.1
  %v146 = vmul.f32 %v114, 0.1
  %v147 = vmul.f32 %v115, 0.1
  %v148 = vmul.f32 %v116, 0.1
  %v149 = vmul.f32 %v117, 0.1
  %v150 = vmul.f32 %v118, 0.1
  %v151 = vmul.f32 %v119, 0.1
  %v152 = vmul.f32 %v120, 0.1
  %v153 = vmul.f32 %v121, 0.1
  %v154 = vmul.f32 %v122, 0.1
  %v155 = vmul.f32 %v123, 0.1
  %v156 = vmul.f32 %v124, 0.1
  %v157 = vmul.f32 %v125, 0.1
  %v158 = vmul.f32 %v126, 0.1
  %v159 = vmul.f32 %v127, 0.1
  %v160 = vmul.f32 %v128, 0.1
  %v161 = vsel %vm129, %v113, %v145
  %v162 = vsel %vm130, %v114, %v146
  %v163 = vsel %vm131, %v115, %v147
  %v164 = vsel %vm132, %v116, %v148
  %v165 = vsel %vm133, %v117, %v149
  %v166 = vsel %vm134, %v118, %v150
  %v167 = vsel %vm135, %v119, %v151
  %v168 = vsel %vm136, %v120, %v152
  %v169 = vsel %vm137, %v121, %v153
  %v170 = vsel %vm138, %v122, %v154
  %v171 = vsel %vm139, %v123, %v155
  %v172 = vsel %vm140, %v124, %v156
  %v173 = vsel %vm141, %v125, %v157
  %v174 = vsel %vm142, %v126, %v158
  %v175 = vsel %vm143, %v127, %v159
  %v176 = vsel %vm144, %v128, %v160
  %v177 = vld [vmem:[%s3] sm:$0xff]
  %v178 = vld [vmem:[%s3 + $0x8] sm:$0xff]
  %v179 = vld [vmem:[%s3 + $0x10] sm:$0xff]
  %v180 = vld [vmem:[%s3 + $0x18] sm:$0xff]
  %v181 = vld [vmem:[%s4] sm:$0xff]
  %v182 = vld [vmem:[%s4 + $0x8] sm:$0xff]
  %v183 = vld [vmem:[%s4 + $0x10] sm:$0xff]
  %v184 = vld [vmem:[%s4 + $0x18] sm:$0xff]
  %186 = vset.pattern.permute.xlu0 0
  %187 = vperm.xlu0 %186, %v181
  %v188 = vpop.permute.xlu0 %187
  %191 = vset.pattern.permute.xlu0 0
  %192 = vperm.xlu0 %191, %v182
  %v193 = vpop.permute.xlu0 %192
  %196 = vset.pattern.permute.xlu0 0
  %197 = vperm.xlu0 %196, %v183
  %v198 = vpop.permute.xlu0 %197
  %201 = vset.pattern.permute.xlu0 0
  %202 = vperm.xlu0 %201, %v184
  %v203 = vpop.permute.xlu0 %202
  %vm205 = vcmask 261120
  %v207 = vsel %vm205, %v177, 0
  %v210 = vsel %vm205, %v178, 0
  %v213 = vsel %vm205, %v179, 0
  %v216 = vsel %vm205, %v180, 0
  %218 = vmatprep.subr.mxu0 %v162
  %219 = vmatpush1.msra.mxu0 %v161
  %220 = vmatprep.subr.mxu0 %v166
  %221 = vmatpush1.msra.mxu0 %v165
  %222 = vmatprep.subr.mxu0 %v170
  %223 = vmatpush1.msra.mxu0 %v169
  %224 = vmatprep.subr.mxu0 %v174
  %225 = vmatpush1.msra.mxu0 %v173
  %226 = vmatprep.subr.mxu0 0.0
  %227 = vmatpush1.msra.mxu0 0.0
  %228 = vmatprep.subr.mxu0 0.0
  %229 = vmatpush1.msra.mxu0 0.0
  %230 = vmatprep.subr.mxu0 0.0
  %231 = vmatpush1.msra.mxu0 0.0
  %232 = vmatprep.subr.mxu0 0.0
  %233 = vmatpush1.msra.mxu0 0.0
  %234 = vmatprep.subr.mxu0 0.0
  %235 = vmatpush1.msra.mxu0 0.0
  %236 = vmatprep.subr.mxu0 0.0
  %237 = vmatpush1.msra.mxu0 0.0
  %238 = vmatprep.subr.mxu0 0.0
  %239 = vmatpush1.msra.mxu0 0.0
  %240 = vmatprep.subr.mxu0 0.0
  %241 = vmatpush1.msra.mxu0 0.0
  %242 = vmatprep.subr.mxu0 0.0
  %243 = vmatpush1.msra.mxu0 0.0
  %244 = vmatprep.subr.mxu0 0.0
  %245 = vmatpush1.msra.mxu0 0.0
  %246 = vmatprep.subr.mxu0 0.0
  %247 = vmatpush1.msra.mxu0 0.0
  %248 = vmatprep.subr.mxu0 0.0
  %249 = vmatpush1.msra.mxu0 0.0
  %250 = vmatprep.subr.mxu0 0.0
  %251 = vmatpush1.msra.mxu0 0.0
  %252 = vmatprep.subr.mxu0 0.0
  %253 = vmatpush1.msra.mxu0 0.0
  %254 = vmatprep.subr.mxu0 0.0
  %255 = vmatpush1.msra.mxu0 0.0
  %256 = vmatprep.subr.mxu0 0.0
  %257 = vmatpush1.msra.mxu0 0.0
  %258 = vmatprep.subr.mxu0 0.0
  %259 = vmatpush1.msra.mxu0 0.0
  %260 = vmatprep.subr.mxu0 0.0
  %261 = vmatpush1.msra.mxu0 0.0
  %262 = vmatprep.subr.mxu0 0.0
  %263 = vmatpush1.msra.mxu0 0.0
  %264 = vmatprep.subr.mxu0 0.0
  %265 = vmatpush1.msra.mxu0 0.0
  %266 = vmatprep.subr.mxu0 0.0
  %267 = vmatpush1.msra.mxu0 0.0
  %268 = vmatprep.subr.mxu0 0.0
  %269 = vmatpush1.msra.mxu0 0.0
  %270 = vmatprep.subr.mxu0 0.0
  %271 = vmatpush1.msra.mxu0 0.0
  %272 = vmatprep.subr.mxu0 0.0
  %273 = vmatpush1.msra.mxu0 0.0
  %274 = vmatprep.subr.mxu0 0.0
  %275 = vmatpush1.msra.mxu0 0.0
  %276 = vmatprep.subr.mxu0 0.0
  %277 = vmatpush1.msra.mxu0 0.0
  %278 = vmatprep.subr.mxu0 0.0
  %279 = vmatpush1.msra.mxu0 0.0
  %280 = vmatprep.subr.mxu0 0.0
  %281 = vmatpush1.msra.mxu0 0.0
  %282 = vmatprep.mubr.f32.mxu0 0.0
  %283 = vmatmul.mubr.f32.gmra.mrb[0].mxu0 %v207
  %v284 = vpop.f32.mrb[0].mxu0
  %v285 = vadd.f32 %v188, %v284
  %v286 = vpop.f32.mrb[0].mxu0
  %v287 = vadd.f32 %v188, %v286
  %288 = vmatprep.mubr.f32.mxu0 0.0
  %289 = vmatmul.mubr.f32.gmra.mrb[0].mxu0 %v210
  %v290 = vpop.f32.mrb[0].mxu0
  %v291 = vadd.f32 %v193, %v290
  %v292 = vpop.f32.mrb[0].mxu0
  %v293 = vadd.f32 %v193, %v292
  %294 = vmatprep.mubr.f32.mxu0 0.0
  %295 = vmatmul.mubr.f32.gmra.mrb[0].mxu0 %v213
  %v296 = vpop.f32.mrb[0].mxu0
  %v297 = vadd.f32 %v198, %v296
  %v298 = vpop.f32.mrb[0].mxu0
  %v299 = vadd.f32 %v198, %v298
  %300 = vmatprep.mubr.f32.mxu0 0.0
  %301 = vmatmul.mubr.f32.gmra.mrb[0].mxu0 %v216
  %v302 = vpop.f32.mrb[0].mxu0
  %v303 = vadd.f32 %v203, %v302
  %v304 = vpop.f32.mrb[0].mxu0
  %v305 = vadd.f32 %v203, %v304
  %306 = vdwg.mxu0
  %307 = vmatprep.subr.mxu0 %v164
  %308 = vmatpush1.msra.mxu0 %v163
  %309 = vmatprep.subr.mxu0 %v168
  %310 = vmatpush1.msra.mxu0 %v167
  %311 = vmatprep.subr.mxu0 %v172
  %312 = vmatpush1.msra.mxu0 %v171
  %313 = vmatprep.subr.mxu0 %v176
  %314 = vmatpush1.msra.mxu0 %v175
  %315 = vmatprep.subr.mxu0 0.0
  %316 = vmatpush1.msra.mxu0 0.0
  %317 = vmatprep.subr.mxu0 0.0
  %318 = vmatpush1.msra.mxu0 0.0
  %319 = vmatprep.subr.mxu0 0.0
  %320 = vmatpush1.msra.mxu0 0.0
  %321 = vmatprep.subr.mxu0 0.0
  %322 = vmatpush1.msra.mxu0 0.0
  %323 = vmatprep.subr.mxu0 0.0
  %324 = vmatpush1.msra.mxu0 0.0
  %325 = vmatprep.subr.mxu0 0.0
  %326 = vmatpush1.msra.mxu0 0.0
  %327 = vmatprep.subr.mxu0 0.0
  %328 = vmatpush1.msra.mxu0 0.0
  %329 = vmatprep.subr.mxu0 0.0
  %330 = vmatpush1.msra.mxu0 0.0
  %331 = vmatprep.subr.mxu0 0.0
  %332 = vmatpush1.msra.mxu0 0.0
  %333 = vmatprep.subr.mxu0 0.0
  %334 = vmatpush1.msra.mxu0 0.0
  %335 = vmatprep.subr.mxu0 0.0
  %336 = vmatpush1.msra.mxu0 0.0
  %337 = vmatprep.subr.mxu0 0.0
  %338 = vmatpush1.msra.mxu0 0.0
  %339 = vmatprep.subr.mxu0 0.0
  %340 = vmatpush1.msra.mxu0 0.0
  %341 = vmatprep.subr.mxu0 0.0
  %342 = vmatpush1.msra.mxu0 0.0
  %343 = vmatprep.subr.mxu0 0.0
  %344 = vmatpush1.msra.mxu0 0.0
  %345 = vmatprep.subr.mxu0 0.0
  %346 = vmatpush1.msra.mxu0 0.0
  %347 = vmatprep.subr.mxu0 0.0
  %348 = vmatpush1.msra.mxu0 0.0
  %349 = vmatprep.subr.mxu0 0.0
  %350 = vmatpush1.msra.mxu0 0.0
  %351 = vmatprep.subr.mxu0 0.0
  %352 = vmatpush1.msra.mxu0 0.0
  %353 = vmatprep.subr.mxu0 0.0
  %354 = vmatpush1.msra.mxu0 0.0
  %355 = vmatprep.subr.mxu0 0.0
  %356 = vmatpush1.msra.mxu0 0.0
  %357 = vmatprep.subr.mxu0 0.0
  %358 = vmatpush1.msra.mxu0 0.0
  %359 = vmatprep.subr.mxu0 0.0
  %360 = vmatpush1.msra.mxu0 0.0
  %361 = vmatprep.subr.mxu0 0.0
  %362 = vmatpush1.msra.mxu0 0.0
  %363 = vmatprep.subr.mxu0 0.0
  %364 = vmatpush1.msra.mxu0 0.0
  %365 = vmatprep.subr.mxu0 0.0
  %366 = vmatpush1.msra.mxu0 0.0
  %367 = vmatprep.subr.mxu0 0.0
  %368 = vmatpush1.msra.mxu0 0.0
  %369 = vmatprep.subr.mxu0 0.0
  %370 = vmatpush1.msra.mxu0 0.0
  %371 = vmatprep.mubr.f32.mxu0 0.0
  %372 = vmatmul.mubr.f32.gmra.mrb[0].mxu0 %v207
  %v373 = vpop.f32.mrb[0].mxu0
  %v374 = vadd.f32 %v188, %v373
  %v375 = vpop.f32.mrb[0].mxu0
  %v376 = vadd.f32 %v188, %v375
  %377 = vmatprep.mubr.f32.mxu0 0.0
  %378 = vmatmul.mubr.f32.gmra.mrb[0].mxu0 %v210
  %v379 = vpop.f32.mrb[0].mxu0
  %v380 = vadd.f32 %v193, %v379
  %v381 = vpop.f32.mrb[0].mxu0
  %v382 = vadd.f32 %v193, %v381
  %383 = vmatprep.mubr.f32.mxu0 0.0
  %384 = vmatmul.mubr.f32.gmra.mrb[0].mxu0 %v213
  %v385 = vpop.f32.mrb[0].mxu0
  %v386 = vadd.f32 %v198, %v385
  %v387 = vpop.f32.mrb[0].mxu0
  %v388 = vadd.f32 %v198, %v387
  %389 = vmatprep.mubr.f32.mxu0 0.0
  %390 = vmatmul.mubr.f32.gmra.mrb[0].mxu0 %v216
  %v391 = vpop.f32.mrb[0].mxu0
  %v392 = vadd.f32 %v203, %v391
  %v393 = vpop.f32.mrb[0].mxu0
  %v394 = vadd.f32 %v203, %v393
  %395 = vdwg.mxu0
  %vm396 = vcmp.ge.f32.partialorder %v285, 0.0
  %vm397 = vcmp.ge.f32.partialorder %v287, 0.0
  %vm398 = vcmp.ge.f32.partialorder %v374, 0.0
  %vm399 = vcmp.ge.f32.partialorder %v376, 0.0
  %vm400 = vcmp.ge.f32.partialorder %v291, 0.0
  %vm401 = vcmp.ge.f32.partialorder %v293, 0.0
  %vm402 = vcmp.ge.f32.partialorder %v380, 0.0
  %vm403 = vcmp.ge.f32.partialorder %v382, 0.0
  %vm404 = vcmp.ge.f32.partialorder %v297, 0.0
  %vm405 = vcmp.ge.f32.partialorder %v299, 0.0
  %vm406 = vcmp.ge.f32.partialorder %v386, 0.0
  %vm407 = vcmp.ge.f32.partialorder %v388, 0.0
  %vm408 = vcmp.ge.f32.partialorder %v303, 0.0
  %vm409 = vcmp.ge.f32.partialorder %v305, 0.0
  %vm410 = vcmp.ge.f32.partialorder %v392, 0.0
  %vm411 = vcmp.ge.f32.partialorder %v394, 0.0
  %v412 = vmul.f32 %v285, 0.1
  %v413 = vmul.f32 %v287, 0.1
  %v414 = vmul.f32 %v374, 0.1
  %v415 = vmul.f32 %v376, 0.1
  %v416 = vmul.f32 %v291, 0.1
  %v417 = vmul.f32 %v293, 0.1
  %v418 = vmul.f32 %v380, 0.1
  %v419 = vmul.f32 %v382, 0.1
  %v420 = vmul.f32 %v297, 0.1
  %v421 = vmul.f32 %v299, 0.1
  %v422 = vmul.f32 %v386, 0.1
  %v423 = vmul.f32 %v388, 0.1
  %v424 = vmul.f32 %v303, 0.1
  %v425 = vmul.f32 %v305, 0.1
  %v426 = vmul.f32 %v392, 0.1
  %v427 = vmul.f32 %v394, 0.1
  %v428 = vsel %vm396, %v285, %v412
  %v429 = vsel %vm397, %v287, %v413
  %v430 = vsel %vm398, %v374, %v414
  %v431 = vsel %vm399, %v376, %v415
  %v432 = vsel %vm400, %v291, %v416
  %v433 = vsel %vm401, %v293, %v417
  %v434 = vsel %vm402, %v380, %v418
  %v435 = vsel %vm403, %v382, %v419
  %v436 = vsel %vm404, %v297, %v420
  %v437 = vsel %vm405, %v299, %v421
  %v438 = vsel %vm406, %v386, %v422
  %v439 = vsel %vm407, %v388, %v423
  %v440 = vsel %vm408, %v303, %v424
  %v441 = vsel %vm409, %v305, %v425
  %v442 = vsel %vm410, %v392, %v426
  %v443 = vsel %vm411, %v394, %v427
  %v444 = vld [vmem:[%s5] sm:$0xff]
  %v445 = vld [vmem:[%s5 + $0x8] sm:$0xff]
  %v446 = vld [vmem:[%s5 + $0x10] sm:$0xff]
  %v447 = vld [vmem:[%s5 + $0x18] sm:$0xff]
  %449 = vset.pattern.permute.xlu0 0
  %450 = vperm.xlu0 %449, %v444
  %v451 = vpop.permute.xlu0 %450
  %454 = vset.pattern.permute.xlu0 0
  %455 = vperm.xlu0 %454, %v445
  %v456 = vpop.permute.xlu0 %455
  %459 = vset.pattern.permute.xlu0 0
  %460 = vperm.xlu0 %459, %v446
  %v461 = vpop.permute.xlu0 %460
  %464 = vset.pattern.permute.xlu0 0
  %465 = vperm.xlu0 %464, %v447
  %v466 = vpop.permute.xlu0 %465
  %v468 = vmul.f32 %v428, %v451
  %v469 = vmul.f32 %v429, %v451
  %v470 = vmul.f32 %v430, %v451
  %v471 = vmul.f32 %v431, %v451
  %v472 = vmul.f32 %v432, %v456
  %v473 = vmul.f32 %v433, %v456
  %v474 = vmul.f32 %v434, %v456
  %v475 = vmul.f32 %v435, %v456
  %v476 = vmul.f32 %v436, %v461
  %v477 = vmul.f32 %v437, %v461
  %v478 = vmul.f32 %v438, %v461
  %v479 = vmul.f32 %v439, %v461
  %v480 = vmul.f32 %v440, %v466
  %v481 = vmul.f32 %v441, %v466
  %v482 = vmul.f32 %v442, %v466
  %v483 = vmul.f32 %v443, %v466
  %v484 = vadd.f32 %v468, %v472
  %v485 = vadd.f32 %v484, %v476
  %v486 = vadd.f32 %v485, %v480
  %v487 = vrot.slane %v486, 4
  %v488 = vadd.f32 %v486, %v487
  %v489 = vrot.slane %v488, 2
  %v490 = vadd.f32 %v488, %v489
  %v491 = vrot.slane %v490, 1
  %v492 = vadd.f32 %v490, %v491
  %v493 = vadd.f32 %v469, %v473
  %v494 = vadd.f32 %v493, %v477
  %v495 = vadd.f32 %v494, %v481
  %v496 = vrot.slane %v495, 4
  %v497 = vadd.f32 %v495, %v496
  %v498 = vrot.slane %v497, 2
  %v499 = vadd.f32 %v497, %v498
  %v500 = vrot.slane %v499, 1
  %v501 = vadd.f32 %v499, %v500
  %v502 = vadd.f32 %v470, %v474
  %v503 = vadd.f32 %v502, %v478
  %v504 = vadd.f32 %v503, %v482
  %v505 = vrot.slane %v504, 4
  %v506 = vadd.f32 %v504, %v505
  %v507 = vrot.slane %v506, 2
  %v508 = vadd.f32 %v506, %v507
  %v509 = vrot.slane %v508, 1
  %v510 = vadd.f32 %v508, %v509
  %v511 = vadd.f32 %v471, %v475
  %v512 = vadd.f32 %v511, %v479
  %v513 = vadd.f32 %v512, %v483
  %v514 = vrot.slane %v513, 4
  %v515 = vadd.f32 %v513, %v514
  %v516 = vrot.slane %v515, 2
  %v517 = vadd.f32 %v515, %v516
  %v518 = vrot.slane %v517, 1
  %v519 = vadd.f32 %v517, %v518
  %s520 = sld [smem:[#allocation2]]
  %v521 = vstv %s520
  %v522 = vadd.f32 %v492, %v521
  %v523 = vadd.f32 %v501, %v521
  %v524 = vadd.f32 %v510, %v521
  %v525 = vadd.f32 %v519, %v521
  %v530 = vcombine.low %v522, %v523
  %v531 = vcombine.low %v524, %v525
  %v533 = vunpack.c.l.s4 1966171168
  %v534 = vunpack.c.0.s8 %v533
  %v535 = vlaneseq
  %v536 = vshrl.u32 %v535, 7
  %v537 = vsub.s32 %v534, %v536
  %v538 = vrot.slane %v530, %v537
  %v540 = vunpack.c.l.s4 1966171168
  %v541 = vunpack.c.0.s8 %v540
  %v542 = vlaneseq
  %v543 = vshrl.u32 %v542, 7
  %v544 = vsub.s32 %v541, %v543
  %v545 = vrot.slane %v531, %v544
  %v546 = vcombine.low %v538, %v545
  %v548 = vunpack.c.l.s4 1966171168
  %v549 = vunpack.c.0.s8 %v548
  %v550 = vlaneseq
  %v551 = vshrl.u32 %v550, 7
  %v552 = vsub.s32 %v549, %v551
  %v553 = vrot.slane %v546, %v552
  %v555 = vlaneseq
  %vm556 = vcmp.ge.s32.totalorder %v555, 0
  %vm557 = vcmp.lt.s32.totalorder %v555, 512
  %vm558 = vmand %vm556, %vm557
  %559 = vst.msk [vmem:[%s7] sm:$0xf] %vm558, %v553
  // Predicated region
  $region30: #{gird_forward.2} parent=0 // pred_check
    _
  $region31: #{gird_forward.2} parent=0 // pred_check_branch
    %561 = sbr.rel (0) target = $region33
  $region32: #{gird_forward.2} parent=0 // pred_region
    _
  $region33: #{gird_forward.2} parent=0 // pred_fallthru
    _
  // Predicated region
  $region34: #{gird_forward.2} parent=0 // pred_check
    _
  $region35: #{gird_forward.2} parent=0 // pred_check_branch
    %563 = sbr.rel (0) target = $region37
  $region36: #{gird_forward.2} parent=0 // pred_region
    _
  $region37: #{gird_forward.2} parent=0 // pred_fallthru
    _

// kernel: gird_forward.3
$region0: #{gird_forward.3}
  #allocation0 [shape = 'u32[]', space=smem, size = 0x4, offset = 0x4, fixed_abs, tag = 'smem constant byte address 0x4 - core index']
  #allocation1 [shape = 'u32[144,128]{1,0:T(1,128)}', space=vmem, size = 0x12000, scoped, tag = 'internal scratch']
  #allocation2 [shape = 'f32[1]{0:T(128)S(6)}', space=smem, size = 0x200, scoped, tag = 'scoped memory for gird_forward.3']
  %s0 = inlined_call_operand.vmem [shape: f32[3,2048], index: 0, kind: input, shape index: {}]
  %s1 = inlined_call_operand.vmem [shape: f32[128,1], index: 1, kind: input, shape index: {}]
  %s2 = inlined_call_operand.vmem [shape: f32[128,1], index: 2, kind: input, shape index: {}]
  %s3 = inlined_call_operand.vmem [shape: f32[128,32], index: 3, kind: input, shape index: {}]
  %s4 = inlined_call_operand.vmem [shape: f32[32,1], index: 4, kind: input, shape index: {}]
  %s5 = inlined_call_operand.<no memory space> [shape: f32[1], index: 5, kind: input, shape index: {}]
  %s6 = inlined_call_operand.vmem [shape: f32[1,2048], index: 6, kind: output, shape index: {}]
  %s7 = sld [smem:[#allocation0]]
  $region57: #{gird_forward.3} parent=0
    _
  %s9 = ssub.s32 1, %s7
  %s10 = scalar_select 0, %s9, %s7
  %11 = sst [smem:[#allocation2]] %s5
  loop: start=0, step=1, limit=4
  $region2: #{gird_forward.3} parent=0 // loop_pre_header
    _
  $region3: #{gird_forward.3} parent=0 // loop_header
    %s13 = sphi 0, %s17
    %p14 = scmp.ge.s32.totalorder %s13, 4
    %s23 = sphi 0, %s25
    %s26 = sphi 0, %s23
    %s27 = sphi 0, %s26
    %s43 = sphi 0, %s27
    %s47 = sphi 0, %s47
    %s49 = sphi 0, %s47
    %s50 = sphi 0, %s49
    %s64 = sphi 0, %s50
    %s68 = sphi 0, %s68
    %s70 = sphi 0, %s68
    %s71 = sphi 0, %s70
    %s85 = sphi 0, %s71
    %s89 = sphi 0, %s89
    %s91 = sphi 0, %s89
    %s92 = sphi 0, %s91
    %s106 = sphi 0, %s92
    %s110 = sphi 0, %s110
    %s112 = sphi 0, %s110
    %s113 = sphi 0, %s112
    %s127 = sphi 0, %s113
    %s131 = sphi 0, %s131
    %s133 = sphi 0, %s131
    %s134 = sphi 0, %s133
    %s148 = sphi 0, %s134
    %s154 = sphi 0, %s156
    %s157 = sphi 0, %s154
    %s158 = sphi 0, %s157
    %s174 = sphi 0, %s158
  $region4: #{gird_forward.3} parent=0 // loop_header_branch
    %16 = sbr.rel (%p14) target = $region8
  $region5: #{gird_forward.3} parent=0 // loop_body
    %s18 = ssub.s32 %s13, 1
    %s19 = ssub.s32 %s13, 2
    %s20 = sadd.s32 %s13, 1
    %s21 = ssub.s32 %s13, %s20
    %p22 = scmp.eq.s32.totalorder %s21, 0
    %s24 = sadd.s32 %s23, 1
    %s25 = scalar_select %p22, %s23, %s24
    %p28 = pneg %p22
    %p29 = scmp.eq.s32.totalorder %s13, 1
    %p30 = por %p28, %p29
    %p31 = scmp.ne.s32.totalorder %s23, %s26
    %p32 = scmp.eq.s32.totalorder %s13, 0
    %p33 = por %p31, %p32
    %p34 = scmp.ne.s32.totalorder %s23, %s26
    %p35 = scmp.eq.s32.totalorder %s18, 1
    %p36 = por %p34, %p35
    %p37 = scmp.ne.s32.totalorder %s26, %s27
    %p38 = scmp.eq.s32.totalorder %s18, 0
    %p39 = por %p37, %p38
    %p40 = scmp.ne.s32.totalorder %s26, %s27
    %p41 = scmp.eq.s32.totalorder %s19, 1
    %p42 = por %p40, %p41
    %p44 = scmp.ne.s32.totalorder %s27, %s43
    %p45 = scmp.eq.s32.totalorder %s19, 0
    %p46 = por %p44, %p45
    %s48 = sadd.s32 %s47, 1
    %p51 = scmp.eq.s32.totalorder %s13, 1
    %p52 = scmp.ne.s32.totalorder %s47, %s49
    %p53 = scmp.eq.s32.totalorder %s13, 0
    %p54 = por %p52, %p53
    %p55 = scmp.ne.s32.totalorder %s47, %s49
    %p56 = scmp.eq.s32.totalorder %s18, 1
    %p57 = por %p55, %p56
    %p58 = scmp.ne.s32.totalorder %s49, %s50
    %p59 = scmp.eq.s32.totalorder %s18, 0
    %p60 = por %p58, %p59
    %p61 = scmp.ne.s32.totalorder %s49, %s50
    %p62 = scmp.eq.s32.totalorder %s19, 1
    %p63 = por %p61, %p62
    %p65 = scmp.ne.s32.totalorder %s50, %s64
    %p66 = scmp.eq.s32.totalorder %s19, 0
    %p67 = por %p65, %p66
    %s69 = sadd.s32 %s68, 1
    %p72 = scmp.eq.s32.totalorder %s13, 1
    %p73 = scmp.ne.s32.totalorder %s68, %s70
    %p74 = scmp.eq.s32.totalorder %s13, 0
    %p75 = por %p73, %p74
    %p76 = scmp.ne.s32.totalorder %s68, %s70
    %p77 = scmp.eq.s32.totalorder %s18, 1
    %p78 = por %p76, %p77
    %p79 = scmp.ne.s32.totalorder %s70, %s71
    %p80 = scmp.eq.s32.totalorder %s18, 0
    %p81 = por %p79, %p80
    %p82 = scmp.ne.s32.totalorder %s70, %s71
    %p83 = scmp.eq.s32.totalorder %s19, 1
    %p84 = por %p82, %p83
    %p86 = scmp.ne.s32.totalorder %s71, %s85
    %p87 = scmp.eq.s32.totalorder %s19, 0
    %p88 = por %p86, %p87
    %s90 = sadd.s32 %s89, 1
    %p93 = scmp.eq.s32.totalorder %s13, 1
    %p94 = scmp.ne.s32.totalorder %s89, %s91
    %p95 = scmp.eq.s32.totalorder %s13, 0
    %p96 = por %p94, %p95
    %p97 = scmp.ne.s32.totalorder %s89, %s91
    %p98 = scmp.eq.s32.totalorder %s18, 1
    %p99 = por %p97, %p98
    %p100 = scmp.ne.s32.totalorder %s91, %s92
    %p101 = scmp.eq.s32.totalorder %s18, 0
    %p102 = por %p100, %p101
    %p103 = scmp.ne.s32.totalorder %s91, %s92
    %p104 = scmp.eq.s32.totalorder %s19, 1
    %p105 = por %p103, %p104
    %p107 = scmp.ne.s32.totalorder %s92, %s106
    %p108 = scmp.eq.s32.totalorder %s19, 0
    %p109 = por %p107, %p108
    %s111 = sadd.s32 %s110, 1
    %p114 = scmp.eq.s32.totalorder %s13, 1
    %p115 = scmp.ne.s32.totalorder %s110, %s112
    %p116 = scmp.eq.s32.totalorder %s13, 0
    %p117 = por %p115, %p116
    %p118 = scmp.ne.s32.totalorder %s110, %s112
    %p119 = scmp.eq.s32.totalorder %s18, 1
    %p120 = por %p118, %p119
    %p121 = scmp.ne.s32.totalorder %s112, %s113
    %p122 = scmp.eq.s32.totalorder %s18, 0
    %p123 = por %p121, %p122
    %p124 = scmp.ne.s32.totalorder %s112, %s113
    %p125 = scmp.eq.s32.totalorder %s19, 1
    %p126 = por %p124, %p125
    %p128 = scmp.ne.s32.totalorder %s113, %s127
    %p129 = scmp.eq.s32.totalorder %s19, 0
    %p130 = por %p128, %p129
    %s132 = sadd.s32 %s131, 1
    %p135 = scmp.eq.s32.totalorder %s13, 1
    %p136 = scmp.ne.s32.totalorder %s131, %s133
    %p137 = scmp.eq.s32.totalorder %s13, 0
    %p138 = por %p136, %p137
    %p139 = scmp.ne.s32.totalorder %s131, %s133
    %p140 = scmp.eq.s32.totalorder %s18, 1
    %p141 = por %p139, %p140
    %p142 = scmp.ne.s32.totalorder %s133, %s134
    %p143 = scmp.eq.s32.totalorder %s18, 0
    %p144 = por %p142, %p143
    %p145 = scmp.ne.s32.totalorder %s133, %s134
    %p146 = scmp.eq.s32.totalorder %s19, 1
    %p147 = por %p145, %p146
    %p149 = scmp.ne.s32.totalorder %s134, %s148
    %p150 = scmp.eq.s32.totalorder %s19, 0
    %p151 = por %p149, %p150
    %s152 = ssub.s32 %s13, %s20
    %p153 = scmp.eq.s32.totalorder %s152, 0
    %s155 = sadd.s32 %s154, 1
    %s156 = scalar_select %p153, %s154, %s155
    %p159 = pneg %p153
    %p160 = scmp.eq.s32.totalorder %s13, 1
    %p161 = por %p159, %p160
    %p162 = scmp.ne.s32.totalorder %s154, %s157
    %p163 = scmp.eq.s32.totalorder %s13, 0
    %p164 = por %p162, %p163
    %p165 = scmp.ne.s32.totalorder %s154, %s157
    %p166 = scmp.eq.s32.totalorder %s18, 1
    %p167 = por %p165, %p166
    %p168 = scmp.ne.s32.totalorder %s157, %s158
    %p169 = scmp.eq.s32.totalorder %s18, 0
    %p170 = por %p168, %p169
    %p171 = scmp.ne.s32.totalorder %s157, %s158
    %p172 = scmp.eq.s32.totalorder %s19, 1
    %p173 = por %p171, %p172
    %p175 = scmp.ne.s32.totalorder %s158, %s174
    %p176 = scmp.eq.s32.totalorder %s19, 0
    %p177 = por %p175, %p176
    %p178 = scmp.le.s32.totalorder 1, %s13
    %p179 = scmp.lt.s32.totalorder %s13, 3
    %p180 = pnand %p178, %p179
    %p181 = pneg %p180
    // Predicated region
    $region9: #{gird_forward.3} parent=5 // pred_check
      _
    $region10: #{gird_forward.3} parent=5 // pred_check_branch
      %183 = sbr.rel (%p180) target = $region12
    $region11: #{gird_forward.3} parent=5 // pred_region
      %s184 = ssub.s32 %s13, 1
      // Predicated region
      $region13: #{gird_forward.3} parent=11 // pred_check
        %p185 = pneg %p60
      $region14: #{gird_forward.3} parent=11 // pred_check_branch
        %187 = sbr.rel (%p185) target = $region16
      $region15: #{gird_forward.3} parent=11 // pred_region
        _
      $region16: #{gird_forward.3} parent=11 // pred_fallthru
        _
      // Predicated region
      $region17: #{gird_forward.3} parent=11 // pred_check
        %p188 = pneg %p81
      $region18: #{gird_forward.3} parent=11 // pred_check_branch
        %190 = sbr.rel (%p188) target = $region20
      $region19: #{gird_forward.3} parent=11 // pred_region
        _
      $region20: #{gird_forward.3} parent=11 // pred_fallthru
        _
      // Predicated region
      $region21: #{gird_forward.3} parent=11 // pred_check
        %p191 = pneg %p102
      $region22: #{gird_forward.3} parent=11 // pred_check_branch
        %193 = sbr.rel (%p191) target = $region24
      $region23: #{gird_forward.3} parent=11 // pred_region
        _
      $region24: #{gird_forward.3} parent=11 // pred_fallthru
        _
      // Predicated region
      $region25: #{gird_forward.3} parent=11 // pred_check
        %p194 = pneg %p123
      $region26: #{gird_forward.3} parent=11 // pred_check_branch
        %196 = sbr.rel (%p194) target = $region28
      $region27: #{gird_forward.3} parent=11 // pred_region
        _
      $region28: #{gird_forward.3} parent=11 // pred_fallthru
        _
      // Predicated region
      $region29: #{gird_forward.3} parent=11 // pred_check
        %p197 = pneg %p144
      $region30: #{gird_forward.3} parent=11 // pred_check_branch
        %199 = sbr.rel (%p197) target = $region32
      $region31: #{gird_forward.3} parent=11 // pred_region
        _
      $region32: #{gird_forward.3} parent=11 // pred_fallthru
        _
    $region12: #{gird_forward.3} parent=5 // pred_fallthru
      _
    %p200 = scmp.lt.s32.totalorder %s13, 2
    // Predicated region
    $region33: #{gird_forward.3} parent=5 // pred_check
      %p201 = pneg %p200
    $region34: #{gird_forward.3} parent=5 // pred_check_branch
      %203 = sbr.rel (%p201) target = $region36
    $region35: #{gird_forward.3} parent=5 // pred_region
      // Predicated region
      $region37: #{gird_forward.3} parent=35 // pred_check
        %p204 = pneg %p33
      $region38: #{gird_forward.3} parent=35 // pred_check_branch
        %206 = sbr.rel (%p204) target = $region40
      $region39: #{gird_forward.3} parent=35 // pred_region
        %s207 = smul.u32 8, %s13
        %p208 = scmp.lt.s32.totalorder %s207, 15
        %s209 = scalar_select %p208, %s207, 15
        %s210 = smul.addr %s209, 4
        %s211 = scalar_lea.vmem %s0, %s210
        %s212 = smul.u32 8, %s13
      $region40: #{gird_forward.3} parent=35 // pred_fallthru
        _
    $region36: #{gird_forward.3} parent=5 // pred_fallthru
      _
    %p213 = scmp.le.s32.totalorder 1, %s13
    %p214 = scmp.lt.s32.totalorder %s13, 3
    %p215 = pnand %p213, %p214
    %p216 = pneg %p215
    // Predicated region
    $region41: #{gird_forward.3} parent=5 // pred_check
      _
    $region42: #{gird_forward.3} parent=5 // pred_check_branch
      %218 = sbr.rel (%p215) target = $region44
    $region43: #{gird_forward.3} parent=5 // pred_region
      %s219 = ssub.s32 %s13, 1
      %s220 = smul.u32 8, %s18
      %p221 = scmp.lt.s32.totalorder %s220, 15
      %s222 = scalar_select %p221, %s220, 15
      %s223 = smul.addr %s222, 4
      %s224 = scalar_lea.vmem %s0, %s223
      %p225 = pneg %p39
      %p226 = pneg %p36
      %p227 = pneg %p60
      %p228 = pneg %p57
      %p229 = pneg %p81
      %p230 = pneg %p78
      %p231 = pneg %p102
      %p232 = pneg %p99
      %p233 = pneg %p123
      %p234 = pneg %p120
      %p235 = pneg %p144
      %p236 = pneg %p141
      %p237 = pneg %p170
      %p238 = pneg %p167
      %s239 = smul.u32 8, %s18
      %p240 = scmp.lt.s32.totalorder %s239, 15
      %s241 = scalar_select %p240, %s239, 15
      %s242 = scalar_lea.vmem %s6, %s241
      %s243 = smul.u32 8, %s18
      %p244 = scmp.lt.s32.totalorder %s243, 15
      %s245 = scalar_select %p244, %s243, 15
      %s246 = smul.addr %s245, 4
      %s247 = scalar_lea.vmem %s0, %s246
      %s248 = smul.u32 8, %s18
      %s249 = smul.u32 8, %s18
      %p250 = scmp.lt.s32.totalorder %s249, 15
      %s251 = scalar_select %p250, %s249, 15
      %s252 = scalar_lea.vmem %s6, %s251
      %s253 = smul.u32 8, %s18
      %v254 = vld [vmem:[%s247] sm:$0x77]
      %v255 = vld [vmem:[%s247 + $0x8] sm:$0x77]
      %v256 = vld [vmem:[%s247 + $0x10] sm:$0x77]
      %v257 = vld [vmem:[%s247 + $0x18] sm:$0x77]
      %v262 = vcombine.high %v254, %v254
      %v263 = vcombine.high %v255, %v255
      %v264 = vcombine.high %v256, %v256
      %v265 = vcombine.high %v257, %v257
      %vm270 = vcmask 1042432
      %v271 = vsel %vm270, %v254, 0.0
      %v272 = vrot.slane %v271, 4
      %v273 = vadd.f32 %v271, %v272
      %v274 = vrot.slane %v273, 2
      %v275 = vadd.f32 %v273, %v274
      %v276 = vrot.slane %v275, 1
      %v277 = vadd.f32 %v275, %v276
      %v278 = vsel %vm270, %v262, 0.0
      %v279 = vrot.slane %v278, 4
      %v280 = vadd.f32 %v278, %v279
      %v281 = vrot.slane %v280, 2
      %v282 = vadd.f32 %v280, %v281
      %v283 = vrot.slane %v282, 1
      %v284 = vadd.f32 %v282, %v283
      %v285 = vsel %vm270, %v255, 0.0
      %v286 = vrot.slane %v285, 4
      %v287 = vadd.f32 %v285, %v286
      %v288 = vrot.slane %v287, 2
      %v289 = vadd.f32 %v287, %v288
      %v290 = vrot.slane %v289, 1
      %v291 = vadd.f32 %v289, %v290
      %v292 = vsel %vm270, %v263, 0.0
      %v293 = vrot.slane %v292, 4
      %v294 = vadd.f32 %v292, %v293
      %v295 = vrot.slane %v294, 2
      %v296 = vadd.f32 %v294, %v295
      %v297 = vrot.slane %v296, 1
      %v298 = vadd.f32 %v296, %v297
      %v299 = vsel %vm270, %v256, 0.0
      %v300 = vrot.slane %v299, 4
      %v301 = vadd.f32 %v299, %v300
      %v302 = vrot.slane %v301, 2
      %v303 = vadd.f32 %v301, %v302
      %v304 = vrot.slane %v303, 1
      %v305 = vadd.f32 %v303, %v304
      %v306 = vsel %vm270, %v264, 0.0
      %v307 = vrot.slane %v306, 4
      %v308 = vadd.f32 %v306, %v307
      %v309 = vrot.slane %v308, 2
      %v310 = vadd.f32 %v308, %v309
      %v311 = vrot.slane %v310, 1
      %v312 = vadd.f32 %v310, %v311
      %v313 = vsel %vm270, %v257, 0.0
      %v314 = vrot.slane %v313, 4
      %v315 = vadd.f32 %v313, %v314
      %v316 = vrot.slane %v315, 2
      %v317 = vadd.f32 %v315, %v316
      %v318 = vrot.slane %v317, 1
      %v319 = vadd.f32 %v317, %v318
      %v320 = vsel %vm270, %v265, 0.0
      %v321 = vrot.slane %v320, 4
      %v322 = vadd.f32 %v320, %v321
      %v323 = vrot.slane %v322, 2
      %v324 = vadd.f32 %v322, %v323
      %v325 = vrot.slane %v324, 1
      %v326 = vadd.f32 %v324, %v325
      %vm327 = vcmp.ne.f32.partialorder %v254, 0.0
      %vm328 = vcmp.ne.f32.partialorder %v255, 0.0
      %vm329 = vcmp.ne.f32.partialorder %v256, 0.0
      %vm330 = vcmp.ne.f32.partialorder %v257, 0.0
      %v331 = vsel %vm327, 1, 0
      %v332 = vsel %vm328, 1, 0
      %v333 = vsel %vm329, 1, 0
      %v334 = vsel %vm330, 1, 0
      %v335 = vcvt.s32.f32 %v331
      %v336 = vcvt.s32.f32 %v332
      %v337 = vcvt.s32.f32 %v333
      %v338 = vcvt.s32.f32 %v334
      %v343 = vcombine.high %v335, %v335
      %v344 = vcombine.high %v336, %v336
      %v345 = vcombine.high %v337, %v337
      %v346 = vcombine.high %v338, %v338
      %v351 = vsel %vm270, %v335, 0.0
      %v352 = vrot.slane %v351, 4
      %v353 = vadd.f32 %v351, %v352
      %v354 = vrot.slane %v353, 2
      %v355 = vadd.f32 %v353, %v354
      %v356 = vrot.slane %v355, 1
      %v357 = vadd.f32 %v355, %v356
      %v358 = vsel %vm270, %v343, 0.0
      %v359 = vrot.slane %v358, 4
      %v360 = vadd.f32 %v358, %v359
      %v361 = vrot.slane %v360, 2
      %v362 = vadd.f32 %v360, %v361
      %v363 = vrot.slane %v362, 1
      %v364 = vadd.f32 %v362, %v363
      %v365 = vsel %vm270, %v336, 0.0
      %v366 = vrot.slane %v365, 4
      %v367 = vadd.f32 %v365, %v366
      %v368 = vrot.slane %v367, 2
      %v369 = vadd.f32 %v367, %v368
      %v370 = vrot.slane %v369, 1
      %v371 = vadd.f32 %v369, %v370
      %v372 = vsel %vm270, %v344, 0.0
      %v373 = vrot.slane %v372, 4
      %v374 = vadd.f32 %v372, %v373
      %v375 = vrot.slane %v374, 2
      %v376 = vadd.f32 %v374, %v375
      %v377 = vrot.slane %v376, 1
      %v378 = vadd.f32 %v376, %v377
      %v379 = vsel %vm270, %v337, 0.0
      %v380 = vrot.slane %v379, 4
      %v381 = vadd.f32 %v379, %v380
      %v382 = vrot.slane %v381, 2
      %v383 = vadd.f32 %v381, %v382
      %v384 = vrot.slane %v383, 1
      %v385 = vadd.f32 %v383, %v384
      %v386 = vsel %vm270, %v345, 0.0
      %v387 = vrot.slane %v386, 4
      %v388 = vadd.f32 %v386, %v387
      %v389 = vrot.slane %v388, 2
      %v390 = vadd.f32 %v388, %v389
      %v391 = vrot.slane %v390, 1
      %v392 = vadd.f32 %v390, %v391
      %v393 = vsel %vm270, %v338, 0.0
      %v394 = vrot.slane %v393, 4
      %v395 = vadd.f32 %v393, %v394
      %v396 = vrot.slane %v395, 2
      %v397 = vadd.f32 %v395, %v396
      %v398 = vrot.slane %v397, 1
      %v399 = vadd.f32 %v397, %v398
      %v400 = vsel %vm270, %v346, 0.0
      %v401 = vrot.slane %v400, 4
      %v402 = vadd.f32 %v400, %v401
      %v403 = vrot.slane %v402, 2
      %v404 = vadd.f32 %v402, %v403
      %v405 = vrot.slane %v404, 1
      %v406 = vadd.f32 %v404, %v405
      %v407 = vld [vmem:[%s1] sm:$0xff]
      %v408 = vld [vmem:[%s1 + $0x8] sm:$0xff]
      %v409 = vld [vmem:[%s1 + $0x10] sm:$0xff]
      %v410 = vld [vmem:[%s1 + $0x18] sm:$0xff]
      %v411 = vld [vmem:[%s1 + $0x20] sm:$0xff]
      %v412 = vld [vmem:[%s1 + $0x28] sm:$0xff]
      %v413 = vld [vmem:[%s1 + $0x30] sm:$0xff]
      %v414 = vld [vmem:[%s1 + $0x38] sm:$0xff]
      %v415 = vld [vmem:[%s1 + $0x40] sm:$0xff]
      %v416 = vld [vmem:[%s1 + $0x48] sm:$0xff]
      %v417 = vld [vmem:[%s1 + $0x50] sm:$0xff]
      %v418 = vld [vmem:[%s1 + $0x58] sm:$0xff]
      %v419 = vld [vmem:[%s1 + $0x60] sm:$0xff]
      %v420 = vld [vmem:[%s1 + $0x68] sm:$0xff]
      %v421 = vld [vmem:[%s1 + $0x70] sm:$0xff]
      %v422 = vld [vmem:[%s1 + $0x78] sm:$0xff]
      %v423 = vld [vmem:[%s2] sm:$0xff]
      %v424 = vld [vmem:[%s2 + $0x8] sm:$0xff]
      %v425 = vld [vmem:[%s2 + $0x10] sm:$0xff]
      %v426 = vld [vmem:[%s2 + $0x18] sm:$0xff]
      %v427 = vld [vmem:[%s2 + $0x20] sm:$0xff]
      %v428 = vld [vmem:[%s2 + $0x28] sm:$0xff]
      %v429 = vld [vmem:[%s2 + $0x30] sm:$0xff]
      %v430 = vld [vmem:[%s2 + $0x38] sm:$0xff]
      %v431 = vld [vmem:[%s2 + $0x40] sm:$0xff]
      %v432 = vld [vmem:[%s2 + $0x48] sm:$0xff]
      %v433 = vld [vmem:[%s2 + $0x50] sm:$0xff]
      %v434 = vld [vmem:[%s2 + $0x58] sm:$0xff]
      %v435 = vld [vmem:[%s2 + $0x60] sm:$0xff]
      %v436 = vld [vmem:[%s2 + $0x68] sm:$0xff]
      %v437 = vld [vmem:[%s2 + $0x70] sm:$0xff]
      %v438 = vld [vmem:[%s2 + $0x78] sm:$0xff]
      %v439 = vld [vmem:[%s3] sm:$0xff]
      %v440 = vld [vmem:[%s3 + $0x8] sm:$0xff]
      %v441 = vld [vmem:[%s3 + $0x10] sm:$0xff]
      %v442 = vld [vmem:[%s3 + $0x18] sm:$0xff]
      %v443 = vld [vmem:[%s3 + $0x20] sm:$0xff]
      %v444 = vld [vmem:[%s3 + $0x28] sm:$0xff]
      %v445 = vld [vmem:[%s3 + $0x30] sm:$0xff]
      %v446 = vld [vmem:[%s3 + $0x38] sm:$0xff]
      %v447 = vld [vmem:[%s3 + $0x40] sm:$0xff]
      %v448 = vld [vmem:[%s3 + $0x48] sm:$0xff]
      %v449 = vld [vmem:[%s3 + $0x50] sm:$0xff]
      %v450 = vld [vmem:[%s3 + $0x58] sm:$0xff]
      %v451 = vld [vmem:[%s3 + $0x60] sm:$0xff]
      %v452 = vld [vmem:[%s3 + $0x68] sm:$0xff]
      %v453 = vld [vmem:[%s3 + $0x70] sm:$0xff]
      %v454 = vld [vmem:[%s3 + $0x78] sm:$0xff]
      %v455 = vlaneseq
      %v456 = vshrl.u32 %v455, 7
      %v457 = vsub.s32 0, %v456
      %v458 = vrot.slane %v254, %v457
      %v459 = vlaneseq
      %v460 = vshrl.u32 %v459, 7
      %v461 = vsub.s32 4, %v460
      %v462 = vrot.slane %v254, %v461
      %v463 = vlaneseq
      %v464 = vshrl.u32 %v463, 7
      %v465 = vsub.s32 0, %v464
      %v466 = vrot.slane %v255, %v465
      %v467 = vlaneseq
      %v468 = vshrl.u32 %v467, 7
      %v469 = vsub.s32 4, %v468
      %v470 = vrot.slane %v255, %v469
      %v471 = vlaneseq
      %v472 = vshrl.u32 %v471, 7
      %v473 = vsub.s32 0, %v472
      %v474 = vrot.slane %v256, %v473
      %v475 = vlaneseq
      %v476 = vshrl.u32 %v475, 7
      %v477 = vsub.s32 4, %v476
      %v478 = vrot.slane %v256, %v477
      %v479 = vlaneseq
      %v480 = vshrl.u32 %v479, 7
      %v481 = vsub.s32 0, %v480
      %v482 = vrot.slane %v257, %v481
      %v483 = vlaneseq
      %v484 = vshrl.u32 %v483, 7
      %v485 = vsub.s32 4, %v484
      %v486 = vrot.slane %v257, %v485
      %v495 = vlaneseq
      %v496 = vshrl.u32 %v495, 7
      %v497 = vsub.s32 0, %v496
      %v498 = vrot.slane %v458, %v497
      %v499 = vlaneseq
      %v500 = vshrl.u32 %v499, 7
      %v501 = vsub.s32 0, %v500
      %v502 = vrot.slane %v462, %v501
      %v503 = vlaneseq
      %v504 = vshrl.u32 %v503, 7
      %v505 = vsub.s32 0, %v504
      %v506 = vrot.slane %v466, %v505
      %v507 = vlaneseq
      %v508 = vshrl.u32 %v507, 7
      %v509 = vsub.s32 0, %v508
      %v510 = vrot.slane %v470, %v509
      %v511 = vlaneseq
      %v512 = vshrl.u32 %v511, 7
      %v513 = vsub.s32 0, %v512
      %v514 = vrot.slane %v474, %v513
      %v515 = vlaneseq
      %v516 = vshrl.u32 %v515, 7
      %v517 = vsub.s32 0, %v516
      %v518 = vrot.slane %v478, %v517
      %v519 = vlaneseq
      %v520 = vshrl.u32 %v519, 7
      %v521 = vsub.s32 0, %v520
      %v522 = vrot.slane %v482, %v521
      %v523 = vlaneseq
      %v524 = vshrl.u32 %v523, 7
      %v525 = vsub.s32 0, %v524
      %v526 = vrot.slane %v486, %v525
      %528 = vset.pattern.permute.xlu0 0
      %529 = vperm.xlu0 %528, %v407
      %v530 = vpop.permute.xlu0 %529
      %533 = vset.pattern.permute.xlu0 0
      %534 = vperm.xlu0 %533, %v408
      %v535 = vpop.permute.xlu0 %534
      %538 = vset.pattern.permute.xlu0 0
      %539 = vperm.xlu0 %538, %v409
      %v540 = vpop.permute.xlu0 %539
      %543 = vset.pattern.permute.xlu0 0
      %544 = vperm.xlu0 %543, %v410
      %v545 = vpop.permute.xlu0 %544
      %548 = vset.pattern.permute.xlu0 0
      %549 = vperm.xlu0 %548, %v411
      %v550 = vpop.permute.xlu0 %549
      %553 = vset.pattern.permute.xlu0 0
      %554 = vperm.xlu0 %553, %v412
      %v555 = vpop.permute.xlu0 %554
      %558 = vset.pattern.permute.xlu0 0
      %559 = vperm.xlu0 %558, %v413
      %v560 = vpop.permute.xlu0 %559
      %563 = vset.pattern.permute.xlu0 0
      %564 = vperm.xlu0 %563, %v414
      %v565 = vpop.permute.xlu0 %564
      %568 = vset.pattern.permute.xlu0 0
      %569 = vperm.xlu0 %568, %v415
      %v570 = vpop.permute.xlu0 %569
      %573 = vset.pattern.permute.xlu0 0
      %574 = vperm.xlu0 %573, %v416
      %v575 = vpop.permute.xlu0 %574
      %578 = vset.pattern.permute.xlu0 0
      %579 = vperm.xlu0 %578, %v417
      %v580 = vpop.permute.xlu0 %579
      %583 = vset.pattern.permute.xlu0 0
      %584 = vperm.xlu0 %583, %v418
      %v585 = vpop.permute.xlu0 %584
      %588 = vset.pattern.permute.xlu0 0
      %589 = vperm.xlu0 %588, %v419
      %v590 = vpop.permute.xlu0 %589
      %593 = vset.pattern.permute.xlu0 0
      %594 = vperm.xlu0 %593, %v420
      %v595 = vpop.permute.xlu0 %594
      %598 = vset.pattern.permute.xlu0 0
      %599 = vperm.xlu0 %598, %v421
      %v600 = vpop.permute.xlu0 %599
      %603 = vset.pattern.permute.xlu0 0
      %604 = vperm.xlu0 %603, %v422
      %v605 = vpop.permute.xlu0 %604
      %v607 = vmul.f32 %v498, %v530
      %v608 = vmul.f32 %v502, %v530
      %v609 = vmul.f32 %v506, %v530
      %v610 = vmul.f32 %v510, %v530
      %v611 = vmul.f32 %v514, %v530
      %v612 = vmul.f32 %v518, %v530
      %v613 = vmul.f32 %v522, %v530
      %v614 = vmul.f32 %v526, %v530
      %v615 = vmul.f32 %v498, %v535
      %v616 = vmul.f32 %v502, %v535
      %v617 = vmul.f32 %v506, %v535
      %v618 = vmul.f32 %v510, %v535
      %v619 = vmul.f32 %v514, %v535
      %v620 = vmul.f32 %v518, %v535
      %v621 = vmul.f32 %v522, %v535
      %v622 = vmul.f32 %v526, %v535
      %v623 = vmul.f32 %v498, %v540
      %v624 = vmul.f32 %v502, %v540
      %v625 = vmul.f32 %v506, %v540
      %v626 = vmul.f32 %v510, %v540
      %v627 = vmul.f32 %v514, %v540
      %v628 = vmul.f32 %v518, %v540
      %v629 = vmul.f32 %v522, %v540
      %v630 = vmul.f32 %v526, %v540
      %v631 = vmul.f32 %v498, %v545
      %v632 = vmul.f32 %v502, %v545
      %v633 = vmul.f32 %v506, %v545
      %v634 = vmul.f32 %v510, %v545
      %v635 = vmul.f32 %v514, %v545
      %v636 = vmul.f32 %v518, %v545
      %v637 = vmul.f32 %v522, %v545
      %v638 = vmul.f32 %v526, %v545
      %v639 = vmul.f32 %v498, %v550
      %v640 = vmul.f32 %v502, %v550
      %v641 = vmul.f32 %v506, %v550
      %v642 = vmul.f32 %v510, %v550
      %v643 = vmul.f32 %v514, %v550
      %v644 = vmul.f32 %v518, %v550
      %v645 = vmul.f32 %v522, %v550
      %v646 = vmul.f32 %v526, %v550
      %v647 = vmul.f32 %v498, %v555
      %v648 = vmul.f32 %v502, %v555
      %v649 = vmul.f32 %v506, %v555
      %v650 = vmul.f32 %v510, %v555
      %v651 = vmul.f32 %v514, %v555
      %v652 = vmul.f32 %v518, %v555
      %v653 = vmul.f32 %v522, %v555
      %v654 = vmul.f32 %v526, %v555
      %v655 = vmul.f32 %v498, %v560
      %v656 = vmul.f32 %v502, %v560
      %v657 = vmul.f32 %v506, %v560
      %v658 = vmul.f32 %v510, %v560
      %v659 = vmul.f32 %v514, %v560
      %v660 = vmul.f32 %v518, %v560
      %v661 = vmul.f32 %v522, %v560
      %v662 = vmul.f32 %v526, %v560
      %v663 = vmul.f32 %v498, %v565
      %v664 = vmul.f32 %v502, %v565
      %v665 = vmul.f32 %v506, %v565
      %v666 = vmul.f32 %v510, %v565
      %v667 = vmul.f32 %v514, %v565
      %v668 = vmul.f32 %v518, %v565
      %v669 = vmul.f32 %v522, %v565
      %v670 = vmul.f32 %v526, %v565
      %v671 = vmul.f32 %v498, %v570
      %v672 = vmul.f32 %v502, %v570
      %v673 = vmul.f32 %v506, %v570
      %v674 = vmul.f32 %v510, %v570
      %v675 = vmul.f32 %v514, %v570
      %v676 = vmul.f32 %v518, %v570
      %v677 = vmul.f32 %v522, %v570
      %v678 = vmul.f32 %v526, %v570
      %v679 = vmul.f32 %v498, %v575
      %v680 = vmul.f32 %v502, %v575
      %v681 = vmul.f32 %v506, %v575
      %v682 = vmul.f32 %v510, %v575
      %v683 = vmul.f32 %v514, %v575
      %v684 = vmul.f32 %v518, %v575
      %v685 = vmul.f32 %v522, %v575
      %v686 = vmul.f32 %v526, %v575
      %v687 = vmul.f32 %v498, %v580
      %v688 = vmul.f32 %v502, %v580
      %v689 = vmul.f32 %v506, %v580
      %v690 = vmul.f32 %v510, %v580
      %v691 = vmul.f32 %v514, %v580
      %v692 = vmul.f32 %v518, %v580
      %v693 = vmul.f32 %v522, %v580
      %v694 = vmul.f32 %v526, %v580
      %v695 = vmul.f32 %v498, %v585
      %v696 = vmul.f32 %v502, %v585
      %v697 = vmul.f32 %v506, %v585
      %v698 = vmul.f32 %v510, %v585
      %v699 = vmul.f32 %v514, %v585
      %v700 = vmul.f32 %v518, %v585
      %v701 = vmul.f32 %v522, %v585
      %v702 = vmul.f32 %v526, %v585
      %v703 = vmul.f32 %v498, %v590
      %v704 = vmul.f32 %v502, %v590
      %v705 = vmul.f32 %v506, %v590
      %v706 = vmul.f32 %v510, %v590
      %v707 = vmul.f32 %v514, %v590
      %v708 = vmul.f32 %v518, %v590
      %v709 = vmul.f32 %v522, %v590
      %v710 = vmul.f32 %v526, %v590
      %v711 = vmul.f32 %v498, %v595
      %v712 = vmul.f32 %v502, %v595
      %v713 = vmul.f32 %v506, %v595
      %v714 = vmul.f32 %v510, %v595
      %v715 = vmul.f32 %v514, %v595
      %v716 = vmul.f32 %v518, %v595
      %v717 = vmul.f32 %v522, %v595
      %v718 = vmul.f32 %v526, %v595
      %v719 = vmul.f32 %v498, %v600
      %v720 = vmul.f32 %v502, %v600
      %v721 = vmul.f32 %v506, %v600
      %v722 = vmul.f32 %v510, %v600
      %v723 = vmul.f32 %v514, %v600
      %v724 = vmul.f32 %v518, %v600
      %v725 = vmul.f32 %v522, %v600
      %v726 = vmul.f32 %v526, %v600
      %v727 = vmul.f32 %v498, %v605
      %v728 = vmul.f32 %v502, %v605
      %v729 = vmul.f32 %v506, %v605
      %v730 = vmul.f32 %v510, %v605
      %v731 = vmul.f32 %v514, %v605
      %v732 = vmul.f32 %v518, %v605
      %v733 = vmul.f32 %v522, %v605
      %v734 = vmul.f32 %v526, %v605
      %vm735 = vcmask 261120
      %v737 = vsel %vm735, %v439, 0
      %v740 = vsel %vm735, %v440, 0
      %v743 = vsel %vm735, %v441, 0
      %v746 = vsel %vm735, %v442, 0
      %v749 = vsel %vm735, %v443, 0
      %v752 = vsel %vm735, %v444, 0
      %v755 = vsel %vm735, %v445, 0
      %v758 = vsel %vm735, %v446, 0
      %v761 = vsel %vm735, %v447, 0
      %v764 = vsel %vm735, %v448, 0
      %v767 = vsel %vm735, %v449, 0
      %v770 = vsel %vm735, %v450, 0
      %v773 = vsel %vm735, %v451, 0
      %v776 = vsel %vm735, %v452, 0
      %v779 = vsel %vm735, %v453, 0
      %v782 = vsel %vm735, %v454, 0
      %784 = vmatprep.subr.mxu0 0.0
      %785 = vmatpush1.msra.mxu0 0.0
      %786 = vmatprep.subr.mxu0 0.0
      %787 = vmatpush1.msra.mxu0 0.0
      %788 = vmatprep.subr.mxu0 0.0
      %789 = vmatpush1.msra.mxu0 0.0
      %790 = vmatprep.subr.mxu0 0.0
      %791 = vmatpush1.msra.mxu0 0.0
      %792 = vmatprep.subr.mxu0 0.0
      %793 = vmatpush1.msra.mxu0 0.0
      %794 = vmatprep.subr.mxu0 0.0
      %795 = vmatpush1.msra.mxu0 0.0
      %796 = vmatprep.subr.mxu0 0.0
      %797 = vmatpush1.msra.mxu0 0.0
      %798 = vmatprep.subr.mxu0 0.0
      %799 = vmatpush1.msra.mxu0 0.0
      %800 = vmatprep.subr.mxu0 0.0
      %801 = vmatpush1.msra.mxu0 0.0
      %802 = vmatprep.subr.mxu0 0.0
      %803 = vmatpush1.msra.mxu0 0.0
      %804 = vmatprep.subr.mxu0 0.0
      %805 = vmatpush1.msra.mxu0 0.0
      %806 = vmatprep.subr.mxu0 0.0
      %807 = vmatpush1.msra.mxu0 0.0
      %808 = vmatprep.subr.mxu0 0.0
      %809 = vmatpush1.msra.mxu0 0.0
      %810 = vmatprep.subr.mxu0 0.0
      %811 = vmatpush1.msra.mxu0 0.0
      %812 = vmatprep.subr.mxu0 0.0
      %813 = vmatpush1.msra.mxu0 0.0
      %814 = vmatprep.subr.mxu0 0.0
      %815 = vmatpush1.msra.mxu0 0.0
      %816 = vmatprep.subr.mxu0 0.0
      %817 = vmatpush1.msra.mxu0 0.0
      %818 = vmatprep.subr.mxu0 0.0
      %819 = vmatpush1.msra.mxu0 0.0
      %820 = vmatprep.subr.mxu0 0.0
      %821 = vmatpush1.msra.mxu0 0.0
      %822 = vmatprep.subr.mxu0 0.0
      %823 = vmatpush1.msra.mxu0 0.0
      %824 = vmatprep.subr.mxu0 0.0
      %825 = vmatpush1.msra.mxu0 0.0
      %826 = vmatprep.subr.mxu0 0.0
      %827 = vmatpush1.msra.mxu0 0.0
      %828 = vmatprep.subr.mxu0 0.0
      %829 = vmatpush1.msra.mxu0 0.0
      %830 = vmatprep.subr.mxu0 0.0
      %831 = vmatpush1.msra.mxu0 0.0
      %832 = vmatprep.subr.mxu0 0.0
      %833 = vmatpush1.msra.mxu0 0.0
      %834 = vmatprep.subr.mxu0 0.0
      %835 = vmatpush1.msra.mxu0 0.0
      %836 = vmatprep.subr.mxu0 0.0
      %837 = vmatpush1.msra.mxu0 0.0
      %838 = vmatprep.subr.mxu0 0.0
      %839 = vmatpush1.msra.mxu0 0.0
      %840 = vmatprep.subr.mxu0 0.0
      %841 = vmatpush1.msra.mxu0 0.0
      %842 = vmatprep.subr.mxu0 0.0
      %843 = vmatpush1.msra.mxu0 0.0
      %844 = vmatprep.subr.mxu0 0.0
      %845 = vmatpush1.msra.mxu0 0.0
      %846 = vmatprep.subr.mxu0 0.0
      %847 = vmatpush1.msra.mxu0 0.0
      %848 = vmatprep.mubr.f32.mxu0 0.0
      %849 = vmatmul.mubr.f32.gmra.mrb[0].mxu0 %v737
      %v850 = vpop.f32.mrb[0].mxu0
      %v851 = vadd.f32 0.0, %v850
      %v852 = vpop.f32.mrb[0].mxu0
      %v853 = vadd.f32 0.0, %v852
      %854 = vmatprep.mubr.f32.mxu0 0.0
      %855 = vmatmul.mubr.f32.gmra.mrb[0].mxu0 %v740
      %v856 = vpop.f32.mrb[0].mxu0
      %v857 = vadd.f32 0.0, %v856
      %v858 = vpop.f32.mrb[0].mxu0
      %v859 = vadd.f32 0.0, %v858
      %860 = vmatprep.mubr.f32.mxu0 0.0
      %861 = vmatmul.mubr.f32.gmra.mrb[0].mxu0 %v743
      %v862 = vpop.f32.mrb[0].mxu0
      %v863 = vadd.f32 0.0, %v862
      %v864 = vpop.f32.mrb[0].mxu0
      %v865 = vadd.f32 0.0, %v864
      %866 = vmatprep.mubr.f32.mxu0 0.0
      %867 = vmatmul.mubr.f32.gmra.mrb[0].mxu0 %v746
      %v868 = vpop.f32.mrb[0].mxu0
      %v869 = vadd.f32 0.0, %v868
      %v870 = vpop.f32.mrb[0].mxu0
      %v871 = vadd.f32 0.0, %v870
      %872 = vmatprep.mubr.f32.mxu0 0.0
      %873 = vmatmul.mubr.f32.gmra.mrb[0].mxu0 %v749
      %v874 = vpop.f32.mrb[0].mxu0
      %v875 = vadd.f32 0.0, %v874
      %v876 = vpop.f32.mrb[0].mxu0
      %v877 = vadd.f32 0.0, %v876
      %878 = vmatprep.mubr.f32.mxu0 0.0
      %879 = vmatmul.mubr.f32.gmra.mrb[0].mxu0 %v752
      %v880 = vpop.f32.mrb[0].mxu0
      %v881 = vadd.f32 0.0, %v880
      %v882 = vpop.f32.mrb[0].mxu0
      %v883 = vadd.f32 0.0, %v882
      %884 = vmatprep.mubr.f32.mxu0 0.0
      %885 = vmatmul.mubr.f32.gmra.mrb[0].mxu0 %v755
      %v886 = vpop.f32.mrb[0].mxu0
      %v887 = vadd.f32 0.0, %v886
      %v888 = vpop.f32.mrb[0].mxu0
      %v889 = vadd.f32 0.0, %v888
      %890 = vmatprep.mubr.f32.mxu0 0.0
      %891 = vmatmul.mubr.f32.gmra.mrb[0].mxu0 %v758
      %v892 = vpop.f32.mrb[0].mxu0
      %v893 = vadd.f32 0.0, %v892
      %v894 = vpop.f32.mrb[0].mxu0
      %v895 = vadd.f32 0.0, %v894
      %896 = vmatprep.mubr.f32.mxu0 0.0
      %897 = vmatmul.mubr.f32.gmra.mrb[0].mxu0 %v761
      %v898 = vpop.f32.mrb[0].mxu0
      %v899 = vadd.f32 0.0, %v898
      %v900 = vpop.f32.mrb[0].mxu0
      %v901 = vadd.f32 0.0, %v900
      %902 = vmatprep.mubr.f32.mxu0 0.0
      %903 = vmatmul.mubr.f32.gmra.mrb[0].mxu0 %v764
      %v904 = vpop.f32.mrb[0].mxu0
      %v905 = vadd.f32 0.0, %v904
      %v906 = vpop.f32.mrb[0].mxu0
      %v907 = vadd.f32 0.0, %v906
      %908 = vmatprep.mubr.f32.mxu0 0.0
      %909 = vmatmul.mubr.f32.gmra.mrb[0].mxu0 %v767
      %v910 = vpop.f32.mrb[0].mxu0
      %v911 = vadd.f32 0.0, %v910
      %v912 = vpop.f32.mrb[0].mxu0
      %v913 = vadd.f32 0.0, %v912
      %914 = vmatprep.mubr.f32.mxu0 0.0
      %915 = vmatmul.mubr.f32.gmra.mrb[0].mxu0 %v770
      %v916 = vpop.f32.mrb[0].mxu0
      %v917 = vadd.f32 0.0, %v916
      %v918 = vpop.f32.mrb[0].mxu0
      %v919 = vadd.f32 0.0, %v918
      %920 = vmatprep.mubr.f32.mxu0 0.0
      %921 = vmatmul.mubr.f32.gmra.mrb[0].mxu0 %v773
      %v922 = vpop.f32.mrb[0].mxu0
      %v923 = vadd.f32 0.0, %v922
      %v924 = vpop.f32.mrb[0].mxu0
      %v925 = vadd.f32 0.0, %v924
      %926 = vmatprep.mubr.f32.mxu0 0.0
      %927 = vmatmul.mubr.f32.gmra.mrb[0].mxu0 %v776
      %v928 = vpop.f32.mrb[0].mxu0
      %v929 = vadd.f32 0.0, %v928
      %v930 = vpop.f32.mrb[0].mxu0
      %v931 = vadd.f32 0.0, %v930
      %932 = vmatprep.mubr.f32.mxu0 0.0
      %933 = vmatmul.mubr.f32.gmra.mrb[0].mxu0 %v779
      %v934 = vpop.f32.mrb[0].mxu0
      %v935 = vadd.f32 0.0, %v934
      %v936 = vpop.f32.mrb[0].mxu0
      %v937 = vadd.f32 0.0, %v936
      %938 = vmatprep.mubr.f32.mxu0 0.0
      %939 = vmatmul.mubr.f32.gmra.mrb[0].mxu0 %v782
      %v940 = vpop.f32.mrb[0].mxu0
      %v941 = vadd.f32 0.0, %v940
      %v942 = vpop.f32.mrb[0].mxu0
      %v943 = vadd.f32 0.0, %v942
      %944 = vdwg.mxu0
      %v945 = vadd.f32 %v607, %v851
      %v946 = vadd.f32 %v608, %v853
      %v947 = vadd.f32 %v609, %v851
      %v948 = vadd.f32 %v610, %v853
      %v949 = vadd.f32 %v611, %v851
      %v950 = vadd.f32 %v612, %v853
      %v951 = vadd.f32 %v613, %v851
      %v952 = vadd.f32 %v614, %v853
      %v953 = vadd.f32 %v615, %v857
      %v954 = vadd.f32 %v616, %v859
      %v955 = vadd.f32 %v617, %v857
      %v956 = vadd.f32 %v618, %v859
      %v957 = vadd.f32 %v619, %v857
      %v958 = vadd.f32 %v620, %v859
      %v959 = vadd.f32 %v621, %v857
      %v960 = vadd.f32 %v622, %v859
      %v961 = vadd.f32 %v623, %v863
      %v962 = vadd.f32 %v624, %v865
      %v963 = vadd.f32 %v625, %v863
      %v964 = vadd.f32 %v626, %v865
      %v965 = vadd.f32 %v627, %v863
      %v966 = vadd.f32 %v628, %v865
      %v967 = vadd.f32 %v629, %v863
      %v968 = vadd.f32 %v630, %v865
      %v969 = vadd.f32 %v631, %v869
      %v970 = vadd.f32 %v632, %v871
      %v971 = vadd.f32 %v633, %v869
      %v972 = vadd.f32 %v634, %v871
      %v973 = vadd.f32 %v635, %v869
      %v974 = vadd.f32 %v636, %v871
      %v975 = vadd.f32 %v637, %v869
      %v976 = vadd.f32 %v638, %v871
      %v977 = vadd.f32 %v639, %v875
      %v978 = vadd.f32 %v640, %v877
      %v979 = vadd.f32 %v641, %v875
      %v980 = vadd.f32 %v642, %v877
      %v981 = vadd.f32 %v643, %v875
      %v982 = vadd.f32 %v644, %v877
      %v983 = vadd.f32 %v645, %v875
      %v984 = vadd.f32 %v646, %v877
      %v985 = vadd.f32 %v647, %v881
      %v986 = vadd.f32 %v648, %v883
      %v987 = vadd.f32 %v649, %v881
      %v988 = vadd.f32 %v650, %v883
      %v989 = vadd.f32 %v651, %v881
      %v990 = vadd.f32 %v652, %v883
      %v991 = vadd.f32 %v653, %v881
      %v992 = vadd.f32 %v654, %v883
      %v993 = vadd.f32 %v655, %v887
      %v994 = vadd.f32 %v656, %v889
      %v995 = vadd.f32 %v657, %v887
      %v996 = vadd.f32 %v658, %v889
      %v997 = vadd.f32 %v659, %v887
      %v998 = vadd.f32 %v660, %v889
      %v999 = vadd.f32 %v661, %v887
      %v1000 = vadd.f32 %v662, %v889
      %v1001 = vadd.f32 %v663, %v893
      %v1002 = vadd.f32 %v664, %v895
      %v1003 = vadd.f32 %v665, %v893
      %v1004 = vadd.f32 %v666, %v895
      %v1005 = vadd.f32 %v667, %v893
      %v1006 = vadd.f32 %v668, %v895
      %v1007 = vadd.f32 %v669, %v893
      %v1008 = vadd.f32 %v670, %v895
      %v1009 = vadd.f32 %v671, %v899
      %v1010 = vadd.f32 %v672, %v901
      %v1011 = vadd.f32 %v673, %v899
      %v1012 = vadd.f32 %v674, %v901
      %v1013 = vadd.f32 %v675, %v899
      %v1014 = vadd.f32 %v676, %v901
      %v1015 = vadd.f32 %v677, %v899
      %v1016 = vadd.f32 %v678, %v901
      %v1017 = vadd.f32 %v679, %v905
      %v1018 = vadd.f32 %v680, %v907
      %v1019 = vadd.f32 %v681, %v905
      %v1020 = vadd.f32 %v682, %v907
      %v1021 = vadd.f32 %v683, %v905
      %v1022 = vadd.f32 %v684, %v907
      %v1023 = vadd.f32 %v685, %v905
      %v1024 = vadd.f32 %v686, %v907
      %v1025 = vadd.f32 %v687, %v911
      %v1026 = vadd.f32 %v688, %v913
      %v1027 = vadd.f32 %v689, %v911
      %v1028 = vadd.f32 %v690, %v913
      %v1029 = vadd.f32 %v691, %v911
      %v1030 = vadd.f32 %v692, %v913
      %v1031 = vadd.f32 %v693, %v911
      %v1032 = vadd.f32 %v694, %v913
      %v1033 = vadd.f32 %v695, %v917
      %v1034 = vadd.f32 %v696, %v919
      %v1035 = vadd.f32 %v697, %v917
      %v1036 = vadd.f32 %v698, %v919
      %v1037 = vadd.f32 %v699, %v917
      %v1038 = vadd.f32 %v700, %v919
      %v1039 = vadd.f32 %v701, %v917
      %v1040 = vadd.f32 %v702, %v919
      %v1041 = vadd.f32 %v703, %v923
      %v1042 = vadd.f32 %v704, %v925
      %v1043 = vadd.f32 %v705, %v923
      %v1044 = vadd.f32 %v706, %v925
      %v1045 = vadd.f32 %v707, %v923
      %v1046 = vadd.f32 %v708, %v925
      %v1047 = vadd.f32 %v709, %v923
      %v1048 = vadd.f32 %v710, %v925
      %v1049 = vadd.f32 %v711, %v929
      %v1050 = vadd.f32 %v712, %v931
      %v1051 = vadd.f32 %v713, %v929
      %v1052 = vadd.f32 %v714, %v931
      %v1053 = vadd.f32 %v715, %v929
      %v1054 = vadd.f32 %v716, %v931
      %v1055 = vadd.f32 %v717, %v929
      %v1056 = vadd.f32 %v718, %v931
      %v1057 = vadd.f32 %v719, %v935
      %v1058 = vadd.f32 %v720, %v937
      %v1059 = vadd.f32 %v721, %v935
      %v1060 = vadd.f32 %v722, %v937
      %v1061 = vadd.f32 %v723, %v935
      %v1062 = vadd.f32 %v724, %v937
      %v1063 = vadd.f32 %v725, %v935
      %v1064 = vadd.f32 %v726, %v937
      %v1065 = vadd.f32 %v727, %v941
      %v1066 = vadd.f32 %v728, %v943
      %v1067 = vadd.f32 %v729, %v941
      %v1068 = vadd.f32 %v730, %v943
      %v1069 = vadd.f32 %v731, %v941
      %v1070 = vadd.f32 %v732, %v943
      %v1071 = vadd.f32 %v733, %v941
      %v1072 = vadd.f32 %v734, %v943
      %1074 = vset.pattern.permute.xlu0 0
      %1075 = vperm.xlu0 %1074, %v423
      %v1076 = vpop.permute.xlu0 %1075
      %1079 = vset.pattern.permute.xlu0 0
      %1080 = vperm.xlu0 %1079, %v424
      %v1081 = vpop.permute.xlu0 %1080
      %1084 = vset.pattern.permute.xlu0 0
      %1085 = vperm.xlu0 %1084, %v425
      %v1086 = vpop.permute.xlu0 %1085
      %1089 = vset.pattern.permute.xlu0 0
      %1090 = vperm.xlu0 %1089, %v426
      %v1091 = vpop.permute.xlu0 %1090
      %1094 = vset.pattern.permute.xlu0 0
      %1095 = vperm.xlu0 %1094, %v427
      %v1096 = vpop.permute.xlu0 %1095
      %1099 = vset.pattern.permute.xlu0 0
      %1100 = vperm.xlu0 %1099, %v428
      %v1101 = vpop.permute.xlu0 %1100
      %1104 = vset.pattern.permute.xlu0 0
      %1105 = vperm.xlu0 %1104, %v429
      %v1106 = vpop.permute.xlu0 %1105
      %1109 = vset.pattern.permute.xlu0 0
      %1110 = vperm.xlu0 %1109, %v430
      %v1111 = vpop.permute.xlu0 %1110
      %1114 = vset.pattern.permute.xlu0 0
      %1115 = vperm.xlu0 %1114, %v431
      %v1116 = vpop.permute.xlu0 %1115
      %1119 = vset.pattern.permute.xlu0 0
      %1120 = vperm.xlu0 %1119, %v432
      %v1121 = vpop.permute.xlu0 %1120
      %1124 = vset.pattern.permute.xlu0 0
      %1125 = vperm.xlu0 %1124, %v433
      %v1126 = vpop.permute.xlu0 %1125
      %1129 = vset.pattern.permute.xlu0 0
      %1130 = vperm.xlu0 %1129, %v434
      %v1131 = vpop.permute.xlu0 %1130
      %1134 = vset.pattern.permute.xlu0 0
      %1135 = vperm.xlu0 %1134, %v435
      %v1136 = vpop.permute.xlu0 %1135
      %1139 = vset.pattern.permute.xlu0 0
      %1140 = vperm.xlu0 %1139, %v436
      %v1141 = vpop.permute.xlu0 %1140
      %1144 = vset.pattern.permute.xlu0 0
      %1145 = vperm.xlu0 %1144, %v437
      %v1146 = vpop.permute.xlu0 %1145
      %1149 = vset.pattern.permute.xlu0 0
      %1150 = vperm.xlu0 %1149, %v438
      %v1151 = vpop.permute.xlu0 %1150
      %v1153 = vadd.f32 %v945, %v1076
      %v1154 = vadd.f32 %v946, %v1076
      %v1155 = vadd.f32 %v947, %v1076
      %v1156 = vadd.f32 %v948, %v1076
      %v1157 = vadd.f32 %v949, %v1076
      %v1158 = vadd.f32 %v950, %v1076
      %v1159 = vadd.f32 %v951, %v1076
      %v1160 = vadd.f32 %v952, %v1076
      %v1161 = vadd.f32 %v953, %v1081
      %v1162 = vadd.f32 %v954, %v1081
      %v1163 = vadd.f32 %v955, %v1081
      %v1164 = vadd.f32 %v956, %v1081
      %v1165 = vadd.f32 %v957, %v1081
      %v1166 = vadd.f32 %v958, %v1081
      %v1167 = vadd.f32 %v959, %v1081
      %v1168 = vadd.f32 %v960, %v1081
      %v1169 = vadd.f32 %v961, %v1086
      %v1170 = vadd.f32 %v962, %v1086
      %v1171 = vadd.f32 %v963, %v1086
      %v1172 = vadd.f32 %v964, %v1086
      %v1173 = vadd.f32 %v965, %v1086
      %v1174 = vadd.f32 %v966, %v1086
      %v1175 = vadd.f32 %v967, %v1086
      %v1176 = vadd.f32 %v968, %v1086
      %v1177 = vadd.f32 %v969, %v1091
      %v1178 = vadd.f32 %v970, %v1091
      %v1179 = vadd.f32 %v971, %v1091
      %v1180 = vadd.f32 %v972, %v1091
      %v1181 = vadd.f32 %v973, %v1091
      %v1182 = vadd.f32 %v974, %v1091
      %v1183 = vadd.f32 %v975, %v1091
      %v1184 = vadd.f32 %v976, %v1091
      %v1185 = vadd.f32 %v977, %v1096
      %v1186 = vadd.f32 %v978, %v1096
      %v1187 = vadd.f32 %v979, %v1096
      %v1188 = vadd.f32 %v980, %v1096
      %v1189 = vadd.f32 %v981, %v1096
      %v1190 = vadd.f32 %v982, %v1096
      %v1191 = vadd.f32 %v983, %v1096
      %v1192 = vadd.f32 %v984, %v1096
      %v1193 = vadd.f32 %v985, %v1101
      %v1194 = vadd.f32 %v986, %v1101
      %v1195 = vadd.f32 %v987, %v1101
      %v1196 = vadd.f32 %v988, %v1101
      %v1197 = vadd.f32 %v989, %v1101
      %v1198 = vadd.f32 %v990, %v1101
      %v1199 = vadd.f32 %v991, %v1101
      %v1200 = vadd.f32 %v992, %v1101
      %v1201 = vadd.f32 %v993, %v1106
      %v1202 = vadd.f32 %v994, %v1106
      %v1203 = vadd.f32 %v995, %v1106
      %v1204 = vadd.f32 %v996, %v1106
      %v1205 = vadd.f32 %v997, %v1106
      %v1206 = vadd.f32 %v998, %v1106
      %v1207 = vadd.f32 %v999, %v1106
      %v1208 = vadd.f32 %v1000, %v1106
      %v1209 = vadd.f32 %v1001, %v1111
      %v1210 = vadd.f32 %v1002, %v1111
      %v1211 = vadd.f32 %v1003, %v1111
      %v1212 = vadd.f32 %v1004, %v1111
      %v1213 = vadd.f32 %v1005, %v1111
      %v1214 = vadd.f32 %v1006, %v1111
      %v1215 = vadd.f32 %v1007, %v1111
      %v1216 = vadd.f32 %v1008, %v1111
      %v1217 = vadd.f32 %v1009, %v1116
      %v1218 = vadd.f32 %v1010, %v1116
      %v1219 = vadd.f32 %v1011, %v1116
      %v1220 = vadd.f32 %v1012, %v1116
      %v1221 = vadd.f32 %v1013, %v1116
      %v1222 = vadd.f32 %v1014, %v1116
      %v1223 = vadd.f32 %v1015, %v1116
      %v1224 = vadd.f32 %v1016, %v1116
      %v1225 = vadd.f32 %v1017, %v1121
      %v1226 = vadd.f32 %v1018, %v1121
      %v1227 = vadd.f32 %v1019, %v1121
      %v1228 = vadd.f32 %v1020, %v1121
      %v1229 = vadd.f32 %v1021, %v1121
      %v1230 = vadd.f32 %v1022, %v1121
      %v1231 = vadd.f32 %v1023, %v1121
      %v1232 = vadd.f32 %v1024, %v1121
      %v1233 = vadd.f32 %v1025, %v1126
      %v1234 = vadd.f32 %v1026, %v1126
      %v1235 = vadd.f32 %v1027, %v1126
      %v1236 = vadd.f32 %v1028, %v1126
      %v1237 = vadd.f32 %v1029, %v1126
      %v1238 = vadd.f32 %v1030, %v1126
      %v1239 = vadd.f32 %v1031, %v1126
      %v1240 = vadd.f32 %v1032, %v1126
      %v1241 = vadd.f32 %v1033, %v1131
      %v1242 = vadd.f32 %v1034, %v1131
      %v1243 = vadd.f32 %v1035, %v1131
      %v1244 = vadd.f32 %v1036, %v1131
      %v1245 = vadd.f32 %v1037, %v1131
      %v1246 = vadd.f32 %v1038, %v1131
      %v1247 = vadd.f32 %v1039, %v1131
      %v1248 = vadd.f32 %v1040, %v1131
      %v1249 = vadd.f32 %v1041, %v1136
      %v1250 = vadd.f32 %v1042, %v1136
      %v1251 = vadd.f32 %v1043, %v1136
      %v1252 = vadd.f32 %v1044, %v1136
      %v1253 = vadd.f32 %v1045, %v1136
      %v1254 = vadd.f32 %v1046, %v1136
      %v1255 = vadd.f32 %v1047, %v1136
      %v1256 = vadd.f32 %v1048, %v1136
      %v1257 = vadd.f32 %v1049, %v1141
      %v1258 = vadd.f32 %v1050, %v1141
      %v1259 = vadd.f32 %v1051, %v1141
      %v1260 = vadd.f32 %v1052, %v1141
      %v1261 = vadd.f32 %v1053, %v1141
      %v1262 = vadd.f32 %v1054, %v1141
      %v1263 = vadd.f32 %v1055, %v1141
      %v1264 = vadd.f32 %v1056, %v1141
      %v1265 = vadd.f32 %v1057, %v1146
      %v1266 = vadd.f32 %v1058, %v1146
      %v1267 = vadd.f32 %v1059, %v1146
      %v1268 = vadd.f32 %v1060, %v1146
      %v1269 = vadd.f32 %v1061, %v1146
      %v1270 = vadd.f32 %v1062, %v1146
      %v1271 = vadd.f32 %v1063, %v1146
      %v1272 = vadd.f32 %v1064, %v1146
      %v1273 = vadd.f32 %v1065, %v1151
      %v1274 = vadd.f32 %v1066, %v1151
      %v1275 = vadd.f32 %v1067, %v1151
      %v1276 = vadd.f32 %v1068, %v1151
      %v1277 = vadd.f32 %v1069, %v1151
      %v1278 = vadd.f32 %v1070, %v1151
      %v1279 = vadd.f32 %v1071, %v1151
      %v1280 = vadd.f32 %v1072, %v1151
      %v1281 = vxor.u32 %v1153, 2147483648
      %v1282 = vxor.u32 %v1154, 2147483648
      %v1283 = vxor.u32 %v1155, 2147483648
      %v1284 = vxor.u32 %v1156, 2147483648
      %v1285 = vxor.u32 %v1157, 2147483648
      %v1286 = vxor.u32 %v1158, 2147483648
      %v1287 = vxor.u32 %v1159, 2147483648
      %v1288 = vxor.u32 %v1160, 2147483648
      %v1289 = vxor.u32 %v1161, 2147483648
      %v1290 = vxor.u32 %v1162, 2147483648
      %v1291 = vxor.u32 %v1163, 2147483648
      %v1292 = vxor.u32 %v1164, 2147483648
      %v1293 = vxor.u32 %v1165, 2147483648
      %v1294 = vxor.u32 %v1166, 2147483648
      %v1295 = vxor.u32 %v1167, 2147483648
      %v1296 = vxor.u32 %v1168, 2147483648
      %v1297 = vxor.u32 %v1169, 2147483648
      %v1298 = vxor.u32 %v1170, 2147483648
      %v1299 = vxor.u32 %v1171, 2147483648
      %v1300 = vxor.u32 %v1172, 2147483648
      %v1301 = vxor.u32 %v1173, 2147483648
      %v1302 = vxor.u32 %v1174, 2147483648
      %v1303 = vxor.u32 %v1175, 2147483648
      %v1304 = vxor.u32 %v1176, 2147483648
      %v1305 = vxor.u32 %v1177, 2147483648
      %v1306 = vxor.u32 %v1178, 2147483648
      %v1307 = vxor.u32 %v1179, 2147483648
      %v1308 = vxor.u32 %v1180, 2147483648
      %v1309 = vxor.u32 %v1181, 2147483648
      %v1310 = vxor.u32 %v1182, 2147483648
      %v1311 = vxor.u32 %v1183, 2147483648
      %v1312 = vxor.u32 %v1184, 2147483648
      %v1313 = vmul.f32 %v1281, 1.442695
      %v1314 = vpow.pop %v1313
      %v1315 = vmul.f32 %v1282, 1.442695
      %v1316 = vpow.pop %v1315
      %v1317 = vmul.f32 %v1283, 1.442695
      %v1318 = vpow.pop %v1317
      %v1319 = vmul.f32 %v1284, 1.442695
      %v1320 = vpow.pop %v1319
      %v1321 = vmul.f32 %v1285, 1.442695
      %v1322 = vpow.pop %v1321
      %v1323 = vmul.f32 %v1286, 1.442695
      %v1324 = vpow.pop %v1323
      %v1325 = vmul.f32 %v1287, 1.442695
      %v1326 = vpow.pop %v1325
      %v1327 = vmul.f32 %v1288, 1.442695
      %v1328 = vpow.pop %v1327
      %v1329 = vmul.f32 %v1289, 1.442695
      %v1330 = vpow.pop %v1329
      %v1331 = vmul.f32 %v1290, 1.442695
      %v1332 = vpow.pop %v1331
      %v1333 = vmul.f32 %v1291, 1.442695
      %v1334 = vpow.pop %v1333
      %v1335 = vmul.f32 %v1292, 1.442695
      %v1336 = vpow.pop %v1335
      %v1337 = vmul.f32 %v1293, 1.442695
      %v1338 = vpow.pop %v1337
      %v1339 = vmul.f32 %v1294, 1.442695
      %v1340 = vpow.pop %v1339
      %v1341 = vmul.f32 %v1295, 1.442695
      %v1342 = vpow.pop %v1341
      %v1343 = vmul.f32 %v1296, 1.442695
      %v1344 = vpow.pop %v1343
      %v1345 = vmul.f32 %v1297, 1.442695
      %v1346 = vpow.pop %v1345
      %v1347 = vmul.f32 %v1298, 1.442695
      %v1348 = vpow.pop %v1347
      %v1349 = vmul.f32 %v1299, 1.442695
      %v1350 = vpow.pop %v1349
      %v1351 = vmul.f32 %v1300, 1.442695
      %v1352 = vpow.pop %v1351
      %v1353 = vmul.f32 %v1301, 1.442695
      %v1354 = vpow.pop %v1353
      %v1355 = vmul.f32 %v1302, 1.442695
      %v1356 = vpow.pop %v1355
      %v1357 = vmul.f32 %v1303, 1.442695
      %v1358 = vpow.pop %v1357
      %v1359 = vmul.f32 %v1304, 1.442695
      %v1360 = vpow.pop %v1359
      %v1361 = vmul.f32 %v1305, 1.442695
      %v1362 = vpow.pop %v1361
      %v1363 = vmul.f32 %v1306, 1.442695
      %v1364 = vpow.pop %v1363
      %v1365 = vmul.f32 %v1307, 1.442695
      %v1366 = vpow.pop %v1365
      %v1367 = vmul.f32 %v1308, 1.442695
      %v1368 = vpow.pop %v1367
      %v1369 = vmul.f32 %v1309, 1.442695
      %v1370 = vpow.pop %v1369
      %v1371 = vmul.f32 %v1310, 1.442695
      %v1372 = vpow.pop %v1371
      %v1373 = vmul.f32 %v1311, 1.442695
      %v1374 = vpow.pop %v1373
      %v1375 = vmul.f32 %v1312, 1.442695
      %v1376 = vpow.pop %v1375
      %v1377 = vadd.f32 %v1314, 1.0
      %v1378 = vadd.f32 %v1316, 1.0
      %v1379 = vadd.f32 %v1318, 1.0
      %v1380 = vadd.f32 %v1320, 1.0
      %v1381 = vadd.f32 %v1322, 1.0
      %v1382 = vadd.f32 %v1324, 1.0
      %v1383 = vadd.f32 %v1326, 1.0
      %v1384 = vadd.f32 %v1328, 1.0
      %v1385 = vadd.f32 %v1330, 1.0
      %v1386 = vadd.f32 %v1332, 1.0
      %v1387 = vadd.f32 %v1334, 1.0
      %v1388 = vadd.f32 %v1336, 1.0
      %v1389 = vadd.f32 %v1338, 1.0
      %v1390 = vadd.f32 %v1340, 1.0
      %v1391 = vadd.f32 %v1342, 1.0
      %v1392 = vadd.f32 %v1344, 1.0
      %v1393 = vadd.f32 %v1346, 1.0
      %v1394 = vadd.f32 %v1348, 1.0
      %v1395 = vadd.f32 %v1350, 1.0
      %v1396 = vadd.f32 %v1352, 1.0
      %v1397 = vadd.f32 %v1354, 1.0
      %v1398 = vadd.f32 %v1356, 1.0
      %v1399 = vadd.f32 %v1358, 1.0
      %v1400 = vadd.f32 %v1360, 1.0
      %v1401 = vadd.f32 %v1362, 1.0
      %v1402 = vadd.f32 %v1364, 1.0
      %v1403 = vadd.f32 %v1366, 1.0
      %v1404 = vadd.f32 %v1368, 1.0
      %v1405 = vadd.f32 %v1370, 1.0
      %v1406 = vadd.f32 %v1372, 1.0
      %v1407 = vadd.f32 %v1374, 1.0
      %v1408 = vadd.f32 %v1376, 1.0
      %v1409 = vrcp.pop %v1377
      %v1410 = vmul.f32 1.0, %v1409
      %v1411 = vrcp.pop %v1378
      %v1412 = vmul.f32 1.0, %v1411
      %v1413 = vrcp.pop %v1379
      %v1414 = vmul.f32 1.0, %v1413
      %v1415 = vrcp.pop %v1380
      %v1416 = vmul.f32 1.0, %v1415
      %v1417 = vrcp.pop %v1381
      %v1418 = vmul.f32 1.0, %v1417
      %v1419 = vrcp.pop %v1382
      %v1420 = vmul.f32 1.0, %v1419
      %v1421 = vrcp.pop %v1383
      %v1422 = vmul.f32 1.0, %v1421
      %v1423 = vrcp.pop %v1384
      %v1424 = vmul.f32 1.0, %v1423
      %v1425 = vrcp.pop %v1385
      %v1426 = vmul.f32 1.0, %v1425
      %v1427 = vrcp.pop %v1386
      %v1428 = vmul.f32 1.0, %v1427
      %v1429 = vrcp.pop %v1387
      %v1430 = vmul.f32 1.0, %v1429
      %v1431 = vrcp.pop %v1388
      %v1432 = vmul.f32 1.0, %v1431
      %v1433 = vrcp.pop %v1389
      %v1434 = vmul.f32 1.0, %v1433
      %v1435 = vrcp.pop %v1390
      %v1436 = vmul.f32 1.0, %v1435
      %v1437 = vrcp.pop %v1391
      %v1438 = vmul.f32 1.0, %v1437
      %v1439 = vrcp.pop %v1392
      %v1440 = vmul.f32 1.0, %v1439
      %v1441 = vrcp.pop %v1393
      %v1442 = vmul.f32 1.0, %v1441
      %v1443 = vrcp.pop %v1394
      %v1444 = vmul.f32 1.0, %v1443
      %v1445 = vrcp.pop %v1395
      %v1446 = vmul.f32 1.0, %v1445
      %v1447 = vrcp.pop %v1396
      %v1448 = vmul.f32 1.0, %v1447
      %v1449 = vrcp.pop %v1397
      %v1450 = vmul.f32 1.0, %v1449
      %v1451 = vrcp.pop %v1398
      %v1452 = vmul.f32 1.0, %v1451
      %v1453 = vrcp.pop %v1399
      %v1454 = vmul.f32 1.0, %v1453
      %v1455 = vrcp.pop %v1400
      %v1456 = vmul.f32 1.0, %v1455
      %v1457 = vrcp.pop %v1401
      %v1458 = vmul.f32 1.0, %v1457
      %v1459 = vrcp.pop %v1402
      %v1460 = vmul.f32 1.0, %v1459
      %v1461 = vrcp.pop %v1403
      %v1462 = vmul.f32 1.0, %v1461
      %v1463 = vrcp.pop %v1404
      %v1464 = vmul.f32 1.0, %v1463
      %v1465 = vrcp.pop %v1405
      %v1466 = vmul.f32 1.0, %v1465
      %v1467 = vrcp.pop %v1406
      %v1468 = vmul.f32 1.0, %v1467
      %v1469 = vrcp.pop %v1407
      %v1470 = vmul.f32 1.0, %v1469
      %v1471 = vrcp.pop %v1408
      %v1472 = vmul.f32 1.0, %v1471
      %v1473 = vxor.u32 %v1185, 2147483648
      %v1474 = vxor.u32 %v1186, 2147483648
      %v1475 = vxor.u32 %v1187, 2147483648
      %v1476 = vxor.u32 %v1188, 2147483648
      %v1477 = vxor.u32 %v1189, 2147483648
      %v1478 = vxor.u32 %v1190, 2147483648
      %v1479 = vxor.u32 %v1191, 2147483648
      %v1480 = vxor.u32 %v1192, 2147483648
      %v1481 = vxor.u32 %v1193, 2147483648
      %v1482 = vxor.u32 %v1194, 2147483648
      %v1483 = vxor.u32 %v1195, 2147483648
      %v1484 = vxor.u32 %v1196, 2147483648
      %v1485 = vxor.u32 %v1197, 2147483648
      %v1486 = vxor.u32 %v1198, 2147483648
      %v1487 = vxor.u32 %v1199, 2147483648
      %v1488 = vxor.u32 %v1200, 2147483648
      %v1489 = vxor.u32 %v1201, 2147483648
      %v1490 = vxor.u32 %v1202, 2147483648
      %v1491 = vxor.u32 %v1203, 2147483648
      %v1492 = vxor.u32 %v1204, 2147483648
      %v1493 = vxor.u32 %v1205, 2147483648
      %v1494 = vxor.u32 %v1206, 2147483648
      %v1495 = vxor.u32 %v1207, 2147483648
      %v1496 = vxor.u32 %v1208, 2147483648
      %v1497 = vxor.u32 %v1209, 2147483648
      %v1498 = vxor.u32 %v1210, 2147483648
      %v1499 = vxor.u32 %v1211, 2147483648
      %v1500 = vxor.u32 %v1212, 2147483648
      %v1501 = vxor.u32 %v1213, 2147483648
      %v1502 = vxor.u32 %v1214, 2147483648
      %v1503 = vxor.u32 %v1215, 2147483648
      %v1504 = vxor.u32 %v1216, 2147483648
      %v1505 = vmul.f32 %v1473, 1.442695
      %v1506 = vpow.pop %v1505
      %v1507 = vmul.f32 %v1474, 1.442695
      %v1508 = vpow.pop %v1507
      %v1509 = vmul.f32 %v1475, 1.442695
      %v1510 = vpow.pop %v1509
      %v1511 = vmul.f32 %v1476, 1.442695
      %v1512 = vpow.pop %v1511
      %v1513 = vmul.f32 %v1477, 1.442695
      %v1514 = vpow.pop %v1513
      %v1515 = vmul.f32 %v1478, 1.442695
      %v1516 = vpow.pop %v1515
      %v1517 = vmul.f32 %v1479, 1.442695
      %v1518 = vpow.pop %v1517
      %v1519 = vmul.f32 %v1480, 1.442695
      %v1520 = vpow.pop %v1519
      %v1521 = vmul.f32 %v1481, 1.442695
      %v1522 = vpow.pop %v1521
      %v1523 = vmul.f32 %v1482, 1.442695
      %v1524 = vpow.pop %v1523
      %v1525 = vmul.f32 %v1483, 1.442695
      %v1526 = vpow.pop %v1525
      %v1527 = vmul.f32 %v1484, 1.442695
      %v1528 = vpow.pop %v1527
      %v1529 = vmul.f32 %v1485, 1.442695
      %v1530 = vpow.pop %v1529
      %v1531 = vmul.f32 %v1486, 1.442695
      %v1532 = vpow.pop %v1531
      %v1533 = vmul.f32 %v1487, 1.442695
      %v1534 = vpow.pop %v1533
      %v1535 = vmul.f32 %v1488, 1.442695
      %v1536 = vpow.pop %v1535
      %v1537 = vmul.f32 %v1489, 1.442695
      %v1538 = vpow.pop %v1537
      %v1539 = vmul.f32 %v1490, 1.442695
      %v1540 = vpow.pop %v1539
      %v1541 = vmul.f32 %v1491, 1.442695
      %v1542 = vpow.pop %v1541
      %v1543 = vmul.f32 %v1492, 1.442695
      %v1544 = vpow.pop %v1543
      %v1545 = vmul.f32 %v1493, 1.442695
      %v1546 = vpow.pop %v1545
      %v1547 = vmul.f32 %v1494, 1.442695
      %v1548 = vpow.pop %v1547
      %v1549 = vmul.f32 %v1495, 1.442695
      %v1550 = vpow.pop %v1549
      %v1551 = vmul.f32 %v1496, 1.442695
      %v1552 = vpow.pop %v1551
      %v1553 = vmul.f32 %v1497, 1.442695
      %v1554 = vpow.pop %v1553
      %v1555 = vmul.f32 %v1498, 1.442695
      %v1556 = vpow.pop %v1555
      %v1557 = vmul.f32 %v1499, 1.442695
      %v1558 = vpow.pop %v1557
      %v1559 = vmul.f32 %v1500, 1.442695
      %v1560 = vpow.pop %v1559
      %v1561 = vmul.f32 %v1501, 1.442695
      %v1562 = vpow.pop %v1561
      %v1563 = vmul.f32 %v1502, 1.442695
      %v1564 = vpow.pop %v1563
      %v1565 = vmul.f32 %v1503, 1.442695
      %v1566 = vpow.pop %v1565
      %v1567 = vmul.f32 %v1504, 1.442695
      %v1568 = vpow.pop %v1567
      %v1569 = vadd.f32 %v1506, 1.0
      %v1570 = vadd.f32 %v1508, 1.0
      %v1571 = vadd.f32 %v1510, 1.0
      %v1572 = vadd.f32 %v1512, 1.0
      %v1573 = vadd.f32 %v1514, 1.0
      %v1574 = vadd.f32 %v1516, 1.0
      %v1575 = vadd.f32 %v1518, 1.0
      %v1576 = vadd.f32 %v1520, 1.0
      %v1577 = vadd.f32 %v1522, 1.0
      %v1578 = vadd.f32 %v1524, 1.0
      %v1579 = vadd.f32 %v1526, 1.0
      %v1580 = vadd.f32 %v1528, 1.0
      %v1581 = vadd.f32 %v1530, 1.0
      %v1582 = vadd.f32 %v1532, 1.0
      %v1583 = vadd.f32 %v1534, 1.0
      %v1584 = vadd.f32 %v1536, 1.0
      %v1585 = vadd.f32 %v1538, 1.0
      %v1586 = vadd.f32 %v1540, 1.0
      %v1587 = vadd.f32 %v1542, 1.0
      %v1588 = vadd.f32 %v1544, 1.0
      %v1589 = vadd.f32 %v1546, 1.0
      %v1590 = vadd.f32 %v1548, 1.0
      %v1591 = vadd.f32 %v1550, 1.0
      %v1592 = vadd.f32 %v1552, 1.0
      %v1593 = vadd.f32 %v1554, 1.0
      %v1594 = vadd.f32 %v1556, 1.0
      %v1595 = vadd.f32 %v1558, 1.0
      %v1596 = vadd.f32 %v1560, 1.0
      %v1597 = vadd.f32 %v1562, 1.0
      %v1598 = vadd.f32 %v1564, 1.0
      %v1599 = vadd.f32 %v1566, 1.0
      %v1600 = vadd.f32 %v1568, 1.0
      %v1601 = vrcp.pop %v1569
      %v1602 = vmul.f32 1.0, %v1601
      %v1603 = vrcp.pop %v1570
      %v1604 = vmul.f32 1.0, %v1603
      %v1605 = vrcp.pop %v1571
      %v1606 = vmul.f32 1.0, %v1605
      %v1607 = vrcp.pop %v1572
      %v1608 = vmul.f32 1.0, %v1607
      %v1609 = vrcp.pop %v1573
      %v1610 = vmul.f32 1.0, %v1609
      %v1611 = vrcp.pop %v1574
      %v1612 = vmul.f32 1.0, %v1611
      %v1613 = vrcp.pop %v1575
      %v1614 = vmul.f32 1.0, %v1613
      %v1615 = vrcp.pop %v1576
      %v1616 = vmul.f32 1.0, %v1615
      %v1617 = vrcp.pop %v1577
      %v1618 = vmul.f32 1.0, %v1617
      %v1619 = vrcp.pop %v1578
      %v1620 = vmul.f32 1.0, %v1619
      %v1621 = vrcp.pop %v1579
      %v1622 = vmul.f32 1.0, %v1621
      %v1623 = vrcp.pop %v1580
      %v1624 = vmul.f32 1.0, %v1623
      %v1625 = vrcp.pop %v1581
      %v1626 = vmul.f32 1.0, %v1625
      %v1627 = vrcp.pop %v1582
      %v1628 = vmul.f32 1.0, %v1627
      %v1629 = vrcp.pop %v1583
      %v1630 = vmul.f32 1.0, %v1629
      %v1631 = vrcp.pop %v1584
      %v1632 = vmul.f32 1.0, %v1631
      %v1633 = vrcp.pop %v1585
      %v1634 = vmul.f32 1.0, %v1633
      %v1635 = vrcp.pop %v1586
      %v1636 = vmul.f32 1.0, %v1635
      %v1637 = vrcp.pop %v1587
      %v1638 = vmul.f32 1.0, %v1637
      %v1639 = vrcp.pop %v1588
      %v1640 = vmul.f32 1.0, %v1639
      %v1641 = vrcp.pop %v1589
      %v1642 = vmul.f32 1.0, %v1641
      %v1643 = vrcp.pop %v1590
      %v1644 = vmul.f32 1.0, %v1643
      %v1645 = vrcp.pop %v1591
      %v1646 = vmul.f32 1.0, %v1645
      %v1647 = vrcp.pop %v1592
      %v1648 = vmul.f32 1.0, %v1647
      %v1649 = vrcp.pop %v1593
      %v1650 = vmul.f32 1.0, %v1649
      %v1651 = vrcp.pop %v1594
      %v1652 = vmul.f32 1.0, %v1651
      %v1653 = vrcp.pop %v1595
      %v1654 = vmul.f32 1.0, %v1653
      %v1655 = vrcp.pop %v1596
      %v1656 = vmul.f32 1.0, %v1655
      %v1657 = vrcp.pop %v1597
      %v1658 = vmul.f32 1.0, %v1657
      %v1659 = vrcp.pop %v1598
      %v1660 = vmul.f32 1.0, %v1659
      %v1661 = vrcp.pop %v1599
      %v1662 = vmul.f32 1.0, %v1661
      %v1663 = vrcp.pop %v1600
      %v1664 = vmul.f32 1.0, %v1663
      %v1665 = vtanh.pop %v1217
      %v1666 = vtanh.pop %v1218
      %v1667 = vtanh.pop %v1219
      %v1668 = vtanh.pop %v1220
      %v1669 = vtanh.pop %v1221
      %v1670 = vtanh.pop %v1222
      %v1671 = vtanh.pop %v1223
      %v1672 = vtanh.pop %v1224
      %v1673 = vtanh.pop %v1225
      %v1674 = vtanh.pop %v1226
      %v1675 = vtanh.pop %v1227
      %v1676 = vtanh.pop %v1228
      %v1677 = vtanh.pop %v1229
      %v1678 = vtanh.pop %v1230
      %v1679 = vtanh.pop %v1231
      %v1680 = vtanh.pop %v1232
      %v1681 = vtanh.pop %v1233
      %v1682 = vtanh.pop %v1234
      %v1683 = vtanh.pop %v1235
      %v1684 = vtanh.pop %v1236
      %v1685 = vtanh.pop %v1237
      %v1686 = vtanh.pop %v1238
      %v1687 = vtanh.pop %v1239
      %v1688 = vtanh.pop %v1240
      %v1689 = vtanh.pop %v1241
      %v1690 = vtanh.pop %v1242
      %v1691 = vtanh.pop %v1243
      %v1692 = vtanh.pop %v1244
      %v1693 = vtanh.pop %v1245
      %v1694 = vtanh.pop %v1246
      %v1695 = vtanh.pop %v1247
      %v1696 = vtanh.pop %v1248
      %v1697 = vxor.u32 %v1249, 2147483648
      %v1698 = vxor.u32 %v1250, 2147483648
      %v1699 = vxor.u32 %v1251, 2147483648
      %v1700 = vxor.u32 %v1252, 2147483648
      %v1701 = vxor.u32 %v1253, 2147483648
      %v1702 = vxor.u32 %v1254, 2147483648
      %v1703 = vxor.u32 %v1255, 2147483648
      %v1704 = vxor.u32 %v1256, 2147483648
      %v1705 = vxor.u32 %v1257, 2147483648
      %v1706 = vxor.u32 %v1258, 2147483648
      %v1707 = vxor.u32 %v1259, 2147483648
      %v1708 = vxor.u32 %v1260, 2147483648
      %v1709 = vxor.u32 %v1261, 2147483648
      %v1710 = vxor.u32 %v1262, 2147483648
      %v1711 = vxor.u32 %v1263, 2147483648
      %v1712 = vxor.u32 %v1264, 2147483648
      %v1713 = vxor.u32 %v1265, 2147483648
      %v1714 = vxor.u32 %v1266, 2147483648
      %v1715 = vxor.u32 %v1267, 2147483648
      %v1716 = vxor.u32 %v1268, 2147483648
      %v1717 = vxor.u32 %v1269, 2147483648
      %v1718 = vxor.u32 %v1270, 2147483648
      %v1719 = vxor.u32 %v1271, 2147483648
      %v1720 = vxor.u32 %v1272, 2147483648
      %v1721 = vxor.u32 %v1273, 2147483648
      %v1722 = vxor.u32 %v1274, 2147483648
      %v1723 = vxor.u32 %v1275, 2147483648
      %v1724 = vxor.u32 %v1276, 2147483648
      %v1725 = vxor.u32 %v1277, 2147483648
      %v1726 = vxor.u32 %v1278, 2147483648
      %v1727 = vxor.u32 %v1279, 2147483648
      %v1728 = vxor.u32 %v1280, 2147483648
      %v1729 = vmul.f32 %v1697, 1.442695
      %v1730 = vpow.pop %v1729
      %v1731 = vmul.f32 %v1698, 1.442695
      %v1732 = vpow.pop %v1731
      %v1733 = vmul.f32 %v1699, 1.442695
      %v1734 = vpow.pop %v1733
      %v1735 = vmul.f32 %v1700, 1.442695
      %v1736 = vpow.pop %v1735
      %v1737 = vmul.f32 %v1701, 1.442695
      %v1738 = vpow.pop %v1737
      %v1739 = vmul.f32 %v1702, 1.442695
      %v1740 = vpow.pop %v1739
      %v1741 = vmul.f32 %v1703, 1.442695
      %v1742 = vpow.pop %v1741
      %v1743 = vmul.f32 %v1704, 1.442695
      %v1744 = vpow.pop %v1743
      %v1745 = vmul.f32 %v1705, 1.442695
      %v1746 = vpow.pop %v1745
      %v1747 = vmul.f32 %v1706, 1.442695
      %v1748 = vpow.pop %v1747
      %v1749 = vmul.f32 %v1707, 1.442695
      %v1750 = vpow.pop %v1749
      %v1751 = vmul.f32 %v1708, 1.442695
      %v1752 = vpow.pop %v1751
      %v1753 = vmul.f32 %v1709, 1.442695
      %v1754 = vpow.pop %v1753
      %v1755 = vmul.f32 %v1710, 1.442695
      %v1756 = vpow.pop %v1755
      %v1757 = vmul.f32 %v1711, 1.442695
      %v1758 = vpow.pop %v1757
      %v1759 = vmul.f32 %v1712, 1.442695
      %v1760 = vpow.pop %v1759
      %v1761 = vmul.f32 %v1713, 1.442695
      %v1762 = vpow.pop %v1761
      %v1763 = vmul.f32 %v1714, 1.442695
      %v1764 = vpow.pop %v1763
      %v1765 = vmul.f32 %v1715, 1.442695
      %v1766 = vpow.pop %v1765
      %v1767 = vmul.f32 %v1716, 1.442695
      %v1768 = vpow.pop %v1767
      %v1769 = vmul.f32 %v1717, 1.442695
      %v1770 = vpow.pop %v1769
      %v1771 = vmul.f32 %v1718, 1.442695
      %v1772 = vpow.pop %v1771
      %v1773 = vmul.f32 %v1719, 1.442695
      %v1774 = vpow.pop %v1773
      %v1775 = vmul.f32 %v1720, 1.442695
      %v1776 = vpow.pop %v1775
      %v1777 = vmul.f32 %v1721, 1.442695
      %v1778 = vpow.pop %v1777
      %v1779 = vmul.f32 %v1722, 1.442695
      %v1780 = vpow.pop %v1779
      %v1781 = vmul.f32 %v1723, 1.442695
      %v1782 = vpow.pop %v1781
      %v1783 = vmul.f32 %v1724, 1.442695
      %v1784 = vpow.pop %v1783
      %v1785 = vmul.f32 %v1725, 1.442695
      %v1786 = vpow.pop %v1785
      %v1787 = vmul.f32 %v1726, 1.442695
      %v1788 = vpow.pop %v1787
      %v1789 = vmul.f32 %v1727, 1.442695
      %v1790 = vpow.pop %v1789
      %v1791 = vmul.f32 %v1728, 1.442695
      %v1792 = vpow.pop %v1791
      %v1793 = vadd.f32 %v1730, 1.0
      %v1794 = vadd.f32 %v1732, 1.0
      %v1795 = vadd.f32 %v1734, 1.0
      %v1796 = vadd.f32 %v1736, 1.0
      %v1797 = vadd.f32 %v1738, 1.0
      %v1798 = vadd.f32 %v1740, 1.0
      %v1799 = vadd.f32 %v1742, 1.0
      %v1800 = vadd.f32 %v1744, 1.0
      %v1801 = vadd.f32 %v1746, 1.0
      %v1802 = vadd.f32 %v1748, 1.0
      %v1803 = vadd.f32 %v1750, 1.0
      %v1804 = vadd.f32 %v1752, 1.0
      %v1805 = vadd.f32 %v1754, 1.0
      %v1806 = vadd.f32 %v1756, 1.0
      %v1807 = vadd.f32 %v1758, 1.0
      %v1808 = vadd.f32 %v1760, 1.0
      %v1809 = vadd.f32 %v1762, 1.0
      %v1810 = vadd.f32 %v1764, 1.0
      %v1811 = vadd.f32 %v1766, 1.0
      %v1812 = vadd.f32 %v1768, 1.0
      %v1813 = vadd.f32 %v1770, 1.0
      %v1814 = vadd.f32 %v1772, 1.0
      %v1815 = vadd.f32 %v1774, 1.0
      %v1816 = vadd.f32 %v1776, 1.0
      %v1817 = vadd.f32 %v1778, 1.0
      %v1818 = vadd.f32 %v1780, 1.0
      %v1819 = vadd.f32 %v1782, 1.0
      %v1820 = vadd.f32 %v1784, 1.0
      %v1821 = vadd.f32 %v1786, 1.0
      %v1822 = vadd.f32 %v1788, 1.0
      %v1823 = vadd.f32 %v1790, 1.0
      %v1824 = vadd.f32 %v1792, 1.0
      %v1825 = vrcp.pop %v1793
      %v1826 = vmul.f32 1.0, %v1825
      %v1827 = vrcp.pop %v1794
      %v1828 = vmul.f32 1.0, %v1827
      %v1829 = vrcp.pop %v1795
      %v1830 = vmul.f32 1.0, %v1829
      %v1831 = vrcp.pop %v1796
      %v1832 = vmul.f32 1.0, %v1831
      %v1833 = vrcp.pop %v1797
      %v1834 = vmul.f32 1.0, %v1833
      %v1835 = vrcp.pop %v1798
      %v1836 = vmul.f32 1.0, %v1835
      %v1837 = vrcp.pop %v1799
      %v1838 = vmul.f32 1.0, %v1837
      %v1839 = vrcp.pop %v1800
      %v1840 = vmul.f32 1.0, %v1839
      %v1841 = vrcp.pop %v1801
      %v1842 = vmul.f32 1.0, %v1841
      %v1843 = vrcp.pop %v1802
      %v1844 = vmul.f32 1.0, %v1843
      %v1845 = vrcp.pop %v1803
      %v1846 = vmul.f32 1.0, %v1845
      %v1847 = vrcp.pop %v1804
      %v1848 = vmul.f32 1.0, %v1847
      %v1849 = vrcp.pop %v1805
      %v1850 = vmul.f32 1.0, %v1849
      %v1851 = vrcp.pop %v1806
      %v1852 = vmul.f32 1.0, %v1851
      %v1853 = vrcp.pop %v1807
      %v1854 = vmul.f32 1.0, %v1853
      %v1855 = vrcp.pop %v1808
      %v1856 = vmul.f32 1.0, %v1855
      %v1857 = vrcp.pop %v1809
      %v1858 = vmul.f32 1.0, %v1857
      %v1859 = vrcp.pop %v1810
      %v1860 = vmul.f32 1.0, %v1859
      %v1861 = vrcp.pop %v1811
      %v1862 = vmul.f32 1.0, %v1861
      %v1863 = vrcp.pop %v1812
      %v1864 = vmul.f32 1.0, %v1863
      %v1865 = vrcp.pop %v1813
      %v1866 = vmul.f32 1.0, %v1865
      %v1867 = vrcp.pop %v1814
      %v1868 = vmul.f32 1.0, %v1867
      %v1869 = vrcp.pop %v1815
      %v1870 = vmul.f32 1.0, %v1869
      %v1871 = vrcp.pop %v1816
      %v1872 = vmul.f32 1.0, %v1871
      %v1873 = vrcp.pop %v1817
      %v1874 = vmul.f32 1.0, %v1873
      %v1875 = vrcp.pop %v1818
      %v1876 = vmul.f32 1.0, %v1875
      %v1877 = vrcp.pop %v1819
      %v1878 = vmul.f32 1.0, %v1877
      %v1879 = vrcp.pop %v1820
      %v1880 = vmul.f32 1.0, %v1879
      %v1881 = vrcp.pop %v1821
      %v1882 = vmul.f32 1.0, %v1881
      %v1883 = vrcp.pop %v1822
      %v1884 = vmul.f32 1.0, %v1883
      %v1885 = vrcp.pop %v1823
      %v1886 = vmul.f32 1.0, %v1885
      %v1887 = vrcp.pop %v1824
      %v1888 = vmul.f32 1.0, %v1887
      %v1889 = vmul.f32 %v1602, 0.0
      %v1890 = vmul.f32 %v1604, 0.0
      %v1891 = vmul.f32 %v1606, 0.0
      %v1892 = vmul.f32 %v1608, 0.0
      %v1893 = vmul.f32 %v1610, 0.0
      %v1894 = vmul.f32 %v1612, 0.0
      %v1895 = vmul.f32 %v1614, 0.0
      %v1896 = vmul.f32 %v1616, 0.0
      %v1897 = vmul.f32 %v1618, 0.0
      %v1898 = vmul.f32 %v1620, 0.0
      %v1899 = vmul.f32 %v1622, 0.0
      %v1900 = vmul.f32 %v1624, 0.0
      %v1901 = vmul.f32 %v1626, 0.0
      %v1902 = vmul.f32 %v1628, 0.0
      %v1903 = vmul.f32 %v1630, 0.0
      %v1904 = vmul.f32 %v1632, 0.0
      %v1905 = vmul.f32 %v1634, 0.0
      %v1906 = vmul.f32 %v1636, 0.0
      %v1907 = vmul.f32 %v1638, 0.0
      %v1908 = vmul.f32 %v1640, 0.0
      %v1909 = vmul.f32 %v1642, 0.0
      %v1910 = vmul.f32 %v1644, 0.0
      %v1911 = vmul.f32 %v1646, 0.0
      %v1912 = vmul.f32 %v1648, 0.0
      %v1913 = vmul.f32 %v1650, 0.0
      %v1914 = vmul.f32 %v1652, 0.0
      %v1915 = vmul.f32 %v1654, 0.0
      %v1916 = vmul.f32 %v1656, 0.0
      %v1917 = vmul.f32 %v1658, 0.0
      %v1918 = vmul.f32 %v1660, 0.0
      %v1919 = vmul.f32 %v1662, 0.0
      %v1920 = vmul.f32 %v1664, 0.0
      %v1921 = vmul.f32 %v1410, %v1665
      %v1922 = vmul.f32 %v1412, %v1666
      %v1923 = vmul.f32 %v1414, %v1667
      %v1924 = vmul.f32 %v1416, %v1668
      %v1925 = vmul.f32 %v1418, %v1669
      %v1926 = vmul.f32 %v1420, %v1670
      %v1927 = vmul.f32 %v1422, %v1671
      %v1928 = vmul.f32 %v1424, %v1672
      %v1929 = vmul.f32 %v1426, %v1673
      %v1930 = vmul.f32 %v1428, %v1674
      %v1931 = vmul.f32 %v1430, %v1675
      %v1932 = vmul.f32 %v1432, %v1676
      %v1933 = vmul.f32 %v1434, %v1677
      %v1934 = vmul.f32 %v1436, %v1678
      %v1935 = vmul.f32 %v1438, %v1679
      %v1936 = vmul.f32 %v1440, %v1680
      %v1937 = vmul.f32 %v1442, %v1681
      %v1938 = vmul.f32 %v1444, %v1682
      %v1939 = vmul.f32 %v1446, %v1683
      %v1940 = vmul.f32 %v1448, %v1684
      %v1941 = vmul.f32 %v1450, %v1685
      %v1942 = vmul.f32 %v1452, %v1686
      %v1943 = vmul.f32 %v1454, %v1687
      %v1944 = vmul.f32 %v1456, %v1688
      %v1945 = vmul.f32 %v1458, %v1689
      %v1946 = vmul.f32 %v1460, %v1690
      %v1947 = vmul.f32 %v1462, %v1691
      %v1948 = vmul.f32 %v1464, %v1692
      %v1949 = vmul.f32 %v1466, %v1693
      %v1950 = vmul.f32 %v1468, %v1694
      %v1951 = vmul.f32 %v1470, %v1695
      %v1952 = vmul.f32 %v1472, %v1696
      %v1953 = vadd.f32 %v1889, %v1921
      %v1954 = vadd.f32 %v1890, %v1922
      %v1955 = vadd.f32 %v1891, %v1923
      %v1956 = vadd.f32 %v1892, %v1924
      %v1957 = vadd.f32 %v1893, %v1925
      %v1958 = vadd.f32 %v1894, %v1926
      %v1959 = vadd.f32 %v1895, %v1927
      %v1960 = vadd.f32 %v1896, %v1928
      %v1961 = vadd.f32 %v1897, %v1929
      %v1962 = vadd.f32 %v1898, %v1930
      %v1963 = vadd.f32 %v1899, %v1931
      %v1964 = vadd.f32 %v1900, %v1932
      %v1965 = vadd.f32 %v1901, %v1933
      %v1966 = vadd.f32 %v1902, %v1934
      %v1967 = vadd.f32 %v1903, %v1935
      %v1968 = vadd.f32 %v1904, %v1936
      %v1969 = vadd.f32 %v1905, %v1937
      %v1970 = vadd.f32 %v1906, %v1938
      %v1971 = vadd.f32 %v1907, %v1939
      %v1972 = vadd.f32 %v1908, %v1940
      %v1973 = vadd.f32 %v1909, %v1941
      %v1974 = vadd.f32 %v1910, %v1942
      %v1975 = vadd.f32 %v1911, %v1943
      %v1976 = vadd.f32 %v1912, %v1944
      %v1977 = vadd.f32 %v1913, %v1945
      %v1978 = vadd.f32 %v1914, %v1946
      %v1979 = vadd.f32 %v1915, %v1947
      %v1980 = vadd.f32 %v1916, %v1948
      %v1981 = vadd.f32 %v1917, %v1949
      %v1982 = vadd.f32 %v1918, %v1950
      %v1983 = vadd.f32 %v1919, %v1951
      %v1984 = vadd.f32 %v1920, %v1952
      %v1985 = vtanh.pop %v1953
      %v1986 = vtanh.pop %v1954
      %v1987 = vtanh.pop %v1955
      %v1988 = vtanh.pop %v1956
      %v1989 = vtanh.pop %v1957
      %v1990 = vtanh.pop %v1958
      %v1991 = vtanh.pop %v1959
      %v1992 = vtanh.pop %v1960
      %v1993 = vtanh.pop %v1961
      %v1994 = vtanh.pop %v1962
      %v1995 = vtanh.pop %v1963
      %v1996 = vtanh.pop %v1964
      %v1997 = vtanh.pop %v1965
      %v1998 = vtanh.pop %v1966
      %v1999 = vtanh.pop %v1967
      %v2000 = vtanh.pop %v1968
      %v2001 = vtanh.pop %v1969
      %v2002 = vtanh.pop %v1970
      %v2003 = vtanh.pop %v1971
      %v2004 = vtanh.pop %v1972
      %v2005 = vtanh.pop %v1973
      %v2006 = vtanh.pop %v1974
      %v2007 = vtanh.pop %v1975
      %v2008 = vtanh.pop %v1976
      %v2009 = vtanh.pop %v1977
      %v2010 = vtanh.pop %v1978
      %v2011 = vtanh.pop %v1979
      %v2012 = vtanh.pop %v1980
      %v2013 = vtanh.pop %v1981
      %v2014 = vtanh.pop %v1982
      %v2015 = vtanh.pop %v1983
      %v2016 = vtanh.pop %v1984
      %v2017 = vmul.f32 %v1826, %v1985
      %v2018 = vmul.f32 %v1828, %v1986
      %v2019 = vmul.f32 %v1830, %v1987
      %v2020 = vmul.f32 %v1832, %v1988
      %v2021 = vmul.f32 %v1834, %v1989
      %v2022 = vmul.f32 %v1836, %v1990
      %v2023 = vmul.f32 %v1838, %v1991
      %v2024 = vmul.f32 %v1840, %v1992
      %v2025 = vmul.f32 %v1842, %v1993
      %v2026 = vmul.f32 %v1844, %v1994
      %v2027 = vmul.f32 %v1846, %v1995
      %v2028 = vmul.f32 %v1848, %v1996
      %v2029 = vmul.f32 %v1850, %v1997
      %v2030 = vmul.f32 %v1852, %v1998
      %v2031 = vmul.f32 %v1854, %v1999
      %v2032 = vmul.f32 %v1856, %v2000
      %v2033 = vmul.f32 %v1858, %v2001
      %v2034 = vmul.f32 %v1860, %v2002
      %v2035 = vmul.f32 %v1862, %v2003
      %v2036 = vmul.f32 %v1864, %v2004
      %v2037 = vmul.f32 %v1866, %v2005
      %v2038 = vmul.f32 %v1868, %v2006
      %v2039 = vmul.f32 %v1870, %v2007
      %v2040 = vmul.f32 %v1872, %v2008
      %v2041 = vmul.f32 %v1874, %v2009
      %v2042 = vmul.f32 %v1876, %v2010
      %v2043 = vmul.f32 %v1878, %v2011
      %v2044 = vmul.f32 %v1880, %v2012
      %v2045 = vmul.f32 %v1882, %v2013
      %v2046 = vmul.f32 %v1884, %v2014
      %v2047 = vmul.f32 %v1886, %v2015
      %v2048 = vmul.f32 %v1888, %v2016
      %vm2049 = vcmp.lt.f32.partialorder 0.0, %v357
      %vm2050 = vcmp.lt.f32.partialorder 0.0, %v364
      %vm2051 = vcmp.lt.f32.partialorder 0.0, %v371
      %vm2052 = vcmp.lt.f32.partialorder 0.0, %v378
      %vm2053 = vcmp.lt.f32.partialorder 0.0, %v385
      %vm2054 = vcmp.lt.f32.partialorder 0.0, %v392
      %vm2055 = vcmp.lt.f32.partialorder 0.0, %v399
      %vm2056 = vcmp.lt.f32.partialorder 0.0, %v406
      %v2057 = vsel %vm2049, 1, 0
      %v2058 = vsel %vm2050, 1, 0
      %v2059 = vsel %vm2051, 1, 0
      %v2060 = vsel %vm2052, 1, 0
      %v2061 = vsel %vm2053, 1, 0
      %v2062 = vsel %vm2054, 1, 0
      %v2063 = vsel %vm2055, 1, 0
      %v2064 = vsel %vm2056, 1, 0
      %vm2065 = vcmp.eq.s32.totalorder %v2057, 1
      %vm2066 = vcmp.eq.s32.totalorder %v2058, 1
      %vm2067 = vcmp.eq.s32.totalorder %v2059, 1
      %vm2068 = vcmp.eq.s32.totalorder %v2060, 1
      %vm2069 = vcmp.eq.s32.totalorder %v2061, 1
      %vm2070 = vcmp.eq.s32.totalorder %v2062, 1
      %vm2071 = vcmp.eq.s32.totalorder %v2063, 1
      %vm2072 = vcmp.eq.s32.totalorder %v2064, 1
      %v2073 = vsel %vm2065, %v2017, 0.0
      %v2074 = vsel %vm2066, %v2018, 0.0
      %v2075 = vsel %vm2067, %v2019, 0.0
      %v2076 = vsel %vm2068, %v2020, 0.0
      %v2077 = vsel %vm2069, %v2021, 0.0
      %v2078 = vsel %vm2070, %v2022, 0.0
      %v2079 = vsel %vm2071, %v2023, 0.0
      %v2080 = vsel %vm2072, %v2024, 0.0
      %v2081 = vsel %vm2065, %v2025, 0.0
      %v2082 = vsel %vm2066, %v2026, 0.0
      %v2083 = vsel %vm2067, %v2027, 0.0
      %v2084 = vsel %vm2068, %v2028, 0.0
      %v2085 = vsel %vm2069, %v2029, 0.0
      %v2086 = vsel %vm2070, %v2030, 0.0
      %v2087 = vsel %vm2071, %v2031, 0.0
      %v2088 = vsel %vm2072, %v2032, 0.0
      %v2089 = vsel %vm2065, %v2033, 0.0
      %v2090 = vsel %vm2066, %v2034, 0.0
      %v2091 = vsel %vm2067, %v2035, 0.0
      %v2092 = vsel %vm2068, %v2036, 0.0
      %v2093 = vsel %vm2069, %v2037, 0.0
      %v2094 = vsel %vm2070, %v2038, 0.0
      %v2095 = vsel %vm2071, %v2039, 0.0
      %v2096 = vsel %vm2072, %v2040, 0.0
      %v2097 = vsel %vm2065, %v2041, 0.0
      %v2098 = vsel %vm2066, %v2042, 0.0
      %v2099 = vsel %vm2067, %v2043, 0.0
      %v2100 = vsel %vm2068, %v2044, 0.0
      %v2101 = vsel %vm2069, %v2045, 0.0
      %v2102 = vsel %vm2070, %v2046, 0.0
      %v2103 = vsel %vm2071, %v2047, 0.0
      %v2104 = vsel %vm2072, %v2048, 0.0
      %v2105 = vsel %vm2065, %v1953, 0.0
      %v2106 = vsel %vm2066, %v1954, 0.0
      %v2107 = vsel %vm2067, %v1955, 0.0
      %v2108 = vsel %vm2068, %v1956, 0.0
      %v2109 = vsel %vm2069, %v1957, 0.0
      %v2110 = vsel %vm2070, %v1958, 0.0
      %v2111 = vsel %vm2071, %v1959, 0.0
      %v2112 = vsel %vm2072, %v1960, 0.0
      %v2113 = vsel %vm2065, %v1961, 0.0
      %v2114 = vsel %vm2066, %v1962, 0.0
      %v2115 = vsel %vm2067, %v1963, 0.0
      %v2116 = vsel %vm2068, %v1964, 0.0
      %v2117 = vsel %vm2069, %v1965, 0.0
      %v2118 = vsel %vm2070, %v1966, 0.0
      %v2119 = vsel %vm2071, %v1967, 0.0
      %v2120 = vsel %vm2072, %v1968, 0.0
      %v2121 = vsel %vm2065, %v1969, 0.0
      %v2122 = vsel %vm2066, %v1970, 0.0
      %v2123 = vsel %vm2067, %v1971, 0.0
      %v2124 = vsel %vm2068, %v1972, 0.0
      %v2125 = vsel %vm2069, %v1973, 0.0
      %v2126 = vsel %vm2070, %v1974, 0.0
      %v2127 = vsel %vm2071, %v1975, 0.0
      %v2128 = vsel %vm2072, %v1976, 0.0
      %v2129 = vsel %vm2065, %v1977, 0.0
      %v2130 = vsel %vm2066, %v1978, 0.0
      %v2131 = vsel %vm2067, %v1979, 0.0
      %v2132 = vsel %vm2068, %v1980, 0.0
      %v2133 = vsel %vm2069, %v1981, 0.0
      %v2134 = vsel %vm2070, %v1982, 0.0
      %v2135 = vsel %vm2071, %v1983, 0.0
      %v2136 = vsel %vm2072, %v1984, 0.0
      %v2137 = vlaneseq
      %v2138 = vshrl.u32 %v2137, 7
      %v2139 = vsub.s32 1, %v2138
      %v2140 = vrot.slane %v254, %v2139
      %v2141 = vlaneseq
      %v2142 = vshrl.u32 %v2141, 7
      %v2143 = vsub.s32 5, %v2142
      %v2144 = vrot.slane %v254, %v2143
      %v2145 = vlaneseq
      %v2146 = vshrl.u32 %v2145, 7
      %v2147 = vsub.s32 1, %v2146
      %v2148 = vrot.slane %v255, %v2147
      %v2149 = vlaneseq
      %v2150 = vshrl.u32 %v2149, 7
      %v2151 = vsub.s32 5, %v2150
      %v2152 = vrot.slane %v255, %v2151
      %v2153 = vlaneseq
      %v2154 = vshrl.u32 %v2153, 7
      %v2155 = vsub.s32 1, %v2154
      %v2156 = vrot.slane %v256, %v2155
      %v2157 = vlaneseq
      %v2158 = vshrl.u32 %v2157, 7
      %v2159 = vsub.s32 5, %v2158
      %v2160 = vrot.slane %v256, %v2159
      %v2161 = vlaneseq
      %v2162 = vshrl.u32 %v2161, 7
      %v2163 = vsub.s32 1, %v2162
      %v2164 = vrot.slane %v257, %v2163
      %v2165 = vlaneseq
      %v2166 = vshrl.u32 %v2165, 7
      %v2167 = vsub.s32 5, %v2166
      %v2168 = vrot.slane %v257, %v2167
      %v2177 = vlaneseq
      %v2178 = vshrl.u32 %v2177, 7
      %v2179 = vsub.s32 1, %v2178
      %v2180 = vrot.slane %v2140, %v2179
      %v2181 = vlaneseq
      %v2182 = vshrl.u32 %v2181, 7
      %v2183 = vsub.s32 1, %v2182
      %v2184 = vrot.slane %v2144, %v2183
      %v2185 = vlaneseq
      %v2186 = vshrl.u32 %v2185, 7
      %v2187 = vsub.s32 1, %v2186
      %v2188 = vrot.slane %v2148, %v2187
      %v2189 = vlaneseq
      %v2190 = vshrl.u32 %v2189, 7
      %v2191 = vsub.s32 1, %v2190
      %v2192 = vrot.slane %v2152, %v2191
      %v2193 = vlaneseq
      %v2194 = vshrl.u32 %v2193, 7
      %v2195 = vsub.s32 1, %v2194
      %v2196 = vrot.slane %v2156, %v2195
      %v2197 = vlaneseq
      %v2198 = vshrl.u32 %v2197, 7
      %v2199 = vsub.s32 1, %v2198
      %v2200 = vrot.slane %v2160, %v2199
      %v2201 = vlaneseq
      %v2202 = vshrl.u32 %v2201, 7
      %v2203 = vsub.s32 1, %v2202
      %v2204 = vrot.slane %v2164, %v2203
      %v2205 = vlaneseq
      %v2206 = vshrl.u32 %v2205, 7
      %v2207 = vsub.s32 1, %v2206
      %v2208 = vrot.slane %v2168, %v2207
      %v2209 = vmul.f32 %v2180, %v530
      %v2210 = vmul.f32 %v2184, %v530
      %v2211 = vmul.f32 %v2188, %v530
      %v2212 = vmul.f32 %v2192, %v530
      %v2213 = vmul.f32 %v2196, %v530
      %v2214 = vmul.f32 %v2200, %v530
      %v2215 = vmul.f32 %v2204, %v530
      %v2216 = vmul.f32 %v2208, %v530
      %v2217 = vmul.f32 %v2180, %v535
      %v2218 = vmul.f32 %v2184, %v535
      %v2219 = vmul.f32 %v2188, %v535
      %v2220 = vmul.f32 %v2192, %v535
      %v2221 = vmul.f32 %v2196, %v535
      %v2222 = vmul.f32 %v2200, %v535
      %v2223 = vmul.f32 %v2204, %v535
      %v2224 = vmul.f32 %v2208, %v535
      %v2225 = vmul.f32 %v2180, %v540
      %v2226 = vmul.f32 %v2184, %v540
      %v2227 = vmul.f32 %v2188, %v540
      %v2228 = vmul.f32 %v2192, %v540
      %v2229 = vmul.f32 %v2196, %v540
      %v2230 = vmul.f32 %v2200, %v540
      %v2231 = vmul.f32 %v2204, %v540
      %v2232 = vmul.f32 %v2208, %v540
      %v2233 = vmul.f32 %v2180, %v545
      %v2234 = vmul.f32 %v2184, %v545
      %v2235 = vmul.f32 %v2188, %v545
      %v2236 = vmul.f32 %v2192, %v545
      %v2237 = vmul.f32 %v2196, %v545
      %v2238 = vmul.f32 %v2200, %v545
      %v2239 = vmul.f32 %v2204, %v545
      %v2240 = vmul.f32 %v2208, %v545
      %v2241 = vmul.f32 %v2180, %v550
      %v2242 = vmul.f32 %v2184, %v550
      %v2243 = vmul.f32 %v2188, %v550
      %v2244 = vmul.f32 %v2192, %v550
      %v2245 = vmul.f32 %v2196, %v550
      %v2246 = vmul.f32 %v2200, %v550
      %v2247 = vmul.f32 %v2204, %v550
      %v2248 = vmul.f32 %v2208, %v550
      %v2249 = vmul.f32 %v2180, %v555
      %v2250 = vmul.f32 %v2184, %v555
      %v2251 = vmul.f32 %v2188, %v555
      %v2252 = vmul.f32 %v2192, %v555
      %v2253 = vmul.f32 %v2196, %v555
      %v2254 = vmul.f32 %v2200, %v555
      %v2255 = vmul.f32 %v2204, %v555
      %v2256 = vmul.f32 %v2208, %v555
      %v2257 = vmul.f32 %v2180, %v560
      %v2258 = vmul.f32 %v2184, %v560
      %v2259 = vmul.f32 %v2188, %v560
      %v2260 = vmul.f32 %v2192, %v560
      %v2261 = vmul.f32 %v2196, %v560
      %v2262 = vmul.f32 %v2200, %v560
      %v2263 = vmul.f32 %v2204, %v560
      %v2264 = vmul.f32 %v2208, %v560
      %v2265 = vmul.f32 %v2180, %v565
      %v2266 = vmul.f32 %v2184, %v565
      %v2267 = vmul.f32 %v2188, %v565
      %v2268 = vmul.f32 %v2192, %v565
      %v2269 = vmul.f32 %v2196, %v565
      %v2270 = vmul.f32 %v2200, %v565
      %v2271 = vmul.f32 %v2204, %v565
      %v2272 = vmul.f32 %v2208, %v565
      %v2273 = vmul.f32 %v2180, %v570
      %v2274 = vmul.f32 %v2184, %v570
      %v2275 = vmul.f32 %v2188, %v570
      %v2276 = vmul.f32 %v2192, %v570
      %v2277 = vmul.f32 %v2196, %v570
      %v2278 = vmul.f32 %v2200, %v570
      %v2279 = vmul.f32 %v2204, %v570
      %v2280 = vmul.f32 %v2208, %v570
      %v2281 = vmul.f32 %v2180, %v575
      %v2282 = vmul.f32 %v2184, %v575
      %v2283 = vmul.f32 %v2188, %v575
      %v2284 = vmul.f32 %v2192, %v575
      %v2285 = vmul.f32 %v2196, %v575
      %v2286 = vmul.f32 %v2200, %v575
      %v2287 = vmul.f32 %v2204, %v575
      %v2288 = vmul.f32 %v2208, %v575
      %v2289 = vmul.f32 %v2180, %v580
      %v2290 = vmul.f32 %v2184, %v580
      %v2291 = vmul.f32 %v2188, %v580
      %v2292 = vmul.f32 %v2192, %v580
      %v2293 = vmul.f32 %v2196, %v580
      %v2294 = vmul.f32 %v2200, %v580
      %v2295 = vmul.f32 %v2204, %v580
      %v2296 = vmul.f32 %v2208, %v580
      %v2297 = vmul.f32 %v2180, %v585
      %v2298 = vmul.f32 %v2184, %v585
      %v2299 = vmul.f32 %v2188, %v585
      %v2300 = vmul.f32 %v2192, %v585
      %v2301 = vmul.f32 %v2196, %v585
      %v2302 = vmul.f32 %v2200, %v585
      %v2303 = vmul.f32 %v2204, %v585
      %v2304 = vmul.f32 %v2208, %v585
      %v2305 = vmul.f32 %v2180, %v590
      %v2306 = vmul.f32 %v2184, %v590
      %v2307 = vmul.f32 %v2188, %v590
      %v2308 = vmul.f32 %v2192, %v590
      %v2309 = vmul.f32 %v2196, %v590
      %v2310 = vmul.f32 %v2200, %v590
      %v2311 = vmul.f32 %v2204, %v590
      %v2312 = vmul.f32 %v2208, %v590
      %v2313 = vmul.f32 %v2180, %v595
      %v2314 = vmul.f32 %v2184, %v595
      %v2315 = vmul.f32 %v2188, %v595
      %v2316 = vmul.f32 %v2192, %v595
      %v2317 = vmul.f32 %v2196, %v595
      %v2318 = vmul.f32 %v2200, %v595
      %v2319 = vmul.f32 %v2204, %v595
      %v2320 = vmul.f32 %v2208, %v595
      %v2321 = vmul.f32 %v2180, %v600
      %v2322 = vmul.f32 %v2184, %v600
      %v2323 = vmul.f32 %v2188, %v600
      %v2324 = vmul.f32 %v2192, %v600
      %v2325 = vmul.f32 %v2196, %v600
      %v2326 = vmul.f32 %v2200, %v600
      %v2327 = vmul.f32 %v2204, %v600
      %v2328 = vmul.f32 %v2208, %v600
      %v2329 = vmul.f32 %v2180, %v605
      %v2330 = vmul.f32 %v2184, %v605
      %v2331 = vmul.f32 %v2188, %v605
      %v2332 = vmul.f32 %v2192, %v605
      %v2333 = vmul.f32 %v2196, %v605
      %v2334 = vmul.f32 %v2200, %v605
      %v2335 = vmul.f32 %v2204, %v605
      %v2336 = vmul.f32 %v2208, %v605
      %2337 = vmatprep.subr.mxu0 %v2074
      %2338 = vmatpush1.msra.mxu0 %v2073
      %2339 = vmatprep.subr.mxu0 %v2082
      %2340 = vmatpush1.msra.mxu0 %v2081
      %2341 = vmatprep.subr.mxu0 %v2090
      %2342 = vmatpush1.msra.mxu0 %v2089
      %2343 = vmatprep.subr.mxu0 %v2098
      %2344 = vmatpush1.msra.mxu0 %v2097
      %2345 = vmatprep.subr.mxu0 0.0
      %2346 = vmatpush1.msra.mxu0 0.0
      %2347 = vmatprep.subr.mxu0 0.0
      %2348 = vmatpush1.msra.mxu0 0.0
      %2349 = vmatprep.subr.mxu0 0.0
      %2350 = vmatpush1.msra.mxu0 0.0
      %2351 = vmatprep.subr.mxu0 0.0
      %2352 = vmatpush1.msra.mxu0 0.0
      %2353 = vmatprep.subr.mxu0 0.0
      %2354 = vmatpush1.msra.mxu0 0.0
      %2355 = vmatprep.subr.mxu0 0.0
      %2356 = vmatpush1.msra.mxu0 0.0
      %2357 = vmatprep.subr.mxu0 0.0
      %2358 = vmatpush1.msra.mxu0 0.0
      %2359 = vmatprep.subr.mxu0 0.0
      %2360 = vmatpush1.msra.mxu0 0.0
      %2361 = vmatprep.subr.mxu0 0.0
      %2362 = vmatpush1.msra.mxu0 0.0
      %2363 = vmatprep.subr.mxu0 0.0
      %2364 = vmatpush1.msra.mxu0 0.0
      %2365 = vmatprep.subr.mxu0 0.0
      %2366 = vmatpush1.msra.mxu0 0.0
      %2367 = vmatprep.subr.mxu0 0.0
      %2368 = vmatpush1.msra.mxu0 0.0
      %2369 = vmatprep.subr.mxu0 0.0
      %2370 = vmatpush1.msra.mxu0 0.0
      %2371 = vmatprep.subr.mxu0 0.0
      %2372 = vmatpush1.msra.mxu0 0.0
      %2373 = vmatprep.subr.mxu0 0.0
      %2374 = vmatpush1.msra.mxu0 0.0
      %2375 = vmatprep.subr.mxu0 0.0
      %2376 = vmatpush1.msra.mxu0 0.0
      %2377 = vmatprep.subr.mxu0 0.0
      %2378 = vmatpush1.msra.mxu0 0.0
      %2379 = vmatprep.subr.mxu0 0.0
      %2380 = vmatpush1.msra.mxu0 0.0
      %2381 = vmatprep.subr.mxu0 0.0
      %2382 = vmatpush1.msra.mxu0 0.0
      %2383 = vmatprep.subr.mxu0 0.0
      %2384 = vmatpush1.msra.mxu0 0.0
      %2385 = vmatprep.subr.mxu0 0.0
      %2386 = vmatpush1.msra.mxu0 0.0
      %2387 = vmatprep.subr.mxu0 0.0
      %2388 = vmatpush1.msra.mxu0 0.0
      %2389 = vmatprep.subr.mxu0 0.0
      %2390 = vmatpush1.msra.mxu0 0.0
      %2391 = vmatprep.subr.mxu0 0.0
      %2392 = vmatpush1.msra.mxu0 0.0
      %2393 = vmatprep.subr.mxu0 0.0
      %2394 = vmatpush1.msra.mxu0 0.0
      %2395 = vmatprep.subr.mxu0 0.0
      %2396 = vmatpush1.msra.mxu0 0.0
      %2397 = vmatprep.subr.mxu0 0.0
      %2398 = vmatpush1.msra.mxu0 0.0
      %2399 = vmatprep.subr.mxu0 0.0
      %2400 = vmatpush1.msra.mxu0 0.0
      %2401 = vmatprep.mubr.f32.mxu0 0.0
      %2402 = vmatmul.mubr.f32.gmra.mrb[0].mxu0 %v737
      %v2403 = vpop.f32.mrb[0].mxu0
      %v2404 = vadd.f32 0.0, %v2403
      %v2405 = vpop.f32.mrb[0].mxu0
      %v2406 = vadd.f32 0.0, %v2405
      %2407 = vmatprep.mubr.f32.mxu0 0.0
      %2408 = vmatmul.mubr.f32.gmra.mrb[0].mxu0 %v740
      %v2409 = vpop.f32.mrb[0].mxu0
      %v2410 = vadd.f32 0.0, %v2409
      %v2411 = vpop.f32.mrb[0].mxu0
      %v2412 = vadd.f32 0.0, %v2411
      %2413 = vmatprep.mubr.f32.mxu0 0.0
      %2414 = vmatmul.mubr.f32.gmra.mrb[0].mxu0 %v743
      %v2415 = vpop.f32.mrb[0].mxu0
      %v2416 = vadd.f32 0.0, %v2415
      %v2417 = vpop.f32.mrb[0].mxu0
      %v2418 = vadd.f32 0.0, %v2417
      %2419 = vmatprep.mubr.f32.mxu0 0.0
      %2420 = vmatmul.mubr.f32.gmra.mrb[0].mxu0 %v746
      %v2421 = vpop.f32.mrb[0].mxu0
      %v2422 = vadd.f32 0.0, %v2421
      %v2423 = vpop.f32.mrb[0].mxu0
      %v2424 = vadd.f32 0.0, %v2423
      %2425 = vmatprep.mubr.f32.mxu0 0.0
      %2426 = vmatmul.mubr.f32.gmra.mrb[0].mxu0 %v749
      %v2427 = vpop.f32.mrb[0].mxu0
      %v2428 = vadd.f32 0.0, %v2427
      %v2429 = vpop.f32.mrb[0].mxu0
      %v2430 = vadd.f32 0.0, %v2429
      %2431 = vmatprep.mubr.f32.mxu0 0.0
      %2432 = vmatmul.mubr.f32.gmra.mrb[0].mxu0 %v752
      %v2433 = vpop.f32.mrb[0].mxu0
      %v2434 = vadd.f32 0.0, %v2433
      %v2435 = vpop.f32.mrb[0].mxu0
      %v2436 = vadd.f32 0.0, %v2435
      %2437 = vmatprep.mubr.f32.mxu0 0.0
      %2438 = vmatmul.mubr.f32.gmra.mrb[0].mxu0 %v755
      %v2439 = vpop.f32.mrb[0].mxu0
      %v2440 = vadd.f32 0.0, %v2439
      %v2441 = vpop.f32.mrb[0].mxu0
      %v2442 = vadd.f32 0.0, %v2441
      %2443 = vmatprep.mubr.f32.mxu0 0.0
      %2444 = vmatmul.mubr.f32.gmra.mrb[0].mxu0 %v758
      %v2445 = vpop.f32.mrb[0].mxu0
      %v2446 = vadd.f32 0.0, %v2445
      %v2447 = vpop.f32.mrb[0].mxu0
      %v2448 = vadd.f32 0.0, %v2447
      %2449 = vmatprep.mubr.f32.mxu0 0.0
      %2450 = vmatmul.mubr.f32.gmra.mrb[0].mxu0 %v761
      %v2451 = vpop.f32.mrb[0].mxu0
      %v2452 = vadd.f32 0.0, %v2451
      %v2453 = vpop.f32.mrb[0].mxu0
      %v2454 = vadd.f32 0.0, %v2453
      %2455 = vmatprep.mubr.f32.mxu0 0.0
      %2456 = vmatmul.mubr.f32.gmra.mrb[0].mxu0 %v764
      %v2457 = vpop.f32.mrb[0].mxu0
      %v2458 = vadd.f32 0.0, %v2457
      %v2459 = vpop.f32.mrb[0].mxu0
      %v2460 = vadd.f32 0.0, %v2459
      %2461 = vmatprep.mubr.f32.mxu0 0.0
      %2462 = vmatmul.mubr.f32.gmra.mrb[0].mxu0 %v767
      %v2463 = vpop.f32.mrb[0].mxu0
      %v2464 = vadd.f32 0.0, %v2463
      %v2465 = vpop.f32.mrb[0].mxu0
      %v2466 = vadd.f32 0.0, %v2465
      %2467 = vmatprep.mubr.f32.mxu0 0.0
      %2468 = vmatmul.mubr.f32.gmra.mrb[0].mxu0 %v770
      %v2469 = vpop.f32.mrb[0].mxu0
      %v2470 = vadd.f32 0.0, %v2469
      %v2471 = vpop.f32.mrb[0].mxu0
      %v2472 = vadd.f32 0.0, %v2471
      %2473 = vmatprep.mubr.f32.mxu0 0.0
      %2474 = vmatmul.mubr.f32.gmra.mrb[0].mxu0 %v773
      %v2475 = vpop.f32.mrb[0].mxu0
      %v2476 = vadd.f32 0.0, %v2475
      %v2477 = vpop.f32.mrb[0].mxu0
      %v2478 = vadd.f32 0.0, %v2477
      %2479 = vmatprep.mubr.f32.mxu0 0.0
      %2480 = vmatmul.mubr.f32.gmra.mrb[0].mxu0 %v776
      %v2481 = vpop.f32.mrb[0].mxu0
      %v2482 = vadd.f32 0.0, %v2481
      %v2483 = vpop.f32.mrb[0].mxu0
      %v2484 = vadd.f32 0.0, %v2483
      %2485 = vmatprep.mubr.f32.mxu0 0.0
      %2486 = vmatmul.mubr.f32.gmra.mrb[0].mxu0 %v779
      %v2487 = vpop.f32.mrb[0].mxu0
      %v2488 = vadd.f32 0.0, %v2487
      %v2489 = vpop.f32.mrb[0].mxu0
      %v2490 = vadd.f32 0.0, %v2489
      %2491 = vmatprep.mubr.f32.mxu0 0.0
      %2492 = vmatmul.mubr.f32.gmra.mrb[0].mxu0 %v782
      %v2493 = vpop.f32.mrb[0].mxu0
      %v2494 = vadd.f32 0.0, %v2493
      %v2495 = vpop.f32.mrb[0].mxu0
      %v2496 = vadd.f32 0.0, %v2495
      %2497 = vdwg.mxu0
      %2498 = vmatprep.subr.mxu0 %v2076
      %2499 = vmatpush1.msra.mxu0 %v2075
      %2500 = vmatprep.subr.mxu0 %v2084
      %2501 = vmatpush1.msra.mxu0 %v2083
      %2502 = vmatprep.subr.mxu0 %v2092
      %2503 = vmatpush1.msra.mxu0 %v2091
      %2504 = vmatprep.subr.mxu0 %v2100
      %2505 = vmatpush1.msra.mxu0 %v2099
      %2506 = vmatprep.subr.mxu0 0.0
      %2507 = vmatpush1.msra.mxu0 0.0
      %2508 = vmatprep.subr.mxu0 0.0
      %2509 = vmatpush1.msra.mxu0 0.0
      %2510 = vmatprep.subr.mxu0 0.0
      %2511 = vmatpush1.msra.mxu0 0.0
      %2512 = vmatprep.subr.mxu0 0.0
      %2513 = vmatpush1.msra.mxu0 0.0
      %2514 = vmatprep.subr.mxu0 0.0
      %2515 = vmatpush1.msra.mxu0 0.0
      %2516 = vmatprep.subr.mxu0 0.0
      %2517 = vmatpush1.msra.mxu0 0.0
      %2518 = vmatprep.subr.mxu0 0.0
      %2519 = vmatpush1.msra.mxu0 0.0
      %2520 = vmatprep.subr.mxu0 0.0
      %2521 = vmatpush1.msra.mxu0 0.0
      %2522 = vmatprep.subr.mxu0 0.0
      %2523 = vmatpush1.msra.mxu0 0.0
      %2524 = vmatprep.subr.mxu0 0.0
      %2525 = vmatpush1.msra.mxu0 0.0
      %2526 = vmatprep.subr.mxu0 0.0
      %2527 = vmatpush1.msra.mxu0 0.0
      %2528 = vmatprep.subr.mxu0 0.0
      %2529 = vmatpush1.msra.mxu0 0.0
      %2530 = vmatprep.subr.mxu0 0.0
      %2531 = vmatpush1.msra.mxu0 0.0
      %2532 = vmatprep.subr.mxu0 0.0
      %2533 = vmatpush1.msra.mxu0 0.0
      %2534 = vmatprep.subr.mxu0 0.0
      %2535 = vmatpush1.msra.mxu0 0.0
      %2536 = vmatprep.subr.mxu0 0.0
      %2537 = vmatpush1.msra.mxu0 0.0
      %2538 = vmatprep.subr.mxu0 0.0
      %2539 = vmatpush1.msra.mxu0 0.0
      %2540 = vmatprep.subr.mxu0 0.0
      %2541 = vmatpush1.msra.mxu0 0.0
      %2542 = vmatprep.subr.mxu0 0.0
      %2543 = vmatpush1.msra.mxu0 0.0
      %2544 = vmatprep.subr.mxu0 0.0
      %2545 = vmatpush1.msra.mxu0 0.0
      %2546 = vmatprep.subr.mxu0 0.0
      %2547 = vmatpush1.msra.mxu0 0.0
      %2548 = vmatprep.subr.mxu0 0.0
      %2549 = vmatpush1.msra.mxu0 0.0
      %2550 = vmatprep.subr.mxu0 0.0
      %2551 = vmatpush1.msra.mxu0 0.0
      %2552 = vmatprep.subr.mxu0 0.0
      %2553 = vmatpush1.msra.mxu0 0.0
      %2554 = vmatprep.subr.mxu0 0.0
      %2555 = vmatpush1.msra.mxu0 0.0
      %2556 = vmatprep.subr.mxu0 0.0
      %2557 = vmatpush1.msra.mxu0 0.0
      %2558 = vmatprep.subr.mxu0 0.0
      %2559 = vmatpush1.msra.mxu0 0.0
      %2560 = vmatprep.subr.mxu0 0.0
      %2561 = vmatpush1.msra.mxu0 0.0
      %2562 = vmatprep.mubr.f32.mxu0 0.0
      %2563 = vmatmul.mubr.f32.gmra.mrb[0].mxu0 %v737
      %v2564 = vpop.f32.mrb[0].mxu0
      %v2565 = vadd.f32 0.0, %v2564
      %v2566 = vpop.f32.mrb[0].mxu0
      %v2567 = vadd.f32 0.0, %v2566
      %2568 = vmatprep.mubr.f32.mxu0 0.0
      %2569 = vmatmul.mubr.f32.gmra.mrb[0].mxu0 %v740
      %v2570 = vpop.f32.mrb[0].mxu0
      %v2571 = vadd.f32 0.0, %v2570
      %v2572 = vpop.f32.mrb[0].mxu0
      %v2573 = vadd.f32 0.0, %v2572
      %2574 = vmatprep.mubr.f32.mxu0 0.0
      %2575 = vmatmul.mubr.f32.gmra.mrb[0].mxu0 %v743
      %v2576 = vpop.f32.mrb[0].mxu0
      %v2577 = vadd.f32 0.0, %v2576
      %v2578 = vpop.f32.mrb[0].mxu0
      %v2579 = vadd.f32 0.0, %v2578
      %2580 = vmatprep.mubr.f32.mxu0 0.0
      %2581 = vmatmul.mubr.f32.gmra.mrb[0].mxu0 %v746
      %v2582 = vpop.f32.mrb[0].mxu0
      %v2583 = vadd.f32 0.0, %v2582
      %v2584 = vpop.f32.mrb[0].mxu0
      %v2585 = vadd.f32 0.0, %v2584
      %2586 = vmatprep.mubr.f32.mxu0 0.0
      %2587 = vmatmul.mubr.f32.gmra.mrb[0].mxu0 %v749
      %v2588 = vpop.f32.mrb[0].mxu0
      %v2589 = vadd.f32 0.0, %v2588
      %v2590 = vpop.f32.mrb[0].mxu0
      %v2591 = vadd.f32 0.0, %v2590
      %2592 = vmatprep.mubr.f32.mxu0 0.0
      %2593 = vmatmul.mubr.f32.gmra.mrb[0].mxu0 %v752
      %v2594 = vpop.f32.mrb[0].mxu0
      %v2595 = vadd.f32 0.0, %v2594
      %v2596 = vpop.f32.mrb[0].mxu0
      %v2597 = vadd.f32 0.0, %v2596
      %2598 = vmatprep.mubr.f32.mxu0 0.0
      %2599 = vmatmul.mubr.f32.gmra.mrb[0].mxu0 %v755
      %v2600 = vpop.f32.mrb[0].mxu0
      %v2601 = vadd.f32 0.0, %v2600
      %v2602 = vpop.f32.mrb[0].mxu0
      %v2603 = vadd.f32 0.0, %v2602
      %2604 = vmatprep.mubr.f32.mxu0 0.0
      %2605 = vmatmul.mubr.f32.gmra.mrb[0].mxu0 %v758
      %v2606 = vpop.f32.mrb[0].mxu0
      %v2607 = vadd.f32 0.0, %v2606
      %v2608 = vpop.f32.mrb[0].mxu0
      %v2609 = vadd.f32 0.0, %v2608
      %2610 = vmatprep.mubr.f32.mxu0 0.0
      %2611 = vmatmul.mubr.f32.gmra.mrb[0].mxu0 %v761
      %v2612 = vpop.f32.mrb[0].mxu0
      %v2613 = vadd.f32 0.0, %v2612
      %v2614 = vpop.f32.mrb[0].mxu0
      %v2615 = vadd.f32 0.0, %v2614
      %2616 = vmatprep.mubr.f32.mxu0 0.0
      %2617 = vmatmul.mubr.f32.gmra.mrb[0].mxu0 %v764
      %v2618 = vpop.f32.mrb[0].mxu0
      %v2619 = vadd.f32 0.0, %v2618
      %v2620 = vpop.f32.mrb[0].mxu0
      %v2621 = vadd.f32 0.0, %v2620
      %2622 = vmatprep.mubr.f32.mxu0 0.0
      %2623 = vmatmul.mubr.f32.gmra.mrb[0].mxu0 %v767
      %v2624 = vpop.f32.mrb[0].mxu0
      %v2625 = vadd.f32 0.0, %v2624
      %v2626 = vpop.f32.mrb[0].mxu0
      %v2627 = vadd.f32 0.0, %v2626
      %2628 = vmatprep.mubr.f32.mxu0 0.0
      %2629 = vmatmul.mubr.f32.gmra.mrb[0].mxu0 %v770
      %v2630 = vpop.f32.mrb[0].mxu0
      %v2631 = vadd.f32 0.0, %v2630
      %v2632 = vpop.f32.mrb[0].mxu0
      %v2633 = vadd.f32 0.0, %v2632
      %2634 = vmatprep.mubr.f32.mxu0 0.0
      %2635 = vmatmul.mubr.f32.gmra.mrb[0].mxu0 %v773
      %v2636 = vpop.f32.mrb[0].mxu0
      %v2637 = vadd.f32 0.0, %v2636
      %v2638 = vpop.f32.mrb[0].mxu0
      %v2639 = vadd.f32 0.0, %v2638
      %2640 = vmatprep.mubr.f32.mxu0 0.0
      %2641 = vmatmul.mubr.f32.gmra.mrb[0].mxu0 %v776
      %v2642 = vpop.f32.mrb[0].mxu0
      %v2643 = vadd.f32 0.0, %v2642
      %v2644 = vpop.f32.mrb[0].mxu0
      %v2645 = vadd.f32 0.0, %v2644
      %2646 = vmatprep.mubr.f32.mxu0 0.0
      %2647 = vmatmul.mubr.f32.gmra.mrb[0].mxu0 %v779
      %v2648 = vpop.f32.mrb[0].mxu0
      %v2649 = vadd.f32 0.0, %v2648
      %v2650 = vpop.f32.mrb[0].mxu0
      %v2651 = vadd.f32 0.0, %v2650
      %2652 = vmatprep.mubr.f32.mxu0 0.0
      %2653 = vmatmul.mubr.f32.gmra.mrb[0].mxu0 %v782
      %v2654 = vpop.f32.mrb[0].mxu0
      %v2655 = vadd.f32 0.0, %v2654
      %v2656 = vpop.f32.mrb[0].mxu0
      %v2657 = vadd.f32 0.0, %v2656
      %2658 = vdwg.mxu0
      %2659 = vmatprep.subr.mxu0 %v2078
      %2660 = vmatpush1.msra.mxu0 %v2077
      %2661 = vmatprep.subr.mxu0 %v2086
      %2662 = vmatpush1.msra.mxu0 %v2085
      %2663 = vmatprep.subr.mxu0 %v2094
      %2664 = vmatpush1.msra.mxu0 %v2093
      %2665 = vmatprep.subr.mxu0 %v2102
      %2666 = vmatpush1.msra.mxu0 %v2101
      %2667 = vmatprep.subr.mxu0 0.0
      %2668 = vmatpush1.msra.mxu0 0.0
      %2669 = vmatprep.subr.mxu0 0.0
      %2670 = vmatpush1.msra.mxu0 0.0
      %2671 = vmatprep.subr.mxu0 0.0
      %2672 = vmatpush1.msra.mxu0 0.0
      %2673 = vmatprep.subr.mxu0 0.0
      %2674 = vmatpush1.msra.mxu0 0.0
      %2675 = vmatprep.subr.mxu0 0.0
      %2676 = vmatpush1.msra.mxu0 0.0
      %2677 = vmatprep.subr.mxu0 0.0
      %2678 = vmatpush1.msra.mxu0 0.0
      %2679 = vmatprep.subr.mxu0 0.0
      %2680 = vmatpush1.msra.mxu0 0.0
      %2681 = vmatprep.subr.mxu0 0.0
      %2682 = vmatpush1.msra.mxu0 0.0
      %2683 = vmatprep.subr.mxu0 0.0
      %2684 = vmatpush1.msra.mxu0 0.0
      %2685 = vmatprep.subr.mxu0 0.0
      %2686 = vmatpush1.msra.mxu0 0.0
      %2687 = vmatprep.subr.mxu0 0.0
      %2688 = vmatpush1.msra.mxu0 0.0
      %2689 = vmatprep.subr.mxu0 0.0
      %2690 = vmatpush1.msra.mxu0 0.0
      %2691 = vmatprep.subr.mxu0 0.0
      %2692 = vmatpush1.msra.mxu0 0.0
      %2693 = vmatprep.subr.mxu0 0.0
      %2694 = vmatpush1.msra.mxu0 0.0
      %2695 = vmatprep.subr.mxu0 0.0
      %2696 = vmatpush1.msra.mxu0 0.0
      %2697 = vmatprep.subr.mxu0 0.0
      %2698 = vmatpush1.msra.mxu0 0.0
      %2699 = vmatprep.subr.mxu0 0.0
      %2700 = vmatpush1.msra.mxu0 0.0
      %2701 = vmatprep.subr.mxu0 0.0
      %2702 = vmatpush1.msra.mxu0 0.0
      %2703 = vmatprep.subr.mxu0 0.0
      %2704 = vmatpush1.msra.mxu0 0.0
      %2705 = vmatprep.subr.mxu0 0.0
      %2706 = vmatpush1.msra.mxu0 0.0
      %2707 = vmatprep.subr.mxu0 0.0
      %2708 = vmatpush1.msra.mxu0 0.0
      %2709 = vmatprep.subr.mxu0 0.0
      %2710 = vmatpush1.msra.mxu0 0.0
      %2711 = vmatprep.subr.mxu0 0.0
      %2712 = vmatpush1.msra.mxu0 0.0
      %2713 = vmatprep.subr.mxu0 0.0
      %2714 = vmatpush1.msra.mxu0 0.0
      %2715 = vmatprep.subr.mxu0 0.0
      %2716 = vmatpush1.msra.mxu0 0.0
      %2717 = vmatprep.subr.mxu0 0.0
      %2718 = vmatpush1.msra.mxu0 0.0
      %2719 = vmatprep.subr.mxu0 0.0
      %2720 = vmatpush1.msra.mxu0 0.0
      %2721 = vmatprep.subr.mxu0 0.0
      %2722 = vmatpush1.msra.mxu0 0.0
      %2723 = vmatprep.mubr.f32.mxu0 0.0
      %2724 = vmatmul.mubr.f32.gmra.mrb[0].mxu0 %v737
      %v2725 = vpop.f32.mrb[0].mxu0
      %v2726 = vadd.f32 0.0, %v2725
      %v2727 = vpop.f32.mrb[0].mxu0
      %v2728 = vadd.f32 0.0, %v2727
      %2729 = vmatprep.mubr.f32.mxu0 0.0
      %2730 = vmatmul.mubr.f32.gmra.mrb[0].mxu0 %v740
      %v2731 = vpop.f32.mrb[0].mxu0
      %v2732 = vadd.f32 0.0, %v2731
      %v2733 = vpop.f32.mrb[0].mxu0
      %v2734 = vadd.f32 0.0, %v2733
      %2735 = vmatprep.mubr.f32.mxu0 0.0
      %2736 = vmatmul.mubr.f32.gmra.mrb[0].mxu0 %v743
      %v2737 = vpop.f32.mrb[0].mxu0
      %v2738 = vadd.f32 0.0, %v2737
      %v2739 = vpop.f32.mrb[0].mxu0
      %v2740 = vadd.f32 0.0, %v2739
      %2741 = vmatprep.mubr.f32.mxu0 0.0
      %2742 = vmatmul.mubr.f32.gmra.mrb[0].mxu0 %v746
      %v2743 = vpop.f32.mrb[0].mxu0
      %v2744 = vadd.f32 0.0, %v2743
      %v2745 = vpop.f32.mrb[0].mxu0
      %v2746 = vadd.f32 0.0, %v2745
      %2747 = vmatprep.mubr.f32.mxu0 0.0
      %2748 = vmatmul.mubr.f32.gmra.mrb[0].mxu0 %v749
      %v2749 = vpop.f32.mrb[0].mxu0
      %v2750 = vadd.f32 0.0, %v2749
      %v2751 = vpop.f32.mrb[0].mxu0
      %v2752 = vadd.f32 0.0, %v2751
      %2753 = vmatprep.mubr.f32.mxu0 0.0
      %2754 = vmatmul.mubr.f32.gmra.mrb[0].mxu0 %v752
      %v2755 = vpop.f32.mrb[0].mxu0
      %v2756 = vadd.f32 0.0, %v2755
      %v2757 = vpop.f32.mrb[0].mxu0
      %v2758 = vadd.f32 0.0, %v2757
      %2759 = vmatprep.mubr.f32.mxu0 0.0
      %2760 = vmatmul.mubr.f32.gmra.mrb[0].mxu0 %v755
      %v2761 = vpop.f32.mrb[0].mxu0
      %v2762 = vadd.f32 0.0, %v2761
      %v2763 = vpop.f32.mrb[0].mxu0
      %v2764 = vadd.f32 0.0, %v2763
      %2765 = vmatprep.mubr.f32.mxu0 0.0
      %2766 = vmatmul.mubr.f32.gmra.mrb[0].mxu0 %v758
      %v2767 = vpop.f32.mrb[0].mxu0
      %v2768 = vadd.f32 0.0, %v2767
      %v2769 = vpop.f32.mrb[0].mxu0
      %v2770 = vadd.f32 0.0, %v2769
      %2771 = vmatprep.mubr.f32.mxu0 0.0
      %2772 = vmatmul.mubr.f32.gmra.mrb[0].mxu0 %v761
      %v2773 = vpop.f32.mrb[0].mxu0
      %v2774 = vadd.f32 0.0, %v2773
      %v2775 = vpop.f32.mrb[0].mxu0
      %v2776 = vadd.f32 0.0, %v2775
      %2777 = vmatprep.mubr.f32.mxu0 0.0
      %2778 = vmatmul.mubr.f32.gmra.mrb[0].mxu0 %v764
      %v2779 = vpop.f32.mrb[0].mxu0
      %v2780 = vadd.f32 0.0, %v2779
      %v2781 = vpop.f32.mrb[0].mxu0
      %v2782 = vadd.f32 0.0, %v2781
      %2783 = vmatprep.mubr.f32.mxu0 0.0
      %2784 = vmatmul.mubr.f32.gmra.mrb[0].mxu0 %v767
      %v2785 = vpop.f32.mrb[0].mxu0
      %v2786 = vadd.f32 0.0, %v2785
      %v2787 = vpop.f32.mrb[0].mxu0
      %v2788 = vadd.f32 0.0, %v2787
      %2789 = vmatprep.mubr.f32.mxu0 0.0
      %2790 = vmatmul.mubr.f32.gmra.mrb[0].mxu0 %v770
      %v2791 = vpop.f32.mrb[0].mxu0
      %v2792 = vadd.f32 0.0, %v2791
      %v2793 = vpop.f32.mrb[0].mxu0
      %v2794 = vadd.f32 0.0, %v2793
      %2795 = vmatprep.mubr.f32.mxu0 0.0
      %2796 = vmatmul.mubr.f32.gmra.mrb[0].mxu0 %v773
      %v2797 = vpop.f32.mrb[0].mxu0
      %v2798 = vadd.f32 0.0, %v2797
      %v2799 = vpop.f32.mrb[0].mxu0
      %v2800 = vadd.f32 0.0, %v2799
      %2801 = vmatprep.mubr.f32.mxu0 0.0
      %2802 = vmatmul.mubr.f32.gmra.mrb[0].mxu0 %v776
      %v2803 = vpop.f32.mrb[0].mxu0
      %v2804 = vadd.f32 0.0, %v2803
      %v2805 = vpop.f32.mrb[0].mxu0
      %v2806 = vadd.f32 0.0, %v2805
      %2807 = vmatprep.mubr.f32.mxu0 0.0
      %2808 = vmatmul.mubr.f32.gmra.mrb[0].mxu0 %v779
      %v2809 = vpop.f32.mrb[0].mxu0
      %v2810 = vadd.f32 0.0, %v2809
      %v2811 = vpop.f32.mrb[0].mxu0
      %v2812 = vadd.f32 0.0, %v2811
      %2813 = vmatprep.mubr.f32.mxu0 0.0
      %2814 = vmatmul.mubr.f32.gmra.mrb[0].mxu0 %v782
      %v2815 = vpop.f32.mrb[0].mxu0
      %v2816 = vadd.f32 0.0, %v2815
      %v2817 = vpop.f32.mrb[0].mxu0
      %v2818 = vadd.f32 0.0, %v2817
      %2819 = vdwg.mxu0
      %2820 = vmatprep.subr.mxu0 %v2080
      %2821 = vmatpush1.msra.mxu0 %v2079
      %2822 = vmatprep.subr.mxu0 %v2088
      %2823 = vmatpush1.msra.mxu0 %v2087
      %2824 = vmatprep.subr.mxu0 %v2096
      %2825 = vmatpush1.msra.mxu0 %v2095
      %2826 = vmatprep.subr.mxu0 %v2104
      %2827 = vmatpush1.msra.mxu0 %v2103
      %2828 = vmatprep.subr.mxu0 0.0
      %2829 = vmatpush1.msra.mxu0 0.0
      %2830 = vmatprep.subr.mxu0 0.0
      %2831 = vmatpush1.msra.mxu0 0.0
      %2832 = vmatprep.subr.mxu0 0.0
      %2833 = vmatpush1.msra.mxu0 0.0
      %2834 = vmatprep.subr.mxu0 0.0
      %2835 = vmatpush1.msra.mxu0 0.0
      %2836 = vmatprep.subr.mxu0 0.0
      %2837 = vmatpush1.msra.mxu0 0.0
      %2838 = vmatprep.subr.mxu0 0.0
      %2839 = vmatpush1.msra.mxu0 0.0
      %2840 = vmatprep.subr.mxu0 0.0
      %2841 = vmatpush1.msra.mxu0 0.0
      %2842 = vmatprep.subr.mxu0 0.0
      %2843 = vmatpush1.msra.mxu0 0.0
      %2844 = vmatprep.subr.mxu0 0.0
      %2845 = vmatpush1.msra.mxu0 0.0
      %2846 = vmatprep.subr.mxu0 0.0
      %2847 = vmatpush1.msra.mxu0 0.0
      %2848 = vmatprep.subr.mxu0 0.0
      %2849 = vmatpush1.msra.mxu0 0.0
      %2850 = vmatprep.subr.mxu0 0.0
      %2851 = vmatpush1.msra.mxu0 0.0
      %2852 = vmatprep.subr.mxu0 0.0
      %2853 = vmatpush1.msra.mxu0 0.0
      %2854 = vmatprep.subr.mxu0 0.0
      %2855 = vmatpush1.msra.mxu0 0.0
      %2856 = vmatprep.subr.mxu0 0.0
      %2857 = vmatpush1.msra.mxu0 0.0
      %2858 = vmatprep.subr.mxu0 0.0
      %2859 = vmatpush1.msra.mxu0 0.0
      %2860 = vmatprep.subr.mxu0 0.0
      %2861 = vmatpush1.msra.mxu0 0.0
      %2862 = vmatprep.subr.mxu0 0.0
      %2863 = vmatpush1.msra.mxu0 0.0
      %2864 = vmatprep.subr.mxu0 0.0
      %2865 = vmatpush1.msra.mxu0 0.0
      %2866 = vmatprep.subr.mxu0 0.0
      %2867 = vmatpush1.msra.mxu0 0.0
      %2868 = vmatprep.subr.mxu0 0.0
      %2869 = vmatpush1.msra.mxu0 0.0
      %2870 = vmatprep.subr.mxu0 0.0
      %2871 = vmatpush1.msra.mxu0 0.0
      %2872 = vmatprep.subr.mxu0 0.0
      %2873 = vmatpush1.msra.mxu0 0.0
      %2874 = vmatprep.subr.mxu0 0.0
      %2875 = vmatpush1.msra.mxu0 0.0
      %2876 = vmatprep.subr.mxu0 0.0
      %2877 = vmatpush1.msra.mxu0 0.0
      %2878 = vmatprep.subr.mxu0 0.0
      %2879 = vmatpush1.msra.mxu0 0.0
      %2880 = vmatprep.subr.mxu0 0.0
      %2881 = vmatpush1.msra.mxu0 0.0
      %2882 = vmatprep.subr.mxu0 0.0
      %2883 = vmatpush1.msra.mxu0 0.0
      %2884 = vmatprep.mubr.f32.mxu0 0.0
      %2885 = vmatmul.mubr.f32.gmra.mrb[0].mxu0 %v737
      %v2886 = vpop.f32.mrb[0].mxu0
      %v2887 = vadd.f32 0.0, %v2886
      %v2888 = vpop.f32.mrb[0].mxu0
      %v2889 = vadd.f32 0.0, %v2888
      %2890 = vmatprep.mubr.f32.mxu0 0.0
      %2891 = vmatmul.mubr.f32.gmra.mrb[0].mxu0 %v740
      %v2892 = vpop.f32.mrb[0].mxu0
      %v2893 = vadd.f32 0.0, %v2892
      %v2894 = vpop.f32.mrb[0].mxu0
      %v2895 = vadd.f32 0.0, %v2894
      %2896 = vmatprep.mubr.f32.mxu0 0.0
      %2897 = vmatmul.mubr.f32.gmra.mrb[0].mxu0 %v743
      %v2898 = vpop.f32.mrb[0].mxu0
      %v2899 = vadd.f32 0.0, %v2898
      %v2900 = vpop.f32.mrb[0].mxu0
      %v2901 = vadd.f32 0.0, %v2900
      %2902 = vmatprep.mubr.f32.mxu0 0.0
      %2903 = vmatmul.mubr.f32.gmra.mrb[0].mxu0 %v746
      %v2904 = vpop.f32.mrb[0].mxu0
      %v2905 = vadd.f32 0.0, %v2904
      %v2906 = vpop.f32.mrb[0].mxu0
      %v2907 = vadd.f32 0.0, %v2906
      %2908 = vmatprep.mubr.f32.mxu0 0.0
      %2909 = vmatmul.mubr.f32.gmra.mrb[0].mxu0 %v749
      %v2910 = vpop.f32.mrb[0].mxu0
      %v2911 = vadd.f32 0.0, %v2910
      %v2912 = vpop.f32.mrb[0].mxu0
      %v2913 = vadd.f32 0.0, %v2912
      %2914 = vmatprep.mubr.f32.mxu0 0.0
      %2915 = vmatmul.mubr.f32.gmra.mrb[0].mxu0 %v752
      %v2916 = vpop.f32.mrb[0].mxu0
      %v2917 = vadd.f32 0.0, %v2916
      %v2918 = vpop.f32.mrb[0].mxu0
      %v2919 = vadd.f32 0.0, %v2918
      %2920 = vmatprep.mubr.f32.mxu0 0.0
      %2921 = vmatmul.mubr.f32.gmra.mrb[0].mxu0 %v755
      %v2922 = vpop.f32.mrb[0].mxu0
      %v2923 = vadd.f32 0.0, %v2922
      %v2924 = vpop.f32.mrb[0].mxu0
      %v2925 = vadd.f32 0.0, %v2924
      %2926 = vmatprep.mubr.f32.mxu0 0.0
      %2927 = vmatmul.mubr.f32.gmra.mrb[0].mxu0 %v758
      %v2928 = vpop.f32.mrb[0].mxu0
      %v2929 = vadd.f32 0.0, %v2928
      %v2930 = vpop.f32.mrb[0].mxu0
      %v2931 = vadd.f32 0.0, %v2930
      %2932 = vmatprep.mubr.f32.mxu0 0.0
      %2933 = vmatmul.mubr.f32.gmra.mrb[0].mxu0 %v761
      %v2934 = vpop.f32.mrb[0].mxu0
      %v2935 = vadd.f32 0.0, %v2934
      %v2936 = vpop.f32.mrb[0].mxu0
      %v2937 = vadd.f32 0.0, %v2936
      %2938 = vmatprep.mubr.f32.mxu0 0.0
      %2939 = vmatmul.mubr.f32.gmra.mrb[0].mxu0 %v764
      %v2940 = vpop.f32.mrb[0].mxu0
      %v2941 = vadd.f32 0.0, %v2940
      %v2942 = vpop.f32.mrb[0].mxu0
      %v2943 = vadd.f32 0.0, %v2942
      %2944 = vmatprep.mubr.f32.mxu0 0.0
      %2945 = vmatmul.mubr.f32.gmra.mrb[0].mxu0 %v767
      %v2946 = vpop.f32.mrb[0].mxu0
      %v2947 = vadd.f32 0.0, %v2946
      %v2948 = vpop.f32.mrb[0].mxu0
      %v2949 = vadd.f32 0.0, %v2948
      %2950 = vmatprep.mubr.f32.mxu0 0.0
      %2951 = vmatmul.mubr.f32.gmra.mrb[0].mxu0 %v770
      %v2952 = vpop.f32.mrb[0].mxu0
      %v2953 = vadd.f32 0.0, %v2952
      %v2954 = vpop.f32.mrb[0].mxu0
      %v2955 = vadd.f32 0.0, %v2954
      %2956 = vmatprep.mubr.f32.mxu0 0.0
      %2957 = vmatmul.mubr.f32.gmra.mrb[0].mxu0 %v773
      %v2958 = vpop.f32.mrb[0].mxu0
      %v2959 = vadd.f32 0.0, %v2958
      %v2960 = vpop.f32.mrb[0].mxu0
      %v2961 = vadd.f32 0.0, %v2960
      %2962 = vmatprep.mubr.f32.mxu0 0.0
      %2963 = vmatmul.mubr.f32.gmra.mrb[0].mxu0 %v776
      %v2964 = vpop.f32.mrb[0].mxu0
      %v2965 = vadd.f32 0.0, %v2964
      %v2966 = vpop.f32.mrb[0].mxu0
      %v2967 = vadd.f32 0.0, %v2966
      %2968 = vmatprep.mubr.f32.mxu0 0.0
      %2969 = vmatmul.mubr.f32.gmra.mrb[0].mxu0 %v779
      %v2970 = vpop.f32.mrb[0].mxu0
      %v2971 = vadd.f32 0.0, %v2970
      %v2972 = vpop.f32.mrb[0].mxu0
      %v2973 = vadd.f32 0.0, %v2972
      %2974 = vmatprep.mubr.f32.mxu0 0.0
      %2975 = vmatmul.mubr.f32.gmra.mrb[0].mxu0 %v782
      %v2976 = vpop.f32.mrb[0].mxu0
      %v2977 = vadd.f32 0.0, %v2976
      %v2978 = vpop.f32.mrb[0].mxu0
      %v2979 = vadd.f32 0.0, %v2978
      %2980 = vdwg.mxu0
      %v2981 = vadd.f32 %v2209, %v2404
      %v2982 = vadd.f32 %v2210, %v2406
      %v2983 = vadd.f32 %v2211, %v2565
      %v2984 = vadd.f32 %v2212, %v2567
      %v2985 = vadd.f32 %v2213, %v2726
      %v2986 = vadd.f32 %v2214, %v2728
      %v2987 = vadd.f32 %v2215, %v2887
      %v2988 = vadd.f32 %v2216, %v2889
      %v2989 = vadd.f32 %v2217, %v2410
      %v2990 = vadd.f32 %v2218, %v2412
      %v2991 = vadd.f32 %v2219, %v2571
      %v2992 = vadd.f32 %v2220, %v2573
      %v2993 = vadd.f32 %v2221, %v2732
      %v2994 = vadd.f32 %v2222, %v2734
      %v2995 = vadd.f32 %v2223, %v2893
      %v2996 = vadd.f32 %v2224, %v2895
      %v2997 = vadd.f32 %v2225, %v2416
      %v2998 = vadd.f32 %v2226, %v2418
      %v2999 = vadd.f32 %v2227, %v2577
      %v3000 = vadd.f32 %v2228, %v2579
      %v3001 = vadd.f32 %v2229, %v2738
      %v3002 = vadd.f32 %v2230, %v2740
      %v3003 = vadd.f32 %v2231, %v2899
      %v3004 = vadd.f32 %v2232, %v2901
      %v3005 = vadd.f32 %v2233, %v2422
      %v3006 = vadd.f32 %v2234, %v2424
      %v3007 = vadd.f32 %v2235, %v2583
      %v3008 = vadd.f32 %v2236, %v2585
      %v3009 = vadd.f32 %v2237, %v2744
      %v3010 = vadd.f32 %v2238, %v2746
      %v3011 = vadd.f32 %v2239, %v2905
      %v3012 = vadd.f32 %v2240, %v2907
      %v3013 = vadd.f32 %v2241, %v2428
      %v3014 = vadd.f32 %v2242, %v2430
      %v3015 = vadd.f32 %v2243, %v2589
      %v3016 = vadd.f32 %v2244, %v2591
      %v3017 = vadd.f32 %v2245, %v2750
      %v3018 = vadd.f32 %v2246, %v2752
      %v3019 = vadd.f32 %v2247, %v2911
      %v3020 = vadd.f32 %v2248, %v2913
      %v3021 = vadd.f32 %v2249, %v2434
      %v3022 = vadd.f32 %v2250, %v2436
      %v3023 = vadd.f32 %v2251, %v2595
      %v3024 = vadd.f32 %v2252, %v2597
      %v3025 = vadd.f32 %v2253, %v2756
      %v3026 = vadd.f32 %v2254, %v2758
      %v3027 = vadd.f32 %v2255, %v2917
      %v3028 = vadd.f32 %v2256, %v2919
      %v3029 = vadd.f32 %v2257, %v2440
      %v3030 = vadd.f32 %v2258, %v2442
      %v3031 = vadd.f32 %v2259, %v2601
      %v3032 = vadd.f32 %v2260, %v2603
      %v3033 = vadd.f32 %v2261, %v2762
      %v3034 = vadd.f32 %v2262, %v2764
      %v3035 = vadd.f32 %v2263, %v2923
      %v3036 = vadd.f32 %v2264, %v2925
      %v3037 = vadd.f32 %v2265, %v2446
      %v3038 = vadd.f32 %v2266, %v2448
      %v3039 = vadd.f32 %v2267, %v2607
      %v3040 = vadd.f32 %v2268, %v2609
      %v3041 = vadd.f32 %v2269, %v2768
      %v3042 = vadd.f32 %v2270, %v2770
      %v3043 = vadd.f32 %v2271, %v2929
      %v3044 = vadd.f32 %v2272, %v2931
      %v3045 = vadd.f32 %v2273, %v2452
      %v3046 = vadd.f32 %v2274, %v2454
      %v3047 = vadd.f32 %v2275, %v2613
      %v3048 = vadd.f32 %v2276, %v2615
      %v3049 = vadd.f32 %v2277, %v2774
      %v3050 = vadd.f32 %v2278, %v2776
      %v3051 = vadd.f32 %v2279, %v2935
      %v3052 = vadd.f32 %v2280, %v2937
      %v3053 = vadd.f32 %v2281, %v2458
      %v3054 = vadd.f32 %v2282, %v2460
      %v3055 = vadd.f32 %v2283, %v2619
      %v3056 = vadd.f32 %v2284, %v2621
      %v3057 = vadd.f32 %v2285, %v2780
      %v3058 = vadd.f32 %v2286, %v2782
      %v3059 = vadd.f32 %v2287, %v2941
      %v3060 = vadd.f32 %v2288, %v2943
      %v3061 = vadd.f32 %v2289, %v2464
      %v3062 = vadd.f32 %v2290, %v2466
      %v3063 = vadd.f32 %v2291, %v2625
      %v3064 = vadd.f32 %v2292, %v2627
      %v3065 = vadd.f32 %v2293, %v2786
      %v3066 = vadd.f32 %v2294, %v2788
      %v3067 = vadd.f32 %v2295, %v2947
      %v3068 = vadd.f32 %v2296, %v2949
      %v3069 = vadd.f32 %v2297, %v2470
      %v3070 = vadd.f32 %v2298, %v2472
      %v3071 = vadd.f32 %v2299, %v2631
      %v3072 = vadd.f32 %v2300, %v2633
      %v3073 = vadd.f32 %v2301, %v2792
      %v3074 = vadd.f32 %v2302, %v2794
      %v3075 = vadd.f32 %v2303, %v2953
      %v3076 = vadd.f32 %v2304, %v2955
      %v3077 = vadd.f32 %v2305, %v2476
      %v3078 = vadd.f32 %v2306, %v2478
      %v3079 = vadd.f32 %v2307, %v2637
      %v3080 = vadd.f32 %v2308, %v2639
      %v3081 = vadd.f32 %v2309, %v2798
      %v3082 = vadd.f32 %v2310, %v2800
      %v3083 = vadd.f32 %v2311, %v2959
      %v3084 = vadd.f32 %v2312, %v2961
      %v3085 = vadd.f32 %v2313, %v2482
      %v3086 = vadd.f32 %v2314, %v2484
      %v3087 = vadd.f32 %v2315, %v2643
      %v3088 = vadd.f32 %v2316, %v2645
      %v3089 = vadd.f32 %v2317, %v2804
      %v3090 = vadd.f32 %v2318, %v2806
      %v3091 = vadd.f32 %v2319, %v2965
      %v3092 = vadd.f32 %v2320, %v2967
      %v3093 = vadd.f32 %v2321, %v2488
      %v3094 = vadd.f32 %v2322, %v2490
      %v3095 = vadd.f32 %v2323, %v2649
      %v3096 = vadd.f32 %v2324, %v2651
      %v3097 = vadd.f32 %v2325, %v2810
      %v3098 = vadd.f32 %v2326, %v2812
      %v3099 = vadd.f32 %v2327, %v2971
      %v3100 = vadd.f32 %v2328, %v2973
      %v3101 = vadd.f32 %v2329, %v2494
      %v3102 = vadd.f32 %v2330, %v2496
      %v3103 = vadd.f32 %v2331, %v2655
      %v3104 = vadd.f32 %v2332, %v2657
      %v3105 = vadd.f32 %v2333, %v2816
      %v3106 = vadd.f32 %v2334, %v2818
      %v3107 = vadd.f32 %v2335, %v2977
      %v3108 = vadd.f32 %v2336, %v2979
      %v3109 = vadd.f32 %v2981, %v1076
      %v3110 = vadd.f32 %v2982, %v1076
      %v3111 = vadd.f32 %v2983, %v1076
      %v3112 = vadd.f32 %v2984, %v1076
      %v3113 = vadd.f32 %v2985, %v1076
      %v3114 = vadd.f32 %v2986, %v1076
      %v3115 = vadd.f32 %v2987, %v1076
      %v3116 = vadd.f32 %v2988, %v1076
      %v3117 = vadd.f32 %v2989, %v1081
      %v3118 = vadd.f32 %v2990, %v1081
      %v3119 = vadd.f32 %v2991, %v1081
      %v3120 = vadd.f32 %v2992, %v1081
      %v3121 = vadd.f32 %v2993, %v1081
      %v3122 = vadd.f32 %v2994, %v1081
      %v3123 = vadd.f32 %v2995, %v1081
      %v3124 = vadd.f32 %v2996, %v1081
      %v3125 = vadd.f32 %v2997, %v1086
      %v3126 = vadd.f32 %v2998, %v1086
      %v3127 = vadd.f32 %v2999, %v1086
      %v3128 = vadd.f32 %v3000, %v1086
      %v3129 = vadd.f32 %v3001, %v1086
      %v3130 = vadd.f32 %v3002, %v1086
      %v3131 = vadd.f32 %v3003, %v1086
      %v3132 = vadd.f32 %v3004, %v1086
      %v3133 = vadd.f32 %v3005, %v1091
      %v3134 = vadd.f32 %v3006, %v1091
      %v3135 = vadd.f32 %v3007, %v1091
      %v3136 = vadd.f32 %v3008, %v1091
      %v3137 = vadd.f32 %v3009, %v1091
      %v3138 = vadd.f32 %v3010, %v1091
      %v3139 = vadd.f32 %v3011, %v1091
      %v3140 = vadd.f32 %v3012, %v1091
      %v3141 = vadd.f32 %v3013, %v1096
      %v3142 = vadd.f32 %v3014, %v1096
      %v3143 = vadd.f32 %v3015, %v1096
      %v3144 = vadd.f32 %v3016, %v1096
      %v3145 = vadd.f32 %v3017, %v1096
      %v3146 = vadd.f32 %v3018, %v1096
      %v3147 = vadd.f32 %v3019, %v1096
      %v3148 = vadd.f32 %v3020, %v1096
      %v3149 = vadd.f32 %v3021, %v1101
      %v3150 = vadd.f32 %v3022, %v1101
      %v3151 = vadd.f32 %v3023, %v1101
      %v3152 = vadd.f32 %v3024, %v1101
      %v3153 = vadd.f32 %v3025, %v1101
      %v3154 = vadd.f32 %v3026, %v1101
      %v3155 = vadd.f32 %v3027, %v1101
      %v3156 = vadd.f32 %v3028, %v1101
      %v3157 = vadd.f32 %v3029, %v1106
      %v3158 = vadd.f32 %v3030, %v1106
      %v3159 = vadd.f32 %v3031, %v1106
      %v3160 = vadd.f32 %v3032, %v1106
      %v3161 = vadd.f32 %v3033, %v1106
      %v3162 = vadd.f32 %v3034, %v1106
      %v3163 = vadd.f32 %v3035, %v1106
      %v3164 = vadd.f32 %v3036, %v1106
      %v3165 = vadd.f32 %v3037, %v1111
      %v3166 = vadd.f32 %v3038, %v1111
      %v3167 = vadd.f32 %v3039, %v1111
      %v3168 = vadd.f32 %v3040, %v1111
      %v3169 = vadd.f32 %v3041, %v1111
      %v3170 = vadd.f32 %v3042, %v1111
      %v3171 = vadd.f32 %v3043, %v1111
      %v3172 = vadd.f32 %v3044, %v1111
      %v3173 = vadd.f32 %v3045, %v1116
      %v3174 = vadd.f32 %v3046, %v1116
      %v3175 = vadd.f32 %v3047, %v1116
      %v3176 = vadd.f32 %v3048, %v1116
      %v3177 = vadd.f32 %v3049, %v1116
      %v3178 = vadd.f32 %v3050, %v1116
      %v3179 = vadd.f32 %v3051, %v1116
      %v3180 = vadd.f32 %v3052, %v1116
      %v3181 = vadd.f32 %v3053, %v1121
      %v3182 = vadd.f32 %v3054, %v1121
      %v3183 = vadd.f32 %v3055, %v1121
      %v3184 = vadd.f32 %v3056, %v1121
      %v3185 = vadd.f32 %v3057, %v1121
      %v3186 = vadd.f32 %v3058, %v1121
      %v3187 = vadd.f32 %v3059, %v1121
      %v3188 = vadd.f32 %v3060, %v1121
      %v3189 = vadd.f32 %v3061, %v1126
      %v3190 = vadd.f32 %v3062, %v1126
      %v3191 = vadd.f32 %v3063, %v1126
      %v3192 = vadd.f32 %v3064, %v1126
      %v3193 = vadd.f32 %v3065, %v1126
      %v3194 = vadd.f32 %v3066, %v1126
      %v3195 = vadd.f32 %v3067, %v1126
      %v3196 = vadd.f32 %v3068, %v1126
      %v3197 = vadd.f32 %v3069, %v1131
      %v3198 = vadd.f32 %v3070, %v1131
      %v3199 = vadd.f32 %v3071, %v1131
      %v3200 = vadd.f32 %v3072, %v1131
      %v3201 = vadd.f32 %v3073, %v1131
      %v3202 = vadd.f32 %v3074, %v1131
      %v3203 = vadd.f32 %v3075, %v1131
      %v3204 = vadd.f32 %v3076, %v1131
      %v3205 = vadd.f32 %v3077, %v1136
      %v3206 = vadd.f32 %v3078, %v1136
      %v3207 = vadd.f32 %v3079, %v1136
      %v3208 = vadd.f32 %v3080, %v1136
      %v3209 = vadd.f32 %v3081, %v1136
      %v3210 = vadd.f32 %v3082, %v1136
      %v3211 = vadd.f32 %v3083, %v1136
      %v3212 = vadd.f32 %v3084, %v1136
      %v3213 = vadd.f32 %v3085, %v1141
      %v3214 = vadd.f32 %v3086, %v1141
      %v3215 = vadd.f32 %v3087, %v1141
      %v3216 = vadd.f32 %v3088, %v1141
      %v3217 = vadd.f32 %v3089, %v1141
      %v3218 = vadd.f32 %v3090, %v1141
      %v3219 = vadd.f32 %v3091, %v1141
      %v3220 = vadd.f32 %v3092, %v1141
      %v3221 = vadd.f32 %v3093, %v1146
      %v3222 = vadd.f32 %v3094, %v1146
      %v3223 = vadd.f32 %v3095, %v1146
      %v3224 = vadd.f32 %v3096, %v1146
      %v3225 = vadd.f32 %v3097, %v1146
      %v3226 = vadd.f32 %v3098, %v1146
      %v3227 = vadd.f32 %v3099, %v1146
      %v3228 = vadd.f32 %v3100, %v1146
      %v3229 = vadd.f32 %v3101, %v1151
      %v3230 = vadd.f32 %v3102, %v1151
      %v3231 = vadd.f32 %v3103, %v1151
      %v3232 = vadd.f32 %v3104, %v1151
      %v3233 = vadd.f32 %v3105, %v1151
      %v3234 = vadd.f32 %v3106, %v1151
      %v3235 = vadd.f32 %v3107, %v1151
      %v3236 = vadd.f32 %v3108, %v1151
      %v3237 = vxor.u32 %v3109, 2147483648
      %v3238 = vxor.u32 %v3110, 2147483648
      %v3239 = vxor.u32 %v3111, 2147483648
      %v3240 = vxor.u32 %v3112, 2147483648
      %v3241 = vxor.u32 %v3113, 2147483648
      %v3242 = vxor.u32 %v3114, 2147483648
      %v3243 = vxor.u32 %v3115, 2147483648
      %v3244 = vxor.u32 %v3116, 2147483648
      %v3245 = vxor.u32 %v3117, 2147483648
      %v3246 = vxor.u32 %v3118, 2147483648
      %v3247 = vxor.u32 %v3119, 2147483648
      %v3248 = vxor.u32 %v3120, 2147483648
      %v3249 = vxor.u32 %v3121, 2147483648
      %v3250 = vxor.u32 %v3122, 2147483648
      %v3251 = vxor.u32 %v3123, 2147483648
      %v3252 = vxor.u32 %v3124, 2147483648
      %v3253 = vxor.u32 %v3125, 2147483648
      %v3254 = vxor.u32 %v3126, 2147483648
      %v3255 = vxor.u32 %v3127, 2147483648
      %v3256 = vxor.u32 %v3128, 2147483648
      %v3257 = vxor.u32 %v3129, 2147483648
      %v3258 = vxor.u32 %v3130, 2147483648
      %v3259 = vxor.u32 %v3131, 2147483648
      %v3260 = vxor.u32 %v3132, 2147483648
      %v3261 = vxor.u32 %v3133, 2147483648
      %v3262 = vxor.u32 %v3134, 2147483648
      %v3263 = vxor.u32 %v3135, 2147483648
      %v3264 = vxor.u32 %v3136, 2147483648
      %v3265 = vxor.u32 %v3137, 2147483648
      %v3266 = vxor.u32 %v3138, 2147483648
      %v3267 = vxor.u32 %v3139, 2147483648
      %v3268 = vxor.u32 %v3140, 2147483648
      %v3269 = vmul.f32 %v3237, 1.442695
      %v3270 = vpow.pop %v3269
      %v3271 = vmul.f32 %v3238, 1.442695
      %v3272 = vpow.pop %v3271
      %v3273 = vmul.f32 %v3239, 1.442695
      %v3274 = vpow.pop %v3273
      %v3275 = vmul.f32 %v3240, 1.442695
      %v3276 = vpow.pop %v3275
      %v3277 = vmul.f32 %v3241, 1.442695
      %v3278 = vpow.pop %v3277
      %v3279 = vmul.f32 %v3242, 1.442695
      %v3280 = vpow.pop %v3279
      %v3281 = vmul.f32 %v3243, 1.442695
      %v3282 = vpow.pop %v3281
      %v3283 = vmul.f32 %v3244, 1.442695
      %v3284 = vpow.pop %v3283
      %v3285 = vmul.f32 %v3245, 1.442695
      %v3286 = vpow.pop %v3285
      %v3287 = vmul.f32 %v3246, 1.442695
      %v3288 = vpow.pop %v3287
      %v3289 = vmul.f32 %v3247, 1.442695
      %v3290 = vpow.pop %v3289
      %v3291 = vmul.f32 %v3248, 1.442695
      %v3292 = vpow.pop %v3291
      %v3293 = vmul.f32 %v3249, 1.442695
      %v3294 = vpow.pop %v3293
      %v3295 = vmul.f32 %v3250, 1.442695
      %v3296 = vpow.pop %v3295
      %v3297 = vmul.f32 %v3251, 1.442695
      %v3298 = vpow.pop %v3297
      %v3299 = vmul.f32 %v3252, 1.442695
      %v3300 = vpow.pop %v3299
      %v3301 = vmul.f32 %v3253, 1.442695
      %v3302 = vpow.pop %v3301
      %v3303 = vmul.f32 %v3254, 1.442695
      %v3304 = vpow.pop %v3303
      %v3305 = vmul.f32 %v3255, 1.442695
      %v3306 = vpow.pop %v3305
      %v3307 = vmul.f32 %v3256, 1.442695
      %v3308 = vpow.pop %v3307
      %v3309 = vmul.f32 %v3257, 1.442695
      %v3310 = vpow.pop %v3309
      %v3311 = vmul.f32 %v3258, 1.442695
      %v3312 = vpow.pop %v3311
      %v3313 = vmul.f32 %v3259, 1.442695
      %v3314 = vpow.pop %v3313
      %v3315 = vmul.f32 %v3260, 1.442695
      %v3316 = vpow.pop %v3315
      %v3317 = vmul.f32 %v3261, 1.442695
      %v3318 = vpow.pop %v3317
      %v3319 = vmul.f32 %v3262, 1.442695
      %v3320 = vpow.pop %v3319
      %v3321 = vmul.f32 %v3263, 1.442695
      %v3322 = vpow.pop %v3321
      %v3323 = vmul.f32 %v3264, 1.442695
      %v3324 = vpow.pop %v3323
      %v3325 = vmul.f32 %v3265, 1.442695
      %v3326 = vpow.pop %v3325
      %v3327 = vmul.f32 %v3266, 1.442695
      %v3328 = vpow.pop %v3327
      %v3329 = vmul.f32 %v3267, 1.442695
      %v3330 = vpow.pop %v3329
      %v3331 = vmul.f32 %v3268, 1.442695
      %v3332 = vpow.pop %v3331
      %v3333 = vadd.f32 %v3270, 1.0
      %v3334 = vadd.f32 %v3272, 1.0
      %v3335 = vadd.f32 %v3274, 1.0
      %v3336 = vadd.f32 %v3276, 1.0
      %v3337 = vadd.f32 %v3278, 1.0
      %v3338 = vadd.f32 %v3280, 1.0
      %v3339 = vadd.f32 %v3282, 1.0
      %v3340 = vadd.f32 %v3284, 1.0
      %v3341 = vadd.f32 %v3286, 1.0
      %v3342 = vadd.f32 %v3288, 1.0
      %v3343 = vadd.f32 %v3290, 1.0
      %v3344 = vadd.f32 %v3292, 1.0
      %v3345 = vadd.f32 %v3294, 1.0
      %v3346 = vadd.f32 %v3296, 1.0
      %v3347 = vadd.f32 %v3298, 1.0
      %v3348 = vadd.f32 %v3300, 1.0
      %v3349 = vadd.f32 %v3302, 1.0
      %v3350 = vadd.f32 %v3304, 1.0
      %v3351 = vadd.f32 %v3306, 1.0
      %v3352 = vadd.f32 %v3308, 1.0
      %v3353 = vadd.f32 %v3310, 1.0
      %v3354 = vadd.f32 %v3312, 1.0
      %v3355 = vadd.f32 %v3314, 1.0
      %v3356 = vadd.f32 %v3316, 1.0
      %v3357 = vadd.f32 %v3318, 1.0
      %v3358 = vadd.f32 %v3320, 1.0
      %v3359 = vadd.f32 %v3322, 1.0
      %v3360 = vadd.f32 %v3324, 1.0
      %v3361 = vadd.f32 %v3326, 1.0
      %v3362 = vadd.f32 %v3328, 1.0
      %v3363 = vadd.f32 %v3330, 1.0
      %v3364 = vadd.f32 %v3332, 1.0
      %v3365 = vrcp.pop %v3333
      %v3366 = vmul.f32 1.0, %v3365
      %v3367 = vrcp.pop %v3334
      %v3368 = vmul.f32 1.0, %v3367
      %v3369 = vrcp.pop %v3335
      %v3370 = vmul.f32 1.0, %v3369
      %v3371 = vrcp.pop %v3336
      %v3372 = vmul.f32 1.0, %v3371
      %v3373 = vrcp.pop %v3337
      %v3374 = vmul.f32 1.0, %v3373
      %v3375 = vrcp.pop %v3338
      %v3376 = vmul.f32 1.0, %v3375
      %v3377 = vrcp.pop %v3339
      %v3378 = vmul.f32 1.0, %v3377
      %v3379 = vrcp.pop %v3340
      %v3380 = vmul.f32 1.0, %v3379
      %v3381 = vrcp.pop %v3341
      %v3382 = vmul.f32 1.0, %v3381
      %v3383 = vrcp.pop %v3342
      %v3384 = vmul.f32 1.0, %v3383
      %v3385 = vrcp.pop %v3343
      %v3386 = vmul.f32 1.0, %v3385
      %v3387 = vrcp.pop %v3344
      %v3388 = vmul.f32 1.0, %v3387
      %v3389 = vrcp.pop %v3345
      %v3390 = vmul.f32 1.0, %v3389
      %v3391 = vrcp.pop %v3346
      %v3392 = vmul.f32 1.0, %v3391
      %v3393 = vrcp.pop %v3347
      %v3394 = vmul.f32 1.0, %v3393
      %v3395 = vrcp.pop %v3348
      %v3396 = vmul.f32 1.0, %v3395
      %v3397 = vrcp.pop %v3349
      %v3398 = vmul.f32 1.0, %v3397
      %v3399 = vrcp.pop %v3350
      %v3400 = vmul.f32 1.0, %v3399
      %v3401 = vrcp.pop %v3351
      %v3402 = vmul.f32 1.0, %v3401
      %v3403 = vrcp.pop %v3352
      %v3404 = vmul.f32 1.0, %v3403
      %v3405 = vrcp.pop %v3353
      %v3406 = vmul.f32 1.0, %v3405
      %v3407 = vrcp.pop %v3354
      %v3408 = vmul.f32 1.0, %v3407
      %v3409 = vrcp.pop %v3355
      %v3410 = vmul.f32 1.0, %v3409
      %v3411 = vrcp.pop %v3356
      %v3412 = vmul.f32 1.0, %v3411
      %v3413 = vrcp.pop %v3357
      %v3414 = vmul.f32 1.0, %v3413
      %v3415 = vrcp.pop %v3358
      %v3416 = vmul.f32 1.0, %v3415
      %v3417 = vrcp.pop %v3359
      %v3418 = vmul.f32 1.0, %v3417
      %v3419 = vrcp.pop %v3360
      %v3420 = vmul.f32 1.0, %v3419
      %v3421 = vrcp.pop %v3361
      %v3422 = vmul.f32 1.0, %v3421
      %v3423 = vrcp.pop %v3362
      %v3424 = vmul.f32 1.0, %v3423
      %v3425 = vrcp.pop %v3363
      %v3426 = vmul.f32 1.0, %v3425
      %v3427 = vrcp.pop %v3364
      %v3428 = vmul.f32 1.0, %v3427
      %v3429 = vxor.u32 %v3141, 2147483648
      %v3430 = vxor.u32 %v3142, 2147483648
      %v3431 = vxor.u32 %v3143, 2147483648
      %v3432 = vxor.u32 %v3144, 2147483648
      %v3433 = vxor.u32 %v3145, 2147483648
      %v3434 = vxor.u32 %v3146, 2147483648
      %v3435 = vxor.u32 %v3147, 2147483648
      %v3436 = vxor.u32 %v3148, 2147483648
      %v3437 = vxor.u32 %v3149, 2147483648
      %v3438 = vxor.u32 %v3150, 2147483648
      %v3439 = vxor.u32 %v3151, 2147483648
      %v3440 = vxor.u32 %v3152, 2147483648
      %v3441 = vxor.u32 %v3153, 2147483648
      %v3442 = vxor.u32 %v3154, 2147483648
      %v3443 = vxor.u32 %v3155, 2147483648
      %v3444 = vxor.u32 %v3156, 2147483648
      %v3445 = vxor.u32 %v3157, 2147483648
      %v3446 = vxor.u32 %v3158, 2147483648
      %v3447 = vxor.u32 %v3159, 2147483648
      %v3448 = vxor.u32 %v3160, 2147483648
      %v3449 = vxor.u32 %v3161, 2147483648
      %v3450 = vxor.u32 %v3162, 2147483648
      %v3451 = vxor.u32 %v3163, 2147483648
      %v3452 = vxor.u32 %v3164, 2147483648
      %v3453 = vxor.u32 %v3165, 2147483648
      %v3454 = vxor.u32 %v3166, 2147483648
      %v3455 = vxor.u32 %v3167, 2147483648
      %v3456 = vxor.u32 %v3168, 2147483648
      %v3457 = vxor.u32 %v3169, 2147483648
      %v3458 = vxor.u32 %v3170, 2147483648
      %v3459 = vxor.u32 %v3171, 2147483648
      %v3460 = vxor.u32 %v3172, 2147483648
      %v3461 = vmul.f32 %v3429, 1.442695
      %v3462 = vpow.pop %v3461
      %v3463 = vmul.f32 %v3430, 1.442695
      %v3464 = vpow.pop %v3463
      %v3465 = vmul.f32 %v3431, 1.442695
      %v3466 = vpow.pop %v3465
      %v3467 = vmul.f32 %v3432, 1.442695
      %v3468 = vpow.pop %v3467
      %v3469 = vmul.f32 %v3433, 1.442695
      %v3470 = vpow.pop %v3469
      %v3471 = vmul.f32 %v3434, 1.442695
      %v3472 = vpow.pop %v3471
      %v3473 = vmul.f32 %v3435, 1.442695
      %v3474 = vpow.pop %v3473
      %v3475 = vmul.f32 %v3436, 1.442695
      %v3476 = vpow.pop %v3475
      %v3477 = vmul.f32 %v3437, 1.442695
      %v3478 = vpow.pop %v3477
      %v3479 = vmul.f32 %v3438, 1.442695
      %v3480 = vpow.pop %v3479
      %v3481 = vmul.f32 %v3439, 1.442695
      %v3482 = vpow.pop %v3481
      %v3483 = vmul.f32 %v3440, 1.442695
      %v3484 = vpow.pop %v3483
      %v3485 = vmul.f32 %v3441, 1.442695
      %v3486 = vpow.pop %v3485
      %v3487 = vmul.f32 %v3442, 1.442695
      %v3488 = vpow.pop %v3487
      %v3489 = vmul.f32 %v3443, 1.442695
      %v3490 = vpow.pop %v3489
      %v3491 = vmul.f32 %v3444, 1.442695
      %v3492 = vpow.pop %v3491
      %v3493 = vmul.f32 %v3445, 1.442695
      %v3494 = vpow.pop %v3493
      %v3495 = vmul.f32 %v3446, 1.442695
      %v3496 = vpow.pop %v3495
      %v3497 = vmul.f32 %v3447, 1.442695
      %v3498 = vpow.pop %v3497
      %v3499 = vmul.f32 %v3448, 1.442695
      %v3500 = vpow.pop %v3499
      %v3501 = vmul.f32 %v3449, 1.442695
      %v3502 = vpow.pop %v3501
      %v3503 = vmul.f32 %v3450, 1.442695
      %v3504 = vpow.pop %v3503
      %v3505 = vmul.f32 %v3451, 1.442695
      %v3506 = vpow.pop %v3505
      %v3507 = vmul.f32 %v3452, 1.442695
      %v3508 = vpow.pop %v3507
      %v3509 = vmul.f32 %v3453, 1.442695
      %v3510 = vpow.pop %v3509
      %v3511 = vmul.f32 %v3454, 1.442695
      %v3512 = vpow.pop %v3511
      %v3513 = vmul.f32 %v3455, 1.442695
      %v3514 = vpow.pop %v3513
      %v3515 = vmul.f32 %v3456, 1.442695
      %v3516 = vpow.pop %v3515
      %v3517 = vmul.f32 %v3457, 1.442695
      %v3518 = vpow.pop %v3517
      %v3519 = vmul.f32 %v3458, 1.442695
      %v3520 = vpow.pop %v3519
      %v3521 = vmul.f32 %v3459, 1.442695
      %v3522 = vpow.pop %v3521
      %v3523 = vmul.f32 %v3460, 1.442695
      %v3524 = vpow.pop %v3523
      %v3525 = vadd.f32 %v3462, 1.0
      %v3526 = vadd.f32 %v3464, 1.0
      %v3527 = vadd.f32 %v3466, 1.0
      %v3528 = vadd.f32 %v3468, 1.0
      %v3529 = vadd.f32 %v3470, 1.0
      %v3530 = vadd.f32 %v3472, 1.0
      %v3531 = vadd.f32 %v3474, 1.0
      %v3532 = vadd.f32 %v3476, 1.0
      %v3533 = vadd.f32 %v3478, 1.0
      %v3534 = vadd.f32 %v3480, 1.0
      %v3535 = vadd.f32 %v3482, 1.0
      %v3536 = vadd.f32 %v3484, 1.0
      %v3537 = vadd.f32 %v3486, 1.0
      %v3538 = vadd.f32 %v3488, 1.0
      %v3539 = vadd.f32 %v3490, 1.0
      %v3540 = vadd.f32 %v3492, 1.0
      %v3541 = vadd.f32 %v3494, 1.0
      %v3542 = vadd.f32 %v3496, 1.0
      %v3543 = vadd.f32 %v3498, 1.0
      %v3544 = vadd.f32 %v3500, 1.0
      %v3545 = vadd.f32 %v3502, 1.0
      %v3546 = vadd.f32 %v3504, 1.0
      %v3547 = vadd.f32 %v3506, 1.0
      %v3548 = vadd.f32 %v3508, 1.0
      %v3549 = vadd.f32 %v3510, 1.0
      %v3550 = vadd.f32 %v3512, 1.0
      %v3551 = vadd.f32 %v3514, 1.0
      %v3552 = vadd.f32 %v3516, 1.0
      %v3553 = vadd.f32 %v3518, 1.0
      %v3554 = vadd.f32 %v3520, 1.0
      %v3555 = vadd.f32 %v3522, 1.0
      %v3556 = vadd.f32 %v3524, 1.0
      %v3557 = vrcp.pop %v3525
      %v3558 = vmul.f32 1.0, %v3557
      %v3559 = vrcp.pop %v3526
      %v3560 = vmul.f32 1.0, %v3559
      %v3561 = vrcp.pop %v3527
      %v3562 = vmul.f32 1.0, %v3561
      %v3563 = vrcp.pop %v3528
      %v3564 = vmul.f32 1.0, %v3563
      %v3565 = vrcp.pop %v3529
      %v3566 = vmul.f32 1.0, %v3565
      %v3567 = vrcp.pop %v3530
      %v3568 = vmul.f32 1.0, %v3567
      %v3569 = vrcp.pop %v3531
      %v3570 = vmul.f32 1.0, %v3569
      %v3571 = vrcp.pop %v3532
      %v3572 = vmul.f32 1.0, %v3571
      %v3573 = vrcp.pop %v3533
      %v3574 = vmul.f32 1.0, %v3573
      %v3575 = vrcp.pop %v3534
      %v3576 = vmul.f32 1.0, %v3575
      %v3577 = vrcp.pop %v3535
      %v3578 = vmul.f32 1.0, %v3577
      %v3579 = vrcp.pop %v3536
      %v3580 = vmul.f32 1.0, %v3579
      %v3581 = vrcp.pop %v3537
      %v3582 = vmul.f32 1.0, %v3581
      %v3583 = vrcp.pop %v3538
      %v3584 = vmul.f32 1.0, %v3583
      %v3585 = vrcp.pop %v3539
      %v3586 = vmul.f32 1.0, %v3585
      %v3587 = vrcp.pop %v3540
      %v3588 = vmul.f32 1.0, %v3587
      %v3589 = vrcp.pop %v3541
      %v3590 = vmul.f32 1.0, %v3589
      %v3591 = vrcp.pop %v3542
      %v3592 = vmul.f32 1.0, %v3591
      %v3593 = vrcp.pop %v3543
      %v3594 = vmul.f32 1.0, %v3593
      %v3595 = vrcp.pop %v3544
      %v3596 = vmul.f32 1.0, %v3595
      %v3597 = vrcp.pop %v3545
      %v3598 = vmul.f32 1.0, %v3597
      %v3599 = vrcp.pop %v3546
      %v3600 = vmul.f32 1.0, %v3599
      %v3601 = vrcp.pop %v3547
      %v3602 = vmul.f32 1.0, %v3601
      %v3603 = vrcp.pop %v3548
      %v3604 = vmul.f32 1.0, %v3603
      %v3605 = vrcp.pop %v3549
      %v3606 = vmul.f32 1.0, %v3605
      %v3607 = vrcp.pop %v3550
      %v3608 = vmul.f32 1.0, %v3607
      %v3609 = vrcp.pop %v3551
      %v3610 = vmul.f32 1.0, %v3609
      %v3611 = vrcp.pop %v3552
      %v3612 = vmul.f32 1.0, %v3611
      %v3613 = vrcp.pop %v3553
      %v3614 = vmul.f32 1.0, %v3613
      %v3615 = vrcp.pop %v3554
      %v3616 = vmul.f32 1.0, %v3615
      %v3617 = vrcp.pop %v3555
      %v3618 = vmul.f32 1.0, %v3617
      %v3619 = vrcp.pop %v3556
      %v3620 = vmul.f32 1.0, %v3619
      %v3621 = vtanh.pop %v3173
      %v3622 = vtanh.pop %v3174
      %v3623 = vtanh.pop %v3175
      %v3624 = vtanh.pop %v3176
      %v3625 = vtanh.pop %v3177
      %v3626 = vtanh.pop %v3178
      %v3627 = vtanh.pop %v3179
      %v3628 = vtanh.pop %v3180
      %v3629 = vtanh.pop %v3181
      %v3630 = vtanh.pop %v3182
      %v3631 = vtanh.pop %v3183
      %v3632 = vtanh.pop %v3184
      %v3633 = vtanh.pop %v3185
      %v3634 = vtanh.pop %v3186
      %v3635 = vtanh.pop %v3187
      %v3636 = vtanh.pop %v3188
      %v3637 = vtanh.pop %v3189
      %v3638 = vtanh.pop %v3190
      %v3639 = vtanh.pop %v3191
      %v3640 = vtanh.pop %v3192
      %v3641 = vtanh.pop %v3193
      %v3642 = vtanh.pop %v3194
      %v3643 = vtanh.pop %v3195
      %v3644 = vtanh.pop %v3196
      %v3645 = vtanh.pop %v3197
      %v3646 = vtanh.pop %v3198
      %v3647 = vtanh.pop %v3199
      %v3648 = vtanh.pop %v3200
      %v3649 = vtanh.pop %v3201
      %v3650 = vtanh.pop %v3202
      %v3651 = vtanh.pop %v3203
      %v3652 = vtanh.pop %v3204
      %v3653 = vxor.u32 %v3205, 2147483648
      %v3654 = vxor.u32 %v3206, 2147483648
      %v3655 = vxor.u32 %v3207, 2147483648
      %v3656 = vxor.u32 %v3208, 2147483648
      %v3657 = vxor.u32 %v3209, 2147483648
      %v3658 = vxor.u32 %v3210, 2147483648
      %v3659 = vxor.u32 %v3211, 2147483648
      %v3660 = vxor.u32 %v3212, 2147483648
      %v3661 = vxor.u32 %v3213, 2147483648
      %v3662 = vxor.u32 %v3214, 2147483648
      %v3663 = vxor.u32 %v3215, 2147483648
      %v3664 = vxor.u32 %v3216, 2147483648
      %v3665 = vxor.u32 %v3217, 2147483648
      %v3666 = vxor.u32 %v3218, 2147483648
      %v3667 = vxor.u32 %v3219, 2147483648
      %v3668 = vxor.u32 %v3220, 2147483648
      %v3669 = vxor.u32 %v3221, 2147483648
      %v3670 = vxor.u32 %v3222, 2147483648
      %v3671 = vxor.u32 %v3223, 2147483648
      %v3672 = vxor.u32 %v3224, 2147483648
      %v3673 = vxor.u32 %v3225, 2147483648
      %v3674 = vxor.u32 %v3226, 2147483648
      %v3675 = vxor.u32 %v3227, 2147483648
      %v3676 = vxor.u32 %v3228, 2147483648
      %v3677 = vxor.u32 %v3229, 2147483648
      %v3678 = vxor.u32 %v3230, 2147483648
      %v3679 = vxor.u32 %v3231, 2147483648
      %v3680 = vxor.u32 %v3232, 2147483648
      %v3681 = vxor.u32 %v3233, 2147483648
      %v3682 = vxor.u32 %v3234, 2147483648
      %v3683 = vxor.u32 %v3235, 2147483648
      %v3684 = vxor.u32 %v3236, 2147483648
      %v3685 = vmul.f32 %v3653, 1.442695
      %v3686 = vpow.pop %v3685
      %v3687 = vmul.f32 %v3654, 1.442695
      %v3688 = vpow.pop %v3687
      %v3689 = vmul.f32 %v3655, 1.442695
      %v3690 = vpow.pop %v3689
      %v3691 = vmul.f32 %v3656, 1.442695
      %v3692 = vpow.pop %v3691
      %v3693 = vmul.f32 %v3657, 1.442695
      %v3694 = vpow.pop %v3693
      %v3695 = vmul.f32 %v3658, 1.442695
      %v3696 = vpow.pop %v3695
      %v3697 = vmul.f32 %v3659, 1.442695
      %v3698 = vpow.pop %v3697
      %v3699 = vmul.f32 %v3660, 1.442695
      %v3700 = vpow.pop %v3699
      %v3701 = vmul.f32 %v3661, 1.442695
      %v3702 = vpow.pop %v3701
      %v3703 = vmul.f32 %v3662, 1.442695
      %v3704 = vpow.pop %v3703
      %v3705 = vmul.f32 %v3663, 1.442695
      %v3706 = vpow.pop %v3705
      %v3707 = vmul.f32 %v3664, 1.442695
      %v3708 = vpow.pop %v3707
      %v3709 = vmul.f32 %v3665, 1.442695
      %v3710 = vpow.pop %v3709
      %v3711 = vmul.f32 %v3666, 1.442695
      %v3712 = vpow.pop %v3711
      %v3713 = vmul.f32 %v3667, 1.442695
      %v3714 = vpow.pop %v3713
      %v3715 = vmul.f32 %v3668, 1.442695
      %v3716 = vpow.pop %v3715
      %v3717 = vmul.f32 %v3669, 1.442695
      %v3718 = vpow.pop %v3717
      %v3719 = vmul.f32 %v3670, 1.442695
      %v3720 = vpow.pop %v3719
      %v3721 = vmul.f32 %v3671, 1.442695
      %v3722 = vpow.pop %v3721
      %v3723 = vmul.f32 %v3672, 1.442695
      %v3724 = vpow.pop %v3723
      %v3725 = vmul.f32 %v3673, 1.442695
      %v3726 = vpow.pop %v3725
      %v3727 = vmul.f32 %v3674, 1.442695
      %v3728 = vpow.pop %v3727
      %v3729 = vmul.f32 %v3675, 1.442695
      %v3730 = vpow.pop %v3729
      %v3731 = vmul.f32 %v3676, 1.442695
      %v3732 = vpow.pop %v3731
      %v3733 = vmul.f32 %v3677, 1.442695
      %v3734 = vpow.pop %v3733
      %v3735 = vmul.f32 %v3678, 1.442695
      %v3736 = vpow.pop %v3735
      %v3737 = vmul.f32 %v3679, 1.442695
      %v3738 = vpow.pop %v3737
      %v3739 = vmul.f32 %v3680, 1.442695
      %v3740 = vpow.pop %v3739
      %v3741 = vmul.f32 %v3681, 1.442695
      %v3742 = vpow.pop %v3741
      %v3743 = vmul.f32 %v3682, 1.442695
      %v3744 = vpow.pop %v3743
      %v3745 = vmul.f32 %v3683, 1.442695
      %v3746 = vpow.pop %v3745
      %v3747 = vmul.f32 %v3684, 1.442695
      %v3748 = vpow.pop %v3747
      %v3749 = vadd.f32 %v3686, 1.0
      %v3750 = vadd.f32 %v3688, 1.0
      %v3751 = vadd.f32 %v3690, 1.0
      %v3752 = vadd.f32 %v3692, 1.0
      %v3753 = vadd.f32 %v3694, 1.0
      %v3754 = vadd.f32 %v3696, 1.0
      %v3755 = vadd.f32 %v3698, 1.0
      %v3756 = vadd.f32 %v3700, 1.0
      %v3757 = vadd.f32 %v3702, 1.0
      %v3758 = vadd.f32 %v3704, 1.0
      %v3759 = vadd.f32 %v3706, 1.0
      %v3760 = vadd.f32 %v3708, 1.0
      %v3761 = vadd.f32 %v3710, 1.0
      %v3762 = vadd.f32 %v3712, 1.0
      %v3763 = vadd.f32 %v3714, 1.0
      %v3764 = vadd.f32 %v3716, 1.0
      %v3765 = vadd.f32 %v3718, 1.0
      %v3766 = vadd.f32 %v3720, 1.0
      %v3767 = vadd.f32 %v3722, 1.0
      %v3768 = vadd.f32 %v3724, 1.0
      %v3769 = vadd.f32 %v3726, 1.0
      %v3770 = vadd.f32 %v3728, 1.0
      %v3771 = vadd.f32 %v3730, 1.0
      %v3772 = vadd.f32 %v3732, 1.0
      %v3773 = vadd.f32 %v3734, 1.0
      %v3774 = vadd.f32 %v3736, 1.0
      %v3775 = vadd.f32 %v3738, 1.0
      %v3776 = vadd.f32 %v3740, 1.0
      %v3777 = vadd.f32 %v3742, 1.0
      %v3778 = vadd.f32 %v3744, 1.0
      %v3779 = vadd.f32 %v3746, 1.0
      %v3780 = vadd.f32 %v3748, 1.0
      %v3781 = vrcp.pop %v3749
      %v3782 = vmul.f32 1.0, %v3781
      %v3783 = vrcp.pop %v3750
      %v3784 = vmul.f32 1.0, %v3783
      %v3785 = vrcp.pop %v3751
      %v3786 = vmul.f32 1.0, %v3785
      %v3787 = vrcp.pop %v3752
      %v3788 = vmul.f32 1.0, %v3787
      %v3789 = vrcp.pop %v3753
      %v3790 = vmul.f32 1.0, %v3789
      %v3791 = vrcp.pop %v3754
      %v3792 = vmul.f32 1.0, %v3791
      %v3793 = vrcp.pop %v3755
      %v3794 = vmul.f32 1.0, %v3793
      %v3795 = vrcp.pop %v3756
      %v3796 = vmul.f32 1.0, %v3795
      %v3797 = vrcp.pop %v3757
      %v3798 = vmul.f32 1.0, %v3797
      %v3799 = vrcp.pop %v3758
      %v3800 = vmul.f32 1.0, %v3799
      %v3801 = vrcp.pop %v3759
      %v3802 = vmul.f32 1.0, %v3801
      %v3803 = vrcp.pop %v3760
      %v3804 = vmul.f32 1.0, %v3803
      %v3805 = vrcp.pop %v3761
      %v3806 = vmul.f32 1.0, %v3805
      %v3807 = vrcp.pop %v3762
      %v3808 = vmul.f32 1.0, %v3807
      %v3809 = vrcp.pop %v3763
      %v3810 = vmul.f32 1.0, %v3809
      %v3811 = vrcp.pop %v3764
      %v3812 = vmul.f32 1.0, %v3811
      %v3813 = vrcp.pop %v3765
      %v3814 = vmul.f32 1.0, %v3813
      %v3815 = vrcp.pop %v3766
      %v3816 = vmul.f32 1.0, %v3815
      %v3817 = vrcp.pop %v3767
      %v3818 = vmul.f32 1.0, %v3817
      %v3819 = vrcp.pop %v3768
      %v3820 = vmul.f32 1.0, %v3819
      %v3821 = vrcp.pop %v3769
      %v3822 = vmul.f32 1.0, %v3821
      %v3823 = vrcp.pop %v3770
      %v3824 = vmul.f32 1.0, %v3823
      %v3825 = vrcp.pop %v3771
      %v3826 = vmul.f32 1.0, %v3825
      %v3827 = vrcp.pop %v3772
      %v3828 = vmul.f32 1.0, %v3827
      %v3829 = vrcp.pop %v3773
      %v3830 = vmul.f32 1.0, %v3829
      %v3831 = vrcp.pop %v3774
      %v3832 = vmul.f32 1.0, %v3831
      %v3833 = vrcp.pop %v3775
      %v3834 = vmul.f32 1.0, %v3833
      %v3835 = vrcp.pop %v3776
      %v3836 = vmul.f32 1.0, %v3835
      %v3837 = vrcp.pop %v3777
      %v3838 = vmul.f32 1.0, %v3837
      %v3839 = vrcp.pop %v3778
      %v3840 = vmul.f32 1.0, %v3839
      %v3841 = vrcp.pop %v3779
      %v3842 = vmul.f32 1.0, %v3841
      %v3843 = vrcp.pop %v3780
      %v3844 = vmul.f32 1.0, %v3843
      %v3845 = vmul.f32 %v3558, %v2105
      %v3846 = vmul.f32 %v3560, %v2106
      %v3847 = vmul.f32 %v3562, %v2107
      %v3848 = vmul.f32 %v3564, %v2108
      %v3849 = vmul.f32 %v3566, %v2109
      %v3850 = vmul.f32 %v3568, %v2110
      %v3851 = vmul.f32 %v3570, %v2111
      %v3852 = vmul.f32 %v3572, %v2112
      %v3853 = vmul.f32 %v3574, %v2113
      %v3854 = vmul.f32 %v3576, %v2114
      %v3855 = vmul.f32 %v3578, %v2115
      %v3856 = vmul.f32 %v3580, %v2116
      %v3857 = vmul.f32 %v3582, %v2117
      %v3858 = vmul.f32 %v3584, %v2118
      %v3859 = vmul.f32 %v3586, %v2119
      %v3860 = vmul.f32 %v3588, %v2120
      %v3861 = vmul.f32 %v3590, %v2121
      %v3862 = vmul.f32 %v3592, %v2122
      %v3863 = vmul.f32 %v3594, %v2123
      %v3864 = vmul.f32 %v3596, %v2124
      %v3865 = vmul.f32 %v3598, %v2125
      %v3866 = vmul.f32 %v3600, %v2126
      %v3867 = vmul.f32 %v3602, %v2127
      %v3868 = vmul.f32 %v3604, %v2128
      %v3869 = vmul.f32 %v3606, %v2129
      %v3870 = vmul.f32 %v3608, %v2130
      %v3871 = vmul.f32 %v3610, %v2131
      %v3872 = vmul.f32 %v3612, %v2132
      %v3873 = vmul.f32 %v3614, %v2133
      %v3874 = vmul.f32 %v3616, %v2134
      %v3875 = vmul.f32 %v3618, %v2135
      %v3876 = vmul.f32 %v3620, %v2136
      %v3877 = vmul.f32 %v3366, %v3621
      %v3878 = vmul.f32 %v3368, %v3622
      %v3879 = vmul.f32 %v3370, %v3623
      %v3880 = vmul.f32 %v3372, %v3624
      %v3881 = vmul.f32 %v3374, %v3625
      %v3882 = vmul.f32 %v3376, %v3626
      %v3883 = vmul.f32 %v3378, %v3627
      %v3884 = vmul.f32 %v3380, %v3628
      %v3885 = vmul.f32 %v3382, %v3629
      %v3886 = vmul.f32 %v3384, %v3630
      %v3887 = vmul.f32 %v3386, %v3631
      %v3888 = vmul.f32 %v3388, %v3632
      %v3889 = vmul.f32 %v3390, %v3633
      %v3890 = vmul.f32 %v3392, %v3634
      %v3891 = vmul.f32 %v3394, %v3635
      %v3892 = vmul.f32 %v3396, %v3636
      %v3893 = vmul.f32 %v3398, %v3637
      %v3894 = vmul.f32 %v3400, %v3638
      %v3895 = vmul.f32 %v3402, %v3639
      %v3896 = vmul.f32 %v3404, %v3640
      %v3897 = vmul.f32 %v3406, %v3641
      %v3898 = vmul.f32 %v3408, %v3642
      %v3899 = vmul.f32 %v3410, %v3643
      %v3900 = vmul.f32 %v3412, %v3644
      %v3901 = vmul.f32 %v3414, %v3645
      %v3902 = vmul.f32 %v3416, %v3646
      %v3903 = vmul.f32 %v3418, %v3647
      %v3904 = vmul.f32 %v3420, %v3648
      %v3905 = vmul.f32 %v3422, %v3649
      %v3906 = vmul.f32 %v3424, %v3650
      %v3907 = vmul.f32 %v3426, %v3651
      %v3908 = vmul.f32 %v3428, %v3652
      %v3909 = vadd.f32 %v3845, %v3877
      %v3910 = vadd.f32 %v3846, %v3878
      %v3911 = vadd.f32 %v3847, %v3879
      %v3912 = vadd.f32 %v3848, %v3880
      %v3913 = vadd.f32 %v3849, %v3881
      %v3914 = vadd.f32 %v3850, %v3882
      %v3915 = vadd.f32 %v3851, %v3883
      %v3916 = vadd.f32 %v3852, %v3884
      %v3917 = vadd.f32 %v3853, %v3885
      %v3918 = vadd.f32 %v3854, %v3886
      %v3919 = vadd.f32 %v3855, %v3887
      %v3920 = vadd.f32 %v3856, %v3888
      %v3921 = vadd.f32 %v3857, %v3889
      %v3922 = vadd.f32 %v3858, %v3890
      %v3923 = vadd.f32 %v3859, %v3891
      %v3924 = vadd.f32 %v3860, %v3892
      %v3925 = vadd.f32 %v3861, %v3893
      %v3926 = vadd.f32 %v3862, %v3894
      %v3927 = vadd.f32 %v3863, %v3895
      %v3928 = vadd.f32 %v3864, %v3896
      %v3929 = vadd.f32 %v3865, %v3897
      %v3930 = vadd.f32 %v3866, %v3898
      %v3931 = vadd.f32 %v3867, %v3899
      %v3932 = vadd.f32 %v3868, %v3900
      %v3933 = vadd.f32 %v3869, %v3901
      %v3934 = vadd.f32 %v3870, %v3902
      %v3935 = vadd.f32 %v3871, %v3903
      %v3936 = vadd.f32 %v3872, %v3904
      %v3937 = vadd.f32 %v3873, %v3905
      %v3938 = vadd.f32 %v3874, %v3906
      %v3939 = vadd.f32 %v3875, %v3907
      %v3940 = vadd.f32 %v3876, %v3908
      %v3941 = vtanh.pop %v3909
      %v3942 = vtanh.pop %v3910
      %v3943 = vtanh.pop %v3911
      %v3944 = vtanh.pop %v3912
      %v3945 = vtanh.pop %v3913
      %v3946 = vtanh.pop %v3914
      %v3947 = vtanh.pop %v3915
      %v3948 = vtanh.pop %v3916
      %v3949 = vtanh.pop %v3917
      %v3950 = vtanh.pop %v3918
      %v3951 = vtanh.pop %v3919
      %v3952 = vtanh.pop %v3920
      %v3953 = vtanh.pop %v3921
      %v3954 = vtanh.pop %v3922
      %v3955 = vtanh.pop %v3923
      %v3956 = vtanh.pop %v3924
      %v3957 = vtanh.pop %v3925
      %v3958 = vtanh.pop %v3926
      %v3959 = vtanh.pop %v3927
      %v3960 = vtanh.pop %v3928
      %v3961 = vtanh.pop %v3929
      %v3962 = vtanh.pop %v3930
      %v3963 = vtanh.pop %v3931
      %v3964 = vtanh.pop %v3932
      %v3965 = vtanh.pop %v3933
      %v3966 = vtanh.pop %v3934
      %v3967 = vtanh.pop %v3935
      %v3968 = vtanh.pop %v3936
      %v3969 = vtanh.pop %v3937
      %v3970 = vtanh.pop %v3938
      %v3971 = vtanh.pop %v3939
      %v3972 = vtanh.pop %v3940
      %v3973 = vmul.f32 %v3782, %v3941
      %v3974 = vmul.f32 %v3784, %v3942
      %v3975 = vmul.f32 %v3786, %v3943
      %v3976 = vmul.f32 %v3788, %v3944
      %v3977 = vmul.f32 %v3790, %v3945
      %v3978 = vmul.f32 %v3792, %v3946
      %v3979 = vmul.f32 %v3794, %v3947
      %v3980 = vmul.f32 %v3796, %v3948
      %v3981 = vmul.f32 %v3798, %v3949
      %v3982 = vmul.f32 %v3800, %v3950
      %v3983 = vmul.f32 %v3802, %v3951
      %v3984 = vmul.f32 %v3804, %v3952
      %v3985 = vmul.f32 %v3806, %v3953
      %v3986 = vmul.f32 %v3808, %v3954
      %v3987 = vmul.f32 %v3810, %v3955
      %v3988 = vmul.f32 %v3812, %v3956
      %v3989 = vmul.f32 %v3814, %v3957
      %v3990 = vmul.f32 %v3816, %v3958
      %v3991 = vmul.f32 %v3818, %v3959
      %v3992 = vmul.f32 %v3820, %v3960
      %v3993 = vmul.f32 %v3822, %v3961
      %v3994 = vmul.f32 %v3824, %v3962
      %v3995 = vmul.f32 %v3826, %v3963
      %v3996 = vmul.f32 %v3828, %v3964
      %v3997 = vmul.f32 %v3830, %v3965
      %v3998 = vmul.f32 %v3832, %v3966
      %v3999 = vmul.f32 %v3834, %v3967
      %v4000 = vmul.f32 %v3836, %v3968
      %v4001 = vmul.f32 %v3838, %v3969
      %v4002 = vmul.f32 %v3840, %v3970
      %v4003 = vmul.f32 %v3842, %v3971
      %v4004 = vmul.f32 %v3844, %v3972
      %vm4005 = vcmp.lt.f32.partialorder 1.0, %v357
      %vm4006 = vcmp.lt.f32.partialorder 1.0, %v364
      %vm4007 = vcmp.lt.f32.partialorder 1.0, %v371
      %vm4008 = vcmp.lt.f32.partialorder 1.0, %v378
      %vm4009 = vcmp.lt.f32.partialorder 1.0, %v385
      %vm4010 = vcmp.lt.f32.partialorder 1.0, %v392
      %vm4011 = vcmp.lt.f32.partialorder 1.0, %v399
      %vm4012 = vcmp.lt.f32.partialorder 1.0, %v406
      %v4013 = vsel %vm4005, 1, 0
      %v4014 = vsel %vm4006, 1, 0
      %v4015 = vsel %vm4007, 1, 0
      %v4016 = vsel %vm4008, 1, 0
      %v4017 = vsel %vm4009, 1, 0
      %v4018 = vsel %vm4010, 1, 0
      %v4019 = vsel %vm4011, 1, 0
      %v4020 = vsel %vm4012, 1, 0
      %vm4021 = vcmp.eq.s32.totalorder %v4013, 1
      %vm4022 = vcmp.eq.s32.totalorder %v4014, 1
      %vm4023 = vcmp.eq.s32.totalorder %v4015, 1
      %vm4024 = vcmp.eq.s32.totalorder %v4016, 1
      %vm4025 = vcmp.eq.s32.totalorder %v4017, 1
      %vm4026 = vcmp.eq.s32.totalorder %v4018, 1
      %vm4027 = vcmp.eq.s32.totalorder %v4019, 1
      %vm4028 = vcmp.eq.s32.totalorder %v4020, 1
      %v4029 = vsel %vm4021, %v3973, %v2073
      %v4030 = vsel %vm4022, %v3974, %v2074
      %v4031 = vsel %vm4023, %v3975, %v2075
      %v4032 = vsel %vm4024, %v3976, %v2076
      %v4033 = vsel %vm4025, %v3977, %v2077
      %v4034 = vsel %vm4026, %v3978, %v2078
      %v4035 = vsel %vm4027, %v3979, %v2079
      %v4036 = vsel %vm4028, %v3980, %v2080
      %v4037 = vsel %vm4021, %v3981, %v2081
      %v4038 = vsel %vm4022, %v3982, %v2082
      %v4039 = vsel %vm4023, %v3983, %v2083
      %v4040 = vsel %vm4024, %v3984, %v2084
      %v4041 = vsel %vm4025, %v3985, %v2085
      %v4042 = vsel %vm4026, %v3986, %v2086
      %v4043 = vsel %vm4027, %v3987, %v2087
      %v4044 = vsel %vm4028, %v3988, %v2088
      %v4045 = vsel %vm4021, %v3989, %v2089
      %v4046 = vsel %vm4022, %v3990, %v2090
      %v4047 = vsel %vm4023, %v3991, %v2091
      %v4048 = vsel %vm4024, %v3992, %v2092
      %v4049 = vsel %vm4025, %v3993, %v2093
      %v4050 = vsel %vm4026, %v3994, %v2094
      %v4051 = vsel %vm4027, %v3995, %v2095
      %v4052 = vsel %vm4028, %v3996, %v2096
      %v4053 = vsel %vm4021, %v3997, %v2097
      %v4054 = vsel %vm4022, %v3998, %v2098
      %v4055 = vsel %vm4023, %v3999, %v2099
      %v4056 = vsel %vm4024, %v4000, %v2100
      %v4057 = vsel %vm4025, %v4001, %v2101
      %v4058 = vsel %vm4026, %v4002, %v2102
      %v4059 = vsel %vm4027, %v4003, %v2103
      %v4060 = vsel %vm4028, %v4004, %v2104
      %v4061 = vsel %vm4021, %v3909, %v2105
      %v4062 = vsel %vm4022, %v3910, %v2106
      %v4063 = vsel %vm4023, %v3911, %v2107
      %v4064 = vsel %vm4024, %v3912, %v2108
      %v4065 = vsel %vm4025, %v3913, %v2109
      %v4066 = vsel %vm4026, %v3914, %v2110
      %v4067 = vsel %vm4027, %v3915, %v2111
      %v4068 = vsel %vm4028, %v3916, %v2112
      %v4069 = vsel %vm4021, %v3917, %v2113
      %v4070 = vsel %vm4022, %v3918, %v2114
      %v4071 = vsel %vm4023, %v3919, %v2115
      %v4072 = vsel %vm4024, %v3920, %v2116
      %v4073 = vsel %vm4025, %v3921, %v2117
      %v4074 = vsel %vm4026, %v3922, %v2118
      %v4075 = vsel %vm4027, %v3923, %v2119
      %v4076 = vsel %vm4028, %v3924, %v2120
      %v4077 = vsel %vm4021, %v3925, %v2121
      %v4078 = vsel %vm4022, %v3926, %v2122
      %v4079 = vsel %vm4023, %v3927, %v2123
      %v4080 = vsel %vm4024, %v3928, %v2124
      %v4081 = vsel %vm4025, %v3929, %v2125
      %v4082 = vsel %vm4026, %v3930, %v2126
      %v4083 = vsel %vm4027, %v3931, %v2127
      %v4084 = vsel %vm4028, %v3932, %v2128
      %v4085 = vsel %vm4021, %v3933, %v2129
      %v4086 = vsel %vm4022, %v3934, %v2130
      %v4087 = vsel %vm4023, %v3935, %v2131
      %v4088 = vsel %vm4024, %v3936, %v2132
      %v4089 = vsel %vm4025, %v3937, %v2133
      %v4090 = vsel %vm4026, %v3938, %v2134
      %v4091 = vsel %vm4027, %v3939, %v2135
      %v4092 = vsel %vm4028, %v3940, %v2136
      %v4093 = vlaneseq
      %v4094 = vshrl.u32 %v4093, 7
      %v4095 = vsub.s32 2, %v4094
      %v4096 = vrot.slane %v254, %v4095
      %v4097 = vlaneseq
      %v4098 = vshrl.u32 %v4097, 7
      %v4099 = vsub.s32 6, %v4098
      %v4100 = vrot.slane %v254, %v4099
      %v4101 = vlaneseq
      %v4102 = vshrl.u32 %v4101, 7
      %v4103 = vsub.s32 2, %v4102
      %v4104 = vrot.slane %v255, %v4103
      %v4105 = vlaneseq
      %v4106 = vshrl.u32 %v4105, 7
      %v4107 = vsub.s32 6, %v4106
      %v4108 = vrot.slane %v255, %v4107
      %v4109 = vlaneseq
      %v4110 = vshrl.u32 %v4109, 7
      %v4111 = vsub.s32 2, %v4110
      %v4112 = vrot.slane %v256, %v4111
      %v4113 = vlaneseq
      %v4114 = vshrl.u32 %v4113, 7
      %v4115 = vsub.s32 6, %v4114
      %v4116 = vrot.slane %v256, %v4115
      %v4117 = vlaneseq
      %v4118 = vshrl.u32 %v4117, 7
      %v4119 = vsub.s32 2, %v4118
      %v4120 = vrot.slane %v257, %v4119
      %v4121 = vlaneseq
      %v4122 = vshrl.u32 %v4121, 7
      %v4123 = vsub.s32 6, %v4122
      %v4124 = vrot.slane %v257, %v4123
      %v4133 = vlaneseq
      %v4134 = vshrl.u32 %v4133, 7
      %v4135 = vsub.s32 2, %v4134
      %v4136 = vrot.slane %v4096, %v4135
      %v4137 = vlaneseq
      %v4138 = vshrl.u32 %v4137, 7
      %v4139 = vsub.s32 2, %v4138
      %v4140 = vrot.slane %v4100, %v4139
      %v4141 = vlaneseq
      %v4142 = vshrl.u32 %v4141, 7
      %v4143 = vsub.s32 2, %v4142
      %v4144 = vrot.slane %v4104, %v4143
      %v4145 = vlaneseq
      %v4146 = vshrl.u32 %v4145, 7
      %v4147 = vsub.s32 2, %v4146
      %v4148 = vrot.slane %v4108, %v4147
      %v4149 = vlaneseq
      %v4150 = vshrl.u32 %v4149, 7
      %v4151 = vsub.s32 2, %v4150
      %v4152 = vrot.slane %v4112, %v4151
      %v4153 = vlaneseq
      %v4154 = vshrl.u32 %v4153, 7
      %v4155 = vsub.s32 2, %v4154
      %v4156 = vrot.slane %v4116, %v4155
      %v4157 = vlaneseq
      %v4158 = vshrl.u32 %v4157, 7
      %v4159 = vsub.s32 2, %v4158
      %v4160 = vrot.slane %v4120, %v4159
      %v4161 = vlaneseq
      %v4162 = vshrl.u32 %v4161, 7
      %v4163 = vsub.s32 2, %v4162
      %v4164 = vrot.slane %v4124, %v4163
      %v4165 = vmul.f32 %v4136, %v530
      %v4166 = vmul.f32 %v4140, %v530
      %v4167 = vmul.f32 %v4144, %v530
      %v4168 = vmul.f32 %v4148, %v530
      %v4169 = vmul.f32 %v4152, %v530
      %v4170 = vmul.f32 %v4156, %v530
      %v4171 = vmul.f32 %v4160, %v530
      %v4172 = vmul.f32 %v4164, %v530
      %v4173 = vmul.f32 %v4136, %v535
      %v4174 = vmul.f32 %v4140, %v535
      %v4175 = vmul.f32 %v4144, %v535
      %v4176 = vmul.f32 %v4148, %v535
      %v4177 = vmul.f32 %v4152, %v535
      %v4178 = vmul.f32 %v4156, %v535
      %v4179 = vmul.f32 %v4160, %v535
      %v4180 = vmul.f32 %v4164, %v535
      %v4181 = vmul.f32 %v4136, %v540
      %v4182 = vmul.f32 %v4140, %v540
      %v4183 = vmul.f32 %v4144, %v540
      %v4184 = vmul.f32 %v4148, %v540
      %v4185 = vmul.f32 %v4152, %v540
      %v4186 = vmul.f32 %v4156, %v540
      %v4187 = vmul.f32 %v4160, %v540
      %v4188 = vmul.f32 %v4164, %v540
      %v4189 = vmul.f32 %v4136, %v545
      %v4190 = vmul.f32 %v4140, %v545
      %v4191 = vmul.f32 %v4144, %v545
      %v4192 = vmul.f32 %v4148, %v545
      %v4193 = vmul.f32 %v4152, %v545
      %v4194 = vmul.f32 %v4156, %v545
      %v4195 = vmul.f32 %v4160, %v545
      %v4196 = vmul.f32 %v4164, %v545
      %v4197 = vmul.f32 %v4136, %v550
      %v4198 = vmul.f32 %v4140, %v550
      %v4199 = vmul.f32 %v4144, %v550
      %v4200 = vmul.f32 %v4148, %v550
      %v4201 = vmul.f32 %v4152, %v550
      %v4202 = vmul.f32 %v4156, %v550
      %v4203 = vmul.f32 %v4160, %v550
      %v4204 = vmul.f32 %v4164, %v550
      %v4205 = vmul.f32 %v4136, %v555
      %v4206 = vmul.f32 %v4140, %v555
      %v4207 = vmul.f32 %v4144, %v555
      %v4208 = vmul.f32 %v4148, %v555
      %v4209 = vmul.f32 %v4152, %v555
      %v4210 = vmul.f32 %v4156, %v555
      %v4211 = vmul.f32 %v4160, %v555
      %v4212 = vmul.f32 %v4164, %v555
      %v4213 = vmul.f32 %v4136, %v560
      %v4214 = vmul.f32 %v4140, %v560
      %v4215 = vmul.f32 %v4144, %v560
      %v4216 = vmul.f32 %v4148, %v560
      %v4217 = vmul.f32 %v4152, %v560
      %v4218 = vmul.f32 %v4156, %v560
      %v4219 = vmul.f32 %v4160, %v560
      %v4220 = vmul.f32 %v4164, %v560
      %v4221 = vmul.f32 %v4136, %v565
      %v4222 = vmul.f32 %v4140, %v565
      %v4223 = vmul.f32 %v4144, %v565
      %v4224 = vmul.f32 %v4148, %v565
      %v4225 = vmul.f32 %v4152, %v565
      %v4226 = vmul.f32 %v4156, %v565
      %v4227 = vmul.f32 %v4160, %v565
      %v4228 = vmul.f32 %v4164, %v565
      %v4229 = vmul.f32 %v4136, %v570
      %v4230 = vmul.f32 %v4140, %v570
      %v4231 = vmul.f32 %v4144, %v570
      %v4232 = vmul.f32 %v4148, %v570
      %v4233 = vmul.f32 %v4152, %v570
      %v4234 = vmul.f32 %v4156, %v570
      %v4235 = vmul.f32 %v4160, %v570
      %v4236 = vmul.f32 %v4164, %v570
      %v4237 = vmul.f32 %v4136, %v575
      %v4238 = vmul.f32 %v4140, %v575
      %v4239 = vmul.f32 %v4144, %v575
      %v4240 = vmul.f32 %v4148, %v575
      %v4241 = vmul.f32 %v4152, %v575
      %v4242 = vmul.f32 %v4156, %v575
      %v4243 = vmul.f32 %v4160, %v575
      %v4244 = vmul.f32 %v4164, %v575
      %v4245 = vmul.f32 %v4136, %v580
      %v4246 = vmul.f32 %v4140, %v580
      %v4247 = vmul.f32 %v4144, %v580
      %v4248 = vmul.f32 %v4148, %v580
      %v4249 = vmul.f32 %v4152, %v580
      %v4250 = vmul.f32 %v4156, %v580
      %v4251 = vmul.f32 %v4160, %v580
      %v4252 = vmul.f32 %v4164, %v580
      %v4253 = vmul.f32 %v4136, %v585
      %v4254 = vmul.f32 %v4140, %v585
      %v4255 = vmul.f32 %v4144, %v585
      %v4256 = vmul.f32 %v4148, %v585
      %v4257 = vmul.f32 %v4152, %v585
      %v4258 = vmul.f32 %v4156, %v585
      %v4259 = vmul.f32 %v4160, %v585
      %v4260 = vmul.f32 %v4164, %v585
      %v4261 = vmul.f32 %v4136, %v590
      %v4262 = vmul.f32 %v4140, %v590
      %v4263 = vmul.f32 %v4144, %v590
      %v4264 = vmul.f32 %v4148, %v590
      %v4265 = vmul.f32 %v4152, %v590
      %v4266 = vmul.f32 %v4156, %v590
      %v4267 = vmul.f32 %v4160, %v590
      %v4268 = vmul.f32 %v4164, %v590
      %v4269 = vmul.f32 %v4136, %v595
      %v4270 = vmul.f32 %v4140, %v595
      %v4271 = vmul.f32 %v4144, %v595
      %v4272 = vmul.f32 %v4148, %v595
      %v4273 = vmul.f32 %v4152, %v595
      %v4274 = vmul.f32 %v4156, %v595
      %v4275 = vmul.f32 %v4160, %v595
      %v4276 = vmul.f32 %v4164, %v595
      %v4277 = vmul.f32 %v4136, %v600
      %v4278 = vmul.f32 %v4140, %v600
      %v4279 = vmul.f32 %v4144, %v600
      %v4280 = vmul.f32 %v4148, %v600
      %v4281 = vmul.f32 %v4152, %v600
      %v4282 = vmul.f32 %v4156, %v600
      %v4283 = vmul.f32 %v4160, %v600
      %v4284 = vmul.f32 %v4164, %v600
      %v4285 = vmul.f32 %v4136, %v605
      %v4286 = vmul.f32 %v4140, %v605
      %v4287 = vmul.f32 %v4144, %v605
      %v4288 = vmul.f32 %v4148, %v605
      %v4289 = vmul.f32 %v4152, %v605
      %v4290 = vmul.f32 %v4156, %v605
      %v4291 = vmul.f32 %v4160, %v605
      %v4292 = vmul.f32 %v4164, %v605
      %4293 = vmatprep.subr.mxu0 %v4030
      %4294 = vmatpush1.msra.mxu0 %v4029
      %4295 = vmatprep.subr.mxu0 %v4038
      %4296 = vmatpush1.msra.mxu0 %v4037
      %4297 = vmatprep.subr.mxu0 %v4046
      %4298 = vmatpush1.msra.mxu0 %v4045
      %4299 = vmatprep.subr.mxu0 %v4054
      %4300 = vmatpush1.msra.mxu0 %v4053
      %4301 = vmatprep.subr.mxu0 0.0
      %4302 = vmatpush1.msra.mxu0 0.0
      %4303 = vmatprep.subr.mxu0 0.0
      %4304 = vmatpush1.msra.mxu0 0.0
      %4305 = vmatprep.subr.mxu0 0.0
      %4306 = vmatpush1.msra.mxu0 0.0
      %4307 = vmatprep.subr.mxu0 0.0
      %4308 = vmatpush1.msra.mxu0 0.0
      %4309 = vmatprep.subr.mxu0 0.0
      %4310 = vmatpush1.msra.mxu0 0.0
      %4311 = vmatprep.subr.mxu0 0.0
      %4312 = vmatpush1.msra.mxu0 0.0
      %4313 = vmatprep.subr.mxu0 0.0
      %4314 = vmatpush1.msra.mxu0 0.0
      %4315 = vmatprep.subr.mxu0 0.0
      %4316 = vmatpush1.msra.mxu0 0.0
      %4317 = vmatprep.subr.mxu0 0.0
      %4318 = vmatpush1.msra.mxu0 0.0
      %4319 = vmatprep.subr.mxu0 0.0
      %4320 = vmatpush1.msra.mxu0 0.0
      %4321 = vmatprep.subr.mxu0 0.0
      %4322 = vmatpush1.msra.mxu0 0.0
      %4323 = vmatprep.subr.mxu0 0.0
      %4324 = vmatpush1.msra.mxu0 0.0
      %4325 = vmatprep.subr.mxu0 0.0
      %4326 = vmatpush1.msra.mxu0 0.0
      %4327 = vmatprep.subr.mxu0 0.0
      %4328 = vmatpush1.msra.mxu0 0.0
      %4329 = vmatprep.subr.mxu0 0.0
      %4330 = vmatpush1.msra.mxu0 0.0
      %4331 = vmatprep.subr.mxu0 0.0
      %4332 = vmatpush1.msra.mxu0 0.0
      %4333 = vmatprep.subr.mxu0 0.0
      %4334 = vmatpush1.msra.mxu0 0.0
      %4335 = vmatprep.subr.mxu0 0.0
      %4336 = vmatpush1.msra.mxu0 0.0
      %4337 = vmatprep.subr.mxu0 0.0
      %4338 = vmatpush1.msra.mxu0 0.0
      %4339 = vmatprep.subr.mxu0 0.0
      %4340 = vmatpush1.msra.mxu0 0.0
      %4341 = vmatprep.subr.mxu0 0.0
      %4342 = vmatpush1.msra.mxu0 0.0
      %4343 = vmatprep.subr.mxu0 0.0
      %4344 = vmatpush1.msra.mxu0 0.0
      %4345 = vmatprep.subr.mxu0 0.0
      %4346 = vmatpush1.msra.mxu0 0.0
      %4347 = vmatprep.subr.mxu0 0.0
      %4348 = vmatpush1.msra.mxu0 0.0
      %4349 = vmatprep.subr.mxu0 0.0
      %4350 = vmatpush1.msra.mxu0 0.0
      %4351 = vmatprep.subr.mxu0 0.0
      %4352 = vmatpush1.msra.mxu0 0.0
      %4353 = vmatprep.subr.mxu0 0.0
      %4354 = vmatpush1.msra.mxu0 0.0
      %4355 = vmatprep.subr.mxu0 0.0
      %4356 = vmatpush1.msra.mxu0 0.0
      %4357 = vmatprep.mubr.f32.mxu0 0.0
      %4358 = vmatmul.mubr.f32.gmra.mrb[0].mxu0 %v737
      %v4359 = vpop.f32.mrb[0].mxu0
      %v4360 = vadd.f32 0.0, %v4359
      %v4361 = vpop.f32.mrb[0].mxu0
      %v4362 = vadd.f32 0.0, %v4361
      %4363 = vmatprep.mubr.f32.mxu0 0.0
      %4364 = vmatmul.mubr.f32.gmra.mrb[0].mxu0 %v740
      %v4365 = vpop.f32.mrb[0].mxu0
      %v4366 = vadd.f32 0.0, %v4365
      %v4367 = vpop.f32.mrb[0].mxu0
      %v4368 = vadd.f32 0.0, %v4367
      %4369 = vmatprep.mubr.f32.mxu0 0.0
      %4370 = vmatmul.mubr.f32.gmra.mrb[0].mxu0 %v743
      %v4371 = vpop.f32.mrb[0].mxu0
      %v4372 = vadd.f32 0.0, %v4371
      %v4373 = vpop.f32.mrb[0].mxu0
      %v4374 = vadd.f32 0.0, %v4373
      %4375 = vmatprep.mubr.f32.mxu0 0.0
      %4376 = vmatmul.mubr.f32.gmra.mrb[0].mxu0 %v746
      %v4377 = vpop.f32.mrb[0].mxu0
      %v4378 = vadd.f32 0.0, %v4377
      %v4379 = vpop.f32.mrb[0].mxu0
      %v4380 = vadd.f32 0.0, %v4379
      %4381 = vmatprep.mubr.f32.mxu0 0.0
      %4382 = vmatmul.mubr.f32.gmra.mrb[0].mxu0 %v749
      %v4383 = vpop.f32.mrb[0].mxu0
      %v4384 = vadd.f32 0.0, %v4383
      %v4385 = vpop.f32.mrb[0].mxu0
      %v4386 = vadd.f32 0.0, %v4385
      %4387 = vmatprep.mubr.f32.mxu0 0.0
      %4388 = vmatmul.mubr.f32.gmra.mrb[0].mxu0 %v752
      %v4389 = vpop.f32.mrb[0].mxu0
      %v4390 = vadd.f32 0.0, %v4389
      %v4391 = vpop.f32.mrb[0].mxu0
      %v4392 = vadd.f32 0.0, %v4391
      %4393 = vmatprep.mubr.f32.mxu0 0.0
      %4394 = vmatmul.mubr.f32.gmra.mrb[0].mxu0 %v755
      %v4395 = vpop.f32.mrb[0].mxu0
      %v4396 = vadd.f32 0.0, %v4395
      %v4397 = vpop.f32.mrb[0].mxu0
      %v4398 = vadd.f32 0.0, %v4397
      %4399 = vmatprep.mubr.f32.mxu0 0.0
      %4400 = vmatmul.mubr.f32.gmra.mrb[0].mxu0 %v758
      %v4401 = vpop.f32.mrb[0].mxu0
      %v4402 = vadd.f32 0.0, %v4401
      %v4403 = vpop.f32.mrb[0].mxu0
      %v4404 = vadd.f32 0.0, %v4403
      %4405 = vmatprep.mubr.f32.mxu0 0.0
      %4406 = vmatmul.mubr.f32.gmra.mrb[0].mxu0 %v761
      %v4407 = vpop.f32.mrb[0].mxu0
      %v4408 = vadd.f32 0.0, %v4407
      %v4409 = vpop.f32.mrb[0].mxu0
      %v4410 = vadd.f32 0.0, %v4409
      %4411 = vmatprep.mubr.f32.mxu0 0.0
      %4412 = vmatmul.mubr.f32.gmra.mrb[0].mxu0 %v764
      %v4413 = vpop.f32.mrb[0].mxu0
      %v4414 = vadd.f32 0.0, %v4413
      %v4415 = vpop.f32.mrb[0].mxu0
      %v4416 = vadd.f32 0.0, %v4415
      %4417 = vmatprep.mubr.f32.mxu0 0.0
      %4418 = vmatmul.mubr.f32.gmra.mrb[0].mxu0 %v767
      %v4419 = vpop.f32.mrb[0].mxu0
      %v4420 = vadd.f32 0.0, %v4419
      %v4421 = vpop.f32.mrb[0].mxu0
      %v4422 = vadd.f32 0.0, %v4421
      %4423 = vmatprep.mubr.f32.mxu0 0.0
      %4424 = vmatmul.mubr.f32.gmra.mrb[0].mxu0 %v770
      %v4425 = vpop.f32.mrb[0].mxu0
      %v4426 = vadd.f32 0.0, %v4425
      %v4427 = vpop.f32.mrb[0].mxu0
      %v4428 = vadd.f32 0.0, %v4427
      %4429 = vmatprep.mubr.f32.mxu0 0.0
      %4430 = vmatmul.mubr.f32.gmra.mrb[0].mxu0 %v773
      %v4431 = vpop.f32.mrb[0].mxu0
      %v4432 = vadd.f32 0.0, %v4431
      %v4433 = vpop.f32.mrb[0].mxu0
      %v4434 = vadd.f32 0.0, %v4433
      %4435 = vmatprep.mubr.f32.mxu0 0.0
      %4436 = vmatmul.mubr.f32.gmra.mrb[0].mxu0 %v776
      %v4437 = vpop.f32.mrb[0].mxu0
      %v4438 = vadd.f32 0.0, %v4437
      %v4439 = vpop.f32.mrb[0].mxu0
      %v4440 = vadd.f32 0.0, %v4439
      %4441 = vmatprep.mubr.f32.mxu0 0.0
      %4442 = vmatmul.mubr.f32.gmra.mrb[0].mxu0 %v779
      %v4443 = vpop.f32.mrb[0].mxu0
      %v4444 = vadd.f32 0.0, %v4443
      %v4445 = vpop.f32.mrb[0].mxu0
      %v4446 = vadd.f32 0.0, %v4445
      %4447 = vmatprep.mubr.f32.mxu0 0.0
      %4448 = vmatmul.mubr.f32.gmra.mrb[0].mxu0 %v782
      %v4449 = vpop.f32.mrb[0].mxu0
      %v4450 = vadd.f32 0.0, %v4449
      %v4451 = vpop.f32.mrb[0].mxu0
      %v4452 = vadd.f32 0.0, %v4451
      %4453 = vdwg.mxu0
      %4454 = vmatprep.subr.mxu0 %v4032
      %4455 = vmatpush1.msra.mxu0 %v4031
      %4456 = vmatprep.subr.mxu0 %v4040
      %4457 = vmatpush1.msra.mxu0 %v4039
      %4458 = vmatprep.subr.mxu0 %v4048
      %4459 = vmatpush1.msra.mxu0 %v4047
      %4460 = vmatprep.subr.mxu0 %v4056
      %4461 = vmatpush1.msra.mxu0 %v4055
      %4462 = vmatprep.subr.mxu0 0.0
      %4463 = vmatpush1.msra.mxu0 0.0
      %4464 = vmatprep.subr.mxu0 0.0
      %4465 = vmatpush1.msra.mxu0 0.0
      %4466 = vmatprep.subr.mxu0 0.0
      %4467 = vmatpush1.msra.mxu0 0.0
      %4468 = vmatprep.subr.mxu0 0.0
      %4469 = vmatpush1.msra.mxu0 0.0
      %4470 = vmatprep.subr.mxu0 0.0
      %4471 = vmatpush1.msra.mxu0 0.0
      %4472 = vmatprep.subr.mxu0 0.0
      %4473 = vmatpush1.msra.mxu0 0.0
      %4474 = vmatprep.subr.mxu0 0.0
      %4475 = vmatpush1.msra.mxu0 0.0
      %4476 = vmatprep.subr.mxu0 0.0
      %4477 = vmatpush1.msra.mxu0 0.0
      %4478 = vmatprep.subr.mxu0 0.0
      %4479 = vmatpush1.msra.mxu0 0.0
      %4480 = vmatprep.subr.mxu0 0.0
      %4481 = vmatpush1.msra.mxu0 0.0
      %4482 = vmatprep.subr.mxu0 0.0
      %4483 = vmatpush1.msra.mxu0 0.0
      %4484 = vmatprep.subr.mxu0 0.0
      %4485 = vmatpush1.msra.mxu0 0.0
      %4486 = vmatprep.subr.mxu0 0.0
      %4487 = vmatpush1.msra.mxu0 0.0
      %4488 = vmatprep.subr.mxu0 0.0
      %4489 = vmatpush1.msra.mxu0 0.0
      %4490 = vmatprep.subr.mxu0 0.0
      %4491 = vmatpush1.msra.mxu0 0.0
      %4492 = vmatprep.subr.mxu0 0.0
      %4493 = vmatpush1.msra.mxu0 0.0
      %4494 = vmatprep.subr.mxu0 0.0
      %4495 = vmatpush1.msra.mxu0 0.0
      %4496 = vmatprep.subr.mxu0 0.0
      %4497 = vmatpush1.msra.mxu0 0.0
      %4498 = vmatprep.subr.mxu0 0.0
      %4499 = vmatpush1.msra.mxu0 0.0
      %4500 = vmatprep.subr.mxu0 0.0
      %4501 = vmatpush1.msra.mxu0 0.0
      %4502 = vmatprep.subr.mxu0 0.0
      %4503 = vmatpush1.msra.mxu0 0.0
      %4504 = vmatprep.subr.mxu0 0.0
      %4505 = vmatpush1.msra.mxu0 0.0
      %4506 = vmatprep.subr.mxu0 0.0
      %4507 = vmatpush1.msra.mxu0 0.0
      %4508 = vmatprep.subr.mxu0 0.0
      %4509 = vmatpush1.msra.mxu0 0.0
      %4510 = vmatprep.subr.mxu0 0.0
      %4511 = vmatpush1.msra.mxu0 0.0
      %4512 = vmatprep.subr.mxu0 0.0
      %4513 = vmatpush1.msra.mxu0 0.0
      %4514 = vmatprep.subr.mxu0 0.0
      %4515 = vmatpush1.msra.mxu0 0.0
      %4516 = vmatprep.subr.mxu0 0.0
      %4517 = vmatpush1.msra.mxu0 0.0
      %4518 = vmatprep.mubr.f32.mxu0 0.0
      %4519 = vmatmul.mubr.f32.gmra.mrb[0].mxu0 %v737
      %v4520 = vpop.f32.mrb[0].mxu0
      %v4521 = vadd.f32 0.0, %v4520
      %v4522 = vpop.f32.mrb[0].mxu0
      %v4523 = vadd.f32 0.0, %v4522
      %4524 = vmatprep.mubr.f32.mxu0 0.0
      %4525 = vmatmul.mubr.f32.gmra.mrb[0].mxu0 %v740
      %v4526 = vpop.f32.mrb[0].mxu0
      %v4527 = vadd.f32 0.0, %v4526
      %v4528 = vpop.f32.mrb[0].mxu0
      %v4529 = vadd.f32 0.0, %v4528
      %4530 = vmatprep.mubr.f32.mxu0 0.0
      %4531 = vmatmul.mubr.f32.gmra.mrb[0].mxu0 %v743
      %v4532 = vpop.f32.mrb[0].mxu0
      %v4533 = vadd.f32 0.0, %v4532
      %v4534 = vpop.f32.mrb[0].mxu0
      %v4535 = vadd.f32 0.0, %v4534
      %4536 = vmatprep.mubr.f32.mxu0 0.0
      %4537 = vmatmul.mubr.f32.gmra.mrb[0].mxu0 %v746
      %v4538 = vpop.f32.mrb[0].mxu0
      %v4539 = vadd.f32 0.0, %v4538
      %v4540 = vpop.f32.mrb[0].mxu0
      %v4541 = vadd.f32 0.0, %v4540
      %4542 = vmatprep.mubr.f32.mxu0 0.0
      %4543 = vmatmul.mubr.f32.gmra.mrb[0].mxu0 %v749
      %v4544 = vpop.f32.mrb[0].mxu0
      %v4545 = vadd.f32 0.0, %v4544
      %v4546 = vpop.f32.mrb[0].mxu0
      %v4547 = vadd.f32 0.0, %v4546
      %4548 = vmatprep.mubr.f32.mxu0 0.0
      %4549 = vmatmul.mubr.f32.gmra.mrb[0].mxu0 %v752
      %v4550 = vpop.f32.mrb[0].mxu0
      %v4551 = vadd.f32 0.0, %v4550
      %v4552 = vpop.f32.mrb[0].mxu0
      %v4553 = vadd.f32 0.0, %v4552
      %4554 = vmatprep.mubr.f32.mxu0 0.0
      %4555 = vmatmul.mubr.f32.gmra.mrb[0].mxu0 %v755
      %v4556 = vpop.f32.mrb[0].mxu0
      %v4557 = vadd.f32 0.0, %v4556
      %v4558 = vpop.f32.mrb[0].mxu0
      %v4559 = vadd.f32 0.0, %v4558
      %4560 = vmatprep.mubr.f32.mxu0 0.0
      %4561 = vmatmul.mubr.f32.gmra.mrb[0].mxu0 %v758
      %v4562 = vpop.f32.mrb[0].mxu0
      %v4563 = vadd.f32 0.0, %v4562
      %v4564 = vpop.f32.mrb[0].mxu0
      %v4565 = vadd.f32 0.0, %v4564
      %4566 = vmatprep.mubr.f32.mxu0 0.0
      %4567 = vmatmul.mubr.f32.gmra.mrb[0].mxu0 %v761
      %v4568 = vpop.f32.mrb[0].mxu0
      %v4569 = vadd.f32 0.0, %v4568
      %v4570 = vpop.f32.mrb[0].mxu0
      %v4571 = vadd.f32 0.0, %v4570
      %4572 = vmatprep.mubr.f32.mxu0 0.0
      %4573 = vmatmul.mubr.f32.gmra.mrb[0].mxu0 %v764
      %v4574 = vpop.f32.mrb[0].mxu0
      %v4575 = vadd.f32 0.0, %v4574
      %v4576 = vpop.f32.mrb[0].mxu0
      %v4577 = vadd.f32 0.0, %v4576
      %4578 = vmatprep.mubr.f32.mxu0 0.0
      %4579 = vmatmul.mubr.f32.gmra.mrb[0].mxu0 %v767
      %v4580 = vpop.f32.mrb[0].mxu0
      %v4581 = vadd.f32 0.0, %v4580
      %v4582 = vpop.f32.mrb[0].mxu0
      %v4583 = vadd.f32 0.0, %v4582
      %4584 = vmatprep.mubr.f32.mxu0 0.0
      %4585 = vmatmul.mubr.f32.gmra.mrb[0].mxu0 %v770
      %v4586 = vpop.f32.mrb[0].mxu0
      %v4587 = vadd.f32 0.0, %v4586
      %v4588 = vpop.f32.mrb[0].mxu0
      %v4589 = vadd.f32 0.0, %v4588
      %4590 = vmatprep.mubr.f32.mxu0 0.0
      %4591 = vmatmul.mubr.f32.gmra.mrb[0].mxu0 %v773
      %v4592 = vpop.f32.mrb[0].mxu0
      %v4593 = vadd.f32 0.0, %v4592
      %v4594 = vpop.f32.mrb[0].mxu0
      %v4595 = vadd.f32 0.0, %v4594
      %4596 = vmatprep.mubr.f32.mxu0 0.0
      %4597 = vmatmul.mubr.f32.gmra.mrb[0].mxu0 %v776
      %v4598 = vpop.f32.mrb[0].mxu0
      %v4599 = vadd.f32 0.0, %v4598
      %v4600 = vpop.f32.mrb[0].mxu0
      %v4601 = vadd.f32 0.0, %v4600
      %4602 = vmatprep.mubr.f32.mxu0 0.0
      %4603 = vmatmul.mubr.f32.gmra.mrb[0].mxu0 %v779
      %v4604 = vpop.f32.mrb[0].mxu0
      %v4605 = vadd.f32 0.0, %v4604
      %v4606 = vpop.f32.mrb[0].mxu0
      %v4607 = vadd.f32 0.0, %v4606
      %4608 = vmatprep.mubr.f32.mxu0 0.0
      %4609 = vmatmul.mubr.f32.gmra.mrb[0].mxu0 %v782
      %v4610 = vpop.f32.mrb[0].mxu0
      %v4611 = vadd.f32 0.0, %v4610
      %v4612 = vpop.f32.mrb[0].mxu0
      %v4613 = vadd.f32 0.0, %v4612
      %4614 = vdwg.mxu0
      %4615 = vmatprep.subr.mxu0 %v4034
      %4616 = vmatpush1.msra.mxu0 %v4033
      %4617 = vmatprep.subr.mxu0 %v4042
      %4618 = vmatpush1.msra.mxu0 %v4041
      %4619 = vmatprep.subr.mxu0 %v4050
      %4620 = vmatpush1.msra.mxu0 %v4049
      %4621 = vmatprep.subr.mxu0 %v4058
      %4622 = vmatpush1.msra.mxu0 %v4057
      %4623 = vmatprep.subr.mxu0 0.0
      %4624 = vmatpush1.msra.mxu0 0.0
      %4625 = vmatprep.subr.mxu0 0.0
      %4626 = vmatpush1.msra.mxu0 0.0
      %4627 = vmatprep.subr.mxu0 0.0
      %4628 = vmatpush1.msra.mxu0 0.0
      %4629 = vmatprep.subr.mxu0 0.0
      %4630 = vmatpush1.msra.mxu0 0.0
      %4631 = vmatprep.subr.mxu0 0.0
      %4632 = vmatpush1.msra.mxu0 0.0
      %4633 = vmatprep.subr.mxu0 0.0
      %4634 = vmatpush1.msra.mxu0 0.0
      %4635 = vmatprep.subr.mxu0 0.0
      %4636 = vmatpush1.msra.mxu0 0.0
      %4637 = vmatprep.subr.mxu0 0.0
      %4638 = vmatpush1.msra.mxu0 0.0
      %4639 = vmatprep.subr.mxu0 0.0
      %4640 = vmatpush1.msra.mxu0 0.0
      %4641 = vmatprep.subr.mxu0 0.0
      %4642 = vmatpush1.msra.mxu0 0.0
      %4643 = vmatprep.subr.mxu0 0.0
      %4644 = vmatpush1.msra.mxu0 0.0
      %4645 = vmatprep.subr.mxu0 0.0
      %4646 = vmatpush1.msra.mxu0 0.0
      %4647 = vmatprep.subr.mxu0 0.0
      %4648 = vmatpush1.msra.mxu0 0.0
      %4649 = vmatprep.subr.mxu0 0.0
      %4650 = vmatpush1.msra.mxu0 0.0
      %4651 = vmatprep.subr.mxu0 0.0
      %4652 = vmatpush1.msra.mxu0 0.0
      %4653 = vmatprep.subr.mxu0 0.0
      %4654 = vmatpush1.msra.mxu0 0.0
      %4655 = vmatprep.subr.mxu0 0.0
      %4656 = vmatpush1.msra.mxu0 0.0
      %4657 = vmatprep.subr.mxu0 0.0
      %4658 = vmatpush1.msra.mxu0 0.0
      %4659 = vmatprep.subr.mxu0 0.0
      %4660 = vmatpush1.msra.mxu0 0.0
      %4661 = vmatprep.subr.mxu0 0.0
      %4662 = vmatpush1.msra.mxu0 0.0
      %4663 = vmatprep.subr.mxu0 0.0
      %4664 = vmatpush1.msra.mxu0 0.0
      %4665 = vmatprep.subr.mxu0 0.0
      %4666 = vmatpush1.msra.mxu0 0.0
      %4667 = vmatprep.subr.mxu0 0.0
      %4668 = vmatpush1.msra.mxu0 0.0
      %4669 = vmatprep.subr.mxu0 0.0
      %4670 = vmatpush1.msra.mxu0 0.0
      %4671 = vmatprep.subr.mxu0 0.0
      %4672 = vmatpush1.msra.mxu0 0.0
      %4673 = vmatprep.subr.mxu0 0.0
      %4674 = vmatpush1.msra.mxu0 0.0
      %4675 = vmatprep.subr.mxu0 0.0
      %4676 = vmatpush1.msra.mxu0 0.0
      %4677 = vmatprep.subr.mxu0 0.0
      %4678 = vmatpush1.msra.mxu0 0.0
      %4679 = vmatprep.mubr.f32.mxu0 0.0
      %4680 = vmatmul.mubr.f32.gmra.mrb[0].mxu0 %v737
      %v4681 = vpop.f32.mrb[0].mxu0
      %v4682 = vadd.f32 0.0, %v4681
      %v4683 = vpop.f32.mrb[0].mxu0
      %v4684 = vadd.f32 0.0, %v4683
      %4685 = vmatprep.mubr.f32.mxu0 0.0
      %4686 = vmatmul.mubr.f32.gmra.mrb[0].mxu0 %v740
      %v4687 = vpop.f32.mrb[0].mxu0
      %v4688 = vadd.f32 0.0, %v4687
      %v4689 = vpop.f32.mrb[0].mxu0
      %v4690 = vadd.f32 0.0, %v4689
      %4691 = vmatprep.mubr.f32.mxu0 0.0
      %4692 = vmatmul.mubr.f32.gmra.mrb[0].mxu0 %v743
      %v4693 = vpop.f32.mrb[0].mxu0
      %v4694 = vadd.f32 0.0, %v4693
      %v4695 = vpop.f32.mrb[0].mxu0
      %v4696 = vadd.f32 0.0, %v4695
      %4697 = vmatprep.mubr.f32.mxu0 0.0
      %4698 = vmatmul.mubr.f32.gmra.mrb[0].mxu0 %v746
      %v4699 = vpop.f32.mrb[0].mxu0
      %v4700 = vadd.f32 0.0, %v4699
      %v4701 = vpop.f32.mrb[0].mxu0
      %v4702 = vadd.f32 0.0, %v4701
      %4703 = vmatprep.mubr.f32.mxu0 0.0
      %4704 = vmatmul.mubr.f32.gmra.mrb[0].mxu0 %v749
      %v4705 = vpop.f32.mrb[0].mxu0
      %v4706 = vadd.f32 0.0, %v4705
      %v4707 = vpop.f32.mrb[0].mxu0
      %v4708 = vadd.f32 0.0, %v4707
      %4709 = vmatprep.mubr.f32.mxu0 0.0
      %4710 = vmatmul.mubr.f32.gmra.mrb[0].mxu0 %v752
      %v4711 = vpop.f32.mrb[0].mxu0
      %v4712 = vadd.f32 0.0, %v4711
      %v4713 = vpop.f32.mrb[0].mxu0
      %v4714 = vadd.f32 0.0, %v4713
      %4715 = vmatprep.mubr.f32.mxu0 0.0
      %4716 = vmatmul.mubr.f32.gmra.mrb[0].mxu0 %v755
      %v4717 = vpop.f32.mrb[0].mxu0
      %v4718 = vadd.f32 0.0, %v4717
      %v4719 = vpop.f32.mrb[0].mxu0
      %v4720 = vadd.f32 0.0, %v4719
      %4721 = vmatprep.mubr.f32.mxu0 0.0
      %4722 = vmatmul.mubr.f32.gmra.mrb[0].mxu0 %v758
      %v4723 = vpop.f32.mrb[0].mxu0
      %v4724 = vadd.f32 0.0, %v4723
      %v4725 = vpop.f32.mrb[0].mxu0
      %v4726 = vadd.f32 0.0, %v4725
      %4727 = vmatprep.mubr.f32.mxu0 0.0
      %4728 = vmatmul.mubr.f32.gmra.mrb[0].mxu0 %v761
      %v4729 = vpop.f32.mrb[0].mxu0
      %v4730 = vadd.f32 0.0, %v4729
      %v4731 = vpop.f32.mrb[0].mxu0
      %v4732 = vadd.f32 0.0, %v4731
      %4733 = vmatprep.mubr.f32.mxu0 0.0
      %4734 = vmatmul.mubr.f32.gmra.mrb[0].mxu0 %v764
      %v4735 = vpop.f32.mrb[0].mxu0
      %v4736 = vadd.f32 0.0, %v4735
      %v4737 = vpop.f32.mrb[0].mxu0
      %v4738 = vadd.f32 0.0, %v4737
      %4739 = vmatprep.mubr.f32.mxu0 0.0
      %4740 = vmatmul.mubr.f32.gmra.mrb[0].mxu0 %v767
      %v4741 = vpop.f32.mrb[0].mxu0
      %v4742 = vadd.f32 0.0, %v4741
      %v4743 = vpop.f32.mrb[0].mxu0
      %v4744 = vadd.f32 0.0, %v4743
      %4745 = vmatprep.mubr.f32.mxu0 0.0
      %4746 = vmatmul.mubr.f32.gmra.mrb[0].mxu0 %v770
      %v4747 = vpop.f32.mrb[0].mxu0
      %v4748 = vadd.f32 0.0, %v4747
      %v4749 = vpop.f32.mrb[0].mxu0
      %v4750 = vadd.f32 0.0, %v4749
      %4751 = vmatprep.mubr.f32.mxu0 0.0
      %4752 = vmatmul.mubr.f32.gmra.mrb[0].mxu0 %v773
      %v4753 = vpop.f32.mrb[0].mxu0
      %v4754 = vadd.f32 0.0, %v4753
      %v4755 = vpop.f32.mrb[0].mxu0
      %v4756 = vadd.f32 0.0, %v4755
      %4757 = vmatprep.mubr.f32.mxu0 0.0
      %4758 = vmatmul.mubr.f32.gmra.mrb[0].mxu0 %v776
      %v4759 = vpop.f32.mrb[0].mxu0
      %v4760 = vadd.f32 0.0, %v4759
      %v4761 = vpop.f32.mrb[0].mxu0
      %v4762 = vadd.f32 0.0, %v4761
      %4763 = vmatprep.mubr.f32.mxu0 0.0
      %4764 = vmatmul.mubr.f32.gmra.mrb[0].mxu0 %v779
      %v4765 = vpop.f32.mrb[0].mxu0
      %v4766 = vadd.f32 0.0, %v4765
      %v4767 = vpop.f32.mrb[0].mxu0
      %v4768 = vadd.f32 0.0, %v4767
      %4769 = vmatprep.mubr.f32.mxu0 0.0
      %4770 = vmatmul.mubr.f32.gmra.mrb[0].mxu0 %v782
      %v4771 = vpop.f32.mrb[0].mxu0
      %v4772 = vadd.f32 0.0, %v4771
      %v4773 = vpop.f32.mrb[0].mxu0
      %v4774 = vadd.f32 0.0, %v4773
      %4775 = vdwg.mxu0
      %4776 = vmatprep.subr.mxu0 %v4036
      %4777 = vmatpush1.msra.mxu0 %v4035
      %4778 = vmatprep.subr.mxu0 %v4044
      %4779 = vmatpush1.msra.mxu0 %v4043
      %4780 = vmatprep.subr.mxu0 %v4052
      %4781 = vmatpush1.msra.mxu0 %v4051
      %4782 = vmatprep.subr.mxu0 %v4060
      %4783 = vmatpush1.msra.mxu0 %v4059
      %4784 = vmatprep.subr.mxu0 0.0
      %4785 = vmatpush1.msra.mxu0 0.0
      %4786 = vmatprep.subr.mxu0 0.0
      %4787 = vmatpush1.msra.mxu0 0.0
      %4788 = vmatprep.subr.mxu0 0.0
      %4789 = vmatpush1.msra.mxu0 0.0
      %4790 = vmatprep.subr.mxu0 0.0
      %4791 = vmatpush1.msra.mxu0 0.0
      %4792 = vmatprep.subr.mxu0 0.0
      %4793 = vmatpush1.msra.mxu0 0.0
      %4794 = vmatprep.subr.mxu0 0.0
      %4795 = vmatpush1.msra.mxu0 0.0
      %4796 = vmatprep.subr.mxu0 0.0
      %4797 = vmatpush1.msra.mxu0 0.0
      %4798 = vmatprep.subr.mxu0 0.0
      %4799 = vmatpush1.msra.mxu0 0.0
      %4800 = vmatprep.subr.mxu0 0.0
      %4801 = vmatpush1.msra.mxu0 0.0
      %4802 = vmatprep.subr.mxu0 0.0
      %4803 = vmatpush1.msra.mxu0 0.0
      %4804 = vmatprep.subr.mxu0 0.0
      %4805 = vmatpush1.msra.mxu0 0.0
      %4806 = vmatprep.subr.mxu0 0.0
      %4807 = vmatpush1.msra.mxu0 0.0
      %4808 = vmatprep.subr.mxu0 0.0
      %4809 = vmatpush1.msra.mxu0 0.0
      %4810 = vmatprep.subr.mxu0 0.0
      %4811 = vmatpush1.msra.mxu0 0.0
      %4812 = vmatprep.subr.mxu0 0.0
      %4813 = vmatpush1.msra.mxu0 0.0
      %4814 = vmatprep.subr.mxu0 0.0
      %4815 = vmatpush1.msra.mxu0 0.0
      %4816 = vmatprep.subr.mxu0 0.0
      %4817 = vmatpush1.msra.mxu0 0.0
      %4818 = vmatprep.subr.mxu0 0.0
      %4819 = vmatpush1.msra.mxu0 0.0
      %4820 = vmatprep.subr.mxu0 0.0
      %4821 = vmatpush1.msra.mxu0 0.0
      %4822 = vmatprep.subr.mxu0 0.0
      %4823 = vmatpush1.msra.mxu0 0.0
      %4824 = vmatprep.subr.mxu0 0.0
      %4825 = vmatpush1.msra.mxu0 0.0
      %4826 = vmatprep.subr.mxu0 0.0
      %4827 = vmatpush1.msra.mxu0 0.0
      %4828 = vmatprep.subr.mxu0 0.0
      %4829 = vmatpush1.msra.mxu0 0.0
      %4830 = vmatprep.subr.mxu0 0.0
      %4831 = vmatpush1.msra.mxu0 0.0
      %4832 = vmatprep.subr.mxu0 0.0
      %4833 = vmatpush1.msra.mxu0 0.0
      %4834 = vmatprep.subr.mxu0 0.0
      %4835 = vmatpush1.msra.mxu0 0.0
      %4836 = vmatprep.subr.mxu0 0.0
      %4837 = vmatpush1.msra.mxu0 0.0
      %4838 = vmatprep.subr.mxu0 0.0
      %4839 = vmatpush1.msra.mxu0 0.0
      %4840 = vmatprep.mubr.f32.mxu0 0.0
      %4841 = vmatmul.mubr.f32.gmra.mrb[0].mxu0 %v737
      %v4842 = vpop.f32.mrb[0].mxu0
      %v4843 = vadd.f32 0.0, %v4842
      %v4844 = vpop.f32.mrb[0].mxu0
      %v4845 = vadd.f32 0.0, %v4844
      %4846 = vmatprep.mubr.f32.mxu0 0.0
      %4847 = vmatmul.mubr.f32.gmra.mrb[0].mxu0 %v740
      %v4848 = vpop.f32.mrb[0].mxu0
      %v4849 = vadd.f32 0.0, %v4848
      %v4850 = vpop.f32.mrb[0].mxu0
      %v4851 = vadd.f32 0.0, %v4850
      %4852 = vmatprep.mubr.f32.mxu0 0.0
      %4853 = vmatmul.mubr.f32.gmra.mrb[0].mxu0 %v743
      %v4854 = vpop.f32.mrb[0].mxu0
      %v4855 = vadd.f32 0.0, %v4854
      %v4856 = vpop.f32.mrb[0].mxu0
      %v4857 = vadd.f32 0.0, %v4856
      %4858 = vmatprep.mubr.f32.mxu0 0.0
      %4859 = vmatmul.mubr.f32.gmra.mrb[0].mxu0 %v746
      %v4860 = vpop.f32.mrb[0].mxu0
      %v4861 = vadd.f32 0.0, %v4860
      %v4862 = vpop.f32.mrb[0].mxu0
      %v4863 = vadd.f32 0.0, %v4862
      %4864 = vmatprep.mubr.f32.mxu0 0.0
      %4865 = vmatmul.mubr.f32.gmra.mrb[0].mxu0 %v749
      %v4866 = vpop.f32.mrb[0].mxu0
      %v4867 = vadd.f32 0.0, %v4866
      %v4868 = vpop.f32.mrb[0].mxu0
      %v4869 = vadd.f32 0.0, %v4868
      %4870 = vmatprep.mubr.f32.mxu0 0.0
      %4871 = vmatmul.mubr.f32.gmra.mrb[0].mxu0 %v752
      %v4872 = vpop.f32.mrb[0].mxu0
      %v4873 = vadd.f32 0.0, %v4872
      %v4874 = vpop.f32.mrb[0].mxu0
      %v4875 = vadd.f32 0.0, %v4874
      %4876 = vmatprep.mubr.f32.mxu0 0.0
      %4877 = vmatmul.mubr.f32.gmra.mrb[0].mxu0 %v755
      %v4878 = vpop.f32.mrb[0].mxu0
      %v4879 = vadd.f32 0.0, %v4878
      %v4880 = vpop.f32.mrb[0].mxu0
      %v4881 = vadd.f32 0.0, %v4880
      %4882 = vmatprep.mubr.f32.mxu0 0.0
      %4883 = vmatmul.mubr.f32.gmra.mrb[0].mxu0 %v758
      %v4884 = vpop.f32.mrb[0].mxu0
      %v4885 = vadd.f32 0.0, %v4884
      %v4886 = vpop.f32.mrb[0].mxu0
      %v4887 = vadd.f32 0.0, %v4886
      %4888 = vmatprep.mubr.f32.mxu0 0.0
      %4889 = vmatmul.mubr.f32.gmra.mrb[0].mxu0 %v761
      %v4890 = vpop.f32.mrb[0].mxu0
      %v4891 = vadd.f32 0.0, %v4890
      %v4892 = vpop.f32.mrb[0].mxu0
      %v4893 = vadd.f32 0.0, %v4892
      %4894 = vmatprep.mubr.f32.mxu0 0.0
      %4895 = vmatmul.mubr.f32.gmra.mrb[0].mxu0 %v764
      %v4896 = vpop.f32.mrb[0].mxu0
      %v4897 = vadd.f32 0.0, %v4896
      %v4898 = vpop.f32.mrb[0].mxu0
      %v4899 = vadd.f32 0.0, %v4898
      %4900 = vmatprep.mubr.f32.mxu0 0.0
      %4901 = vmatmul.mubr.f32.gmra.mrb[0].mxu0 %v767
      %v4902 = vpop.f32.mrb[0].mxu0
      %v4903 = vadd.f32 0.0, %v4902
      %v4904 = vpop.f32.mrb[0].mxu0
      %v4905 = vadd.f32 0.0, %v4904
      %4906 = vmatprep.mubr.f32.mxu0 0.0
      %4907 = vmatmul.mubr.f32.gmra.mrb[0].mxu0 %v770
      %v4908 = vpop.f32.mrb[0].mxu0
      %v4909 = vadd.f32 0.0, %v4908
      %v4910 = vpop.f32.mrb[0].mxu0
      %v4911 = vadd.f32 0.0, %v4910
      %4912 = vmatprep.mubr.f32.mxu0 0.0
      %4913 = vmatmul.mubr.f32.gmra.mrb[0].mxu0 %v773
      %v4914 = vpop.f32.mrb[0].mxu0
      %v4915 = vadd.f32 0.0, %v4914
      %v4916 = vpop.f32.mrb[0].mxu0
      %v4917 = vadd.f32 0.0, %v4916
      %4918 = vmatprep.mubr.f32.mxu0 0.0
      %4919 = vmatmul.mubr.f32.gmra.mrb[0].mxu0 %v776
      %v4920 = vpop.f32.mrb[0].mxu0
      %v4921 = vadd.f32 0.0, %v4920
      %v4922 = vpop.f32.mrb[0].mxu0
      %v4923 = vadd.f32 0.0, %v4922
      %4924 = vmatprep.mubr.f32.mxu0 0.0
      %4925 = vmatmul.mubr.f32.gmra.mrb[0].mxu0 %v779
      %v4926 = vpop.f32.mrb[0].mxu0
      %v4927 = vadd.f32 0.0, %v4926
      %v4928 = vpop.f32.mrb[0].mxu0
      %v4929 = vadd.f32 0.0, %v4928
      %4930 = vmatprep.mubr.f32.mxu0 0.0
      %4931 = vmatmul.mubr.f32.gmra.mrb[0].mxu0 %v782
      %v4932 = vpop.f32.mrb[0].mxu0
      %v4933 = vadd.f32 0.0, %v4932
      %v4934 = vpop.f32.mrb[0].mxu0
      %v4935 = vadd.f32 0.0, %v4934
      %4936 = vdwg.mxu0
      %v4937 = vadd.f32 %v4165, %v4360
      %v4938 = vadd.f32 %v4166, %v4362
      %v4939 = vadd.f32 %v4167, %v4521
      %v4940 = vadd.f32 %v4168, %v4523
      %v4941 = vadd.f32 %v4169, %v4682
      %v4942 = vadd.f32 %v4170, %v4684
      %v4943 = vadd.f32 %v4171, %v4843
      %v4944 = vadd.f32 %v4172, %v4845
      %v4945 = vadd.f32 %v4173, %v4366
      %v4946 = vadd.f32 %v4174, %v4368
      %v4947 = vadd.f32 %v4175, %v4527
      %v4948 = vadd.f32 %v4176, %v4529
      %v4949 = vadd.f32 %v4177, %v4688
      %v4950 = vadd.f32 %v4178, %v4690
      %v4951 = vadd.f32 %v4179, %v4849
      %v4952 = vadd.f32 %v4180, %v4851
      %v4953 = vadd.f32 %v4181, %v4372
      %v4954 = vadd.f32 %v4182, %v4374
      %v4955 = vadd.f32 %v4183, %v4533
      %v4956 = vadd.f32 %v4184, %v4535
      %v4957 = vadd.f32 %v4185, %v4694
      %v4958 = vadd.f32 %v4186, %v4696
      %v4959 = vadd.f32 %v4187, %v4855
      %v4960 = vadd.f32 %v4188, %v4857
      %v4961 = vadd.f32 %v4189, %v4378
      %v4962 = vadd.f32 %v4190, %v4380
      %v4963 = vadd.f32 %v4191, %v4539
      %v4964 = vadd.f32 %v4192, %v4541
      %v4965 = vadd.f32 %v4193, %v4700
      %v4966 = vadd.f32 %v4194, %v4702
      %v4967 = vadd.f32 %v4195, %v4861
      %v4968 = vadd.f32 %v4196, %v4863
      %v4969 = vadd.f32 %v4197, %v4384
      %v4970 = vadd.f32 %v4198, %v4386
      %v4971 = vadd.f32 %v4199, %v4545
      %v4972 = vadd.f32 %v4200, %v4547
      %v4973 = vadd.f32 %v4201, %v4706
      %v4974 = vadd.f32 %v4202, %v4708
      %v4975 = vadd.f32 %v4203, %v4867
      %v4976 = vadd.f32 %v4204, %v4869
      %v4977 = vadd.f32 %v4205, %v4390
      %v4978 = vadd.f32 %v4206, %v4392
      %v4979 = vadd.f32 %v4207, %v4551
      %v4980 = vadd.f32 %v4208, %v4553
      %v4981 = vadd.f32 %v4209, %v4712
      %v4982 = vadd.f32 %v4210, %v4714
      %v4983 = vadd.f32 %v4211, %v4873
      %v4984 = vadd.f32 %v4212, %v4875
      %v4985 = vadd.f32 %v4213, %v4396
      %v4986 = vadd.f32 %v4214, %v4398
      %v4987 = vadd.f32 %v4215, %v4557
      %v4988 = vadd.f32 %v4216, %v4559
      %v4989 = vadd.f32 %v4217, %v4718
      %v4990 = vadd.f32 %v4218, %v4720
      %v4991 = vadd.f32 %v4219, %v4879
      %v4992 = vadd.f32 %v4220, %v4881
      %v4993 = vadd.f32 %v4221, %v4402
      %v4994 = vadd.f32 %v4222, %v4404
      %v4995 = vadd.f32 %v4223, %v4563
      %v4996 = vadd.f32 %v4224, %v4565
      %v4997 = vadd.f32 %v4225, %v4724
      %v4998 = vadd.f32 %v4226, %v4726
      %v4999 = vadd.f32 %v4227, %v4885
      %v5000 = vadd.f32 %v4228, %v4887
      %v5001 = vadd.f32 %v4229, %v4408
      %v5002 = vadd.f32 %v4230, %v4410
      %v5003 = vadd.f32 %v4231, %v4569
      %v5004 = vadd.f32 %v4232, %v4571
      %v5005 = vadd.f32 %v4233, %v4730
      %v5006 = vadd.f32 %v4234, %v4732
      %v5007 = vadd.f32 %v4235, %v4891
      %v5008 = vadd.f32 %v4236, %v4893
      %v5009 = vadd.f32 %v4237, %v4414
      %v5010 = vadd.f32 %v4238, %v4416
      %v5011 = vadd.f32 %v4239, %v4575
      %v5012 = vadd.f32 %v4240, %v4577
      %v5013 = vadd.f32 %v4241, %v4736
      %v5014 = vadd.f32 %v4242, %v4738
      %v5015 = vadd.f32 %v4243, %v4897
      %v5016 = vadd.f32 %v4244, %v4899
      %v5017 = vadd.f32 %v4245, %v4420
      %v5018 = vadd.f32 %v4246, %v4422
      %v5019 = vadd.f32 %v4247, %v4581
      %v5020 = vadd.f32 %v4248, %v4583
      %v5021 = vadd.f32 %v4249, %v4742
      %v5022 = vadd.f32 %v4250, %v4744
      %v5023 = vadd.f32 %v4251, %v4903
      %v5024 = vadd.f32 %v4252, %v4905
      %v5025 = vadd.f32 %v4253, %v4426
      %v5026 = vadd.f32 %v4254, %v4428
      %v5027 = vadd.f32 %v4255, %v4587
      %v5028 = vadd.f32 %v4256, %v4589
      %v5029 = vadd.f32 %v4257, %v4748
      %v5030 = vadd.f32 %v4258, %v4750
      %v5031 = vadd.f32 %v4259, %v4909
      %v5032 = vadd.f32 %v4260, %v4911
      %v5033 = vadd.f32 %v4261, %v4432
      %v5034 = vadd.f32 %v4262, %v4434
      %v5035 = vadd.f32 %v4263, %v4593
      %v5036 = vadd.f32 %v4264, %v4595
      %v5037 = vadd.f32 %v4265, %v4754
      %v5038 = vadd.f32 %v4266, %v4756
      %v5039 = vadd.f32 %v4267, %v4915
      %v5040 = vadd.f32 %v4268, %v4917
      %v5041 = vadd.f32 %v4269, %v4438
      %v5042 = vadd.f32 %v4270, %v4440
      %v5043 = vadd.f32 %v4271, %v4599
      %v5044 = vadd.f32 %v4272, %v4601
      %v5045 = vadd.f32 %v4273, %v4760
      %v5046 = vadd.f32 %v4274, %v4762
      %v5047 = vadd.f32 %v4275, %v4921
      %v5048 = vadd.f32 %v4276, %v4923
      %v5049 = vadd.f32 %v4277, %v4444
      %v5050 = vadd.f32 %v4278, %v4446
      %v5051 = vadd.f32 %v4279, %v4605
      %v5052 = vadd.f32 %v4280, %v4607
      %v5053 = vadd.f32 %v4281, %v4766
      %v5054 = vadd.f32 %v4282, %v4768
      %v5055 = vadd.f32 %v4283, %v4927
      %v5056 = vadd.f32 %v4284, %v4929
      %v5057 = vadd.f32 %v4285, %v4450
      %v5058 = vadd.f32 %v4286, %v4452
      %v5059 = vadd.f32 %v4287, %v4611
      %v5060 = vadd.f32 %v4288, %v4613
      %v5061 = vadd.f32 %v4289, %v4772
      %v5062 = vadd.f32 %v4290, %v4774
      %v5063 = vadd.f32 %v4291, %v4933
      %v5064 = vadd.f32 %v4292, %v4935
      %v5065 = vadd.f32 %v4937, %v1076
      %v5066 = vadd.f32 %v4938, %v1076
      %v5067 = vadd.f32 %v4939, %v1076
      %v5068 = vadd.f32 %v4940, %v1076
      %v5069 = vadd.f32 %v4941, %v1076
      %v5070 = vadd.f32 %v4942, %v1076
      %v5071 = vadd.f32 %v4943, %v1076
      %v5072 = vadd.f32 %v4944, %v1076
      %v5073 = vadd.f32 %v4945, %v1081
      %v5074 = vadd.f32 %v4946, %v1081
      %v5075 = vadd.f32 %v4947, %v1081
      %v5076 = vadd.f32 %v4948, %v1081
      %v5077 = vadd.f32 %v4949, %v1081
      %v5078 = vadd.f32 %v4950, %v1081
      %v5079 = vadd.f32 %v4951, %v1081
      %v5080 = vadd.f32 %v4952, %v1081
      %v5081 = vadd.f32 %v4953, %v1086
      %v5082 = vadd.f32 %v4954, %v1086
      %v5083 = vadd.f32 %v4955, %v1086
      %v5084 = vadd.f32 %v4956, %v1086
      %v5085 = vadd.f32 %v4957, %v1086
      %v5086 = vadd.f32 %v4958, %v1086
      %v5087 = vadd.f32 %v4959, %v1086
      %v5088 = vadd.f32 %v4960, %v1086
      %v5089 = vadd.f32 %v4961, %v1091
      %v5090 = vadd.f32 %v4962, %v1091
      %v5091 = vadd.f32 %v4963, %v1091
      %v5092 = vadd.f32 %v4964, %v1091
      %v5093 = vadd.f32 %v4965, %v1091
      %v5094 = vadd.f32 %v4966, %v1091
      %v5095 = vadd.f32 %v4967, %v1091
      %v5096 = vadd.f32 %v4968, %v1091
      %v5097 = vadd.f32 %v4969, %v1096
      %v5098 = vadd.f32 %v4970, %v1096
      %v5099 = vadd.f32 %v4971, %v1096
      %v5100 = vadd.f32 %v4972, %v1096
      %v5101 = vadd.f32 %v4973, %v1096
      %v5102 = vadd.f32 %v4974, %v1096
      %v5103 = vadd.f32 %v4975, %v1096
      %v5104 = vadd.f32 %v4976, %v1096
      %v5105 = vadd.f32 %v4977, %v1101
      %v5106 = vadd.f32 %v4978, %v1101
      %v5107 = vadd.f32 %v4979, %v1101
      %v5108 = vadd.f32 %v4980, %v1101
      %v5109 = vadd.f32 %v4981, %v1101
      %v5110 = vadd.f32 %v4982, %v1101
      %v5111 = vadd.f32 %v4983, %v1101
      %v5112 = vadd.f32 %v4984, %v1101
      %v5113 = vadd.f32 %v4985, %v1106
      %v5114 = vadd.f32 %v4986, %v1106
      %v5115 = vadd.f32 %v4987, %v1106
      %v5116 = vadd.f32 %v4988, %v1106
      %v5117 = vadd.f32 %v4989, %v1106
      %v5118 = vadd.f32 %v4990, %v1106
      %v5119 = vadd.f32 %v4991, %v1106
      %v5120 = vadd.f32 %v4992, %v1106
      %v5121 = vadd.f32 %v4993, %v1111
      %v5122 = vadd.f32 %v4994, %v1111
      %v5123 = vadd.f32 %v4995, %v1111
      %v5124 = vadd.f32 %v4996, %v1111
      %v5125 = vadd.f32 %v4997, %v1111
      %v5126 = vadd.f32 %v4998, %v1111
      %v5127 = vadd.f32 %v4999, %v1111
      %v5128 = vadd.f32 %v5000, %v1111
      %v5129 = vadd.f32 %v5001, %v1116
      %v5130 = vadd.f32 %v5002, %v1116
      %v5131 = vadd.f32 %v5003, %v1116
      %v5132 = vadd.f32 %v5004, %v1116
      %v5133 = vadd.f32 %v5005, %v1116
      %v5134 = vadd.f32 %v5006, %v1116
      %v5135 = vadd.f32 %v5007, %v1116
      %v5136 = vadd.f32 %v5008, %v1116
      %v5137 = vadd.f32 %v5009, %v1121
      %v5138 = vadd.f32 %v5010, %v1121
      %v5139 = vadd.f32 %v5011, %v1121
      %v5140 = vadd.f32 %v5012, %v1121
      %v5141 = vadd.f32 %v5013, %v1121
      %v5142 = vadd.f32 %v5014, %v1121
      %v5143 = vadd.f32 %v5015, %v1121
      %v5144 = vadd.f32 %v5016, %v1121
      %v5145 = vadd.f32 %v5017, %v1126
      %v5146 = vadd.f32 %v5018, %v1126
      %v5147 = vadd.f32 %v5019, %v1126
      %v5148 = vadd.f32 %v5020, %v1126
      %v5149 = vadd.f32 %v5021, %v1126
      %v5150 = vadd.f32 %v5022, %v1126
      %v5151 = vadd.f32 %v5023, %v1126
      %v5152 = vadd.f32 %v5024, %v1126
      %v5153 = vadd.f32 %v5025, %v1131
      %v5154 = vadd.f32 %v5026, %v1131
      %v5155 = vadd.f32 %v5027, %v1131
      %v5156 = vadd.f32 %v5028, %v1131
      %v5157 = vadd.f32 %v5029, %v1131
      %v5158 = vadd.f32 %v5030, %v1131
      %v5159 = vadd.f32 %v5031, %v1131
      %v5160 = vadd.f32 %v5032, %v1131
      %v5161 = vadd.f32 %v5033, %v1136
      %v5162 = vadd.f32 %v5034, %v1136
      %v5163 = vadd.f32 %v5035, %v1136
      %v5164 = vadd.f32 %v5036, %v1136
      %v5165 = vadd.f32 %v5037, %v1136
      %v5166 = vadd.f32 %v5038, %v1136
      %v5167 = vadd.f32 %v5039, %v1136
      %v5168 = vadd.f32 %v5040, %v1136
      %v5169 = vadd.f32 %v5041, %v1141
      %v5170 = vadd.f32 %v5042, %v1141
      %v5171 = vadd.f32 %v5043, %v1141
      %v5172 = vadd.f32 %v5044, %v1141
      %v5173 = vadd.f32 %v5045, %v1141
      %v5174 = vadd.f32 %v5046, %v1141
      %v5175 = vadd.f32 %v5047, %v1141
      %v5176 = vadd.f32 %v5048, %v1141
      %v5177 = vadd.f32 %v5049, %v1146
      %v5178 = vadd.f32 %v5050, %v1146
      %v5179 = vadd.f32 %v5051, %v1146
      %v5180 = vadd.f32 %v5052, %v1146
      %v5181 = vadd.f32 %v5053, %v1146
      %v5182 = vadd.f32 %v5054, %v1146
      %v5183 = vadd.f32 %v5055, %v1146
      %v5184 = vadd.f32 %v5056, %v1146
      %v5185 = vadd.f32 %v5057, %v1151
      %v5186 = vadd.f32 %v5058, %v1151
      %v5187 = vadd.f32 %v5059, %v1151
      %v5188 = vadd.f32 %v5060, %v1151
      %v5189 = vadd.f32 %v5061, %v1151
      %v5190 = vadd.f32 %v5062, %v1151
      %v5191 = vadd.f32 %v5063, %v1151
      %v5192 = vadd.f32 %v5064, %v1151
      %v5193 = vxor.u32 %v5065, 2147483648
      %v5194 = vxor.u32 %v5066, 2147483648
      %v5195 = vxor.u32 %v5067, 2147483648
      %v5196 = vxor.u32 %v5068, 2147483648
      %v5197 = vxor.u32 %v5069, 2147483648
      %v5198 = vxor.u32 %v5070, 2147483648
      %v5199 = vxor.u32 %v5071, 2147483648
      %v5200 = vxor.u32 %v5072, 2147483648
      %v5201 = vxor.u32 %v5073, 2147483648
      %v5202 = vxor.u32 %v5074, 2147483648
      %v5203 = vxor.u32 %v5075, 2147483648
      %v5204 = vxor.u32 %v5076, 2147483648
      %v5205 = vxor.u32 %v5077, 2147483648
      %v5206 = vxor.u32 %v5078, 2147483648
      %v5207 = vxor.u32 %v5079, 2147483648
      %v5208 = vxor.u32 %v5080, 2147483648
      %v5209 = vxor.u32 %v5081, 2147483648
      %v5210 = vxor.u32 %v5082, 2147483648
      %v5211 = vxor.u32 %v5083, 2147483648
      %v5212 = vxor.u32 %v5084, 2147483648
      %v5213 = vxor.u32 %v5085, 2147483648
      %v5214 = vxor.u32 %v5086, 2147483648
      %v5215 = vxor.u32 %v5087, 2147483648
      %v5216 = vxor.u32 %v5088, 2147483648
      %v5217 = vxor.u32 %v5089, 2147483648
      %v5218 = vxor.u32 %v5090, 2147483648
      %v5219 = vxor.u32 %v5091, 2147483648
      %v5220 = vxor.u32 %v5092, 2147483648
      %v5221 = vxor.u32 %v5093, 2147483648
      %v5222 = vxor.u32 %v5094, 2147483648
      %v5223 = vxor.u32 %v5095, 2147483648
      %v5224 = vxor.u32 %v5096, 2147483648
      %v5225 = vmul.f32 %v5193, 1.442695
      %v5226 = vpow.pop %v5225
      %v5227 = vmul.f32 %v5194, 1.442695
      %v5228 = vpow.pop %v5227
      %v5229 = vmul.f32 %v5195, 1.442695
      %v5230 = vpow.pop %v5229
      %v5231 = vmul.f32 %v5196, 1.442695
      %v5232 = vpow.pop %v5231
      %v5233 = vmul.f32 %v5197, 1.442695
      %v5234 = vpow.pop %v5233
      %v5235 = vmul.f32 %v5198, 1.442695
      %v5236 = vpow.pop %v5235
      %v5237 = vmul.f32 %v5199, 1.442695
      %v5238 = vpow.pop %v5237
      %v5239 = vmul.f32 %v5200, 1.442695
      %v5240 = vpow.pop %v5239
      %v5241 = vmul.f32 %v5201, 1.442695
      %v5242 = vpow.pop %v5241
      %v5243 = vmul.f32 %v5202, 1.442695
      %v5244 = vpow.pop %v5243
      %v5245 = vmul.f32 %v5203, 1.442695
      %v5246 = vpow.pop %v5245
      %v5247 = vmul.f32 %v5204, 1.442695
      %v5248 = vpow.pop %v5247
      %v5249 = vmul.f32 %v5205, 1.442695
      %v5250 = vpow.pop %v5249
      %v5251 = vmul.f32 %v5206, 1.442695
      %v5252 = vpow.pop %v5251
      %v5253 = vmul.f32 %v5207, 1.442695
      %v5254 = vpow.pop %v5253
      %v5255 = vmul.f32 %v5208, 1.442695
      %v5256 = vpow.pop %v5255
      %v5257 = vmul.f32 %v5209, 1.442695
      %v5258 = vpow.pop %v5257
      %v5259 = vmul.f32 %v5210, 1.442695
      %v5260 = vpow.pop %v5259
      %v5261 = vmul.f32 %v5211, 1.442695
      %v5262 = vpow.pop %v5261
      %v5263 = vmul.f32 %v5212, 1.442695
      %v5264 = vpow.pop %v5263
      %v5265 = vmul.f32 %v5213, 1.442695
      %v5266 = vpow.pop %v5265
      %v5267 = vmul.f32 %v5214, 1.442695
      %v5268 = vpow.pop %v5267
      %v5269 = vmul.f32 %v5215, 1.442695
      %v5270 = vpow.pop %v5269
      %v5271 = vmul.f32 %v5216, 1.442695
      %v5272 = vpow.pop %v5271
      %v5273 = vmul.f32 %v5217, 1.442695
      %v5274 = vpow.pop %v5273
      %v5275 = vmul.f32 %v5218, 1.442695
      %v5276 = vpow.pop %v5275
      %v5277 = vmul.f32 %v5219, 1.442695
      %v5278 = vpow.pop %v5277
      %v5279 = vmul.f32 %v5220, 1.442695
      %v5280 = vpow.pop %v5279
      %v5281 = vmul.f32 %v5221, 1.442695
      %v5282 = vpow.pop %v5281
      %v5283 = vmul.f32 %v5222, 1.442695
      %v5284 = vpow.pop %v5283
      %v5285 = vmul.f32 %v5223, 1.442695
      %v5286 = vpow.pop %v5285
      %v5287 = vmul.f32 %v5224, 1.442695
      %v5288 = vpow.pop %v5287
      %v5289 = vadd.f32 %v5226, 1.0
      %v5290 = vadd.f32 %v5228, 1.0
      %v5291 = vadd.f32 %v5230, 1.0
      %v5292 = vadd.f32 %v5232, 1.0
      %v5293 = vadd.f32 %v5234, 1.0
      %v5294 = vadd.f32 %v5236, 1.0
      %v5295 = vadd.f32 %v5238, 1.0
      %v5296 = vadd.f32 %v5240, 1.0
      %v5297 = vadd.f32 %v5242, 1.0
      %v5298 = vadd.f32 %v5244, 1.0
      %v5299 = vadd.f32 %v5246, 1.0
      %v5300 = vadd.f32 %v5248, 1.0
      %v5301 = vadd.f32 %v5250, 1.0
      %v5302 = vadd.f32 %v5252, 1.0
      %v5303 = vadd.f32 %v5254, 1.0
      %v5304 = vadd.f32 %v5256, 1.0
      %v5305 = vadd.f32 %v5258, 1.0
      %v5306 = vadd.f32 %v5260, 1.0
      %v5307 = vadd.f32 %v5262, 1.0
      %v5308 = vadd.f32 %v5264, 1.0
      %v5309 = vadd.f32 %v5266, 1.0
      %v5310 = vadd.f32 %v5268, 1.0
      %v5311 = vadd.f32 %v5270, 1.0
      %v5312 = vadd.f32 %v5272, 1.0
      %v5313 = vadd.f32 %v5274, 1.0
      %v5314 = vadd.f32 %v5276, 1.0
      %v5315 = vadd.f32 %v5278, 1.0
      %v5316 = vadd.f32 %v5280, 1.0
      %v5317 = vadd.f32 %v5282, 1.0
      %v5318 = vadd.f32 %v5284, 1.0
      %v5319 = vadd.f32 %v5286, 1.0
      %v5320 = vadd.f32 %v5288, 1.0
      %v5321 = vrcp.pop %v5289
      %v5322 = vmul.f32 1.0, %v5321
      %v5323 = vrcp.pop %v5290
      %v5324 = vmul.f32 1.0, %v5323
      %v5325 = vrcp.pop %v5291
      %v5326 = vmul.f32 1.0, %v5325
      %v5327 = vrcp.pop %v5292
      %v5328 = vmul.f32 1.0, %v5327
      %v5329 = vrcp.pop %v5293
      %v5330 = vmul.f32 1.0, %v5329
      %v5331 = vrcp.pop %v5294
      %v5332 = vmul.f32 1.0, %v5331
      %v5333 = vrcp.pop %v5295
      %v5334 = vmul.f32 1.0, %v5333
      %v5335 = vrcp.pop %v5296
      %v5336 = vmul.f32 1.0, %v5335
      %v5337 = vrcp.pop %v5297
      %v5338 = vmul.f32 1.0, %v5337
      %v5339 = vrcp.pop %v5298
      %v5340 = vmul.f32 1.0, %v5339
      %v5341 = vrcp.pop %v5299
      %v5342 = vmul.f32 1.0, %v5341
      %v5343 = vrcp.pop %v5300
      %v5344 = vmul.f32 1.0, %v5343
      %v5345 = vrcp.pop %v5301
      %v5346 = vmul.f32 1.0, %v5345
      %v5347 = vrcp.pop %v5302
      %v5348 = vmul.f32 1.0, %v5347
      %v5349 = vrcp.pop %v5303
      %v5350 = vmul.f32 1.0, %v5349
      %v5351 = vrcp.pop %v5304
      %v5352 = vmul.f32 1.0, %v5351
      %v5353 = vrcp.pop %v5305
      %v5354 = vmul.f32 1.0, %v5353
      %v5355 = vrcp.pop %v5306
      %v5356 = vmul.f32 1.0, %v5355
      %v5357 = vrcp.pop %v5307
      %v5358 = vmul.f32 1.0, %v5357
      %v5359 = vrcp.pop %v5308
      %v5360 = vmul.f32 1.0, %v5359
      %v5361 = vrcp.pop %v5309
      %v5362 = vmul.f32 1.0, %v5361
      %v5363 = vrcp.pop %v5310
      %v5364 = vmul.f32 1.0, %v5363
      %v5365 = vrcp.pop %v5311
      %v5366 = vmul.f32 1.0, %v5365
      %v5367 = vrcp.pop %v5312
      %v5368 = vmul.f32 1.0, %v5367
      %v5369 = vrcp.pop %v5313
      %v5370 = vmul.f32 1.0, %v5369
      %v5371 = vrcp.pop %v5314
      %v5372 = vmul.f32 1.0, %v5371
      %v5373 = vrcp.pop %v5315
      %v5374 = vmul.f32 1.0, %v5373
      %v5375 = vrcp.pop %v5316
      %v5376 = vmul.f32 1.0, %v5375
      %v5377 = vrcp.pop %v5317
      %v5378 = vmul.f32 1.0, %v5377
      %v5379 = vrcp.pop %v5318
      %v5380 = vmul.f32 1.0, %v5379
      %v5381 = vrcp.pop %v5319
      %v5382 = vmul.f32 1.0, %v5381
      %v5383 = vrcp.pop %v5320
      %v5384 = vmul.f32 1.0, %v5383
      %v5385 = vxor.u32 %v5097, 2147483648
      %v5386 = vxor.u32 %v5098, 2147483648
      %v5387 = vxor.u32 %v5099, 2147483648
      %v5388 = vxor.u32 %v5100, 2147483648
      %v5389 = vxor.u32 %v5101, 2147483648
      %v5390 = vxor.u32 %v5102, 2147483648
      %v5391 = vxor.u32 %v5103, 2147483648
      %v5392 = vxor.u32 %v5104, 2147483648
      %v5393 = vxor.u32 %v5105, 2147483648
      %v5394 = vxor.u32 %v5106, 2147483648
      %v5395 = vxor.u32 %v5107, 2147483648
      %v5396 = vxor.u32 %v5108, 2147483648
      %v5397 = vxor.u32 %v5109, 2147483648
      %v5398 = vxor.u32 %v5110, 2147483648
      %v5399 = vxor.u32 %v5111, 2147483648
      %v5400 = vxor.u32 %v5112, 2147483648
      %v5401 = vxor.u32 %v5113, 2147483648
      %v5402 = vxor.u32 %v5114, 2147483648
      %v5403 = vxor.u32 %v5115, 2147483648
      %v5404 = vxor.u32 %v5116, 2147483648
      %v5405 = vxor.u32 %v5117, 2147483648
      %v5406 = vxor.u32 %v5118, 2147483648
      %v5407 = vxor.u32 %v5119, 2147483648
      %v5408 = vxor.u32 %v5120, 2147483648
      %v5409 = vxor.u32 %v5121, 2147483648
      %v5410 = vxor.u32 %v5122, 2147483648
      %v5411 = vxor.u32 %v5123, 2147483648
      %v5412 = vxor.u32 %v5124, 2147483648
      %v5413 = vxor.u32 %v5125, 2147483648
      %v5414 = vxor.u32 %v5126, 2147483648
      %v5415 = vxor.u32 %v5127, 2147483648
      %v5416 = vxor.u32 %v5128, 2147483648
      %v5417 = vmul.f32 %v5385, 1.442695
      %v5418 = vpow.pop %v5417
      %v5419 = vmul.f32 %v5386, 1.442695
      %v5420 = vpow.pop %v5419
      %v5421 = vmul.f32 %v5387, 1.442695
      %v5422 = vpow.pop %v5421
      %v5423 = vmul.f32 %v5388, 1.442695
      %v5424 = vpow.pop %v5423
      %v5425 = vmul.f32 %v5389, 1.442695
      %v5426 = vpow.pop %v5425
      %v5427 = vmul.f32 %v5390, 1.442695
      %v5428 = vpow.pop %v5427
      %v5429 = vmul.f32 %v5391, 1.442695
      %v5430 = vpow.pop %v5429
      %v5431 = vmul.f32 %v5392, 1.442695
      %v5432 = vpow.pop %v5431
      %v5433 = vmul.f32 %v5393, 1.442695
      %v5434 = vpow.pop %v5433
      %v5435 = vmul.f32 %v5394, 1.442695
      %v5436 = vpow.pop %v5435
      %v5437 = vmul.f32 %v5395, 1.442695
      %v5438 = vpow.pop %v5437
      %v5439 = vmul.f32 %v5396, 1.442695
      %v5440 = vpow.pop %v5439
      %v5441 = vmul.f32 %v5397, 1.442695
      %v5442 = vpow.pop %v5441
      %v5443 = vmul.f32 %v5398, 1.442695
      %v5444 = vpow.pop %v5443
      %v5445 = vmul.f32 %v5399, 1.442695
      %v5446 = vpow.pop %v5445
      %v5447 = vmul.f32 %v5400, 1.442695
      %v5448 = vpow.pop %v5447
      %v5449 = vmul.f32 %v5401, 1.442695
      %v5450 = vpow.pop %v5449
      %v5451 = vmul.f32 %v5402, 1.442695
      %v5452 = vpow.pop %v5451
      %v5453 = vmul.f32 %v5403, 1.442695
      %v5454 = vpow.pop %v5453
      %v5455 = vmul.f32 %v5404, 1.442695
      %v5456 = vpow.pop %v5455
      %v5457 = vmul.f32 %v5405, 1.442695
      %v5458 = vpow.pop %v5457
      %v5459 = vmul.f32 %v5406, 1.442695
      %v5460 = vpow.pop %v5459
      %v5461 = vmul.f32 %v5407, 1.442695
      %v5462 = vpow.pop %v5461
      %v5463 = vmul.f32 %v5408, 1.442695
      %v5464 = vpow.pop %v5463
      %v5465 = vmul.f32 %v5409, 1.442695
      %v5466 = vpow.pop %v5465
      %v5467 = vmul.f32 %v5410, 1.442695
      %v5468 = vpow.pop %v5467
      %v5469 = vmul.f32 %v5411, 1.442695
      %v5470 = vpow.pop %v5469
      %v5471 = vmul.f32 %v5412, 1.442695
      %v5472 = vpow.pop %v5471
      %v5473 = vmul.f32 %v5413, 1.442695
      %v5474 = vpow.pop %v5473
      %v5475 = vmul.f32 %v5414, 1.442695
      %v5476 = vpow.pop %v5475
      %v5477 = vmul.f32 %v5415, 1.442695
      %v5478 = vpow.pop %v5477
      %v5479 = vmul.f32 %v5416, 1.442695
      %v5480 = vpow.pop %v5479
      %v5481 = vadd.f32 %v5418, 1.0
      %v5482 = vadd.f32 %v5420, 1.0
      %v5483 = vadd.f32 %v5422, 1.0
      %v5484 = vadd.f32 %v5424, 1.0
      %v5485 = vadd.f32 %v5426, 1.0
      %v5486 = vadd.f32 %v5428, 1.0
      %v5487 = vadd.f32 %v5430, 1.0
      %v5488 = vadd.f32 %v5432, 1.0
      %v5489 = vadd.f32 %v5434, 1.0
      %v5490 = vadd.f32 %v5436, 1.0
      %v5491 = vadd.f32 %v5438, 1.0
      %v5492 = vadd.f32 %v5440, 1.0
      %v5493 = vadd.f32 %v5442, 1.0
      %v5494 = vadd.f32 %v5444, 1.0
      %v5495 = vadd.f32 %v5446, 1.0
      %v5496 = vadd.f32 %v5448, 1.0
      %v5497 = vadd.f32 %v5450, 1.0
      %v5498 = vadd.f32 %v5452, 1.0
      %v5499 = vadd.f32 %v5454, 1.0
      %v5500 = vadd.f32 %v5456, 1.0
      %v5501 = vadd.f32 %v5458, 1.0
      %v5502 = vadd.f32 %v5460, 1.0
      %v5503 = vadd.f32 %v5462, 1.0
      %v5504 = vadd.f32 %v5464, 1.0
      %v5505 = vadd.f32 %v5466, 1.0
      %v5506 = vadd.f32 %v5468, 1.0
      %v5507 = vadd.f32 %v5470, 1.0
      %v5508 = vadd.f32 %v5472, 1.0
      %v5509 = vadd.f32 %v5474, 1.0
      %v5510 = vadd.f32 %v5476, 1.0
      %v5511 = vadd.f32 %v5478, 1.0
      %v5512 = vadd.f32 %v5480, 1.0
      %v5513 = vrcp.pop %v5481
      %v5514 = vmul.f32 1.0, %v5513
      %v5515 = vrcp.pop %v5482
      %v5516 = vmul.f32 1.0, %v5515
      %v5517 = vrcp.pop %v5483
      %v5518 = vmul.f32 1.0, %v5517
      %v5519 = vrcp.pop %v5484
      %v5520 = vmul.f32 1.0, %v5519
      %v5521 = vrcp.pop %v5485
      %v5522 = vmul.f32 1.0, %v5521
      %v5523 = vrcp.pop %v5486
      %v5524 = vmul.f32 1.0, %v5523
      %v5525 = vrcp.pop %v5487
      %v5526 = vmul.f32 1.0, %v5525
      %v5527 = vrcp.pop %v5488
      %v5528 = vmul.f32 1.0, %v5527
      %v5529 = vrcp.pop %v5489
      %v5530 = vmul.f32 1.0, %v5529
      %v5531 = vrcp.pop %v5490
      %v5532 = vmul.f32 1.0, %v5531
      %v5533 = vrcp.pop %v5491
      %v5534 = vmul.f32 1.0, %v5533
      %v5535 = vrcp.pop %v5492
      %v5536 = vmul.f32 1.0, %v5535
      %v5537 = vrcp.pop %v5493
      %v5538 = vmul.f32 1.0, %v5537
      %v5539 = vrcp.pop %v5494
      %v5540 = vmul.f32 1.0, %v5539
      %v5541 = vrcp.pop %v5495
      %v5542 = vmul.f32 1.0, %v5541
      %v5543 = vrcp.pop %v5496
      %v5544 = vmul.f32 1.0, %v5543
      %v5545 = vrcp.pop %v5497
      %v5546 = vmul.f32 1.0, %v5545
      %v5547 = vrcp.pop %v5498
      %v5548 = vmul.f32 1.0, %v5547
      %v5549 = vrcp.pop %v5499
      %v5550 = vmul.f32 1.0, %v5549
      %v5551 = vrcp.pop %v5500
      %v5552 = vmul.f32 1.0, %v5551
      %v5553 = vrcp.pop %v5501
      %v5554 = vmul.f32 1.0, %v5553
      %v5555 = vrcp.pop %v5502
      %v5556 = vmul.f32 1.0, %v5555
      %v5557 = vrcp.pop %v5503
      %v5558 = vmul.f32 1.0, %v5557
      %v5559 = vrcp.pop %v5504
      %v5560 = vmul.f32 1.0, %v5559
      %v5561 = vrcp.pop %v5505
      %v5562 = vmul.f32 1.0, %v5561
      %v5563 = vrcp.pop %v5506
      %v5564 = vmul.f32 1.0, %v5563
      %v5565 = vrcp.pop %v5507
      %v5566 = vmul.f32 1.0, %v5565
      %v5567 = vrcp.pop %v5508
      %v5568 = vmul.f32 1.0, %v5567
      %v5569 = vrcp.pop %v5509
      %v5570 = vmul.f32 1.0, %v5569
      %v5571 = vrcp.pop %v5510
      %v5572 = vmul.f32 1.0, %v5571
      %v5573 = vrcp.pop %v5511
      %v5574 = vmul.f32 1.0, %v5573
      %v5575 = vrcp.pop %v5512
      %v5576 = vmul.f32 1.0, %v5575
      %v5577 = vtanh.pop %v5129
      %v5578 = vtanh.pop %v5130
      %v5579 = vtanh.pop %v5131
      %v5580 = vtanh.pop %v5132
      %v5581 = vtanh.pop %v5133
      %v5582 = vtanh.pop %v5134
      %v5583 = vtanh.pop %v5135
      %v5584 = vtanh.pop %v5136
      %v5585 = vtanh.pop %v5137
      %v5586 = vtanh.pop %v5138
      %v5587 = vtanh.pop %v5139
      %v5588 = vtanh.pop %v5140
      %v5589 = vtanh.pop %v5141
      %v5590 = vtanh.pop %v5142
      %v5591 = vtanh.pop %v5143
      %v5592 = vtanh.pop %v5144
      %v5593 = vtanh.pop %v5145
      %v5594 = vtanh.pop %v5146
      %v5595 = vtanh.pop %v5147
      %v5596 = vtanh.pop %v5148
      %v5597 = vtanh.pop %v5149
      %v5598 = vtanh.pop %v5150
      %v5599 = vtanh.pop %v5151
      %v5600 = vtanh.pop %v5152
      %v5601 = vtanh.pop %v5153
      %v5602 = vtanh.pop %v5154
      %v5603 = vtanh.pop %v5155
      %v5604 = vtanh.pop %v5156
      %v5605 = vtanh.pop %v5157
      %v5606 = vtanh.pop %v5158
      %v5607 = vtanh.pop %v5159
      %v5608 = vtanh.pop %v5160
      %v5609 = vxor.u32 %v5161, 2147483648
      %v5610 = vxor.u32 %v5162, 2147483648
      %v5611 = vxor.u32 %v5163, 2147483648
      %v5612 = vxor.u32 %v5164, 2147483648
      %v5613 = vxor.u32 %v5165, 2147483648
      %v5614 = vxor.u32 %v5166, 2147483648
      %v5615 = vxor.u32 %v5167, 2147483648
      %v5616 = vxor.u32 %v5168, 2147483648
      %v5617 = vxor.u32 %v5169, 2147483648
      %v5618 = vxor.u32 %v5170, 2147483648
      %v5619 = vxor.u32 %v5171, 2147483648
      %v5620 = vxor.u32 %v5172, 2147483648
      %v5621 = vxor.u32 %v5173, 2147483648
      %v5622 = vxor.u32 %v5174, 2147483648
      %v5623 = vxor.u32 %v5175, 2147483648
      %v5624 = vxor.u32 %v5176, 2147483648
      %v5625 = vxor.u32 %v5177, 2147483648
      %v5626 = vxor.u32 %v5178, 2147483648
      %v5627 = vxor.u32 %v5179, 2147483648
      %v5628 = vxor.u32 %v5180, 2147483648
      %v5629 = vxor.u32 %v5181, 2147483648
      %v5630 = vxor.u32 %v5182, 2147483648
      %v5631 = vxor.u32 %v5183, 2147483648
      %v5632 = vxor.u32 %v5184, 2147483648
      %v5633 = vxor.u32 %v5185, 2147483648
      %v5634 = vxor.u32 %v5186, 2147483648
      %v5635 = vxor.u32 %v5187, 2147483648
      %v5636 = vxor.u32 %v5188, 2147483648
      %v5637 = vxor.u32 %v5189, 2147483648
      %v5638 = vxor.u32 %v5190, 2147483648
      %v5639 = vxor.u32 %v5191, 2147483648
      %v5640 = vxor.u32 %v5192, 2147483648
      %v5641 = vmul.f32 %v5609, 1.442695
      %v5642 = vpow.pop %v5641
      %v5643 = vmul.f32 %v5610, 1.442695
      %v5644 = vpow.pop %v5643
      %v5645 = vmul.f32 %v5611, 1.442695
      %v5646 = vpow.pop %v5645
      %v5647 = vmul.f32 %v5612, 1.442695
      %v5648 = vpow.pop %v5647
      %v5649 = vmul.f32 %v5613, 1.442695
      %v5650 = vpow.pop %v5649
      %v5651 = vmul.f32 %v5614, 1.442695
      %v5652 = vpow.pop %v5651
      %v5653 = vmul.f32 %v5615, 1.442695
      %v5654 = vpow.pop %v5653
      %v5655 = vmul.f32 %v5616, 1.442695
      %v5656 = vpow.pop %v5655
      %v5657 = vmul.f32 %v5617, 1.442695
      %v5658 = vpow.pop %v5657
      %v5659 = vmul.f32 %v5618, 1.442695
      %v5660 = vpow.pop %v5659
      %v5661 = vmul.f32 %v5619, 1.442695
      %v5662 = vpow.pop %v5661
      %v5663 = vmul.f32 %v5620, 1.442695
      %v5664 = vpow.pop %v5663
      %v5665 = vmul.f32 %v5621, 1.442695
      %v5666 = vpow.pop %v5665
      %v5667 = vmul.f32 %v5622, 1.442695
      %v5668 = vpow.pop %v5667
      %v5669 = vmul.f32 %v5623, 1.442695
      %v5670 = vpow.pop %v5669
      %v5671 = vmul.f32 %v5624, 1.442695
      %v5672 = vpow.pop %v5671
      %v5673 = vmul.f32 %v5625, 1.442695
      %v5674 = vpow.pop %v5673
      %v5675 = vmul.f32 %v5626, 1.442695
      %v5676 = vpow.pop %v5675
      %v5677 = vmul.f32 %v5627, 1.442695
      %v5678 = vpow.pop %v5677
      %v5679 = vmul.f32 %v5628, 1.442695
      %v5680 = vpow.pop %v5679
      %v5681 = vmul.f32 %v5629, 1.442695
      %v5682 = vpow.pop %v5681
      %v5683 = vmul.f32 %v5630, 1.442695
      %v5684 = vpow.pop %v5683
      %v5685 = vmul.f32 %v5631, 1.442695
      %v5686 = vpow.pop %v5685
      %v5687 = vmul.f32 %v5632, 1.442695
      %v5688 = vpow.pop %v5687
      %v5689 = vmul.f32 %v5633, 1.442695
      %v5690 = vpow.pop %v5689
      %v5691 = vmul.f32 %v5634, 1.442695
      %v5692 = vpow.pop %v5691
      %v5693 = vmul.f32 %v5635, 1.442695
      %v5694 = vpow.pop %v5693
      %v5695 = vmul.f32 %v5636, 1.442695
      %v5696 = vpow.pop %v5695
      %v5697 = vmul.f32 %v5637, 1.442695
      %v5698 = vpow.pop %v5697
      %v5699 = vmul.f32 %v5638, 1.442695
      %v5700 = vpow.pop %v5699
      %v5701 = vmul.f32 %v5639, 1.442695
      %v5702 = vpow.pop %v5701
      %v5703 = vmul.f32 %v5640, 1.442695
      %v5704 = vpow.pop %v5703
      %v5705 = vadd.f32 %v5642, 1.0
      %v5706 = vadd.f32 %v5644, 1.0
      %v5707 = vadd.f32 %v5646, 1.0
      %v5708 = vadd.f32 %v5648, 1.0
      %v5709 = vadd.f32 %v5650, 1.0
      %v5710 = vadd.f32 %v5652, 1.0
      %v5711 = vadd.f32 %v5654, 1.0
      %v5712 = vadd.f32 %v5656, 1.0
      %v5713 = vadd.f32 %v5658, 1.0
      %v5714 = vadd.f32 %v5660, 1.0
      %v5715 = vadd.f32 %v5662, 1.0
      %v5716 = vadd.f32 %v5664, 1.0
      %v5717 = vadd.f32 %v5666, 1.0
      %v5718 = vadd.f32 %v5668, 1.0
      %v5719 = vadd.f32 %v5670, 1.0
      %v5720 = vadd.f32 %v5672, 1.0
      %v5721 = vadd.f32 %v5674, 1.0
      %v5722 = vadd.f32 %v5676, 1.0
      %v5723 = vadd.f32 %v5678, 1.0
      %v5724 = vadd.f32 %v5680, 1.0
      %v5725 = vadd.f32 %v5682, 1.0
      %v5726 = vadd.f32 %v5684, 1.0
      %v5727 = vadd.f32 %v5686, 1.0
      %v5728 = vadd.f32 %v5688, 1.0
      %v5729 = vadd.f32 %v5690, 1.0
      %v5730 = vadd.f32 %v5692, 1.0
      %v5731 = vadd.f32 %v5694, 1.0
      %v5732 = vadd.f32 %v5696, 1.0
      %v5733 = vadd.f32 %v5698, 1.0
      %v5734 = vadd.f32 %v5700, 1.0
      %v5735 = vadd.f32 %v5702, 1.0
      %v5736 = vadd.f32 %v5704, 1.0
      %v5737 = vrcp.pop %v5705
      %v5738 = vmul.f32 1.0, %v5737
      %v5739 = vrcp.pop %v5706
      %v5740 = vmul.f32 1.0, %v5739
      %v5741 = vrcp.pop %v5707
      %v5742 = vmul.f32 1.0, %v5741
      %v5743 = vrcp.pop %v5708
      %v5744 = vmul.f32 1.0, %v5743
      %v5745 = vrcp.pop %v5709
      %v5746 = vmul.f32 1.0, %v5745
      %v5747 = vrcp.pop %v5710
      %v5748 = vmul.f32 1.0, %v5747
      %v5749 = vrcp.pop %v5711
      %v5750 = vmul.f32 1.0, %v5749
      %v5751 = vrcp.pop %v5712
      %v5752 = vmul.f32 1.0, %v5751
      %v5753 = vrcp.pop %v5713
      %v5754 = vmul.f32 1.0, %v5753
      %v5755 = vrcp.pop %v5714
      %v5756 = vmul.f32 1.0, %v5755
      %v5757 = vrcp.pop %v5715
      %v5758 = vmul.f32 1.0, %v5757
      %v5759 = vrcp.pop %v5716
      %v5760 = vmul.f32 1.0, %v5759
      %v5761 = vrcp.pop %v5717
      %v5762 = vmul.f32 1.0, %v5761
      %v5763 = vrcp.pop %v5718
      %v5764 = vmul.f32 1.0, %v5763
      %v5765 = vrcp.pop %v5719
      %v5766 = vmul.f32 1.0, %v5765
      %v5767 = vrcp.pop %v5720
      %v5768 = vmul.f32 1.0, %v5767
      %v5769 = vrcp.pop %v5721
      %v5770 = vmul.f32 1.0, %v5769
      %v5771 = vrcp.pop %v5722
      %v5772 = vmul.f32 1.0, %v5771
      %v5773 = vrcp.pop %v5723
      %v5774 = vmul.f32 1.0, %v5773
      %v5775 = vrcp.pop %v5724
      %v5776 = vmul.f32 1.0, %v5775
      %v5777 = vrcp.pop %v5725
      %v5778 = vmul.f32 1.0, %v5777
      %v5779 = vrcp.pop %v5726
      %v5780 = vmul.f32 1.0, %v5779
      %v5781 = vrcp.pop %v5727
      %v5782 = vmul.f32 1.0, %v5781
      %v5783 = vrcp.pop %v5728
      %v5784 = vmul.f32 1.0, %v5783
      %v5785 = vrcp.pop %v5729
      %v5786 = vmul.f32 1.0, %v5785
      %v5787 = vrcp.pop %v5730
      %v5788 = vmul.f32 1.0, %v5787
      %v5789 = vrcp.pop %v5731
      %v5790 = vmul.f32 1.0, %v5789
      %v5791 = vrcp.pop %v5732
      %v5792 = vmul.f32 1.0, %v5791
      %v5793 = vrcp.pop %v5733
      %v5794 = vmul.f32 1.0, %v5793
      %v5795 = vrcp.pop %v5734
      %v5796 = vmul.f32 1.0, %v5795
      %v5797 = vrcp.pop %v5735
      %v5798 = vmul.f32 1.0, %v5797
      %v5799 = vrcp.pop %v5736
      %v5800 = vmul.f32 1.0, %v5799
      %v5801 = vmul.f32 %v5514, %v4061
      %v5802 = vmul.f32 %v5516, %v4062
      %v5803 = vmul.f32 %v5518, %v4063
      %v5804 = vmul.f32 %v5520, %v4064
      %v5805 = vmul.f32 %v5522, %v4065
      %v5806 = vmul.f32 %v5524, %v4066
      %v5807 = vmul.f32 %v5526, %v4067
      %v5808 = vmul.f32 %v5528, %v4068
      %v5809 = vmul.f32 %v5530, %v4069
      %v5810 = vmul.f32 %v5532, %v4070
      %v5811 = vmul.f32 %v5534, %v4071
      %v5812 = vmul.f32 %v5536, %v4072
      %v5813 = vmul.f32 %v5538, %v4073
      %v5814 = vmul.f32 %v5540, %v4074
      %v5815 = vmul.f32 %v5542, %v4075
      %v5816 = vmul.f32 %v5544, %v4076
      %v5817 = vmul.f32 %v5546, %v4077
      %v5818 = vmul.f32 %v5548, %v4078
      %v5819 = vmul.f32 %v5550, %v4079
      %v5820 = vmul.f32 %v5552, %v4080
      %v5821 = vmul.f32 %v5554, %v4081
      %v5822 = vmul.f32 %v5556, %v4082
      %v5823 = vmul.f32 %v5558, %v4083
      %v5824 = vmul.f32 %v5560, %v4084
      %v5825 = vmul.f32 %v5562, %v4085
      %v5826 = vmul.f32 %v5564, %v4086
      %v5827 = vmul.f32 %v5566, %v4087
      %v5828 = vmul.f32 %v5568, %v4088
      %v5829 = vmul.f32 %v5570, %v4089
      %v5830 = vmul.f32 %v5572, %v4090
      %v5831 = vmul.f32 %v5574, %v4091
      %v5832 = vmul.f32 %v5576, %v4092
      %v5833 = vmul.f32 %v5322, %v5577
      %v5834 = vmul.f32 %v5324, %v5578
      %v5835 = vmul.f32 %v5326, %v5579
      %v5836 = vmul.f32 %v5328, %v5580
      %v5837 = vmul.f32 %v5330, %v5581
      %v5838 = vmul.f32 %v5332, %v5582
      %v5839 = vmul.f32 %v5334, %v5583
      %v5840 = vmul.f32 %v5336, %v5584
      %v5841 = vmul.f32 %v5338, %v5585
      %v5842 = vmul.f32 %v5340, %v5586
      %v5843 = vmul.f32 %v5342, %v5587
      %v5844 = vmul.f32 %v5344, %v5588
      %v5845 = vmul.f32 %v5346, %v5589
      %v5846 = vmul.f32 %v5348, %v5590
      %v5847 = vmul.f32 %v5350, %v5591
      %v5848 = vmul.f32 %v5352, %v5592
      %v5849 = vmul.f32 %v5354, %v5593
      %v5850 = vmul.f32 %v5356, %v5594
      %v5851 = vmul.f32 %v5358, %v5595
      %v5852 = vmul.f32 %v5360, %v5596
      %v5853 = vmul.f32 %v5362, %v5597
      %v5854 = vmul.f32 %v5364, %v5598
      %v5855 = vmul.f32 %v5366, %v5599
      %v5856 = vmul.f32 %v5368, %v5600
      %v5857 = vmul.f32 %v5370, %v5601
      %v5858 = vmul.f32 %v5372, %v5602
      %v5859 = vmul.f32 %v5374, %v5603
      %v5860 = vmul.f32 %v5376, %v5604
      %v5861 = vmul.f32 %v5378, %v5605
      %v5862 = vmul.f32 %v5380, %v5606
      %v5863 = vmul.f32 %v5382, %v5607
      %v5864 = vmul.f32 %v5384, %v5608
      %v5865 = vadd.f32 %v5801, %v5833
      %v5866 = vadd.f32 %v5802, %v5834
      %v5867 = vadd.f32 %v5803, %v5835
      %v5868 = vadd.f32 %v5804, %v5836
      %v5869 = vadd.f32 %v5805, %v5837
      %v5870 = vadd.f32 %v5806, %v5838
      %v5871 = vadd.f32 %v5807, %v5839
      %v5872 = vadd.f32 %v5808, %v5840
      %v5873 = vadd.f32 %v5809, %v5841
      %v5874 = vadd.f32 %v5810, %v5842
      %v5875 = vadd.f32 %v5811, %v5843
      %v5876 = vadd.f32 %v5812, %v5844
      %v5877 = vadd.f32 %v5813, %v5845
      %v5878 = vadd.f32 %v5814, %v5846
      %v5879 = vadd.f32 %v5815, %v5847
      %v5880 = vadd.f32 %v5816, %v5848
      %v5881 = vadd.f32 %v5817, %v5849
      %v5882 = vadd.f32 %v5818, %v5850
      %v5883 = vadd.f32 %v5819, %v5851
      %v5884 = vadd.f32 %v5820, %v5852
      %v5885 = vadd.f32 %v5821, %v5853
      %v5886 = vadd.f32 %v5822, %v5854
      %v5887 = vadd.f32 %v5823, %v5855
      %v5888 = vadd.f32 %v5824, %v5856
      %v5889 = vadd.f32 %v5825, %v5857
      %v5890 = vadd.f32 %v5826, %v5858
      %v5891 = vadd.f32 %v5827, %v5859
      %v5892 = vadd.f32 %v5828, %v5860
      %v5893 = vadd.f32 %v5829, %v5861
      %v5894 = vadd.f32 %v5830, %v5862
      %v5895 = vadd.f32 %v5831, %v5863
      %v5896 = vadd.f32 %v5832, %v5864
      %v5897 = vtanh.pop %v5865
      %v5898 = vtanh.pop %v5866
      %v5899 = vtanh.pop %v5867
      %v5900 = vtanh.pop %v5868
      %v5901 = vtanh.pop %v5869
      %v5902 = vtanh.pop %v5870
      %v5903 = vtanh.pop %v5871
      %v5904 = vtanh.pop %v5872
      %v5905 = vtanh.pop %v5873
      %v5906 = vtanh.pop %v5874
      %v5907 = vtanh.pop %v5875
      %v5908 = vtanh.pop %v5876
      %v5909 = vtanh.pop %v5877
      %v5910 = vtanh.pop %v5878
      %v5911 = vtanh.pop %v5879
      %v5912 = vtanh.pop %v5880
      %v5913 = vtanh.pop %v5881
      %v5914 = vtanh.pop %v5882
      %v5915 = vtanh.pop %v5883
      %v5916 = vtanh.pop %v5884
      %v5917 = vtanh.pop %v5885
      %v5918 = vtanh.pop %v5886
      %v5919 = vtanh.pop %v5887
      %v5920 = vtanh.pop %v5888
      %v5921 = vtanh.pop %v5889
      %v5922 = vtanh.pop %v5890
      %v5923 = vtanh.pop %v5891
      %v5924 = vtanh.pop %v5892
      %v5925 = vtanh.pop %v5893
      %v5926 = vtanh.pop %v5894
      %v5927 = vtanh.pop %v5895
      %v5928 = vtanh.pop %v5896
      %v5929 = vmul.f32 %v5738, %v5897
      %v5930 = vmul.f32 %v5740, %v5898
      %v5931 = vmul.f32 %v5742, %v5899
      %v5932 = vmul.f32 %v5744, %v5900
      %v5933 = vmul.f32 %v5746, %v5901
      %v5934 = vmul.f32 %v5748, %v5902
      %v5935 = vmul.f32 %v5750, %v5903
      %v5936 = vmul.f32 %v5752, %v5904
      %v5937 = vmul.f32 %v5754, %v5905
      %v5938 = vmul.f32 %v5756, %v5906
      %v5939 = vmul.f32 %v5758, %v5907
      %v5940 = vmul.f32 %v5760, %v5908
      %v5941 = vmul.f32 %v5762, %v5909
      %v5942 = vmul.f32 %v5764, %v5910
      %v5943 = vmul.f32 %v5766, %v5911
      %v5944 = vmul.f32 %v5768, %v5912
      %v5945 = vmul.f32 %v5770, %v5913
      %v5946 = vmul.f32 %v5772, %v5914
      %v5947 = vmul.f32 %v5774, %v5915
      %v5948 = vmul.f32 %v5776, %v5916
      %v5949 = vmul.f32 %v5778, %v5917
      %v5950 = vmul.f32 %v5780, %v5918
      %v5951 = vmul.f32 %v5782, %v5919
      %v5952 = vmul.f32 %v5784, %v5920
      %v5953 = vmul.f32 %v5786, %v5921
      %v5954 = vmul.f32 %v5788, %v5922
      %v5955 = vmul.f32 %v5790, %v5923
      %v5956 = vmul.f32 %v5792, %v5924
      %v5957 = vmul.f32 %v5794, %v5925
      %v5958 = vmul.f32 %v5796, %v5926
      %v5959 = vmul.f32 %v5798, %v5927
      %v5960 = vmul.f32 %v5800, %v5928
      %vm5961 = vcmp.lt.f32.partialorder 2.0, %v357
      %vm5962 = vcmp.lt.f32.partialorder 2.0, %v364
      %vm5963 = vcmp.lt.f32.partialorder 2.0, %v371
      %vm5964 = vcmp.lt.f32.partialorder 2.0, %v378
      %vm5965 = vcmp.lt.f32.partialorder 2.0, %v385
      %vm5966 = vcmp.lt.f32.partialorder 2.0, %v392
      %vm5967 = vcmp.lt.f32.partialorder 2.0, %v399
      %vm5968 = vcmp.lt.f32.partialorder 2.0, %v406
      %v5969 = vsel %vm5961, 1, 0
      %v5970 = vsel %vm5962, 1, 0
      %v5971 = vsel %vm5963, 1, 0
      %v5972 = vsel %vm5964, 1, 0
      %v5973 = vsel %vm5965, 1, 0
      %v5974 = vsel %vm5966, 1, 0
      %v5975 = vsel %vm5967, 1, 0
      %v5976 = vsel %vm5968, 1, 0
      %vm5977 = vcmp.eq.s32.totalorder %v5969, 1
      %vm5978 = vcmp.eq.s32.totalorder %v5970, 1
      %vm5979 = vcmp.eq.s32.totalorder %v5971, 1
      %vm5980 = vcmp.eq.s32.totalorder %v5972, 1
      %vm5981 = vcmp.eq.s32.totalorder %v5973, 1
      %vm5982 = vcmp.eq.s32.totalorder %v5974, 1
      %vm5983 = vcmp.eq.s32.totalorder %v5975, 1
      %vm5984 = vcmp.eq.s32.totalorder %v5976, 1
      %v5985 = vsel %vm5977, %v5929, %v4029
      %v5986 = vsel %vm5978, %v5930, %v4030
      %v5987 = vsel %vm5979, %v5931, %v4031
      %v5988 = vsel %vm5980, %v5932, %v4032
      %v5989 = vsel %vm5981, %v5933, %v4033
      %v5990 = vsel %vm5982, %v5934, %v4034
      %v5991 = vsel %vm5983, %v5935, %v4035
      %v5992 = vsel %vm5984, %v5936, %v4036
      %v5993 = vsel %vm5977, %v5937, %v4037
      %v5994 = vsel %vm5978, %v5938, %v4038
      %v5995 = vsel %vm5979, %v5939, %v4039
      %v5996 = vsel %vm5980, %v5940, %v4040
      %v5997 = vsel %vm5981, %v5941, %v4041
      %v5998 = vsel %vm5982, %v5942, %v4042
      %v5999 = vsel %vm5983, %v5943, %v4043
      %v6000 = vsel %vm5984, %v5944, %v4044
      %v6001 = vsel %vm5977, %v5945, %v4045
      %v6002 = vsel %vm5978, %v5946, %v4046
      %v6003 = vsel %vm5979, %v5947, %v4047
      %v6004 = vsel %vm5980, %v5948, %v4048
      %v6005 = vsel %vm5981, %v5949, %v4049
      %v6006 = vsel %vm5982, %v5950, %v4050
      %v6007 = vsel %vm5983, %v5951, %v4051
      %v6008 = vsel %vm5984, %v5952, %v4052
      %v6009 = vsel %vm5977, %v5953, %v4053
      %v6010 = vsel %vm5978, %v5954, %v4054
      %v6011 = vsel %vm5979, %v5955, %v4055
      %v6012 = vsel %vm5980, %v5956, %v4056
      %v6013 = vsel %vm5981, %v5957, %v4057
      %v6014 = vsel %vm5982, %v5958, %v4058
      %v6015 = vsel %vm5983, %v5959, %v4059
      %v6016 = vsel %vm5984, %v5960, %v4060
      %v6017 = vld [vmem:[%s4] sm:$0xff]
      %v6018 = vld [vmem:[%s4 + $0x8] sm:$0xff]
      %v6019 = vld [vmem:[%s4 + $0x10] sm:$0xff]
      %v6020 = vld [vmem:[%s4 + $0x18] sm:$0xff]
      %6022 = vset.pattern.permute.xlu0 0
      %6023 = vperm.xlu0 %6022, %v6017
      %v6024 = vpop.permute.xlu0 %6023
      %6027 = vset.pattern.permute.xlu0 0
      %6028 = vperm.xlu0 %6027, %v6018
      %v6029 = vpop.permute.xlu0 %6028
      %6032 = vset.pattern.permute.xlu0 0
      %6033 = vperm.xlu0 %6032, %v6019
      %v6034 = vpop.permute.xlu0 %6033
      %6037 = vset.pattern.permute.xlu0 0
      %6038 = vperm.xlu0 %6037, %v6020
      %v6039 = vpop.permute.xlu0 %6038
      %v6041 = vmul.f32 %v5985, %v6024
      %v6042 = vmul.f32 %v5986, %v6024
      %v6043 = vmul.f32 %v5987, %v6024
      %v6044 = vmul.f32 %v5988, %v6024
      %v6045 = vmul.f32 %v5989, %v6024
      %v6046 = vmul.f32 %v5990, %v6024
      %v6047 = vmul.f32 %v5991, %v6024
      %v6048 = vmul.f32 %v5992, %v6024
      %v6049 = vmul.f32 %v5993, %v6029
      %v6050 = vmul.f32 %v5994, %v6029
      %v6051 = vmul.f32 %v5995, %v6029
      %v6052 = vmul.f32 %v5996, %v6029
      %v6053 = vmul.f32 %v5997, %v6029
      %v6054 = vmul.f32 %v5998, %v6029
      %v6055 = vmul.f32 %v5999, %v6029
      %v6056 = vmul.f32 %v6000, %v6029
      %v6057 = vmul.f32 %v6001, %v6034
      %v6058 = vmul.f32 %v6002, %v6034
      %v6059 = vmul.f32 %v6003, %v6034
      %v6060 = vmul.f32 %v6004, %v6034
      %v6061 = vmul.f32 %v6005, %v6034
      %v6062 = vmul.f32 %v6006, %v6034
      %v6063 = vmul.f32 %v6007, %v6034
      %v6064 = vmul.f32 %v6008, %v6034
      %v6065 = vmul.f32 %v6009, %v6039
      %v6066 = vmul.f32 %v6010, %v6039
      %v6067 = vmul.f32 %v6011, %v6039
      %v6068 = vmul.f32 %v6012, %v6039
      %v6069 = vmul.f32 %v6013, %v6039
      %v6070 = vmul.f32 %v6014, %v6039
      %v6071 = vmul.f32 %v6015, %v6039
      %v6072 = vmul.f32 %v6016, %v6039
      %v6073 = vadd.f32 %v6041, %v6049
      %v6074 = vadd.f32 %v6073, %v6057
      %v6075 = vadd.f32 %v6074, %v6065
      %v6076 = vrot.slane %v6075, 4
      %v6077 = vadd.f32 %v6075, %v6076
      %v6078 = vrot.slane %v6077, 2
      %v6079 = vadd.f32 %v6077, %v6078
      %v6080 = vrot.slane %v6079, 1
      %v6081 = vadd.f32 %v6079, %v6080
      %v6082 = vadd.f32 %v6042, %v6050
      %v6083 = vadd.f32 %v6082, %v6058
      %v6084 = vadd.f32 %v6083, %v6066
      %v6085 = vrot.slane %v6084, 4
      %v6086 = vadd.f32 %v6084, %v6085
      %v6087 = vrot.slane %v6086, 2
      %v6088 = vadd.f32 %v6086, %v6087
      %v6089 = vrot.slane %v6088, 1
      %v6090 = vadd.f32 %v6088, %v6089
      %v6091 = vadd.f32 %v6043, %v6051
      %v6092 = vadd.f32 %v6091, %v6059
      %v6093 = vadd.f32 %v6092, %v6067
      %v6094 = vrot.slane %v6093, 4
      %v6095 = vadd.f32 %v6093, %v6094
      %v6096 = vrot.slane %v6095, 2
      %v6097 = vadd.f32 %v6095, %v6096
      %v6098 = vrot.slane %v6097, 1
      %v6099 = vadd.f32 %v6097, %v6098
      %v6100 = vadd.f32 %v6044, %v6052
      %v6101 = vadd.f32 %v6100, %v6060
      %v6102 = vadd.f32 %v6101, %v6068
      %v6103 = vrot.slane %v6102, 4
      %v6104 = vadd.f32 %v6102, %v6103
      %v6105 = vrot.slane %v6104, 2
      %v6106 = vadd.f32 %v6104, %v6105
      %v6107 = vrot.slane %v6106, 1
      %v6108 = vadd.f32 %v6106, %v6107
      %v6109 = vadd.f32 %v6045, %v6053
      %v6110 = vadd.f32 %v6109, %v6061
      %v6111 = vadd.f32 %v6110, %v6069
      %v6112 = vrot.slane %v6111, 4
      %v6113 = vadd.f32 %v6111, %v6112
      %v6114 = vrot.slane %v6113, 2
      %v6115 = vadd.f32 %v6113, %v6114
      %v6116 = vrot.slane %v6115, 1
      %v6117 = vadd.f32 %v6115, %v6116
      %v6118 = vadd.f32 %v6046, %v6054
      %v6119 = vadd.f32 %v6118, %v6062
      %v6120 = vadd.f32 %v6119, %v6070
      %v6121 = vrot.slane %v6120, 4
      %v6122 = vadd.f32 %v6120, %v6121
      %v6123 = vrot.slane %v6122, 2
      %v6124 = vadd.f32 %v6122, %v6123
      %v6125 = vrot.slane %v6124, 1
      %v6126 = vadd.f32 %v6124, %v6125
      %v6127 = vadd.f32 %v6047, %v6055
      %v6128 = vadd.f32 %v6127, %v6063
      %v6129 = vadd.f32 %v6128, %v6071
      %v6130 = vrot.slane %v6129, 4
      %v6131 = vadd.f32 %v6129, %v6130
      %v6132 = vrot.slane %v6131, 2
      %v6133 = vadd.f32 %v6131, %v6132
      %v6134 = vrot.slane %v6133, 1
      %v6135 = vadd.f32 %v6133, %v6134
      %v6136 = vadd.f32 %v6048, %v6056
      %v6137 = vadd.f32 %v6136, %v6064
      %v6138 = vadd.f32 %v6137, %v6072
      %v6139 = vrot.slane %v6138, 4
      %v6140 = vadd.f32 %v6138, %v6139
      %v6141 = vrot.slane %v6140, 2
      %v6142 = vadd.f32 %v6140, %v6141
      %v6143 = vrot.slane %v6142, 1
      %v6144 = vadd.f32 %v6142, %v6143
      %s6145 = sld [smem:[#allocation2]]
      %v6146 = vstv %s6145
      %v6147 = vadd.f32 %v6081, %v6146
      %v6148 = vadd.f32 %v6090, %v6146
      %v6149 = vadd.f32 %v6099, %v6146
      %v6150 = vadd.f32 %v6108, %v6146
      %v6151 = vadd.f32 %v6117, %v6146
      %v6152 = vadd.f32 %v6126, %v6146
      %v6153 = vadd.f32 %v6135, %v6146
      %v6154 = vadd.f32 %v6144, %v6146
      %vm6155 = vcmp.ne.f32.partialorder %v277, 0.0
      %vm6156 = vcmp.ne.f32.partialorder %v284, 0.0
      %vm6157 = vcmp.ne.f32.partialorder %v291, 0.0
      %vm6158 = vcmp.ne.f32.partialorder %v298, 0.0
      %vm6159 = vcmp.ne.f32.partialorder %v305, 0.0
      %vm6160 = vcmp.ne.f32.partialorder %v312, 0.0
      %vm6161 = vcmp.ne.f32.partialorder %v319, 0.0
      %vm6162 = vcmp.ne.f32.partialorder %v326, 0.0
      %v6163 = vsel %vm6155, %v6147, 0.0
      %v6164 = vsel %vm6156, %v6148, 0.0
      %v6165 = vsel %vm6157, %v6149, 0.0
      %v6166 = vsel %vm6158, %v6150, 0.0
      %v6167 = vsel %vm6159, %v6151, 0.0
      %v6168 = vsel %vm6160, %v6152, 0.0
      %v6169 = vsel %vm6161, %v6153, 0.0
      %v6170 = vsel %vm6162, %v6154, 0.0
      %v6179 = vcombine.low %v6163, %v6164
      %v6180 = vcombine.low %v6165, %v6166
      %v6181 = vcombine.low %v6167, %v6168
      %v6182 = vcombine.low %v6169, %v6170
      %v6184 = vunpack.c.l.s4 1966171168
      %v6185 = vunpack.c.0.s8 %v6184
      %v6186 = vlaneseq
      %v6187 = vshrl.u32 %v6186, 7
      %v6188 = vsub.s32 %v6185, %v6187
      %v6189 = vrot.slane %v6179, %v6188
      %v6191 = vunpack.c.l.s4 1966171168
      %v6192 = vunpack.c.0.s8 %v6191
      %v6193 = vlaneseq
      %v6194 = vshrl.u32 %v6193, 7
      %v6195 = vsub.s32 %v6192, %v6194
      %v6196 = vrot.slane %v6180, %v6195
      %v6198 = vunpack.c.l.s4 1966171168
      %v6199 = vunpack.c.0.s8 %v6198
      %v6200 = vlaneseq
      %v6201 = vshrl.u32 %v6200, 7
      %v6202 = vsub.s32 %v6199, %v6201
      %v6203 = vrot.slane %v6181, %v6202
      %v6205 = vunpack.c.l.s4 1966171168
      %v6206 = vunpack.c.0.s8 %v6205
      %v6207 = vlaneseq
      %v6208 = vshrl.u32 %v6207, 7
      %v6209 = vsub.s32 %v6206, %v6208
      %v6210 = vrot.slane %v6182, %v6209
      %v6211 = vcombine.low %v6189, %v6196
      %v6212 = vcombine.low %v6203, %v6210
      %v6214 = vunpack.c.l.s4 1966171168
      %v6215 = vunpack.c.0.s8 %v6214
      %v6216 = vlaneseq
      %v6217 = vshrl.u32 %v6216, 7
      %v6218 = vsub.s32 %v6215, %v6217
      %v6219 = vrot.slane %v6211, %v6218
      %v6221 = vunpack.c.l.s4 1966171168
      %v6222 = vunpack.c.0.s8 %v6221
      %v6223 = vlaneseq
      %v6224 = vshrl.u32 %v6223, 7
      %v6225 = vsub.s32 %v6222, %v6224
      %v6226 = vrot.slane %v6212, %v6225
      %v6227 = vcombine.low %v6219, %v6226
      %6229 = vst [vmem:[%s252] sm:$0xff] %v6227
      %s6230 = smul.u32 8, %s18
      %p6231 = scmp.lt.s32.totalorder %s6230, 15
      %s6232 = scalar_select %p6231, %s6230, 15
      %s6233 = scalar_lea.vmem %s6, %s6232
      // Predicated region
      $region45: #{gird_forward.3} parent=43 // pred_check
        %p6234 = pneg %p167
      $region46: #{gird_forward.3} parent=43 // pred_check_branch
        %6236 = sbr.rel (%p6234) target = $region48
      $region47: #{gird_forward.3} parent=43 // pred_region
        %s6237 = smul.u32 8, %s18
      $region48: #{gird_forward.3} parent=43 // pred_fallthru
        _
    $region44: #{gird_forward.3} parent=5 // pred_fallthru
      _
    %p6238 = scmp.le.s32.totalorder 2, %s13
    // Predicated region
    $region49: #{gird_forward.3} parent=5 // pred_check
      %p6239 = pneg %p6238
    $region50: #{gird_forward.3} parent=5 // pred_check_branch
      %6241 = sbr.rel (%p6239) target = $region52
    $region51: #{gird_forward.3} parent=5 // pred_region
      %s6242 = ssub.s32 %s13, 2
      // Predicated region
      $region53: #{gird_forward.3} parent=51 // pred_check
        %p6243 = pneg %p173
      $region54: #{gird_forward.3} parent=51 // pred_check_branch
        %6245 = sbr.rel (%p6243) target = $region56
      $region55: #{gird_forward.3} parent=51 // pred_region
        %s6246 = smul.u32 8, %s19
        %p6247 = scmp.lt.s32.totalorder %s6246, 15
        %s6248 = scalar_select %p6247, %s6246, 15
        %s6249 = scalar_lea.vmem %s6, %s6248
      $region56: #{gird_forward.3} parent=51 // pred_fallthru
        _
    $region52: #{gird_forward.3} parent=5 // pred_fallthru
      _
  $region6: #{gird_forward.3} parent=0 // loop_footer
    %s17 = sadd.s32 1, %s13
  $region7: #{gird_forward.3} parent=0 // loop_footer_branch
    %12 = sbr.rel target = $region3
  $region8: #{gird_forward.3} parent=0 // loop_exit
    _

</llo_original>
